<compile_context>
chip_gen: v6e
topology: v6e:2x2x1
jax: 0.10.0
libtpu: 0.0.40
codegen_flags: <defaults>
</compile_context>

<pallas_src>
import functools

import jax
import jax.numpy as jnp
from jax import lax
from jax.experimental import pallas as pl
from jax.experimental.pallas import tpu as pltpu

EPS = 1e-5
VMEM_LIMIT = 48 * 1024 * 1024  # leave headroom vs v7x's 64 MiB physical VMEM


# ----------------------------------------------------------------------------
# small helpers
# ----------------------------------------------------------------------------
def _pick_tile(M, cap):
    """Largest multiple-of-8 divisor of M that is <= cap (else M itself)."""
    if M <= cap:
        return M
    for t in range(cap - cap % 8, 7, -8):
        if M % t == 0:
            return t
    return M


def _bn_scale_shift(partial_stats, count, gamma, beta, eps=EPS):
    """partial_stats: (T, 2, C) per-tile [sum, sum_sq] -> fused BN scale/shift."""
    s = jnp.sum(partial_stats, axis=0)                    # (2, C)
    mean = s[0] / count
    var = jnp.maximum(s[1] / count - mean * mean, 0.0)    # biased variance
    scale = gamma * lax.rsqrt(var + eps)
    shift = beta - mean * scale
    return scale.reshape(1, -1).astype(jnp.float32), shift.reshape(1, -1).astype(jnp.float32)


def _block_diag_taps(w2, groups):
    """w2: (3, 3, Cin/G, Cout) grouped HWIO -> (9, Cin, Cout) block-diagonal taps."""
    kh, kw, cgi, cout = w2.shape
    cin = cgi * groups
    cgo = cout // groups
    wbd = jnp.zeros((kh, kw, cin, cout), w2.dtype)
    for g in range(groups):
        wbd = wbd.at[:, :, g * cgi:(g + 1) * cgi, g * cgo:(g + 1) * cgo].set(
            w2[:, :, :, g * cgo:(g + 1) * cgo])
    return wbd.reshape(kh * kw, cin, cout)


def _edge_masks(H, W):
    """(H*W, 2) float masks: col 0 -> (w > 0), col 1 -> (w < W-1)."""
    w_idx = jnp.arange(H * W, dtype=jnp.int32) % W
    return jnp.stack([(w_idx > 0), (w_idx < W - 1)], axis=1).astype(jnp.float32)


# ----------------------------------------------------------------------------
# Kernel 1: tiled 1x1 conv (matmul) + per-tile BN partial statistics.
# ----------------------------------------------------------------------------
def pointwise_conv_stats(x, w, *, tile_m, mm_dtype=jnp.float32, vmem_limit=VMEM_LIMIT):
    M, Cin = x.shape
    Cout = w.shape[1]
    nt = M // tile_m

    def kernel(x_ref, w_ref, y_ref, s_ref):
        y = jnp.dot(x_ref[...].astype(mm_dtype), w_ref[...].astype(mm_dtype),
                    preferred_element_type=jnp.float32)
        y_ref[...] = y
        s_ref[0, 0:1, :] = jnp.sum(y, axis=0, keepdims=True)
        s_ref[0, 1:2, :] = jnp.sum(y * y, axis=0, keepdims=True)

    y, stats = pl.pallas_call(
        kernel,
        grid=(nt,),
        in_specs=[pl.BlockSpec((tile_m, Cin), lambda i: (i, 0)),
                  pl.BlockSpec((Cin, Cout), lambda i: (0, 0))],
        out_specs=[pl.BlockSpec((tile_m, Cout), lambda i: (i, 0)),
                   pl.BlockSpec((1, 2, Cout), lambda i: (i, 0, 0))],
        out_shape=[jax.ShapeDtypeStruct((M, Cout), jnp.float32),
                   jax.ShapeDtypeStruct((nt, 2, Cout), jnp.float32)],
        compiler_params=pltpu.CompilerParams(
            dimension_semantics=("parallel",),
            vmem_limit_bytes=vmem_limit),
    )(x, w)
    return y, stats


# ----------------------------------------------------------------------------
# Kernel 2: fused BN1-apply + ReLU + grouped 3x3 conv (stride 1, pad 1) as
#           block-diagonal lane-dense tap matmuls; halo handled in-kernel with a
#           zero-padded VMEM row buffer + column edge masks.  Grid over batch N.
# ----------------------------------------------------------------------------
def grouped_conv3x3_bn_relu(y1_img, wbd, scale, shift, edge, *, H, W,
                            mm_dtype=jnp.float32, vmem_limit=VMEM_LIMIT):
    N, HW, C = y1_img.shape
    Cout = wbd.shape[2]
    P = ((W + 8) // 8) * 8  # halo pad rows, >= W+1 and a multiple of 8

    def kernel(y_ref, w_ref, sc_ref, sh_ref, e_ref, o_ref, s_ref, zbuf):
        # BN1 affine + ReLU, fused (scale/shift precomputed on host).
        z = jnp.maximum(y_ref[0] * sc_ref[...] + sh_ref[...], 0.0)      # (HW, C)
        # Zero-padded flattened row buffer: zbuf[P + m] = z[m].
        zbuf[...] = jnp.zeros_like(zbuf)
        zbuf[P:P + HW, :] = z
        acc = jnp.zeros((HW, Cout), jnp.float32)
        for dy in range(3):
            for dx in range(3):
                k = (dy - 1) * W + (dx - 1)
                patch = zbuf[P + k:P + k + HW, :]
                if dx == 0:                       # ox = -1: kill w == 0 column
                    patch = patch * e_ref[:, 0:1]
                elif dx == 2:                     # ox = +1: kill w == W-1 column
                    patch = patch * e_ref[:, 1:2]
                acc = acc + jnp.dot(patch.astype(mm_dtype),
                                    w_ref[dy * 3 + dx].astype(mm_dtype),
                                    preferred_element_type=jnp.float32)
        o_ref[0, :, :] = acc
        s_ref[0, 0:1, :] = jnp.sum(acc, axis=0, keepdims=True)
        s_ref[0, 1:2, :] = jnp.sum(acc * acc, axis=0, keepdims=True)

    y2, stats = pl.pallas_call(
        kernel,
        grid=(N,),
        in_specs=[pl.BlockSpec((1, HW, C), lambda n: (n, 0, 0)),
                  pl.BlockSpec((9, C, Cout), lambda n: (0, 0, 0)),
                  pl.BlockSpec((1, C), lambda n: (0, 0)),
                  pl.BlockSpec((1, C), lambda n: (0, 0)),
                  pl.BlockSpec((HW, 2), lambda n: (0, 0))],
        out_specs=[pl.BlockSpec((1, HW, Cout), lambda n: (n, 0, 0)),
                   pl.BlockSpec((1, 2, Cout), lambda n: (n, 0, 0))],
        out_shape=[jax.ShapeDtypeStruct((N, HW, Cout), jnp.float32),
                   jax.ShapeDtypeStruct((N, 2, Cout), jnp.float32)],
        scratch_shapes=[pltpu.VMEM((HW + 2 * P, C), jnp.float32)],
        compiler_params=pltpu.CompilerParams(
            dimension_semantics=("parallel",),
            vmem_limit_bytes=vmem_limit),
    )(y1_img, wbd, scale, shift, edge)
    return y2, stats


# ----------------------------------------------------------------------------
# Kernel 3: fused BN2-apply + ReLU + 1x1 conv3 (+ fused downsample 1x1 conv),
#           tiled over M, with per-tile partial stats for BN3 (and BNd).
# ----------------------------------------------------------------------------
def conv3_with_downsample(y2, x, scale, shift, w3, wd, *, tile_m,
                          mm_dtype=jnp.float32, vmem_limit=VMEM_LIMIT):
    M, Cmid = y2.shape
    Cin = x.shape[1]
    Cexp = w3.shape[1]
    nt = M // tile_m

    def kernel(y2_ref, x_ref, sc_ref, sh_ref, w3_ref, wd_ref,
               y3_ref, yd_ref, s3_ref, sd_ref):
        z = jnp.maximum(y2_ref[...] * sc_ref[...] + sh_ref[...], 0.0)
        y3 = jnp.dot(z.astype(mm_dtype), w3_ref[...].astype(mm_dtype),
                     preferred_element_type=jnp.float32)
        yd = jnp.dot(x_ref[...].astype(mm_dtype), wd_ref[...].astype(mm_dtype),
                     preferred_element_type=jnp.float32)
        y3_ref[...] = y3
        yd_ref[...] = yd
        s3_ref[0, 0:1, :] = jnp.sum(y3, axis=0, keepdims=True)
        s3_ref[0, 1:2, :] = jnp.sum(y3 * y3, axis=0, keepdims=True)
        sd_ref[0, 0:1, :] = jnp.sum(yd, axis=0, keepdims=True)
        sd_ref[0, 1:2, :] = jnp.sum(yd * yd, axis=0, keepdims=True)

    return pl.pallas_call(
        kernel,
        grid=(nt,),
        in_specs=[pl.BlockSpec((tile_m, Cmid), lambda i: (i, 0)),
                  pl.BlockSpec((tile_m, Cin), lambda i: (i, 0)),
                  pl.BlockSpec((1, Cmid), lambda i: (0, 0)),
                  pl.BlockSpec((1, Cmid), lambda i: (0, 0)),
                  pl.BlockSpec((Cmid, Cexp), lambda i: (0, 0)),
                  pl.BlockSpec((Cin, Cexp), lambda i: (0, 0))],
        out_specs=[pl.BlockSpec((tile_m, Cexp), lambda i: (i, 0)),
                   pl.BlockSpec((tile_m, Cexp), lambda i: (i, 0)),
                   pl.BlockSpec((1, 2, Cexp), lambda i: (i, 0, 0)),
                   pl.BlockSpec((1, 2, Cexp), lambda i: (i, 0, 0))],
        out_shape=[jax.ShapeDtypeStruct((M, Cexp), jnp.float32),
                   jax.ShapeDtypeStruct((M, Cexp), jnp.float32),
                   jax.ShapeDtypeStruct((nt, 2, Cexp), jnp.float32),
                   jax.ShapeDtypeStruct((nt, 2, Cexp), jnp.float32)],
        compiler_params=pltpu.CompilerParams(
            dimension_semantics=("parallel",),
            vmem_limit_bytes=vmem_limit),
    )(y2, x, scale, shift, w3, wd)


def conv3_no_downsample(y2, scale, shift, w3, *, tile_m,
                        mm_dtype=jnp.float32, vmem_limit=VMEM_LIMIT):
    M, Cmid = y2.shape
    Cexp = w3.shape[1]
    nt = M // tile_m

    def kernel(y2_ref, sc_ref, sh_ref, w3_ref, y3_ref, s3_ref):
        z = jnp.maximum(y2_ref[...] * sc_ref[...] + sh_ref[...], 0.0)
        y3 = jnp.dot(z.astype(mm_dtype), w3_ref[...].astype(mm_dtype),
                     preferred_element_type=jnp.float32)
        y3_ref[...] = y3
        s3_ref[0, 0:1, :] = jnp.sum(y3, axis=0, keepdims=True)
        s3_ref[0, 1:2, :] = jnp.sum(y3 * y3, axis=0, keepdims=True)

    return pl.pallas_call(
        kernel,
        grid=(nt,),
        in_specs=[pl.BlockSpec((tile_m, Cmid), lambda i: (i, 0)),
                  pl.BlockSpec((1, Cmid), lambda i: (0, 0)),
                  pl.BlockSpec((1, Cmid), lambda i: (0, 0)),
                  pl.BlockSpec((Cmid, Cexp), lambda i: (0, 0))],
        out_specs=[pl.BlockSpec((tile_m, Cexp), lambda i: (i, 0)),
                   pl.BlockSpec((1, 2, Cexp), lambda i: (i, 0, 0))],
        out_shape=[jax.ShapeDtypeStruct((M, Cexp), jnp.float32),
                   jax.ShapeDtypeStruct((nt, 2, Cexp), jnp.float32)],
        compiler_params=pltpu.CompilerParams(
            dimension_semantics=("parallel",),
            vmem_limit_bytes=vmem_limit),
    )(y2, scale, shift, w3)


# ----------------------------------------------------------------------------
# Kernel 4: fused BN3-apply (+ BNd-apply) + residual add + final ReLU, tiled.
# ----------------------------------------------------------------------------
def bn_residual_relu(y3, sc3, sh3, res, scd=None, shd=None, *, tile_m, out_dtype,
                     vmem_limit=VMEM_LIMIT):
    M, Cexp = y3.shape
    nt = M // tile_m
    bn_res = scd is not None

    def kernel(*refs):
        if bn_res:
            y3_ref, r_ref, a3, b3, ad, bd, o_ref = refs
            out = (y3_ref[...] * a3[...] + b3[...]
                   + r_ref[...] * ad[...] + bd[...])
        else:
            y3_ref, r_ref, a3, b3, o_ref = refs
            out = y3_ref[...] * a3[...] + b3[...] + r_ref[...]
        o_ref[...] = jnp.maximum(out, 0.0).astype(o_ref.dtype)

    args = [y3, res, sc3, sh3] + ([scd, shd] if bn_res else [])
    in_specs = ([pl.BlockSpec((tile_m, Cexp), lambda i: (i, 0)),
                 pl.BlockSpec((tile_m, Cexp), lambda i: (i, 0))]
                + [pl.BlockSpec((1, Cexp), lambda i: (0, 0))] * (4 if bn_res else 2))
    return pl.pallas_call(
        kernel,
        grid=(nt,),
        in_specs=in_specs,
        out_specs=pl.BlockSpec((tile_m, Cexp), lambda i: (i, 0)),
        out_shape=jax.ShapeDtypeStruct((M, Cexp), out_dtype),
        compiler_params=pltpu.CompilerParams(
            dimension_semantics=("parallel",),
            vmem_limit_bytes=vmem_limit),
    )(*args)


# ----------------------------------------------------------------------------
# Bottleneck forward (glue in plain JAX, hot paths in the Pallas kernels above).
# ----------------------------------------------------------------------------
def bottleneck_forward(x_nchw, params, *, stride=1, down=True, groups=1,
                       tile_m=256, mm_dtype=jnp.float32):
    if stride != 1:
        # TODO(synk): stride > 1 (strided 3x3 grouped conv + strided downsample)
        #             not implemented in these kernels.
        raise NotImplementedError("stride > 1 not supported")

    N, Cin, H, W = x_nchw.shape
    M = N * H * W
    HW = H * W
    tm = _pick_tile(M, tile_m)

    width = params["w1"].shape[1]
    expanded = params["w3"].shape[1]

    x = jnp.transpose(x_nchw, (0, 2, 3, 1)).reshape(M, Cin).astype(jnp.float32)

    # conv1 (1x1) + partial BN1 stats
    y1, st1 = pointwise_conv_stats(x, params["w1"], tile_m=tm, mm_dtype=mm_dtype)
    sc1, sh1 = _bn_scale_shift(st1, M, params["g1"], params["b1"])

    # conv2 (3x3 grouped, pad=1) fused with BN1-apply + ReLU; partial BN2 stats
    wbd = _block_diag_taps(params["w2"], groups)
    edge = _edge_masks(H, W)
    y2, st2 = grouped_conv3x3_bn_relu(y1.reshape(N, HW, width), wbd, sc1, sh1, edge,
                                      H=H, W=W, mm_dtype=mm_dtype)
    sc2, sh2 = _bn_scale_shift(st2, M, params["g2"], params["b2"])
    y2f = y2.reshape(M, width)

    if down:
        # conv3 (1x1) + fused downsample (1x1) + partial BN3/BNd stats
        y3, yd, st3, std = conv3_with_downsample(
            y2f, x, sc2, sh2, params["w3"], params["wd"], tile_m=tm, mm_dtype=mm_dtype)
        sc3, sh3 = _bn_scale_shift(st3, M, params["g3"], params["b3"])
        scd, shd = _bn_scale_shift(std, M, params["gd"], params["bd"])
        out = bn_residual_relu(y3, sc3, sh3, yd, scd, shd,
                               tile_m=tm, out_dtype=x_nchw.dtype)
    else:
        if Cin != expanded:
            raise ValueError("down=False requires inplanes == planes * expansion")
        y3, st3 = conv3_no_downsample(y2f, sc2, sh2, params["w3"],
                                      tile_m=tm, mm_dtype=mm_dtype)
        sc3, sh3 = _bn_scale_shift(st3, M, params["g3"], params["b3"])
        out = bn_residual_relu(y3, sc3, sh3, x, tile_m=tm, out_dtype=x_nchw.dtype)

    out = out.reshape(N, H, W, expanded)
    return jnp.transpose(out, (0, 3, 1, 2))  # back to NCHW


# ----------------------------------------------------------------------------
# Pure-JAX reference (lax convolutions + training-mode BatchNorm) for validation.
# ----------------------------------------------------------------------------
def _bn_ref(y, gamma, beta, eps=EPS):
    mean = jnp.mean(y, axis=(0, 1, 2), keepdims=True)
    var = jnp.mean((y - mean) ** 2, axis=(0, 1, 2), keepdims=True)
    return (y - mean) * lax.rsqrt(var + eps) * gamma + beta


def bottleneck_reference(x_nchw, params, *, stride=1, down=True, groups=1):
    x = jnp.transpose(x_nchw, (0, 2, 3, 1)).astype(jnp.float32)
    Cin = x.shape[-1]
    width = params["w1"].shape[1]
    expanded = params["w3"].shape[1]
    dn = ("NHWC", "HWIO", "NHWC")

    y = lax.conv_general_dilated(x, params["w1"].reshape(1, 1, Cin, width),
                                 (1, 1), "VALID", dimension_numbers=dn)
    y = jax.nn.relu(_bn_ref(y, params["g1"], params["b1"]))
    y = lax.conv_general_dilated(y, params["w2"], (stride, stride),
                                 ((1, 1), (1, 1)), dimension_numbers=dn,
                                 feature_group_count=groups)
    y = jax.nn.relu(_bn_ref(y, params["g2"], params["b2"]))
    y = lax.conv_general_dilated(y, params["w3"].reshape(1, 1, width, expanded),
                                 (1, 1), "VALID", dimension_numbers=dn)
    y = _bn_ref(y, params["g3"], params["b3"])
    if down:
        ident = lax.conv_general_dilated(x, params["wd"].reshape(1, 1, Cin, expanded),
                                         (stride, stride), "VALID",
                                         dimension_numbers=dn)
        ident = _bn_ref(ident, params["gd"], params["bd"])
    else:
        ident = x
    out = jax.nn.relu(y + ident)
    return jnp.transpose(out, (0, 3, 1, 2))


# ----------------------------------------------------------------------------
# Deterministic parameter construction (mirrors Bottleneck.__init__ shapes).
# ----------------------------------------------------------------------------
def make_params(key, inplanes, planes, *, groups=1, base_width=64):
    expansion = 4
    width = int(planes * (base_width / 64.0)) * groups
    expanded = planes * expansion
    ks = jax.random.split(key, 12)

    def nrm(k, shape, fan_in):
        return (jax.random.normal(k, shape, jnp.float32) * (fan_in ** -0.5))

    params = {
        # 1x1 conv weights stored as (Cin, Cout) matmul matrices.
        "w1": nrm(ks[0], (inplanes, width), inplanes),
        "g1": 1.0 + 0.2 * jax.random.normal(ks[1], (width,), jnp.float32),
        "b1": 0.2 * jax.random.normal(ks[2], (width,), jnp.float32),
        # grouped 3x3 conv stored HWIO-grouped: (3, 3, Cin/G, Cout)
        "w2": nrm(ks[3], (3, 3, width // groups, width), 9 * width // groups),
        "g2": 1.0 + 0.2 * jax.random.normal(ks[4], (width,), jnp.float32),
        "b2": 0.2 * jax.random.normal(ks[5], (width,), jnp.float32),
        "w3": nrm(ks[6], (width, expanded), width),
        "g3": 1.0 + 0.2 * jax.random.normal(ks[7], (expanded,), jnp.float32),
        "b3": 0.2 * jax.random.normal(ks[8], (expanded,), jnp.float32),
        # downsample 1x1 conv + BN
        "wd": nrm(ks[9], (inplanes, expanded), inplanes),
        "gd": 1.0 + 0.2 * jax.random.normal(ks[10], (expanded,), jnp.float32),
        "bd": 0.2 * jax.random.normal(ks[11], (expanded,), jnp.float32),
    }
    return params, width, expanded


if __name__ == "__main__":
    key = jax.random.PRNGKey(0)
    k1, k2, k3, k4 = jax.random.split(key, 4)

    # ---- Case 1: ResNeXt style, grouped conv + downsample path ----------------
    inplanes, planes, groups = 16, 8, 2
    N, H, W = 2, 16, 16
    x = jax.random.normal(k1, (N, inplanes, H, W), jnp.float32)
    params, width, expanded = make_params(k2, inplanes, planes, groups=groups)

    fwd = jax.jit(functools.partial(bottleneck_forward, stride=1, down=True,
                                    groups=groups))
    out = fwd(x, params)
    jax.block_until_ready(out)
    assert out.shape == (N, expanded, H, W), out.shape
    assert bool(jnp.all(jnp.isfinite(out)))
    assert bool(jnp.all(out >= 0.0))  # final ReLU
    ref = bottleneck_reference(x, params, stride=1, down=True, groups=groups)
    err = float(jnp.max(jnp.abs(out - ref)))
    assert err < 1e-3, f"case 1 max abs err {err}"

    # ---- Case 2: identity residual path (down=False), groups=1 ----------------
    inplanes2, planes2 = 32, 8           # inplanes == planes*4 for identity add
    x2 = jax.random.normal(k3, (N, inplanes2, H, W), jnp.float32)
    params2, width2, expanded2 = make_params(k4, inplanes2, planes2, groups=1)

    fwd2 = jax.jit(functools.partial(bottleneck_forward, stride=1, down=False,
                                     groups=1))
    out2 = fwd2(x2, params2)
    jax.block_until_ready(out2)
    assert out2.shape == (N, expanded2, H, W), out2.shape
    ref2 = bottleneck_reference(x2, params2, stride=1, down=False, groups=1)
    err2 = float(jnp.max(jnp.abs(out2 - ref2)))
    assert err2 < 1e-3, f"case 2 max abs err {err2}"

    print("KERNEL_OK")
</pallas_src>

<mosaic_0001>
module attributes {stable_mosaic.version = 11 : i64} {
  func.func @kernel(%arg0: i32, %arg1: memref<256x16xf32, #tpu.memory_space<vmem>>, %arg2: memref<16x16xf32, #tpu.memory_space<vmem>>, %arg3: memref<256x16xf32, #tpu.memory_space<vmem>>, %arg4: memref<1x2x16xf32, #tpu.memory_space<vmem>>) attributes {dimension_semantics = [#tpu.dimension_semantics<parallel>], iteration_bounds = array<i64: 2>, scalar_prefetch = 0 : i64, scratch_operands = 0 : i64, tpu.core_type = #tpu.core_type<tc>, window_params = [{transform_indices = @transform_0, window_bounds = array<i64: 256, 16>}, {pipeline_mode = #tpu.pipeline_mode<synchronous>, transform_indices = @transform_1, window_bounds = array<i64: 16, 16>}, {transform_indices = @transform_2, window_bounds = array<i64: 256, 16>}, {transform_indices = @transform_3, window_bounds = array<i64: 1, 2, 16>}]} {
    %c0 = arith.constant 0 : index
    %c0_0 = arith.constant 0 : index
    %0 = vector.load %arg1[%c0, %c0_0] : memref<256x16xf32, #tpu.memory_space<vmem>>, vector<256x16xf32>
    %c0_1 = arith.constant 0 : index
    %c0_2 = arith.constant 0 : index
    %1 = vector.load %arg2[%c0_1, %c0_2] : memref<16x16xf32, #tpu.memory_space<vmem>>, vector<16x16xf32>
    %cst = arith.constant dense<0.000000e+00> : vector<256x16xf32>
    %2 = tpu.matmul %0, %1, %cst {dimension_numbers = #tpu.dot_dimension_numbers<[1], [0], [0], [1], [0, 0, 1, 1], [], []>} : vector<256x16xf32>, vector<16x16xf32>, vector<256x16xf32> -> vector<256x16xf32>
    %c0_3 = arith.constant 0 : index
    %c0_4 = arith.constant 0 : index
    %3 = vector.load %arg3[%c0_3, %c0_4] : memref<256x16xf32, #tpu.memory_space<vmem>>, vector<256x16xf32>
    tpu.vector_store %arg3[%c0_3, %c0_4], %2 {strides = array<i32>} : memref<256x16xf32, #tpu.memory_space<vmem>>, vector<256x16xf32>,
    %cst_5 = arith.constant dense<0.000000e+00> : vector<16xf32>
    %4 = vector.multi_reduction <add>, %2, %cst_5 [0] : vector<256x16xf32> to vector<16xf32>
    %5 = vector.shape_cast %4 : vector<16xf32> to vector<1x16xf32>
    %c0_6 = arith.constant 0 : index
    %c0_7 = arith.constant 0 : index
    %c0_8 = arith.constant 0 : index
    %6 = vector.load %arg4[%c0_6, %c0_7, %c0_8] : memref<1x2x16xf32, #tpu.memory_space<vmem>>, vector<1x1x16xf32>
    %7 = vector.shape_cast %6 : vector<1x1x16xf32> to vector<1x16xf32>
    %8 = vector.shape_cast %5 : vector<1x16xf32> to vector<1x1x16xf32>
    tpu.vector_store %arg4[%c0_6, %c0_7, %c0_8], %8 {strides = array<i32>} : memref<1x2x16xf32, #tpu.memory_space<vmem>>, vector<1x1x16xf32>,
    %9 = arith.mulf %2, %2 : vector<256x16xf32>
    %cst_9 = arith.constant dense<0.000000e+00> : vector<16xf32>
    %10 = vector.multi_reduction <add>, %9, %cst_9 [0] : vector<256x16xf32> to vector<16xf32>
    %11 = vector.shape_cast %10 : vector<16xf32> to vector<1x16xf32>
    %c0_10 = arith.constant 0 : index
    %c1 = arith.constant 1 : index
    %c0_11 = arith.constant 0 : index
    %12 = vector.load %arg4[%c0_10, %c1, %c0_11] : memref<1x2x16xf32, #tpu.memory_space<vmem>>, vector<1x1x16xf32>
    %13 = vector.shape_cast %12 : vector<1x1x16xf32> to vector<1x16xf32>
    %14 = vector.shape_cast %11 : vector<1x16xf32> to vector<1x1x16xf32>
    tpu.vector_store %arg4[%c0_10, %c1, %c0_11], %14 {strides = array<i32>} : memref<1x2x16xf32, #tpu.memory_space<vmem>>, vector<1x1x16xf32>,
    return
  }
  func.func @transform_0(%arg0: i32) -> (i32, i32) {
    %c0_i32 = arith.constant 0 : i32
    %c0_i32_0 = arith.constant 0 : i32
    return %arg0, %c0_i32 : i32, i32
  }
  func.func @transform_1(%arg0: i32) -> (i32, i32) {
    %c0_i32 = arith.constant 0 : i32
    %c0_i32_0 = arith.constant 0 : i32
    %c0_i32_1 = arith.constant 0 : i32
    return %c0_i32, %c0_i32_0 : i32, i32
  }
  func.func @transform_2(%arg0: i32) -> (i32, i32) {
    %c0_i32 = arith.constant 0 : i32
    %c0_i32_0 = arith.constant 0 : i32
    return %arg0, %c0_i32 : i32, i32
  }
  func.func @transform_3(%arg0: i32) -> (i32, i32, i32) {
    %c0_i32 = arith.constant 0 : i32
    %c0_i32_0 = arith.constant 0 : i32
    %c0_i32_1 = arith.constant 0 : i32
    return %arg0, %c0_i32, %c0_i32_0 : i32, i32, i32
  }
}

module attributes {stable_mosaic.version = 11 : i64} {
  func.func @kernel(%arg0: i32, %arg1: memref<1x256x16xf32, #tpu.memory_space<vmem>>, %arg2: memref<9x16x16xf32, #tpu.memory_space<vmem>>, %arg3: memref<1x16xf32, #tpu.memory_space<vmem>>, %arg4: memref<1x16xf32, #tpu.memory_space<vmem>>, %arg5: memref<256x2xf32, #tpu.memory_space<vmem>>, %arg6: memref<1x256x16xf32, #tpu.memory_space<vmem>>, %arg7: memref<1x2x16xf32, #tpu.memory_space<vmem>>, %arg8: memref<304x16xf32, #tpu.memory_space<vmem>>) attributes {dimension_semantics = [#tpu.dimension_semantics<parallel>], iteration_bounds = array<i64: 2>, scalar_prefetch = 0 : i64, scratch_operands = 1 : i64, tpu.core_type = #tpu.core_type<tc>, window_params = [{transform_indices = @transform_0, window_bounds = array<i64: 1, 256, 16>}, {pipeline_mode = #tpu.pipeline_mode<synchronous>, transform_indices = @transform_1, window_bounds = array<i64: 9, 16, 16>}, {pipeline_mode = #tpu.pipeline_mode<synchronous>, transform_indices = @transform_2, window_bounds = array<i64: 1, 16>}, {pipeline_mode = #tpu.pipeline_mode<synchronous>, transform_indices = @transform_3, window_bounds = array<i64: 1, 16>}, {pipeline_mode = #tpu.pipeline_mode<synchronous>, transform_indices = @transform_4, window_bounds = array<i64: 256, 2>}, {transform_indices = @transform_5, window_bounds = array<i64: 1, 256, 16>}, {transform_indices = @transform_6, window_bounds = array<i64: 1, 2, 16>}]} {
    %c0 = arith.constant 0 : index
    %c0_0 = arith.constant 0 : index
    %c0_1 = arith.constant 0 : index
    %0 = vector.load %arg1[%c0, %c0_0, %c0_1] : memref<1x256x16xf32, #tpu.memory_space<vmem>>, vector<1x256x16xf32>
    %1 = vector.shape_cast %0 : vector<1x256x16xf32> to vector<256x16xf32>
    %c0_2 = arith.constant 0 : index
    %c0_3 = arith.constant 0 : index
    %2 = vector.load %arg3[%c0_2, %c0_3] : memref<1x16xf32, #tpu.memory_space<vmem>>, vector<1x16xf32>
    %3 = vector.broadcast %2 : vector<1x16xf32> to vector<256x16xf32>
    %4 = arith.mulf %1, %3 : vector<256x16xf32>
    %c0_4 = arith.constant 0 : index
    %c0_5 = arith.constant 0 : index
    %5 = vector.load %arg4[%c0_4, %c0_5] : memref<1x16xf32, #tpu.memory_space<vmem>>, vector<1x16xf32>
    %6 = vector.broadcast %5 : vector<1x16xf32> to vector<256x16xf32>
    %7 = arith.addf %4, %6 : vector<256x16xf32>
    %cst = arith.constant 0.000000e+00 : f32
    %8 = vector.broadcast %cst : f32 to vector<256x16xf32>
    %9 = arith.maximumf %7, %8 : vector<256x16xf32>
    %cst_6 = arith.constant 0.000000e+00 : f32
    %10 = vector.broadcast %cst_6 : f32 to vector<304x16xf32>
    %c0_7 = arith.constant 0 : index
    %c0_8 = arith.constant 0 : index
    %11 = vector.load %arg8[%c0_7, %c0_8] : memref<304x16xf32, #tpu.memory_space<vmem>>, vector<304x16xf32>
    tpu.vector_store %arg8[%c0_7, %c0_8], %10 {strides = array<i32>} : memref<304x16xf32, #tpu.memory_space<vmem>>, vector<304x16xf32>,
    %c24 = arith.constant 24 : index
    %c0_9 = arith.constant 0 : index
    %12 = vector.load %arg8[%c24, %c0_9] : memref<304x16xf32, #tpu.memory_space<vmem>>, vector<256x16xf32>
    tpu.vector_store %arg8[%c24, %c0_9], %9 {strides = array<i32>} : memref<304x16xf32, #tpu.memory_space<vmem>>, vector<256x16xf32>,
    %cst_10 = arith.constant 0.000000e+00 : f32
    %13 = vector.broadcast %cst_10 : f32 to vector<256x16xf32>
    %c7 = arith.constant 7 : index
    %c0_11 = arith.constant 0 : index
    %14 = vector.load %arg8[%c7, %c0_11] : memref<304x16xf32, #tpu.memory_space<vmem>>, vector<256x16xf32>
    %c0_12 = arith.constant 0 : index
    %c0_13 = arith.constant 0 : index
    %15 = vector.load %arg5[%c0_12, %c0_13] : memref<256x2xf32, #tpu.memory_space<vmem>>, vector<256x1xf32>
    %16 = vector.broadcast %15 : vector<256x1xf32> to vector<256x16xf32>
    %17 = arith.mulf %14, %16 : vector<256x16xf32>
    %c0_14 = arith.constant 0 : index
    %c0_15 = arith.constant 0 : index
    %c0_16 = arith.constant 0 : index
    %18 = vector.load %arg2[%c0_14, %c0_15, %c0_16] : memref<9x16x16xf32, #tpu.memory_space<vmem>>, vector<1x16x16xf32>
    %19 = vector.shape_cast %18 : vector<1x16x16xf32> to vector<16x16xf32>
    %cst_17 = arith.constant dense<0.000000e+00> : vector<256x16xf32>
    %20 = tpu.matmul %17, %19, %cst_17 {dimension_numbers = #tpu.dot_dimension_numbers<[1], [0], [0], [1], [0, 0, 1, 1], [], []>} : vector<256x16xf32>, vector<16x16xf32>, vector<256x16xf32> -> vector<256x16xf32>
    %21 = arith.addf %13, %20 : vector<256x16xf32>
    %c8 = arith.constant 8 : index
    %c0_18 = arith.constant 0 : index
    %22 = vector.load %arg8[%c8, %c0_18] : memref<304x16xf32, #tpu.memory_space<vmem>>, vector<256x16xf32>
    %c1 = arith.constant 1 : index
    %c0_19 = arith.constant 0 : index
    %c0_20 = arith.constant 0 : index
    %23 = vector.load %arg2[%c1, %c0_19, %c0_20] : memref<9x16x16xf32, #tpu.memory_space<vmem>>, vector<1x16x16xf32>
    %24 = vector.shape_cast %23 : vector<1x16x16xf32> to vector<16x16xf32>
    %cst_21 = arith.constant dense<0.000000e+00> : vector<256x16xf32>
    %25 = tpu.matmul %22, %24, %cst_21 {dimension_numbers = #tpu.dot_dimension_numbers<[1], [0], [0], [1], [0, 0, 1, 1], [], []>} : vector<256x16xf32>, vector<16x16xf32>, vector<256x16xf32> -> vector<256x16xf32>
    %26 = arith.addf %21, %25 : vector<256x16xf32>
    %c9 = arith.constant 9 : index
    %c0_22 = arith.constant 0 : index
    %27 = vector.load %arg8[%c9, %c0_22] : memref<304x16xf32, #tpu.memory_space<vmem>>, vector<256x16xf32>
    %c0_23 = arith.constant 0 : index
    %c1_24 = arith.constant 1 : index
    %28 = vector.load %arg5[%c0_23, %c1_24] : memref<256x2xf32, #tpu.memory_space<vmem>>, vector<256x1xf32>
    %29 = vector.broadcast %28 : vector<256x1xf32> to vector<256x16xf32>
    %30 = arith.mulf %27, %29 : vector<256x16xf32>
    %c2 = arith.constant 2 : index
    %c0_25 = arith.constant 0 : index
    %c0_26 = arith.constant 0 : index
    %31 = vector.load %arg2[%c2, %c0_25, %c0_26] : memref<9x16x16xf32, #tpu.memory_space<vmem>>, vector<1x16x16xf32>
    %32 = vector.shape_cast %31 : vector<1x16x16xf32> to vector<16x16xf32>
    %cst_27 = arith.constant dense<0.000000e+00> : vector<256x16xf32>
    %33 = tpu.matmul %30, %32, %cst_27 {dimension_numbers = #tpu.dot_dimension_numbers<[1], [0], [0], [1], [0, 0, 1, 1], [], []>} : vector<256x16xf32>, vector<16x16xf32>, vector<256x16xf32> -> vector<256x16xf32>
    %34 = arith.addf %26, %33 : vector<256x16xf32>
    %c23 = arith.constant 23 : index
    %c0_28 = arith.constant 0 : index
    %35 = vector.load %arg8[%c23, %c0_28] : memref<304x16xf32, #tpu.memory_space<vmem>>, vector<256x16xf32>
    %c0_29 = arith.constant 0 : index
    %c0_30 = arith.constant 0 : index
    %36 = vector.load %arg5[%c0_29, %c0_30] : memref<256x2xf32, #tpu.memory_space<vmem>>, vector<256x1xf32>
    %37 = vector.broadcast %36 : vector<256x1xf32> to vector<256x16xf32>
    %38 = arith.mulf %35, %37 : vector<256x16xf32>
    %c3 = arith.constant 3 : index
    %c0_31 = arith.constant 0 : index
    %c0_32 = arith.constant 0 : index
    %39 = vector.load %arg2[%c3, %c0_31, %c0_32] : memref<9x16x16xf32, #tpu.memory_space<vmem>>, vector<1x16x16xf32>
    %40 = vector.shape_cast %39 : vector<1x16x16xf32> to vector<16x16xf32>
    %cst_33 = arith.constant dense<0.000000e+00> : vector<256x16xf32>
    %41 = tpu.matmul %38, %40, %cst_33 {dimension_numbers = #tpu.dot_dimension_numbers<[1], [0], [0], [1], [0, 0, 1, 1], [], []>} : vector<256x16xf32>, vector<16x16xf32>, vector<256x16xf32> -> vector<256x16xf32>
    %42 = arith.addf %34, %41 : vector<256x16xf32>
    %c24_34 = arith.constant 24 : index
    %c0_35 = arith.constant 0 : index
    %43 = vector.load %arg8[%c24_34, %c0_35] : memref<304x16xf32, #tpu.memory_space<vmem>>, vector<256x16xf32>
    %c4 = arith.constant 4 : index
    %c0_36 = arith.constant 0 : index
    %c0_37 = arith.constant 0 : index
    %44 = vector.load %arg2[%c4, %c0_36, %c0_37] : memref<9x16x16xf32, #tpu.memory_space<vmem>>, vector<1x16x16xf32>
    %45 = vector.shape_cast %44 : vector<1x16x16xf32> to vector<16x16xf32>
    %cst_38 = arith.constant dense<0.000000e+00> : vector<256x16xf32>
    %46 = tpu.matmul %43, %45, %cst_38 {dimension_numbers = #tpu.dot_dimension_numbers<[1], [0], [0], [1], [0, 0, 1, 1], [], []>} : vector<256x16xf32>, vector<16x16xf32>, vector<256x16xf32> -> vector<256x16xf32>
    %47 = arith.addf %42, %46 : vector<256x16xf32>
    %c25 = arith.constant 25 : index
    %c0_39 = arith.constant 0 : index
    %48 = vector.load %arg8[%c25, %c0_39] : memref<304x16xf32, #tpu.memory_space<vmem>>, vector<256x16xf32>
    %c0_40 = arith.constant 0 : index
    %c1_41 = arith.constant 1 : index
    %49 = vector.load %arg5[%c0_40, %c1_41] : memref<256x2xf32, #tpu.memory_space<vmem>>, vector<256x1xf32>
    %50 = vector.broadcast %49 : vector<256x1xf32> to vector<256x16xf32>
    %51 = arith.mulf %48, %50 : vector<256x16xf32>
    %c5 = arith.constant 5 : index
    %c0_42 = arith.constant 0 : index
    %c0_43 = arith.constant 0 : index
    %52 = vector.load %arg2[%c5, %c0_42, %c0_43] : memref<9x16x16xf32, #tpu.memory_space<vmem>>, vector<1x16x16xf32>
    %53 = vector.shape_cast %52 : vector<1x16x16xf32> to vector<16x16xf32>
    %cst_44 = arith.constant dense<0.000000e+00> : vector<256x16xf32>
    %54 = tpu.matmul %51, %53, %cst_44 {dimension_numbers = #tpu.dot_dimension_numbers<[1], [0], [0], [1], [0, 0, 1, 1], [], []>} : vector<256x16xf32>, vector<16x16xf32>, vector<256x16xf32> -> vector<256x16xf32>
    %55 = arith.addf %47, %54 : vector<256x16xf32>
    %c39 = arith.constant 39 : index
    %c0_45 = arith.constant 0 : index
    %56 = vector.load %arg8[%c39, %c0_45] : memref<304x16xf32, #tpu.memory_space<vmem>>, vector<256x16xf32>
    %c0_46 = arith.constant 0 : index
    %c0_47 = arith.constant 0 : index
    %57 = vector.load %arg5[%c0_46, %c0_47] : memref<256x2xf32, #tpu.memory_space<vmem>>, vector<256x1xf32>
    %58 = vector.broadcast %57 : vector<256x1xf32> to vector<256x16xf32>
    %59 = arith.mulf %56, %58 : vector<256x16xf32>
    %c6 = arith.constant 6 : index
    %c0_48 = arith.constant 0 : index
    %c0_49 = arith.constant 0 : index
    %60 = vector.load %arg2[%c6, %c0_48, %c0_49] : memref<9x16x16xf32, #tpu.memory_space<vmem>>, vector<1x16x16xf32>
    %61 = vector.shape_cast %60 : vector<1x16x16xf32> to vector<16x16xf32>
    %cst_50 = arith.constant dense<0.000000e+00> : vector<256x16xf32>
    %62 = tpu.matmul %59, %61, %cst_50 {dimension_numbers = #tpu.dot_dimension_numbers<[1], [0], [0], [1], [0, 0, 1, 1], [], []>} : vector<256x16xf32>, vector<16x16xf32>, vector<256x16xf32> -> vector<256x16xf32>
    %63 = arith.addf %55, %62 : vector<256x16xf32>
    %c40 = arith.constant 40 : index
    %c0_51 = arith.constant 0 : index
    %64 = vector.load %arg8[%c40, %c0_51] : memref<304x16xf32, #tpu.memory_space<vmem>>, vector<256x16xf32>
    %c7_52 = arith.constant 7 : index
    %c0_53 = arith.constant 0 : index
    %c0_54 = arith.constant 0 : index
    %65 = vector.load %arg2[%c7_52, %c0_53, %c0_54] : memref<9x16x16xf32, #tpu.memory_space<vmem>>, vector<1x16x16xf32>
    %66 = vector.shape_cast %65 : vector<1x16x16xf32> to vector<16x16xf32>
    %cst_55 = arith.constant dense<0.000000e+00> : vector<256x16xf32>
    %67 = tpu.matmul %64, %66, %cst_55 {dimension_numbers = #tpu.dot_dimension_numbers<[1], [0], [0], [1], [0, 0, 1, 1], [], []>} : vector<256x16xf32>, vector<16x16xf32>, vector<256x16xf32> -> vector<256x16xf32>
    %68 = arith.addf %63, %67 : vector<256x16xf32>
    %c41 = arith.constant 41 : index
    %c0_56 = arith.constant 0 : index
    %69 = vector.load %arg8[%c41, %c0_56] : memref<304x16xf32, #tpu.memory_space<vmem>>, vector<256x16xf32>
    %c0_57 = arith.constant 0 : index
    %c1_58 = arith.constant 1 : index
    %70 = vector.load %arg5[%c0_57, %c1_58] : memref<256x2xf32, #tpu.memory_space<vmem>>, vector<256x1xf32>
    %71 = vector.broadcast %70 : vector<256x1xf32> to vector<256x16xf32>
    %72 = arith.mulf %69, %71 : vector<256x16xf32>
    %c8_59 = arith.constant 8 : index
    %c0_60 = arith.constant 0 : index
    %c0_61 = arith.constant 0 : index
    %73 = vector.load %arg2[%c8_59, %c0_60, %c0_61] : memref<9x16x16xf32, #tpu.memory_space<vmem>>, vector<1x16x16xf32>
    %74 = vector.shape_cast %73 : vector<1x16x16xf32> to vector<16x16xf32>
    %cst_62 = arith.constant dense<0.000000e+00> : vector<256x16xf32>
    %75 = tpu.matmul %72, %74, %cst_62 {dimension_numbers = #tpu.dot_dimension_numbers<[1], [0], [0], [1], [0, 0, 1, 1], [], []>} : vector<256x16xf32>, vector<16x16xf32>, vector<256x16xf32> -> vector<256x16xf32>
    %76 = arith.addf %68, %75 : vector<256x16xf32>
    %c0_63 = arith.constant 0 : index
    %c0_64 = arith.constant 0 : index
    %c0_65 = arith.constant 0 : index
    %77 = vector.load %arg6[%c0_63, %c0_64, %c0_65] : memref<1x256x16xf32, #tpu.memory_space<vmem>>, vector<1x256x16xf32>
    %78 = vector.shape_cast %77 : vector<1x256x16xf32> to vector<256x16xf32>
    %79 = vector.shape_cast %76 : vector<256x16xf32> to vector<1x256x16xf32>
    tpu.vector_store %arg6[%c0_63, %c0_64, %c0_65], %79 {strides = array<i32>} : memref<1x256x16xf32, #tpu.memory_space<vmem>>, vector<1x256x16xf32>,
    %cst_66 = arith.constant dense<0.000000e+00> : vector<16xf32>
    %80 = vector.multi_reduction <add>, %76, %cst_66 [0] : vector<256x16xf32> to vector<16xf32>
    %81 = vector.shape_cast %80 : vector<16xf32> to vector<1x16xf32>
    %c0_67 = arith.constant 0 : index
    %c0_68 = arith.constant 0 : index
    %c0_69 = arith.constant 0 : index
    %82 = vector.load %arg7[%c0_67, %c0_68, %c0_69] : memref<1x2x16xf32, #tpu.memory_space<vmem>>, vector<1x1x16xf32>
    %83 = vector.shape_cast %82 : vector<1x1x16xf32> to vector<1x16xf32>
    %84 = vector.shape_cast %81 : vector<1x16xf32> to vector<1x1x16xf32>
    tpu.vector_store %arg7[%c0_67, %c0_68, %c0_69], %84 {strides = array<i32>} : memref<1x2x16xf32, #tpu.memory_space<vmem>>, vector<1x1x16xf32>,
    %85 = arith.mulf %76, %76 : vector<256x16xf32>
    %cst_70 = arith.constant dense<0.000000e+00> : vector<16xf32>
    %86 = vector.multi_reduction <add>, %85, %cst_70 [0] : vector<256x16xf32> to vector<16xf32>
    %87 = vector.shape_cast %86 : vector<16xf32> to vector<1x16xf32>
    %c0_71 = arith.constant 0 : index
    %c1_72 = arith.constant 1 : index
    %c0_73 = arith.constant 0 : index
    %88 = vector.load %arg7[%c0_71, %c1_72, %c0_73] : memref<1x2x16xf32, #tpu.memory_space<vmem>>, vector<1x1x16xf32>
    %89 = vector.shape_cast %88 : vector<1x1x16xf32> to vector<1x16xf32>
    %90 = vector.shape_cast %87 : vector<1x16xf32> to vector<1x1x16xf32>
    tpu.vector_store %arg7[%c0_71, %c1_72, %c0_73], %90 {strides = array<i32>} : memref<1x2x16xf32, #tpu.memory_space<vmem>>, vector<1x1x16xf32>,
    return
  }
  func.func @transform_0(%arg0: i32) -> (i32, i32, i32) {
    %c0_i32 = arith.constant 0 : i32
    %c0_i32_0 = arith.constant 0 : i32
    %c0_i32_1 = arith.constant 0 : i32
    return %arg0, %c0_i32, %c0_i32_0 : i32, i32, i32
  }
  func.func @transform_1(%arg0: i32) -> (i32, i32, i32) {
    %c0_i32 = arith.constant 0 : i32
    %c0_i32_0 = arith.constant 0 : i32
    %c0_i32_1 = arith.constant 0 : i32
    %c0_i32_2 = arith.constant 0 : i32
    return %c0_i32, %c0_i32_0, %c0_i32_1 : i32, i32, i32
  }
  func.func @transform_2(%arg0: i32) -> (i32, i32) {
    %c0_i32 = arith.constant 0 : i32
    %c0_i32_0 = arith.constant 0 : i32
    %c0_i32_1 = arith.constant 0 : i32
    return %c0_i32, %c0_i32_0 : i32, i32
  }
  func.func @transform_3(%arg0: i32) -> (i32, i32) {
    %c0_i32 = arith.constant 0 : i32
    %c0_i32_0 = arith.constant 0 : i32
    %c0_i32_1 = arith.constant 0 : i32
    return %c0_i32, %c0_i32_0 : i32, i32
  }
  func.func @transform_4(%arg0: i32) -> (i32, i32) {
    %c0_i32 = arith.constant 0 : i32
    %c0_i32_0 = arith.constant 0 : i32
    %c0_i32_1 = arith.constant 0 : i32
    return %c0_i32, %c0_i32_0 : i32, i32
  }
  func.func @transform_5(%arg0: i32) -> (i32, i32, i32) {
    %c0_i32 = arith.constant 0 : i32
    %c0_i32_0 = arith.constant 0 : i32
    %c0_i32_1 = arith.constant 0 : i32
    return %arg0, %c0_i32, %c0_i32_0 : i32, i32, i32
  }
  func.func @transform_6(%arg0: i32) -> (i32, i32, i32) {
    %c0_i32 = arith.constant 0 : i32
    %c0_i32_0 = arith.constant 0 : i32
    %c0_i32_1 = arith.constant 0 : i32
    return %arg0, %c0_i32, %c0_i32_0 : i32, i32, i32
  }
}

module attributes {stable_mosaic.version = 11 : i64} {
  func.func @kernel(%arg0: i32, %arg1: memref<256x16xf32, #tpu.memory_space<vmem>>, %arg2: memref<256x16xf32, #tpu.memory_space<vmem>>, %arg3: memref<1x16xf32, #tpu.memory_space<vmem>>, %arg4: memref<1x16xf32, #tpu.memory_space<vmem>>, %arg5: memref<16x32xf32, #tpu.memory_space<vmem>>, %arg6: memref<16x32xf32, #tpu.memory_space<vmem>>, %arg7: memref<256x32xf32, #tpu.memory_space<vmem>>, %arg8: memref<256x32xf32, #tpu.memory_space<vmem>>, %arg9: memref<1x2x32xf32, #tpu.memory_space<vmem>>, %arg10: memref<1x2x32xf32, #tpu.memory_space<vmem>>) attributes {dimension_semantics = [#tpu.dimension_semantics<parallel>], iteration_bounds = array<i64: 2>, scalar_prefetch = 0 : i64, scratch_operands = 0 : i64, tpu.core_type = #tpu.core_type<tc>, window_params = [{transform_indices = @transform_0, window_bounds = array<i64: 256, 16>}, {transform_indices = @transform_1, window_bounds = array<i64: 256, 16>}, {pipeline_mode = #tpu.pipeline_mode<synchronous>, transform_indices = @transform_2, window_bounds = array<i64: 1, 16>}, {pipeline_mode = #tpu.pipeline_mode<synchronous>, transform_indices = @transform_3, window_bounds = array<i64: 1, 16>}, {pipeline_mode = #tpu.pipeline_mode<synchronous>, transform_indices = @transform_4, window_bounds = array<i64: 16, 32>}, {pipeline_mode = #tpu.pipeline_mode<synchronous>, transform_indices = @transform_5, window_bounds = array<i64: 16, 32>}, {transform_indices = @transform_6, window_bounds = array<i64: 256, 32>}, {transform_indices = @transform_7, window_bounds = array<i64: 256, 32>}, {transform_indices = @transform_8, window_bounds = array<i64: 1, 2, 32>}, {transform_indices = @transform_9, window_bounds = array<i64: 1, 2, 32>}]} {
    %c0 = arith.constant 0 : index
    %c0_0 = arith.constant 0 : index
    %0 = vector.load %arg1[%c0, %c0_0] : memref<256x16xf32, #tpu.memory_space<vmem>>, vector<256x16xf32>
    %c0_1 = arith.constant 0 : index
    %c0_2 = arith.constant 0 : index
    %1 = vector.load %arg3[%c0_1, %c0_2] : memref<1x16xf32, #tpu.memory_space<vmem>>, vector<1x16xf32>
    %2 = vector.broadcast %1 : vector<1x16xf32> to vector<256x16xf32>
    %3 = arith.mulf %0, %2 : vector<256x16xf32>
    %c0_3 = arith.constant 0 : index
    %c0_4 = arith.constant 0 : index
    %4 = vector.load %arg4[%c0_3, %c0_4] : memref<1x16xf32, #tpu.memory_space<vmem>>, vector<1x16xf32>
    %5 = vector.broadcast %4 : vector<1x16xf32> to vector<256x16xf32>
    %6 = arith.addf %3, %5 : vector<256x16xf32>
    %cst = arith.constant 0.000000e+00 : f32
    %7 = vector.broadcast %cst : f32 to vector<256x16xf32>
    %8 = arith.maximumf %6, %7 : vector<256x16xf32>
    %c0_5 = arith.constant 0 : index
    %c0_6 = arith.constant 0 : index
    %9 = vector.load %arg5[%c0_5, %c0_6] : memref<16x32xf32, #tpu.memory_space<vmem>>, vector<16x32xf32>
    %cst_7 = arith.constant dense<0.000000e+00> : vector<256x32xf32>
    %10 = tpu.matmul %8, %9, %cst_7 {dimension_numbers = #tpu.dot_dimension_numbers<[1], [0], [0], [1], [0, 0, 1, 1], [], []>} : vector<256x16xf32>, vector<16x32xf32>, vector<256x32xf32> -> vector<256x32xf32>
    %c0_8 = arith.constant 0 : index
    %c0_9 = arith.constant 0 : index
    %11 = vector.load %arg2[%c0_8, %c0_9] : memref<256x16xf32, #tpu.memory_space<vmem>>, vector<256x16xf32>
    %c0_10 = arith.constant 0 : index
    %c0_11 = arith.constant 0 : index
    %12 = vector.load %arg6[%c0_10, %c0_11] : memref<16x32xf32, #tpu.memory_space<vmem>>, vector<16x32xf32>
    %cst_12 = arith.constant dense<0.000000e+00> : vector<256x32xf32>
    %13 = tpu.matmul %11, %12, %cst_12 {dimension_numbers = #tpu.dot_dimension_numbers<[1], [0], [0], [1], [0, 0, 1, 1], [], []>} : vector<256x16xf32>, vector<16x32xf32>, vector<256x32xf32> -> vector<256x32xf32>
    %c0_13 = arith.constant 0 : index
    %c0_14 = arith.constant 0 : index
    %14 = vector.load %arg7[%c0_13, %c0_14] : memref<256x32xf32, #tpu.memory_space<vmem>>, vector<256x32xf32>
    tpu.vector_store %arg7[%c0_13, %c0_14], %10 {strides = array<i32>} : memref<256x32xf32, #tpu.memory_space<vmem>>, vector<256x32xf32>,
    %c0_15 = arith.constant 0 : index
    %c0_16 = arith.constant 0 : index
    %15 = vector.load %arg8[%c0_15, %c0_16] : memref<256x32xf32, #tpu.memory_space<vmem>>, vector<256x32xf32>
    tpu.vector_store %arg8[%c0_15, %c0_16], %13 {strides = array<i32>} : memref<256x32xf32, #tpu.memory_space<vmem>>, vector<256x32xf32>,
    %cst_17 = arith.constant dense<0.000000e+00> : vector<32xf32>
    %16 = vector.multi_reduction <add>, %10, %cst_17 [0] : vector<256x32xf32> to vector<32xf32>
    %17 = vector.shape_cast %16 : vector<32xf32> to vector<1x32xf32>
    %c0_18 = arith.constant 0 : index
    %c0_19 = arith.constant 0 : index
    %c0_20 = arith.constant 0 : index
    %18 = vector.load %arg9[%c0_18, %c0_19, %c0_20] : memref<1x2x32xf32, #tpu.memory_space<vmem>>, vector<1x1x32xf32>
    %19 = vector.shape_cast %18 : vector<1x1x32xf32> to vector<1x32xf32>
    %20 = vector.shape_cast %17 : vector<1x32xf32> to vector<1x1x32xf32>
    tpu.vector_store %arg9[%c0_18, %c0_19, %c0_20], %20 {strides = array<i32>} : memref<1x2x32xf32, #tpu.memory_space<vmem>>, vector<1x1x32xf32>,
    %21 = arith.mulf %10, %10 : vector<256x32xf32>
    %cst_21 = arith.constant dense<0.000000e+00> : vector<32xf32>
    %22 = vector.multi_reduction <add>, %21, %cst_21 [0] : vector<256x32xf32> to vector<32xf32>
    %23 = vector.shape_cast %22 : vector<32xf32> to vector<1x32xf32>
    %c0_22 = arith.constant 0 : index
    %c1 = arith.constant 1 : index
    %c0_23 = arith.constant 0 : index
    %24 = vector.load %arg9[%c0_22, %c1, %c0_23] : memref<1x2x32xf32, #tpu.memory_space<vmem>>, vector<1x1x32xf32>
    %25 = vector.shape_cast %24 : vector<1x1x32xf32> to vector<1x32xf32>
    %26 = vector.shape_cast %23 : vector<1x32xf32> to vector<1x1x32xf32>
    tpu.vector_store %arg9[%c0_22, %c1, %c0_23], %26 {strides = array<i32>} : memref<1x2x32xf32, #tpu.memory_space<vmem>>, vector<1x1x32xf32>,
    %cst_24 = arith.constant dense<0.000000e+00> : vector<32xf32>
    %27 = vector.multi_reduction <add>, %13, %cst_24 [0] : vector<256x32xf32> to vector<32xf32>
    %28 = vector.shape_cast %27 : vector<32xf32> to vector<1x32xf32>
    %c0_25 = arith.constant 0 : index
    %c0_26 = arith.constant 0 : index
    %c0_27 = arith.constant 0 : index
    %29 = vector.load %arg10[%c0_25, %c0_26, %c0_27] : memref<1x2x32xf32, #tpu.memory_space<vmem>>, vector<1x1x32xf32>
    %30 = vector.shape_cast %29 : vector<1x1x32xf32> to vector<1x32xf32>
    %31 = vector.shape_cast %28 : vector<1x32xf32> to vector<1x1x32xf32>
    tpu.vector_store %arg10[%c0_25, %c0_26, %c0_27], %31 {strides = array<i32>} : memref<1x2x32xf32, #tpu.memory_space<vmem>>, vector<1x1x32xf32>,
    %32 = arith.mulf %13, %13 : vector<256x32xf32>
    %cst_28 = arith.constant dense<0.000000e+00> : vector<32xf32>
    %33 = vector.multi_reduction <add>, %32, %cst_28 [0] : vector<256x32xf32> to vector<32xf32>
    %34 = vector.shape_cast %33 : vector<32xf32> to vector<1x32xf32>
    %c0_29 = arith.constant 0 : index
    %c1_30 = arith.constant 1 : index
    %c0_31 = arith.constant 0 : index
    %35 = vector.load %arg10[%c0_29, %c1_30, %c0_31] : memref<1x2x32xf32, #tpu.memory_space<vmem>>, vector<1x1x32xf32>
    %36 = vector.shape_cast %35 : vector<1x1x32xf32> to vector<1x32xf32>
    %37 = vector.shape_cast %34 : vector<1x32xf32> to vector<1x1x32xf32>
    tpu.vector_store %arg10[%c0_29, %c1_30, %c0_31], %37 {strides = array<i32>} : memref<1x2x32xf32, #tpu.memory_space<vmem>>, vector<1x1x32xf32>,
    return
  }
  func.func @transform_0(%arg0: i32) -> (i32, i32) {
    %c0_i32 = arith.constant 0 : i32
    %c0_i32_0 = arith.constant 0 : i32
    return %arg0, %c0_i32 : i32, i32
  }
  func.func @transform_1(%arg0: i32) -> (i32, i32) {
    %c0_i32 = arith.constant 0 : i32
    %c0_i32_0 = arith.constant 0 : i32
    return %arg0, %c0_i32 : i32, i32
  }
  func.func @transform_2(%arg0: i32) -> (i32, i32) {
    %c0_i32 = arith.constant 0 : i32
    %c0_i32_0 = arith.constant 0 : i32
    %c0_i32_1 = arith.constant 0 : i32
    return %c0_i32, %c0_i32_0 : i32, i32
  }
  func.func @transform_3(%arg0: i32) -> (i32, i32) {
    %c0_i32 = arith.constant 0 : i32
    %c0_i32_0 = arith.constant 0 : i32
    %c0_i32_1 = arith.constant 0 : i32
    return %c0_i32, %c0_i32_0 : i32, i32
  }
  func.func @transform_4(%arg0: i32) -> (i32, i32) {
    %c0_i32 = arith.constant 0 : i32
    %c0_i32_0 = arith.constant 0 : i32
    %c0_i32_1 = arith.constant 0 : i32
    return %c0_i32, %c0_i32_0 : i32, i32
  }
  func.func @transform_5(%arg0: i32) -> (i32, i32) {
    %c0_i32 = arith.constant 0 : i32
    %c0_i32_0 = arith.constant 0 : i32
    %c0_i32_1 = arith.constant 0 : i32
    return %c0_i32, %c0_i32_0 : i32, i32
  }
  func.func @transform_6(%arg0: i32) -> (i32, i32) {
    %c0_i32 = arith.constant 0 : i32
    %c0_i32_0 = arith.constant 0 : i32
    return %arg0, %c0_i32 : i32, i32
  }
  func.func @transform_7(%arg0: i32) -> (i32, i32) {
    %c0_i32 = arith.constant 0 : i32
    %c0_i32_0 = arith.constant 0 : i32
    return %arg0, %c0_i32 : i32, i32
  }
  func.func @transform_8(%arg0: i32) -> (i32, i32, i32) {
    %c0_i32 = arith.constant 0 : i32
    %c0_i32_0 = arith.constant 0 : i32
    %c0_i32_1 = arith.constant 0 : i32
    return %arg0, %c0_i32, %c0_i32_0 : i32, i32, i32
  }
  func.func @transform_9(%arg0: i32) -> (i32, i32, i32) {
    %c0_i32 = arith.constant 0 : i32
    %c0_i32_0 = arith.constant 0 : i32
    %c0_i32_1 = arith.constant 0 : i32
    return %arg0, %c0_i32, %c0_i32_0 : i32, i32, i32
  }
}

module attributes {stable_mosaic.version = 11 : i64} {
  func.func @kernel(%arg0: i32, %arg1: memref<256x32xf32, #tpu.memory_space<vmem>>, %arg2: memref<256x32xf32, #tpu.memory_space<vmem>>, %arg3: memref<1x32xf32, #tpu.memory_space<vmem>>, %arg4: memref<1x32xf32, #tpu.memory_space<vmem>>, %arg5: memref<1x32xf32, #tpu.memory_space<vmem>>, %arg6: memref<1x32xf32, #tpu.memory_space<vmem>>, %arg7: memref<256x32xf32, #tpu.memory_space<vmem>>) attributes {dimension_semantics = [#tpu.dimension_semantics<parallel>], iteration_bounds = array<i64: 2>, scalar_prefetch = 0 : i64, scratch_operands = 0 : i64, tpu.core_type = #tpu.core_type<tc>, window_params = [{transform_indices = @transform_0, window_bounds = array<i64: 256, 32>}, {transform_indices = @transform_1, window_bounds = array<i64: 256, 32>}, {pipeline_mode = #tpu.pipeline_mode<synchronous>, transform_indices = @transform_2, window_bounds = array<i64: 1, 32>}, {pipeline_mode = #tpu.pipeline_mode<synchronous>, transform_indices = @transform_3, window_bounds = array<i64: 1, 32>}, {pipeline_mode = #tpu.pipeline_mode<synchronous>, transform_indices = @transform_4, window_bounds = array<i64: 1, 32>}, {pipeline_mode = #tpu.pipeline_mode<synchronous>, transform_indices = @transform_5, window_bounds = array<i64: 1, 32>}, {transform_indices = @transform_6, window_bounds = array<i64: 256, 32>}]} {
    %c0 = arith.constant 0 : index
    %c0_0 = arith.constant 0 : index
    %0 = vector.load %arg1[%c0, %c0_0] : memref<256x32xf32, #tpu.memory_space<vmem>>, vector<256x32xf32>
    %c0_1 = arith.constant 0 : index
    %c0_2 = arith.constant 0 : index
    %1 = vector.load %arg3[%c0_1, %c0_2] : memref<1x32xf32, #tpu.memory_space<vmem>>, vector<1x32xf32>
    %2 = vector.broadcast %1 : vector<1x32xf32> to vector<256x32xf32>
    %3 = arith.mulf %0, %2 : vector<256x32xf32>
    %c0_3 = arith.constant 0 : index
    %c0_4 = arith.constant 0 : index
    %4 = vector.load %arg4[%c0_3, %c0_4] : memref<1x32xf32, #tpu.memory_space<vmem>>, vector<1x32xf32>
    %5 = vector.broadcast %4 : vector<1x32xf32> to vector<256x32xf32>
    %6 = arith.addf %3, %5 : vector<256x32xf32>
    %c0_5 = arith.constant 0 : index
    %c0_6 = arith.constant 0 : index
    %7 = vector.load %arg2[%c0_5, %c0_6] : memref<256x32xf32, #tpu.memory_space<vmem>>, vector<256x32xf32>
    %c0_7 = arith.constant 0 : index
    %c0_8 = arith.constant 0 : index
    %8 = vector.load %arg5[%c0_7, %c0_8] : memref<1x32xf32, #tpu.memory_space<vmem>>, vector<1x32xf32>
    %9 = vector.broadcast %8 : vector<1x32xf32> to vector<256x32xf32>
    %10 = arith.mulf %7, %9 : vector<256x32xf32>
    %11 = arith.addf %6, %10 : vector<256x32xf32>
    %c0_9 = arith.constant 0 : index
    %c0_10 = arith.constant 0 : index
    %12 = vector.load %arg6[%c0_9, %c0_10] : memref<1x32xf32, #tpu.memory_space<vmem>>, vector<1x32xf32>
    %13 = vector.broadcast %12 : vector<1x32xf32> to vector<256x32xf32>
    %14 = arith.addf %11, %13 : vector<256x32xf32>
    %cst = arith.constant 0.000000e+00 : f32
    %15 = vector.broadcast %cst : f32 to vector<256x32xf32>
    %16 = arith.maximumf %14, %15 : vector<256x32xf32>
    %c0_11 = arith.constant 0 : index
    %c0_12 = arith.constant 0 : index
    %17 = vector.load %arg7[%c0_11, %c0_12] : memref<256x32xf32, #tpu.memory_space<vmem>>, vector<256x32xf32>
    tpu.vector_store %arg7[%c0_11, %c0_12], %16 {strides = array<i32>} : memref<256x32xf32, #tpu.memory_space<vmem>>, vector<256x32xf32>,
    return
  }
  func.func @transform_0(%arg0: i32) -> (i32, i32) {
    %c0_i32 = arith.constant 0 : i32
    %c0_i32_0 = arith.constant 0 : i32
    return %arg0, %c0_i32 : i32, i32
  }
  func.func @transform_1(%arg0: i32) -> (i32, i32) {
    %c0_i32 = arith.constant 0 : i32
    %c0_i32_0 = arith.constant 0 : i32
    return %arg0, %c0_i32 : i32, i32
  }
  func.func @transform_2(%arg0: i32) -> (i32, i32) {
    %c0_i32 = arith.constant 0 : i32
    %c0_i32_0 = arith.constant 0 : i32
    %c0_i32_1 = arith.constant 0 : i32
    return %c0_i32, %c0_i32_0 : i32, i32
  }
  func.func @transform_3(%arg0: i32) -> (i32, i32) {
    %c0_i32 = arith.constant 0 : i32
    %c0_i32_0 = arith.constant 0 : i32
    %c0_i32_1 = arith.constant 0 : i32
    return %c0_i32, %c0_i32_0 : i32, i32
  }
  func.func @transform_4(%arg0: i32) -> (i32, i32) {
    %c0_i32 = arith.constant 0 : i32
    %c0_i32_0 = arith.constant 0 : i32
    %c0_i32_1 = arith.constant 0 : i32
    return %c0_i32, %c0_i32_0 : i32, i32
  }
  func.func @transform_5(%arg0: i32) -> (i32, i32) {
    %c0_i32 = arith.constant 0 : i32
    %c0_i32_0 = arith.constant 0 : i32
    %c0_i32_1 = arith.constant 0 : i32
    return %c0_i32, %c0_i32_0 : i32, i32
  }
  func.func @transform_6(%arg0: i32) -> (i32, i32) {
    %c0_i32 = arith.constant 0 : i32
    %c0_i32_0 = arith.constant 0 : i32
    return %arg0, %c0_i32 : i32, i32
  }
}

</mosaic_0001>

<llo_original>
// kernel: bottleneck_forward.4
$region0: #{bottleneck_forward.4}
  #allocation0 [shape = 'u32[]', space=smem, size = 0x4, offset = 0x4, fixed_abs, tag = 'smem constant byte address 0x4 - core index']
  #allocation1 [shape = 'u32[144,128]{1,0:T(1,128)}', space=vmem, size = 0x12000, scoped, tag = 'internal scratch']
  %s0 = inlined_call_operand.vmem [shape: f32[512,16], index: 0, kind: input, shape index: {}]
  %s1 = inlined_call_operand.vmem [shape: f32[16,16], index: 1, kind: input, shape index: {}]
  %s2 = inlined_call_operand.vmem [shape: f32[512,16], index: 2, kind: output, shape index: {0}]
  %s3 = inlined_call_operand.vmem [shape: f32[2,2,16], index: 3, kind: output, shape index: {1}]
  %4 = xla_tuple %s2, %s3
  %s5 = sld [smem:[#allocation0]]
  $region49: #{bottleneck_forward.4} parent=0
    _
  %s7 = ssub.s32 1, %s5
  %s8 = scalar_select 0, %s7, %s5
  loop: start=0, step=1, limit=4
  $region2: #{bottleneck_forward.4} parent=0 // loop_pre_header
    _
  $region3: #{bottleneck_forward.4} parent=0 // loop_header
    %s10 = sphi 0, %s14
    %p11 = scmp.ge.s32.totalorder %s10, 4
    %s20 = sphi 0, %s22
    %s23 = sphi 0, %s20
    %s24 = sphi 0, %s23
    %s40 = sphi 0, %s24
    %s44 = sphi 0, %s44
    %s46 = sphi 0, %s44
    %s47 = sphi 0, %s46
    %s61 = sphi 0, %s47
    %s67 = sphi 0, %s69
    %s70 = sphi 0, %s67
    %s71 = sphi 0, %s70
    %s87 = sphi 0, %s71
    %s93 = sphi 0, %s95
    %s96 = sphi 0, %s93
    %s97 = sphi 0, %s96
    %s113 = sphi 0, %s97
  $region4: #{bottleneck_forward.4} parent=0 // loop_header_branch
    %13 = sbr.rel (%p11) target = $region8
  $region5: #{bottleneck_forward.4} parent=0 // loop_body
    %s15 = ssub.s32 %s10, 1
    %s16 = ssub.s32 %s10, 2
    %s17 = sadd.s32 %s10, 1
    %s18 = ssub.s32 %s10, %s17
    %p19 = scmp.eq.s32.totalorder %s18, 0
    %s21 = sadd.s32 %s20, 1
    %s22 = scalar_select %p19, %s20, %s21
    %p25 = pneg %p19
    %p26 = scmp.eq.s32.totalorder %s10, 1
    %p27 = por %p25, %p26
    %p28 = scmp.ne.s32.totalorder %s20, %s23
    %p29 = scmp.eq.s32.totalorder %s10, 0
    %p30 = por %p28, %p29
    %p31 = scmp.ne.s32.totalorder %s20, %s23
    %p32 = scmp.eq.s32.totalorder %s15, 1
    %p33 = por %p31, %p32
    %p34 = scmp.ne.s32.totalorder %s23, %s24
    %p35 = scmp.eq.s32.totalorder %s15, 0
    %p36 = por %p34, %p35
    %p37 = scmp.ne.s32.totalorder %s23, %s24
    %p38 = scmp.eq.s32.totalorder %s16, 1
    %p39 = por %p37, %p38
    %p41 = scmp.ne.s32.totalorder %s24, %s40
    %p42 = scmp.eq.s32.totalorder %s16, 0
    %p43 = por %p41, %p42
    %s45 = sadd.s32 %s44, 1
    %p48 = scmp.eq.s32.totalorder %s10, 1
    %p49 = scmp.ne.s32.totalorder %s44, %s46
    %p50 = scmp.eq.s32.totalorder %s10, 0
    %p51 = por %p49, %p50
    %p52 = scmp.ne.s32.totalorder %s44, %s46
    %p53 = scmp.eq.s32.totalorder %s15, 1
    %p54 = por %p52, %p53
    %p55 = scmp.ne.s32.totalorder %s46, %s47
    %p56 = scmp.eq.s32.totalorder %s15, 0
    %p57 = por %p55, %p56
    %p58 = scmp.ne.s32.totalorder %s46, %s47
    %p59 = scmp.eq.s32.totalorder %s16, 1
    %p60 = por %p58, %p59
    %p62 = scmp.ne.s32.totalorder %s47, %s61
    %p63 = scmp.eq.s32.totalorder %s16, 0
    %p64 = por %p62, %p63
    %s65 = ssub.s32 %s10, %s17
    %p66 = scmp.eq.s32.totalorder %s65, 0
    %s68 = sadd.s32 %s67, 1
    %s69 = scalar_select %p66, %s67, %s68
    %p72 = pneg %p66
    %p73 = scmp.eq.s32.totalorder %s10, 1
    %p74 = por %p72, %p73
    %p75 = scmp.ne.s32.totalorder %s67, %s70
    %p76 = scmp.eq.s32.totalorder %s10, 0
    %p77 = por %p75, %p76
    %p78 = scmp.ne.s32.totalorder %s67, %s70
    %p79 = scmp.eq.s32.totalorder %s15, 1
    %p80 = por %p78, %p79
    %p81 = scmp.ne.s32.totalorder %s70, %s71
    %p82 = scmp.eq.s32.totalorder %s15, 0
    %p83 = por %p81, %p82
    %p84 = scmp.ne.s32.totalorder %s70, %s71
    %p85 = scmp.eq.s32.totalorder %s16, 1
    %p86 = por %p84, %p85
    %p88 = scmp.ne.s32.totalorder %s71, %s87
    %p89 = scmp.eq.s32.totalorder %s16, 0
    %p90 = por %p88, %p89
    %s91 = ssub.s32 %s10, %s17
    %p92 = scmp.eq.s32.totalorder %s91, 0
    %s94 = sadd.s32 %s93, 1
    %s95 = scalar_select %p92, %s93, %s94
    %p98 = pneg %p92
    %p99 = scmp.eq.s32.totalorder %s10, 1
    %p100 = por %p98, %p99
    %p101 = scmp.ne.s32.totalorder %s93, %s96
    %p102 = scmp.eq.s32.totalorder %s10, 0
    %p103 = por %p101, %p102
    %p104 = scmp.ne.s32.totalorder %s93, %s96
    %p105 = scmp.eq.s32.totalorder %s15, 1
    %p106 = por %p104, %p105
    %p107 = scmp.ne.s32.totalorder %s96, %s97
    %p108 = scmp.eq.s32.totalorder %s15, 0
    %p109 = por %p107, %p108
    %p110 = scmp.ne.s32.totalorder %s96, %s97
    %p111 = scmp.eq.s32.totalorder %s16, 1
    %p112 = por %p110, %p111
    %p114 = scmp.ne.s32.totalorder %s97, %s113
    %p115 = scmp.eq.s32.totalorder %s16, 0
    %p116 = por %p114, %p115
    %p117 = scmp.le.s32.totalorder 1, %s10
    %p118 = scmp.lt.s32.totalorder %s10, 3
    %p119 = pnand %p117, %p118
    %p120 = pneg %p119
    // Predicated region
    $region9: #{bottleneck_forward.4} parent=5 // pred_check
      _
    $region10: #{bottleneck_forward.4} parent=5 // pred_check_branch
      %122 = sbr.rel (%p119) target = $region12
    $region11: #{bottleneck_forward.4} parent=5 // pred_region
      %s123 = ssub.s32 %s10, 1
      // Predicated region
      $region13: #{bottleneck_forward.4} parent=11 // pred_check
        %p124 = pneg %p57
      $region14: #{bottleneck_forward.4} parent=11 // pred_check_branch
        %126 = sbr.rel (%p124) target = $region16
      $region15: #{bottleneck_forward.4} parent=11 // pred_region
        _
      $region16: #{bottleneck_forward.4} parent=11 // pred_fallthru
        _
    $region12: #{bottleneck_forward.4} parent=5 // pred_fallthru
      _
    %p127 = scmp.lt.s32.totalorder %s10, 2
    // Predicated region
    $region17: #{bottleneck_forward.4} parent=5 // pred_check
      %p128 = pneg %p127
    $region18: #{bottleneck_forward.4} parent=5 // pred_check_branch
      %130 = sbr.rel (%p128) target = $region20
    $region19: #{bottleneck_forward.4} parent=5 // pred_region
      // Predicated region
      $region21: #{bottleneck_forward.4} parent=19 // pred_check
        %p131 = pneg %p30
      $region22: #{bottleneck_forward.4} parent=19 // pred_check_branch
        %133 = sbr.rel (%p131) target = $region24
      $region23: #{bottleneck_forward.4} parent=19 // pred_region
        %s134 = smul.u32 32, %s10
        %p135 = scmp.lt.s32.totalorder %s134, 63
        %s136 = scalar_select %p135, %s134, 63
        %s137 = smul.addr %s136, 8
        %s138 = scalar_lea.vmem %s0, %s137
        %s139 = smul.u32 32, %s10
      $region24: #{bottleneck_forward.4} parent=19 // pred_fallthru
        _
    $region20: #{bottleneck_forward.4} parent=5 // pred_fallthru
      _
    %p140 = scmp.le.s32.totalorder 1, %s10
    %p141 = scmp.lt.s32.totalorder %s10, 3
    %p142 = pnand %p140, %p141
    %p143 = pneg %p142
    // Predicated region
    $region25: #{bottleneck_forward.4} parent=5 // pred_check
      _
    $region26: #{bottleneck_forward.4} parent=5 // pred_check_branch
      %145 = sbr.rel (%p142) target = $region28
    $region27: #{bottleneck_forward.4} parent=5 // pred_region
      %s146 = ssub.s32 %s10, 1
      %s147 = smul.u32 32, %s15
      %p148 = scmp.lt.s32.totalorder %s147, 63
      %s149 = scalar_select %p148, %s147, 63
      %s150 = smul.addr %s149, 8
      %s151 = scalar_lea.vmem %s0, %s150
      %p152 = pneg %p36
      %p153 = pneg %p33
      %p154 = pneg %p57
      %p155 = pneg %p54
      %p156 = pneg %p83
      %p157 = pneg %p80
      %s158 = smul.u32 32, %s15
      %p159 = scmp.lt.s32.totalorder %s158, 63
      %s160 = scalar_select %p159, %s158, 63
      %s161 = smul.addr %s160, 8
      %s162 = scalar_lea.vmem %s2, %s161
      %p163 = pneg %p109
      %p164 = pneg %p106
      %p165 = scmp.lt.s32.totalorder %s15, 1
      %s166 = scalar_select %p165, %s15, 1
      %s167 = smul.addr %s166, 2
      %s168 = scalar_lea.vmem %s3, %s167
      %s169 = smul.u32 32, %s15
      %p170 = scmp.lt.s32.totalorder %s169, 63
      %s171 = scalar_select %p170, %s169, 63
      %s172 = smul.addr %s171, 8
      %s173 = scalar_lea.vmem %s0, %s172
      %s174 = smul.u32 32, %s15
      %s175 = smul.u32 32, %s15
      %p176 = scmp.lt.s32.totalorder %s175, 63
      %s177 = scalar_select %p176, %s175, 63
      %s178 = smul.addr %s177, 8
      %s179 = scalar_lea.vmem %s2, %s178
      %s180 = smul.u32 32, %s15
      %p181 = scmp.lt.s32.totalorder %s15, 1
      %s182 = scalar_select %p181, %s15, 1
      %s183 = smul.addr %s182, 2
      %s184 = scalar_lea.vmem %s3, %s183
      %v185 = vld [vmem:[%s173] sm:$0xff]
      %v186 = vld [vmem:[%s173 + $0x8] sm:$0xff]
      %v187 = vld [vmem:[%s173 + $0x10] sm:$0xff]
      %v188 = vld [vmem:[%s173 + $0x18] sm:$0xff]
      %v189 = vld [vmem:[%s173 + $0x20] sm:$0xff]
      %v190 = vld [vmem:[%s173 + $0x28] sm:$0xff]
      %v191 = vld [vmem:[%s173 + $0x30] sm:$0xff]
      %v192 = vld [vmem:[%s173 + $0x38] sm:$0xff]
      %v193 = vld [vmem:[%s173 + $0x40] sm:$0xff]
      %v194 = vld [vmem:[%s173 + $0x48] sm:$0xff]
      %v195 = vld [vmem:[%s173 + $0x50] sm:$0xff]
      %v196 = vld [vmem:[%s173 + $0x58] sm:$0xff]
      %v197 = vld [vmem:[%s173 + $0x60] sm:$0xff]
      %v198 = vld [vmem:[%s173 + $0x68] sm:$0xff]
      %v199 = vld [vmem:[%s173 + $0x70] sm:$0xff]
      %v200 = vld [vmem:[%s173 + $0x78] sm:$0xff]
      %v201 = vld [vmem:[%s173 + $0x80] sm:$0xff]
      %v202 = vld [vmem:[%s173 + $0x88] sm:$0xff]
      %v203 = vld [vmem:[%s173 + $0x90] sm:$0xff]
      %v204 = vld [vmem:[%s173 + $0x98] sm:$0xff]
      %v205 = vld [vmem:[%s173 + $0xa0] sm:$0xff]
      %v206 = vld [vmem:[%s173 + $0xa8] sm:$0xff]
      %v207 = vld [vmem:[%s173 + $0xb0] sm:$0xff]
      %v208 = vld [vmem:[%s173 + $0xb8] sm:$0xff]
      %v209 = vld [vmem:[%s173 + $0xc0] sm:$0xff]
      %v210 = vld [vmem:[%s173 + $0xc8] sm:$0xff]
      %v211 = vld [vmem:[%s173 + $0xd0] sm:$0xff]
      %v212 = vld [vmem:[%s173 + $0xd8] sm:$0xff]
      %v213 = vld [vmem:[%s173 + $0xe0] sm:$0xff]
      %v214 = vld [vmem:[%s173 + $0xe8] sm:$0xff]
      %v215 = vld [vmem:[%s173 + $0xf0] sm:$0xff]
      %v216 = vld [vmem:[%s173 + $0xf8] sm:$0xff]
      %v217 = vld [vmem:[%s1] sm:$0xff]
      %v218 = vld [vmem:[%s1 + $0x8] sm:$0xff]
      %vm219 = vcmask 130048
      %v221 = vsel %vm219, %v185, 0
      %v224 = vsel %vm219, %v186, 0
      %v227 = vsel %vm219, %v187, 0
      %v230 = vsel %vm219, %v188, 0
      %v233 = vsel %vm219, %v189, 0
      %v236 = vsel %vm219, %v190, 0
      %v239 = vsel %vm219, %v191, 0
      %v242 = vsel %vm219, %v192, 0
      %v245 = vsel %vm219, %v193, 0
      %v248 = vsel %vm219, %v194, 0
      %v251 = vsel %vm219, %v195, 0
      %v254 = vsel %vm219, %v196, 0
      %v257 = vsel %vm219, %v197, 0
      %v260 = vsel %vm219, %v198, 0
      %v263 = vsel %vm219, %v199, 0
      %v266 = vsel %vm219, %v200, 0
      %v269 = vsel %vm219, %v201, 0
      %v272 = vsel %vm219, %v202, 0
      %v275 = vsel %vm219, %v203, 0
      %v278 = vsel %vm219, %v204, 0
      %v281 = vsel %vm219, %v205, 0
      %v284 = vsel %vm219, %v206, 0
      %v287 = vsel %vm219, %v207, 0
      %v290 = vsel %vm219, %v208, 0
      %v293 = vsel %vm219, %v209, 0
      %v296 = vsel %vm219, %v210, 0
      %v299 = vsel %vm219, %v211, 0
      %v302 = vsel %vm219, %v212, 0
      %v305 = vsel %vm219, %v213, 0
      %v308 = vsel %vm219, %v214, 0
      %v311 = vsel %vm219, %v215, 0
      %v314 = vsel %vm219, %v216, 0
      %316 = vmatprep.subr.mxu0 0.0
      %317 = vmatpush1.msra.mxu0 0.0
      %318 = vmatprep.subr.mxu0 0.0
      %319 = vmatpush1.msra.mxu0 0.0
      %320 = vmatprep.subr.mxu0 0.0
      %321 = vmatpush1.msra.mxu0 0.0
      %322 = vmatprep.subr.mxu0 0.0
      %323 = vmatpush1.msra.mxu0 0.0
      %324 = vmatprep.subr.mxu0 0.0
      %325 = vmatpush1.msra.mxu0 0.0
      %326 = vmatprep.subr.mxu0 0.0
      %327 = vmatpush1.msra.mxu0 0.0
      %328 = vmatprep.subr.mxu0 0.0
      %329 = vmatpush1.msra.mxu0 0.0
      %330 = vmatprep.subr.mxu0 0.0
      %331 = vmatpush1.msra.mxu0 0.0
      %332 = vmatprep.subr.mxu0 0.0
      %333 = vmatpush1.msra.mxu0 0.0
      %334 = vmatprep.subr.mxu0 0.0
      %335 = vmatpush1.msra.mxu0 0.0
      %336 = vmatprep.subr.mxu0 0.0
      %337 = vmatpush1.msra.mxu0 0.0
      %338 = vmatprep.subr.mxu0 0.0
      %339 = vmatpush1.msra.mxu0 0.0
      %340 = vmatprep.subr.mxu0 0.0
      %341 = vmatpush1.msra.mxu0 0.0
      %342 = vmatprep.subr.mxu0 0.0
      %343 = vmatpush1.msra.mxu0 0.0
      %344 = vmatprep.subr.mxu0 0.0
      %345 = vmatpush1.msra.mxu0 %v218
      %346 = vmatprep.subr.mxu0 0.0
      %347 = vmatpush1.msra.mxu0 %v217
      %348 = vmatprep.subr.mxu0 0.0
      %349 = vmatpush2.msra.mxu0 0.0
      %350 = vmatprep.subr.mxu0 0.0
      %351 = vmatpush2.msra.mxu0 0.0
      %352 = vmatprep.subr.mxu0 0.0
      %353 = vmatpush2.msra.mxu0 0.0
      %354 = vmatprep.subr.mxu0 0.0
      %355 = vmatpush2.msra.mxu0 0.0
      %356 = vmatprep.subr.mxu0 0.0
      %357 = vmatpush2.msra.mxu0 0.0
      %358 = vmatprep.subr.mxu0 0.0
      %359 = vmatpush2.msra.mxu0 0.0
      %360 = vmatprep.subr.mxu0 0.0
      %361 = vmatpush2.msra.mxu0 0.0
      %362 = vmatprep.subr.mxu0 0.0
      %363 = vmatpush2.msra.mxu0 0.0
      %364 = vmatprep.subr.mxu0 0.0
      %365 = vmatpush2.msra.mxu0 0.0
      %366 = vmatprep.subr.mxu0 0.0
      %367 = vmatpush2.msra.mxu0 0.0
      %368 = vmatprep.subr.mxu0 0.0
      %369 = vmatpush2.msra.mxu0 0.0
      %370 = vmatprep.subr.mxu0 0.0
      %371 = vmatpush2.msra.mxu0 0.0
      %372 = vmatprep.subr.mxu0 0.0
      %373 = vmatpush2.msra.mxu0 0.0
      %374 = vmatprep.subr.mxu0 0.0
      %375 = vmatpush2.msra.mxu0 0.0
      %376 = vmatprep.subr.mxu0 0.0
      %377 = vmatpush2.msra.mxu0 0.0
      %378 = vmatprep.subr.mxu0 0.0
      %379 = vmatpush2.msra.mxu0 0.0
      %380 = vmatprep.mubr.f32.mxu0 0.0
      %381 = vmatmul.mubr.f32.gmra.mxu0 %v221
      %v382 = vpop.f32.mrf.mxu0
      %v383 = vadd.f32 0.0, %v382
      %v384 = vpop.f32.mrf.mxu0
      %385 = vmatprep.mubr.f32.mxu0 0.0
      %386 = vmatmul.mubr.f32.gmra.mxu0 %v224
      %v387 = vpop.f32.mrf.mxu0
      %v388 = vadd.f32 0.0, %v387
      %v389 = vpop.f32.mrf.mxu0
      %390 = vmatprep.mubr.f32.mxu0 0.0
      %391 = vmatmul.mubr.f32.gmra.mxu0 %v227
      %v392 = vpop.f32.mrf.mxu0
      %v393 = vadd.f32 0.0, %v392
      %v394 = vpop.f32.mrf.mxu0
      %395 = vmatprep.mubr.f32.mxu0 0.0
      %396 = vmatmul.mubr.f32.gmra.mxu0 %v230
      %v397 = vpop.f32.mrf.mxu0
      %v398 = vadd.f32 0.0, %v397
      %v399 = vpop.f32.mrf.mxu0
      %400 = vmatprep.mubr.f32.mxu0 0.0
      %401 = vmatmul.mubr.f32.gmra.mxu0 %v233
      %v402 = vpop.f32.mrf.mxu0
      %v403 = vadd.f32 0.0, %v402
      %v404 = vpop.f32.mrf.mxu0
      %405 = vmatprep.mubr.f32.mxu0 0.0
      %406 = vmatmul.mubr.f32.gmra.mxu0 %v236
      %v407 = vpop.f32.mrf.mxu0
      %v408 = vadd.f32 0.0, %v407
      %v409 = vpop.f32.mrf.mxu0
      %410 = vmatprep.mubr.f32.mxu0 0.0
      %411 = vmatmul.mubr.f32.gmra.mxu0 %v239
      %v412 = vpop.f32.mrf.mxu0
      %v413 = vadd.f32 0.0, %v412
      %v414 = vpop.f32.mrf.mxu0
      %415 = vmatprep.mubr.f32.mxu0 0.0
      %416 = vmatmul.mubr.f32.gmra.mxu0 %v242
      %v417 = vpop.f32.mrf.mxu0
      %v418 = vadd.f32 0.0, %v417
      %v419 = vpop.f32.mrf.mxu0
      %420 = vmatprep.mubr.f32.mxu0 0.0
      %421 = vmatmul.mubr.f32.gmra.mxu0 %v245
      %v422 = vpop.f32.mrf.mxu0
      %v423 = vadd.f32 0.0, %v422
      %v424 = vpop.f32.mrf.mxu0
      %425 = vmatprep.mubr.f32.mxu0 0.0
      %426 = vmatmul.mubr.f32.gmra.mxu0 %v248
      %v427 = vpop.f32.mrf.mxu0
      %v428 = vadd.f32 0.0, %v427
      %v429 = vpop.f32.mrf.mxu0
      %430 = vmatprep.mubr.f32.mxu0 0.0
      %431 = vmatmul.mubr.f32.gmra.mxu0 %v251
      %v432 = vpop.f32.mrf.mxu0
      %v433 = vadd.f32 0.0, %v432
      %v434 = vpop.f32.mrf.mxu0
      %435 = vmatprep.mubr.f32.mxu0 0.0
      %436 = vmatmul.mubr.f32.gmra.mxu0 %v254
      %v437 = vpop.f32.mrf.mxu0
      %v438 = vadd.f32 0.0, %v437
      %v439 = vpop.f32.mrf.mxu0
      %440 = vmatprep.mubr.f32.mxu0 0.0
      %441 = vmatmul.mubr.f32.gmra.mxu0 %v257
      %v442 = vpop.f32.mrf.mxu0
      %v443 = vadd.f32 0.0, %v442
      %v444 = vpop.f32.mrf.mxu0
      %445 = vmatprep.mubr.f32.mxu0 0.0
      %446 = vmatmul.mubr.f32.gmra.mxu0 %v260
      %v447 = vpop.f32.mrf.mxu0
      %v448 = vadd.f32 0.0, %v447
      %v449 = vpop.f32.mrf.mxu0
      %450 = vmatprep.mubr.f32.mxu0 0.0
      %451 = vmatmul.mubr.f32.gmra.mxu0 %v263
      %v452 = vpop.f32.mrf.mxu0
      %v453 = vadd.f32 0.0, %v452
      %v454 = vpop.f32.mrf.mxu0
      %455 = vmatprep.mubr.f32.mxu0 0.0
      %456 = vmatmul.mubr.f32.gmra.mxu0 %v266
      %v457 = vpop.f32.mrf.mxu0
      %v458 = vadd.f32 0.0, %v457
      %v459 = vpop.f32.mrf.mxu0
      %460 = vmatprep.mubr.f32.mxu0 0.0
      %461 = vmatmul.mubr.f32.gmra.mxu0 %v269
      %v462 = vpop.f32.mrf.mxu0
      %v463 = vadd.f32 0.0, %v462
      %v464 = vpop.f32.mrf.mxu0
      %465 = vmatprep.mubr.f32.mxu0 0.0
      %466 = vmatmul.mubr.f32.gmra.mxu0 %v272
      %v467 = vpop.f32.mrf.mxu0
      %v468 = vadd.f32 0.0, %v467
      %v469 = vpop.f32.mrf.mxu0
      %470 = vmatprep.mubr.f32.mxu0 0.0
      %471 = vmatmul.mubr.f32.gmra.mxu0 %v275
      %v472 = vpop.f32.mrf.mxu0
      %v473 = vadd.f32 0.0, %v472
      %v474 = vpop.f32.mrf.mxu0
      %475 = vmatprep.mubr.f32.mxu0 0.0
      %476 = vmatmul.mubr.f32.gmra.mxu0 %v278
      %v477 = vpop.f32.mrf.mxu0
      %v478 = vadd.f32 0.0, %v477
      %v479 = vpop.f32.mrf.mxu0
      %480 = vmatprep.mubr.f32.mxu0 0.0
      %481 = vmatmul.mubr.f32.gmra.mxu0 %v281
      %v482 = vpop.f32.mrf.mxu0
      %v483 = vadd.f32 0.0, %v482
      %v484 = vpop.f32.mrf.mxu0
      %485 = vmatprep.mubr.f32.mxu0 0.0
      %486 = vmatmul.mubr.f32.gmra.mxu0 %v284
      %v487 = vpop.f32.mrf.mxu0
      %v488 = vadd.f32 0.0, %v487
      %v489 = vpop.f32.mrf.mxu0
      %490 = vmatprep.mubr.f32.mxu0 0.0
      %491 = vmatmul.mubr.f32.gmra.mxu0 %v287
      %v492 = vpop.f32.mrf.mxu0
      %v493 = vadd.f32 0.0, %v492
      %v494 = vpop.f32.mrf.mxu0
      %495 = vmatprep.mubr.f32.mxu0 0.0
      %496 = vmatmul.mubr.f32.gmra.mxu0 %v290
      %v497 = vpop.f32.mrf.mxu0
      %v498 = vadd.f32 0.0, %v497
      %v499 = vpop.f32.mrf.mxu0
      %500 = vmatprep.mubr.f32.mxu0 0.0
      %501 = vmatmul.mubr.f32.gmra.mxu0 %v293
      %v502 = vpop.f32.mrf.mxu0
      %v503 = vadd.f32 0.0, %v502
      %v504 = vpop.f32.mrf.mxu0
      %505 = vmatprep.mubr.f32.mxu0 0.0
      %506 = vmatmul.mubr.f32.gmra.mxu0 %v296
      %v507 = vpop.f32.mrf.mxu0
      %v508 = vadd.f32 0.0, %v507
      %v509 = vpop.f32.mrf.mxu0
      %510 = vmatprep.mubr.f32.mxu0 0.0
      %511 = vmatmul.mubr.f32.gmra.mxu0 %v299
      %v512 = vpop.f32.mrf.mxu0
      %v513 = vadd.f32 0.0, %v512
      %v514 = vpop.f32.mrf.mxu0
      %515 = vmatprep.mubr.f32.mxu0 0.0
      %516 = vmatmul.mubr.f32.gmra.mxu0 %v302
      %v517 = vpop.f32.mrf.mxu0
      %v518 = vadd.f32 0.0, %v517
      %v519 = vpop.f32.mrf.mxu0
      %520 = vmatprep.mubr.f32.mxu0 0.0
      %521 = vmatmul.mubr.f32.gmra.mxu0 %v305
      %v522 = vpop.f32.mrf.mxu0
      %v523 = vadd.f32 0.0, %v522
      %v524 = vpop.f32.mrf.mxu0
      %525 = vmatprep.mubr.f32.mxu0 0.0
      %526 = vmatmul.mubr.f32.gmra.mxu0 %v308
      %v527 = vpop.f32.mrf.mxu0
      %v528 = vadd.f32 0.0, %v527
      %v529 = vpop.f32.mrf.mxu0
      %530 = vmatprep.mubr.f32.mxu0 0.0
      %531 = vmatmul.mubr.f32.gmra.mxu0 %v311
      %v532 = vpop.f32.mrf.mxu0
      %v533 = vadd.f32 0.0, %v532
      %v534 = vpop.f32.mrf.mxu0
      %535 = vmatprep.mubr.f32.mxu0 0.0
      %536 = vmatmul.mubr.f32.gmra.mxu0 %v314
      %v537 = vpop.f32.mrf.mxu0
      %v538 = vadd.f32 0.0, %v537
      %v539 = vpop.f32.mrf.mxu0
      %540 = vdwg.mxu0
      %541 = vst.msk [vmem:[%s179] sm:$0xff] %vm219, %v383
      %542 = vst.msk [vmem:[%s179 + $0x8] sm:$0xff] %vm219, %v388
      %543 = vst.msk [vmem:[%s179 + $0x10] sm:$0xff] %vm219, %v393
      %544 = vst.msk [vmem:[%s179 + $0x18] sm:$0xff] %vm219, %v398
      %545 = vst.msk [vmem:[%s179 + $0x20] sm:$0xff] %vm219, %v403
      %546 = vst.msk [vmem:[%s179 + $0x28] sm:$0xff] %vm219, %v408
      %547 = vst.msk [vmem:[%s179 + $0x30] sm:$0xff] %vm219, %v413
      %548 = vst.msk [vmem:[%s179 + $0x38] sm:$0xff] %vm219, %v418
      %549 = vst.msk [vmem:[%s179 + $0x40] sm:$0xff] %vm219, %v423
      %550 = vst.msk [vmem:[%s179 + $0x48] sm:$0xff] %vm219, %v428
      %551 = vst.msk [vmem:[%s179 + $0x50] sm:$0xff] %vm219, %v433
      %552 = vst.msk [vmem:[%s179 + $0x58] sm:$0xff] %vm219, %v438
      %553 = vst.msk [vmem:[%s179 + $0x60] sm:$0xff] %vm219, %v443
      %554 = vst.msk [vmem:[%s179 + $0x68] sm:$0xff] %vm219, %v448
      %555 = vst.msk [vmem:[%s179 + $0x70] sm:$0xff] %vm219, %v453
      %556 = vst.msk [vmem:[%s179 + $0x78] sm:$0xff] %vm219, %v458
      %557 = vst.msk [vmem:[%s179 + $0x80] sm:$0xff] %vm219, %v463
      %558 = vst.msk [vmem:[%s179 + $0x88] sm:$0xff] %vm219, %v468
      %559 = vst.msk [vmem:[%s179 + $0x90] sm:$0xff] %vm219, %v473
      %560 = vst.msk [vmem:[%s179 + $0x98] sm:$0xff] %vm219, %v478
      %561 = vst.msk [vmem:[%s179 + $0xa0] sm:$0xff] %vm219, %v483
      %562 = vst.msk [vmem:[%s179 + $0xa8] sm:$0xff] %vm219, %v488
      %563 = vst.msk [vmem:[%s179 + $0xb0] sm:$0xff] %vm219, %v493
      %564 = vst.msk [vmem:[%s179 + $0xb8] sm:$0xff] %vm219, %v498
      %565 = vst.msk [vmem:[%s179 + $0xc0] sm:$0xff] %vm219, %v503
      %566 = vst.msk [vmem:[%s179 + $0xc8] sm:$0xff] %vm219, %v508
      %567 = vst.msk [vmem:[%s179 + $0xd0] sm:$0xff] %vm219, %v513
      %568 = vst.msk [vmem:[%s179 + $0xd8] sm:$0xff] %vm219, %v518
      %569 = vst.msk [vmem:[%s179 + $0xe0] sm:$0xff] %vm219, %v523
      %570 = vst.msk [vmem:[%s179 + $0xe8] sm:$0xff] %vm219, %v528
      %571 = vst.msk [vmem:[%s179 + $0xf0] sm:$0xff] %vm219, %v533
      %572 = vst.msk [vmem:[%s179 + $0xf8] sm:$0xff] %vm219, %v538
      %v573 = vsel %vm219, %v383, 0.0
      %v574 = vsel %vm219, %v388, 0.0
      %v575 = vadd.f32 %v573, %v574
      %v576 = vsel %vm219, %v393, 0.0
      %v577 = vadd.f32 %v575, %v576
      %v578 = vsel %vm219, %v398, 0.0
      %v579 = vadd.f32 %v577, %v578
      %v580 = vsel %vm219, %v403, 0.0
      %v581 = vadd.f32 %v579, %v580
      %v582 = vsel %vm219, %v408, 0.0
      %v583 = vadd.f32 %v581, %v582
      %v584 = vsel %vm219, %v413, 0.0
      %v585 = vadd.f32 %v583, %v584
      %v586 = vsel %vm219, %v418, 0.0
      %v587 = vadd.f32 %v585, %v586
      %v588 = vsel %vm219, %v423, 0.0
      %v589 = vadd.f32 %v587, %v588
      %v590 = vsel %vm219, %v428, 0.0
      %v591 = vadd.f32 %v589, %v590
      %v592 = vsel %vm219, %v433, 0.0
      %v593 = vadd.f32 %v591, %v592
      %v594 = vsel %vm219, %v438, 0.0
      %v595 = vadd.f32 %v593, %v594
      %v596 = vsel %vm219, %v443, 0.0
      %v597 = vadd.f32 %v595, %v596
      %v598 = vsel %vm219, %v448, 0.0
      %v599 = vadd.f32 %v597, %v598
      %v600 = vsel %vm219, %v453, 0.0
      %v601 = vadd.f32 %v599, %v600
      %v602 = vsel %vm219, %v458, 0.0
      %v603 = vadd.f32 %v601, %v602
      %v604 = vsel %vm219, %v463, 0.0
      %v605 = vadd.f32 %v603, %v604
      %v606 = vsel %vm219, %v468, 0.0
      %v607 = vadd.f32 %v605, %v606
      %v608 = vsel %vm219, %v473, 0.0
      %v609 = vadd.f32 %v607, %v608
      %v610 = vsel %vm219, %v478, 0.0
      %v611 = vadd.f32 %v609, %v610
      %v612 = vsel %vm219, %v483, 0.0
      %v613 = vadd.f32 %v611, %v612
      %v614 = vsel %vm219, %v488, 0.0
      %v615 = vadd.f32 %v613, %v614
      %v616 = vsel %vm219, %v493, 0.0
      %v617 = vadd.f32 %v615, %v616
      %v618 = vsel %vm219, %v498, 0.0
      %v619 = vadd.f32 %v617, %v618
      %v620 = vsel %vm219, %v503, 0.0
      %v621 = vadd.f32 %v619, %v620
      %v622 = vsel %vm219, %v508, 0.0
      %v623 = vadd.f32 %v621, %v622
      %v624 = vsel %vm219, %v513, 0.0
      %v625 = vadd.f32 %v623, %v624
      %v626 = vsel %vm219, %v518, 0.0
      %v627 = vadd.f32 %v625, %v626
      %v628 = vsel %vm219, %v523, 0.0
      %v629 = vadd.f32 %v627, %v628
      %v630 = vsel %vm219, %v528, 0.0
      %v631 = vadd.f32 %v629, %v630
      %v632 = vsel %vm219, %v533, 0.0
      %v633 = vadd.f32 %v631, %v632
      %v634 = vsel %vm219, %v538, 0.0
      %v635 = vadd.f32 %v633, %v634
      %v636 = vrot.slane %v635, 4
      %v637 = vadd.f32 %v635, %v636
      %v638 = vrot.slane %v637, 2
      %v639 = vadd.f32 %v637, %v638
      %v640 = vrot.slane %v639, 1
      %v641 = vadd.f32 %v639, %v640
      %vm642 = vcmask 122880
      %643 = vst.msk [vmem:[%s184] sm:$0x1] %vm642, %v641
      %v644 = vmul.f32 %v383, %v383
      %v645 = vmul.f32 %v388, %v388
      %v646 = vmul.f32 %v393, %v393
      %v647 = vmul.f32 %v398, %v398
      %v648 = vmul.f32 %v403, %v403
      %v649 = vmul.f32 %v408, %v408
      %v650 = vmul.f32 %v413, %v413
      %v651 = vmul.f32 %v418, %v418
      %v652 = vmul.f32 %v423, %v423
      %v653 = vmul.f32 %v428, %v428
      %v654 = vmul.f32 %v433, %v433
      %v655 = vmul.f32 %v438, %v438
      %v656 = vmul.f32 %v443, %v443
      %v657 = vmul.f32 %v448, %v448
      %v658 = vmul.f32 %v453, %v453
      %v659 = vmul.f32 %v458, %v458
      %v660 = vmul.f32 %v463, %v463
      %v661 = vmul.f32 %v468, %v468
      %v662 = vmul.f32 %v473, %v473
      %v663 = vmul.f32 %v478, %v478
      %v664 = vmul.f32 %v483, %v483
      %v665 = vmul.f32 %v488, %v488
      %v666 = vmul.f32 %v493, %v493
      %v667 = vmul.f32 %v498, %v498
      %v668 = vmul.f32 %v503, %v503
      %v669 = vmul.f32 %v508, %v508
      %v670 = vmul.f32 %v513, %v513
      %v671 = vmul.f32 %v518, %v518
      %v672 = vmul.f32 %v523, %v523
      %v673 = vmul.f32 %v528, %v528
      %v674 = vmul.f32 %v533, %v533
      %v675 = vmul.f32 %v538, %v538
      %v676 = vsel %vm219, %v644, 0.0
      %v677 = vsel %vm219, %v645, 0.0
      %v678 = vadd.f32 %v676, %v677
      %v679 = vsel %vm219, %v646, 0.0
      %v680 = vadd.f32 %v678, %v679
      %v681 = vsel %vm219, %v647, 0.0
      %v682 = vadd.f32 %v680, %v681
      %v683 = vsel %vm219, %v648, 0.0
      %v684 = vadd.f32 %v682, %v683
      %v685 = vsel %vm219, %v649, 0.0
      %v686 = vadd.f32 %v684, %v685
      %v687 = vsel %vm219, %v650, 0.0
      %v688 = vadd.f32 %v686, %v687
      %v689 = vsel %vm219, %v651, 0.0
      %v690 = vadd.f32 %v688, %v689
      %v691 = vsel %vm219, %v652, 0.0
      %v692 = vadd.f32 %v690, %v691
      %v693 = vsel %vm219, %v653, 0.0
      %v694 = vadd.f32 %v692, %v693
      %v695 = vsel %vm219, %v654, 0.0
      %v696 = vadd.f32 %v694, %v695
      %v697 = vsel %vm219, %v655, 0.0
      %v698 = vadd.f32 %v696, %v697
      %v699 = vsel %vm219, %v656, 0.0
      %v700 = vadd.f32 %v698, %v699
      %v701 = vsel %vm219, %v657, 0.0
      %v702 = vadd.f32 %v700, %v701
      %v703 = vsel %vm219, %v658, 0.0
      %v704 = vadd.f32 %v702, %v703
      %v705 = vsel %vm219, %v659, 0.0
      %v706 = vadd.f32 %v704, %v705
      %v707 = vsel %vm219, %v660, 0.0
      %v708 = vadd.f32 %v706, %v707
      %v709 = vsel %vm219, %v661, 0.0
      %v710 = vadd.f32 %v708, %v709
      %v711 = vsel %vm219, %v662, 0.0
      %v712 = vadd.f32 %v710, %v711
      %v713 = vsel %vm219, %v663, 0.0
      %v714 = vadd.f32 %v712, %v713
      %v715 = vsel %vm219, %v664, 0.0
      %v716 = vadd.f32 %v714, %v715
      %v717 = vsel %vm219, %v665, 0.0
      %v718 = vadd.f32 %v716, %v717
      %v719 = vsel %vm219, %v666, 0.0
      %v720 = vadd.f32 %v718, %v719
      %v721 = vsel %vm219, %v667, 0.0
      %v722 = vadd.f32 %v720, %v721
      %v723 = vsel %vm219, %v668, 0.0
      %v724 = vadd.f32 %v722, %v723
      %v725 = vsel %vm219, %v669, 0.0
      %v726 = vadd.f32 %v724, %v725
      %v727 = vsel %vm219, %v670, 0.0
      %v728 = vadd.f32 %v726, %v727
      %v729 = vsel %vm219, %v671, 0.0
      %v730 = vadd.f32 %v728, %v729
      %v731 = vsel %vm219, %v672, 0.0
      %v732 = vadd.f32 %v730, %v731
      %v733 = vsel %vm219, %v673, 0.0
      %v734 = vadd.f32 %v732, %v733
      %v735 = vsel %vm219, %v674, 0.0
      %v736 = vadd.f32 %v734, %v735
      %v737 = vsel %vm219, %v675, 0.0
      %v738 = vadd.f32 %v736, %v737
      %v739 = vrot.slane %v738, 4
      %v740 = vadd.f32 %v738, %v739
      %v741 = vrot.slane %v740, 2
      %v742 = vadd.f32 %v740, %v741
      %v743 = vrot.slane %v742, 1
      %v744 = vadd.f32 %v742, %v743
      %745 = vst.msk [vmem:[%s184 + $0x1] sm:$0x1] %vm642, %v744
      %s746 = smul.u32 32, %s15
      %p747 = scmp.lt.s32.totalorder %s746, 63
      %s748 = scalar_select %p747, %s746, 63
      %s749 = smul.addr %s748, 8
      %s750 = scalar_lea.vmem %s2, %s749
      %p751 = scmp.lt.s32.totalorder %s15, 1
      %s752 = scalar_select %p751, %s15, 1
      %s753 = smul.addr %s752, 2
      %s754 = scalar_lea.vmem %s3, %s753
      // Predicated region
      $region29: #{bottleneck_forward.4} parent=27 // pred_check
        %p755 = pneg %p80
      $region30: #{bottleneck_forward.4} parent=27 // pred_check_branch
        %757 = sbr.rel (%p755) target = $region32
      $region31: #{bottleneck_forward.4} parent=27 // pred_region
        %s758 = smul.u32 32, %s15
      $region32: #{bottleneck_forward.4} parent=27 // pred_fallthru
        _
      // Predicated region
      $region33: #{bottleneck_forward.4} parent=27 // pred_check
        %p759 = pneg %p106
      $region34: #{bottleneck_forward.4} parent=27 // pred_check_branch
        %761 = sbr.rel (%p759) target = $region36
      $region35: #{bottleneck_forward.4} parent=27 // pred_region
        _
      $region36: #{bottleneck_forward.4} parent=27 // pred_fallthru
        _
    $region28: #{bottleneck_forward.4} parent=5 // pred_fallthru
      _
    %p762 = scmp.le.s32.totalorder 2, %s10
    // Predicated region
    $region37: #{bottleneck_forward.4} parent=5 // pred_check
      %p763 = pneg %p762
    $region38: #{bottleneck_forward.4} parent=5 // pred_check_branch
      %765 = sbr.rel (%p763) target = $region40
    $region39: #{bottleneck_forward.4} parent=5 // pred_region
      %s766 = ssub.s32 %s10, 2
      // Predicated region
      $region41: #{bottleneck_forward.4} parent=39 // pred_check
        %p767 = pneg %p86
      $region42: #{bottleneck_forward.4} parent=39 // pred_check_branch
        %769 = sbr.rel (%p767) target = $region44
      $region43: #{bottleneck_forward.4} parent=39 // pred_region
        %s770 = smul.u32 32, %s16
        %p771 = scmp.lt.s32.totalorder %s770, 63
        %s772 = scalar_select %p771, %s770, 63
        %s773 = smul.addr %s772, 8
        %s774 = scalar_lea.vmem %s2, %s773
      $region44: #{bottleneck_forward.4} parent=39 // pred_fallthru
        _
      // Predicated region
      $region45: #{bottleneck_forward.4} parent=39 // pred_check
        %p775 = pneg %p112
      $region46: #{bottleneck_forward.4} parent=39 // pred_check_branch
        %777 = sbr.rel (%p775) target = $region48
      $region47: #{bottleneck_forward.4} parent=39 // pred_region
        %p778 = scmp.lt.s32.totalorder %s16, 1
        %s779 = scalar_select %p778, %s16, 1
        %s780 = smul.addr %s779, 2
        %s781 = scalar_lea.vmem %s3, %s780
      $region48: #{bottleneck_forward.4} parent=39 // pred_fallthru
        _
    $region40: #{bottleneck_forward.4} parent=5 // pred_fallthru
      _
  $region6: #{bottleneck_forward.4} parent=0 // loop_footer
    %s14 = sadd.s32 1, %s10
  $region7: #{bottleneck_forward.4} parent=0 // loop_footer_branch
    %9 = sbr.rel target = $region3
  $region8: #{bottleneck_forward.4} parent=0 // loop_exit
    _

// kernel: bottleneck_forward.6
$region0: #{bottleneck_forward.6}
  #allocation0 [shape = 'u32[]', space=smem, size = 0x4, offset = 0x4, fixed_abs, tag = 'smem constant byte address 0x4 - core index']
  #allocation1 [shape = 'u32[144,128]{1,0:T(1,128)}', space=vmem, size = 0x12000, scoped, tag = 'internal scratch']
  %s0 = inlined_call_operand.vmem [shape: f32[512,16], index: 0, kind: input, shape index: {}]
  %s1 = inlined_call_operand.vmem [shape: f32[512,16], index: 1, kind: input, shape index: {}]
  %s2 = inlined_call_operand.vmem [shape: f32[1,16], index: 2, kind: input, shape index: {}]
  %s3 = inlined_call_operand.vmem [shape: f32[1,16], index: 3, kind: input, shape index: {}]
  %s4 = inlined_call_operand.vmem [shape: f32[16,32], index: 4, kind: input, shape index: {}]
  %s5 = inlined_call_operand.vmem [shape: f32[16,32], index: 5, kind: input, shape index: {}]
  %s6 = inlined_call_operand.vmem [shape: f32[512,32], index: 6, kind: output, shape index: {0}]
  %s7 = inlined_call_operand.vmem [shape: f32[512,32], index: 7, kind: output, shape index: {1}]
  %s8 = inlined_call_operand.vmem [shape: f32[2,2,32], index: 8, kind: output, shape index: {2}]
  %s9 = inlined_call_operand.vmem [shape: f32[2,2,32], index: 9, kind: output, shape index: {3}]
  %10 = xla_tuple %s6, %s7, %s8, %s9
  %s11 = sld [smem:[#allocation0]]
  $region81: #{bottleneck_forward.6} parent=0
    _
  %s13 = ssub.s32 1, %s11
  %s14 = scalar_select 0, %s13, %s11
  loop: start=0, step=1, limit=4
  $region2: #{bottleneck_forward.6} parent=0 // loop_pre_header
    _
  $region3: #{bottleneck_forward.6} parent=0 // loop_header
    %s16 = sphi 0, %s20
    %p17 = scmp.ge.s32.totalorder %s16, 4
    %s26 = sphi 0, %s28
    %s29 = sphi 0, %s26
    %s30 = sphi 0, %s29
    %s46 = sphi 0, %s30
    %s52 = sphi 0, %s54
    %s55 = sphi 0, %s52
    %s56 = sphi 0, %s55
    %s72 = sphi 0, %s56
    %s76 = sphi 0, %s76
    %s78 = sphi 0, %s76
    %s79 = sphi 0, %s78
    %s93 = sphi 0, %s79
    %s97 = sphi 0, %s97
    %s99 = sphi 0, %s97
    %s100 = sphi 0, %s99
    %s114 = sphi 0, %s100
    %s118 = sphi 0, %s118
    %s120 = sphi 0, %s118
    %s121 = sphi 0, %s120
    %s135 = sphi 0, %s121
    %s139 = sphi 0, %s139
    %s141 = sphi 0, %s139
    %s142 = sphi 0, %s141
    %s156 = sphi 0, %s142
    %s162 = sphi 0, %s164
    %s165 = sphi 0, %s162
    %s166 = sphi 0, %s165
    %s182 = sphi 0, %s166
    %s188 = sphi 0, %s190
    %s191 = sphi 0, %s188
    %s192 = sphi 0, %s191
    %s208 = sphi 0, %s192
    %s214 = sphi 0, %s216
    %s217 = sphi 0, %s214
    %s218 = sphi 0, %s217
    %s234 = sphi 0, %s218
    %s240 = sphi 0, %s242
    %s243 = sphi 0, %s240
    %s244 = sphi 0, %s243
    %s260 = sphi 0, %s244
  $region4: #{bottleneck_forward.6} parent=0 // loop_header_branch
    %19 = sbr.rel (%p17) target = $region8
  $region5: #{bottleneck_forward.6} parent=0 // loop_body
    %s21 = ssub.s32 %s16, 1
    %s22 = ssub.s32 %s16, 2
    %s23 = sadd.s32 %s16, 1
    %s24 = ssub.s32 %s16, %s23
    %p25 = scmp.eq.s32.totalorder %s24, 0
    %s27 = sadd.s32 %s26, 1
    %s28 = scalar_select %p25, %s26, %s27
    %p31 = pneg %p25
    %p32 = scmp.eq.s32.totalorder %s16, 1
    %p33 = por %p31, %p32
    %p34 = scmp.ne.s32.totalorder %s26, %s29
    %p35 = scmp.eq.s32.totalorder %s16, 0
    %p36 = por %p34, %p35
    %p37 = scmp.ne.s32.totalorder %s26, %s29
    %p38 = scmp.eq.s32.totalorder %s21, 1
    %p39 = por %p37, %p38
    %p40 = scmp.ne.s32.totalorder %s29, %s30
    %p41 = scmp.eq.s32.totalorder %s21, 0
    %p42 = por %p40, %p41
    %p43 = scmp.ne.s32.totalorder %s29, %s30
    %p44 = scmp.eq.s32.totalorder %s22, 1
    %p45 = por %p43, %p44
    %p47 = scmp.ne.s32.totalorder %s30, %s46
    %p48 = scmp.eq.s32.totalorder %s22, 0
    %p49 = por %p47, %p48
    %s50 = ssub.s32 %s16, %s23
    %p51 = scmp.eq.s32.totalorder %s50, 0
    %s53 = sadd.s32 %s52, 1
    %s54 = scalar_select %p51, %s52, %s53
    %p57 = pneg %p51
    %p58 = scmp.eq.s32.totalorder %s16, 1
    %p59 = por %p57, %p58
    %p60 = scmp.ne.s32.totalorder %s52, %s55
    %p61 = scmp.eq.s32.totalorder %s16, 0
    %p62 = por %p60, %p61
    %p63 = scmp.ne.s32.totalorder %s52, %s55
    %p64 = scmp.eq.s32.totalorder %s21, 1
    %p65 = por %p63, %p64
    %p66 = scmp.ne.s32.totalorder %s55, %s56
    %p67 = scmp.eq.s32.totalorder %s21, 0
    %p68 = por %p66, %p67
    %p69 = scmp.ne.s32.totalorder %s55, %s56
    %p70 = scmp.eq.s32.totalorder %s22, 1
    %p71 = por %p69, %p70
    %p73 = scmp.ne.s32.totalorder %s56, %s72
    %p74 = scmp.eq.s32.totalorder %s22, 0
    %p75 = por %p73, %p74
    %s77 = sadd.s32 %s76, 1
    %p80 = scmp.eq.s32.totalorder %s16, 1
    %p81 = scmp.ne.s32.totalorder %s76, %s78
    %p82 = scmp.eq.s32.totalorder %s16, 0
    %p83 = por %p81, %p82
    %p84 = scmp.ne.s32.totalorder %s76, %s78
    %p85 = scmp.eq.s32.totalorder %s21, 1
    %p86 = por %p84, %p85
    %p87 = scmp.ne.s32.totalorder %s78, %s79
    %p88 = scmp.eq.s32.totalorder %s21, 0
    %p89 = por %p87, %p88
    %p90 = scmp.ne.s32.totalorder %s78, %s79
    %p91 = scmp.eq.s32.totalorder %s22, 1
    %p92 = por %p90, %p91
    %p94 = scmp.ne.s32.totalorder %s79, %s93
    %p95 = scmp.eq.s32.totalorder %s22, 0
    %p96 = por %p94, %p95
    %s98 = sadd.s32 %s97, 1
    %p101 = scmp.eq.s32.totalorder %s16, 1
    %p102 = scmp.ne.s32.totalorder %s97, %s99
    %p103 = scmp.eq.s32.totalorder %s16, 0
    %p104 = por %p102, %p103
    %p105 = scmp.ne.s32.totalorder %s97, %s99
    %p106 = scmp.eq.s32.totalorder %s21, 1
    %p107 = por %p105, %p106
    %p108 = scmp.ne.s32.totalorder %s99, %s100
    %p109 = scmp.eq.s32.totalorder %s21, 0
    %p110 = por %p108, %p109
    %p111 = scmp.ne.s32.totalorder %s99, %s100
    %p112 = scmp.eq.s32.totalorder %s22, 1
    %p113 = por %p111, %p112
    %p115 = scmp.ne.s32.totalorder %s100, %s114
    %p116 = scmp.eq.s32.totalorder %s22, 0
    %p117 = por %p115, %p116
    %s119 = sadd.s32 %s118, 1
    %p122 = scmp.eq.s32.totalorder %s16, 1
    %p123 = scmp.ne.s32.totalorder %s118, %s120
    %p124 = scmp.eq.s32.totalorder %s16, 0
    %p125 = por %p123, %p124
    %p126 = scmp.ne.s32.totalorder %s118, %s120
    %p127 = scmp.eq.s32.totalorder %s21, 1
    %p128 = por %p126, %p127
    %p129 = scmp.ne.s32.totalorder %s120, %s121
    %p130 = scmp.eq.s32.totalorder %s21, 0
    %p131 = por %p129, %p130
    %p132 = scmp.ne.s32.totalorder %s120, %s121
    %p133 = scmp.eq.s32.totalorder %s22, 1
    %p134 = por %p132, %p133
    %p136 = scmp.ne.s32.totalorder %s121, %s135
    %p137 = scmp.eq.s32.totalorder %s22, 0
    %p138 = por %p136, %p137
    %s140 = sadd.s32 %s139, 1
    %p143 = scmp.eq.s32.totalorder %s16, 1
    %p144 = scmp.ne.s32.totalorder %s139, %s141
    %p145 = scmp.eq.s32.totalorder %s16, 0
    %p146 = por %p144, %p145
    %p147 = scmp.ne.s32.totalorder %s139, %s141
    %p148 = scmp.eq.s32.totalorder %s21, 1
    %p149 = por %p147, %p148
    %p150 = scmp.ne.s32.totalorder %s141, %s142
    %p151 = scmp.eq.s32.totalorder %s21, 0
    %p152 = por %p150, %p151
    %p153 = scmp.ne.s32.totalorder %s141, %s142
    %p154 = scmp.eq.s32.totalorder %s22, 1
    %p155 = por %p153, %p154
    %p157 = scmp.ne.s32.totalorder %s142, %s156
    %p158 = scmp.eq.s32.totalorder %s22, 0
    %p159 = por %p157, %p158
    %s160 = ssub.s32 %s16, %s23
    %p161 = scmp.eq.s32.totalorder %s160, 0
    %s163 = sadd.s32 %s162, 1
    %s164 = scalar_select %p161, %s162, %s163
    %p167 = pneg %p161
    %p168 = scmp.eq.s32.totalorder %s16, 1
    %p169 = por %p167, %p168
    %p170 = scmp.ne.s32.totalorder %s162, %s165
    %p171 = scmp.eq.s32.totalorder %s16, 0
    %p172 = por %p170, %p171
    %p173 = scmp.ne.s32.totalorder %s162, %s165
    %p174 = scmp.eq.s32.totalorder %s21, 1
    %p175 = por %p173, %p174
    %p176 = scmp.ne.s32.totalorder %s165, %s166
    %p177 = scmp.eq.s32.totalorder %s21, 0
    %p178 = por %p176, %p177
    %p179 = scmp.ne.s32.totalorder %s165, %s166
    %p180 = scmp.eq.s32.totalorder %s22, 1
    %p181 = por %p179, %p180
    %p183 = scmp.ne.s32.totalorder %s166, %s182
    %p184 = scmp.eq.s32.totalorder %s22, 0
    %p185 = por %p183, %p184
    %s186 = ssub.s32 %s16, %s23
    %p187 = scmp.eq.s32.totalorder %s186, 0
    %s189 = sadd.s32 %s188, 1
    %s190 = scalar_select %p187, %s188, %s189
    %p193 = pneg %p187
    %p194 = scmp.eq.s32.totalorder %s16, 1
    %p195 = por %p193, %p194
    %p196 = scmp.ne.s32.totalorder %s188, %s191
    %p197 = scmp.eq.s32.totalorder %s16, 0
    %p198 = por %p196, %p197
    %p199 = scmp.ne.s32.totalorder %s188, %s191
    %p200 = scmp.eq.s32.totalorder %s21, 1
    %p201 = por %p199, %p200
    %p202 = scmp.ne.s32.totalorder %s191, %s192
    %p203 = scmp.eq.s32.totalorder %s21, 0
    %p204 = por %p202, %p203
    %p205 = scmp.ne.s32.totalorder %s191, %s192
    %p206 = scmp.eq.s32.totalorder %s22, 1
    %p207 = por %p205, %p206
    %p209 = scmp.ne.s32.totalorder %s192, %s208
    %p210 = scmp.eq.s32.totalorder %s22, 0
    %p211 = por %p209, %p210
    %s212 = ssub.s32 %s16, %s23
    %p213 = scmp.eq.s32.totalorder %s212, 0
    %s215 = sadd.s32 %s214, 1
    %s216 = scalar_select %p213, %s214, %s215
    %p219 = pneg %p213
    %p220 = scmp.eq.s32.totalorder %s16, 1
    %p221 = por %p219, %p220
    %p222 = scmp.ne.s32.totalorder %s214, %s217
    %p223 = scmp.eq.s32.totalorder %s16, 0
    %p224 = por %p222, %p223
    %p225 = scmp.ne.s32.totalorder %s214, %s217
    %p226 = scmp.eq.s32.totalorder %s21, 1
    %p227 = por %p225, %p226
    %p228 = scmp.ne.s32.totalorder %s217, %s218
    %p229 = scmp.eq.s32.totalorder %s21, 0
    %p230 = por %p228, %p229
    %p231 = scmp.ne.s32.totalorder %s217, %s218
    %p232 = scmp.eq.s32.totalorder %s22, 1
    %p233 = por %p231, %p232
    %p235 = scmp.ne.s32.totalorder %s218, %s234
    %p236 = scmp.eq.s32.totalorder %s22, 0
    %p237 = por %p235, %p236
    %s238 = ssub.s32 %s16, %s23
    %p239 = scmp.eq.s32.totalorder %s238, 0
    %s241 = sadd.s32 %s240, 1
    %s242 = scalar_select %p239, %s240, %s241
    %p245 = pneg %p239
    %p246 = scmp.eq.s32.totalorder %s16, 1
    %p247 = por %p245, %p246
    %p248 = scmp.ne.s32.totalorder %s240, %s243
    %p249 = scmp.eq.s32.totalorder %s16, 0
    %p250 = por %p248, %p249
    %p251 = scmp.ne.s32.totalorder %s240, %s243
    %p252 = scmp.eq.s32.totalorder %s21, 1
    %p253 = por %p251, %p252
    %p254 = scmp.ne.s32.totalorder %s243, %s244
    %p255 = scmp.eq.s32.totalorder %s21, 0
    %p256 = por %p254, %p255
    %p257 = scmp.ne.s32.totalorder %s243, %s244
    %p258 = scmp.eq.s32.totalorder %s22, 1
    %p259 = por %p257, %p258
    %p261 = scmp.ne.s32.totalorder %s244, %s260
    %p262 = scmp.eq.s32.totalorder %s22, 0
    %p263 = por %p261, %p262
    %p264 = scmp.le.s32.totalorder 1, %s16
    %p265 = scmp.lt.s32.totalorder %s16, 3
    %p266 = pnand %p264, %p265
    %p267 = pneg %p266
    // Predicated region
    $region9: #{bottleneck_forward.6} parent=5 // pred_check
      _
    $region10: #{bottleneck_forward.6} parent=5 // pred_check_branch
      %269 = sbr.rel (%p266) target = $region12
    $region11: #{bottleneck_forward.6} parent=5 // pred_region
      %s270 = ssub.s32 %s16, 1
      // Predicated region
      $region13: #{bottleneck_forward.6} parent=11 // pred_check
        %p271 = pneg %p89
      $region14: #{bottleneck_forward.6} parent=11 // pred_check_branch
        %273 = sbr.rel (%p271) target = $region16
      $region15: #{bottleneck_forward.6} parent=11 // pred_region
        _
      $region16: #{bottleneck_forward.6} parent=11 // pred_fallthru
        _
      // Predicated region
      $region17: #{bottleneck_forward.6} parent=11 // pred_check
        %p274 = pneg %p110
      $region18: #{bottleneck_forward.6} parent=11 // pred_check_branch
        %276 = sbr.rel (%p274) target = $region20
      $region19: #{bottleneck_forward.6} parent=11 // pred_region
        _
      $region20: #{bottleneck_forward.6} parent=11 // pred_fallthru
        _
      // Predicated region
      $region21: #{bottleneck_forward.6} parent=11 // pred_check
        %p277 = pneg %p131
      $region22: #{bottleneck_forward.6} parent=11 // pred_check_branch
        %279 = sbr.rel (%p277) target = $region24
      $region23: #{bottleneck_forward.6} parent=11 // pred_region
        _
      $region24: #{bottleneck_forward.6} parent=11 // pred_fallthru
        _
      // Predicated region
      $region25: #{bottleneck_forward.6} parent=11 // pred_check
        %p280 = pneg %p152
      $region26: #{bottleneck_forward.6} parent=11 // pred_check_branch
        %282 = sbr.rel (%p280) target = $region28
      $region27: #{bottleneck_forward.6} parent=11 // pred_region
        _
      $region28: #{bottleneck_forward.6} parent=11 // pred_fallthru
        _
    $region12: #{bottleneck_forward.6} parent=5 // pred_fallthru
      _
    %p283 = scmp.lt.s32.totalorder %s16, 2
    // Predicated region
    $region29: #{bottleneck_forward.6} parent=5 // pred_check
      %p284 = pneg %p283
    $region30: #{bottleneck_forward.6} parent=5 // pred_check_branch
      %286 = sbr.rel (%p284) target = $region32
    $region31: #{bottleneck_forward.6} parent=5 // pred_region
      // Predicated region
      $region33: #{bottleneck_forward.6} parent=31 // pred_check
        %p287 = pneg %p36
      $region34: #{bottleneck_forward.6} parent=31 // pred_check_branch
        %289 = sbr.rel (%p287) target = $region36
      $region35: #{bottleneck_forward.6} parent=31 // pred_region
        %s290 = smul.u32 32, %s16
        %p291 = scmp.lt.s32.totalorder %s290, 63
        %s292 = scalar_select %p291, %s290, 63
        %s293 = smul.addr %s292, 8
        %s294 = scalar_lea.vmem %s0, %s293
        %s295 = smul.u32 32, %s16
      $region36: #{bottleneck_forward.6} parent=31 // pred_fallthru
        _
      // Predicated region
      $region37: #{bottleneck_forward.6} parent=31 // pred_check
        %p296 = pneg %p62
      $region38: #{bottleneck_forward.6} parent=31 // pred_check_branch
        %298 = sbr.rel (%p296) target = $region40
      $region39: #{bottleneck_forward.6} parent=31 // pred_region
        %s299 = smul.u32 32, %s16
        %p300 = scmp.lt.s32.totalorder %s299, 63
        %s301 = scalar_select %p300, %s299, 63
        %s302 = smul.addr %s301, 8
        %s303 = scalar_lea.vmem %s1, %s302
        %s304 = smul.u32 32, %s16
      $region40: #{bottleneck_forward.6} parent=31 // pred_fallthru
        _
    $region32: #{bottleneck_forward.6} parent=5 // pred_fallthru
      _
    %p305 = scmp.le.s32.totalorder 1, %s16
    %p306 = scmp.lt.s32.totalorder %s16, 3
    %p307 = pnand %p305, %p306
    %p308 = pneg %p307
    // Predicated region
    $region41: #{bottleneck_forward.6} parent=5 // pred_check
      _
    $region42: #{bottleneck_forward.6} parent=5 // pred_check_branch
      %310 = sbr.rel (%p307) target = $region44
    $region43: #{bottleneck_forward.6} parent=5 // pred_region
      %s311 = ssub.s32 %s16, 1
      %s312 = smul.u32 32, %s21
      %p313 = scmp.lt.s32.totalorder %s312, 63
      %s314 = scalar_select %p313, %s312, 63
      %s315 = smul.addr %s314, 8
      %s316 = scalar_lea.vmem %s0, %s315
      %p317 = pneg %p42
      %p318 = pneg %p39
      %s319 = smul.u32 32, %s21
      %p320 = scmp.lt.s32.totalorder %s319, 63
      %s321 = scalar_select %p320, %s319, 63
      %s322 = smul.addr %s321, 8
      %s323 = scalar_lea.vmem %s1, %s322
      %p324 = pneg %p68
      %p325 = pneg %p65
      %p326 = pneg %p89
      %p327 = pneg %p86
      %p328 = pneg %p110
      %p329 = pneg %p107
      %p330 = pneg %p131
      %p331 = pneg %p128
      %p332 = pneg %p152
      %p333 = pneg %p149
      %p334 = pneg %p178
      %p335 = pneg %p175
      %s336 = smul.u32 32, %s21
      %p337 = scmp.lt.s32.totalorder %s336, 63
      %s338 = scalar_select %p337, %s336, 63
      %s339 = smul.addr %s338, 8
      %s340 = scalar_lea.vmem %s6, %s339
      %p341 = pneg %p204
      %p342 = pneg %p201
      %s343 = smul.u32 32, %s21
      %p344 = scmp.lt.s32.totalorder %s343, 63
      %s345 = scalar_select %p344, %s343, 63
      %s346 = smul.addr %s345, 8
      %s347 = scalar_lea.vmem %s7, %s346
      %p348 = pneg %p230
      %p349 = pneg %p227
      %p350 = scmp.lt.s32.totalorder %s21, 1
      %s351 = scalar_select %p350, %s21, 1
      %s352 = smul.addr %s351, 2
      %s353 = scalar_lea.vmem %s8, %s352
      %p354 = pneg %p256
      %p355 = pneg %p253
      %p356 = scmp.lt.s32.totalorder %s21, 1
      %s357 = scalar_select %p356, %s21, 1
      %s358 = smul.addr %s357, 2
      %s359 = scalar_lea.vmem %s9, %s358
      %s360 = smul.u32 32, %s21
      %p361 = scmp.lt.s32.totalorder %s360, 63
      %s362 = scalar_select %p361, %s360, 63
      %s363 = smul.addr %s362, 8
      %s364 = scalar_lea.vmem %s0, %s363
      %s365 = smul.u32 32, %s21
      %s366 = smul.u32 32, %s21
      %p367 = scmp.lt.s32.totalorder %s366, 63
      %s368 = scalar_select %p367, %s366, 63
      %s369 = smul.addr %s368, 8
      %s370 = scalar_lea.vmem %s1, %s369
      %s371 = smul.u32 32, %s21
      %s372 = smul.u32 32, %s21
      %p373 = scmp.lt.s32.totalorder %s372, 63
      %s374 = scalar_select %p373, %s372, 63
      %s375 = smul.addr %s374, 8
      %s376 = scalar_lea.vmem %s6, %s375
      %s377 = smul.u32 32, %s21
      %s378 = smul.u32 32, %s21
      %p379 = scmp.lt.s32.totalorder %s378, 63
      %s380 = scalar_select %p379, %s378, 63
      %s381 = smul.addr %s380, 8
      %s382 = scalar_lea.vmem %s7, %s381
      %s383 = smul.u32 32, %s21
      %p384 = scmp.lt.s32.totalorder %s21, 1
      %s385 = scalar_select %p384, %s21, 1
      %s386 = smul.addr %s385, 2
      %s387 = scalar_lea.vmem %s8, %s386
      %p388 = scmp.lt.s32.totalorder %s21, 1
      %s389 = scalar_select %p388, %s21, 1
      %s390 = smul.addr %s389, 2
      %s391 = scalar_lea.vmem %s9, %s390
      %v392 = vld [vmem:[%s364] sm:$0xff]
      %v393 = vld [vmem:[%s364 + $0x8] sm:$0xff]
      %v394 = vld [vmem:[%s364 + $0x10] sm:$0xff]
      %v395 = vld [vmem:[%s364 + $0x18] sm:$0xff]
      %v396 = vld [vmem:[%s364 + $0x20] sm:$0xff]
      %v397 = vld [vmem:[%s364 + $0x28] sm:$0xff]
      %v398 = vld [vmem:[%s364 + $0x30] sm:$0xff]
      %v399 = vld [vmem:[%s364 + $0x38] sm:$0xff]
      %v400 = vld [vmem:[%s364 + $0x40] sm:$0xff]
      %v401 = vld [vmem:[%s364 + $0x48] sm:$0xff]
      %v402 = vld [vmem:[%s364 + $0x50] sm:$0xff]
      %v403 = vld [vmem:[%s364 + $0x58] sm:$0xff]
      %v404 = vld [vmem:[%s364 + $0x60] sm:$0xff]
      %v405 = vld [vmem:[%s364 + $0x68] sm:$0xff]
      %v406 = vld [vmem:[%s364 + $0x70] sm:$0xff]
      %v407 = vld [vmem:[%s364 + $0x78] sm:$0xff]
      %v408 = vld [vmem:[%s364 + $0x80] sm:$0xff]
      %v409 = vld [vmem:[%s364 + $0x88] sm:$0xff]
      %v410 = vld [vmem:[%s364 + $0x90] sm:$0xff]
      %v411 = vld [vmem:[%s364 + $0x98] sm:$0xff]
      %v412 = vld [vmem:[%s364 + $0xa0] sm:$0xff]
      %v413 = vld [vmem:[%s364 + $0xa8] sm:$0xff]
      %v414 = vld [vmem:[%s364 + $0xb0] sm:$0xff]
      %v415 = vld [vmem:[%s364 + $0xb8] sm:$0xff]
      %v416 = vld [vmem:[%s364 + $0xc0] sm:$0xff]
      %v417 = vld [vmem:[%s364 + $0xc8] sm:$0xff]
      %v418 = vld [vmem:[%s364 + $0xd0] sm:$0xff]
      %v419 = vld [vmem:[%s364 + $0xd8] sm:$0xff]
      %v420 = vld [vmem:[%s364 + $0xe0] sm:$0xff]
      %v421 = vld [vmem:[%s364 + $0xe8] sm:$0xff]
      %v422 = vld [vmem:[%s364 + $0xf0] sm:$0xff]
      %v423 = vld [vmem:[%s364 + $0xf8] sm:$0xff]
      %v424 = vld [vmem:[%s2] sm:$0x1]
      %v426 = vlaneseq
      %v427 = vshrl.u32 %v426, 7
      %v428 = vsub.s32 0, %v427
      %v429 = vrot.slane %v424, %v428
      %v431 = vmul.f32 %v392, %v429
      %v432 = vmul.f32 %v393, %v429
      %v433 = vmul.f32 %v394, %v429
      %v434 = vmul.f32 %v395, %v429
      %v435 = vmul.f32 %v396, %v429
      %v436 = vmul.f32 %v397, %v429
      %v437 = vmul.f32 %v398, %v429
      %v438 = vmul.f32 %v399, %v429
      %v439 = vmul.f32 %v400, %v429
      %v440 = vmul.f32 %v401, %v429
      %v441 = vmul.f32 %v402, %v429
      %v442 = vmul.f32 %v403, %v429
      %v443 = vmul.f32 %v404, %v429
      %v444 = vmul.f32 %v405, %v429
      %v445 = vmul.f32 %v406, %v429
      %v446 = vmul.f32 %v407, %v429
      %v447 = vmul.f32 %v408, %v429
      %v448 = vmul.f32 %v409, %v429
      %v449 = vmul.f32 %v410, %v429
      %v450 = vmul.f32 %v411, %v429
      %v451 = vmul.f32 %v412, %v429
      %v452 = vmul.f32 %v413, %v429
      %v453 = vmul.f32 %v414, %v429
      %v454 = vmul.f32 %v415, %v429
      %v455 = vmul.f32 %v416, %v429
      %v456 = vmul.f32 %v417, %v429
      %v457 = vmul.f32 %v418, %v429
      %v458 = vmul.f32 %v419, %v429
      %v459 = vmul.f32 %v420, %v429
      %v460 = vmul.f32 %v421, %v429
      %v461 = vmul.f32 %v422, %v429
      %v462 = vmul.f32 %v423, %v429
      %v463 = vld [vmem:[%s3] sm:$0x1]
      %v465 = vlaneseq
      %v466 = vshrl.u32 %v465, 7
      %v467 = vsub.s32 0, %v466
      %v468 = vrot.slane %v463, %v467
      %v470 = vadd.f32 %v431, %v468
      %v471 = vadd.f32 %v432, %v468
      %v472 = vadd.f32 %v433, %v468
      %v473 = vadd.f32 %v434, %v468
      %v474 = vadd.f32 %v435, %v468
      %v475 = vadd.f32 %v436, %v468
      %v476 = vadd.f32 %v437, %v468
      %v477 = vadd.f32 %v438, %v468
      %v478 = vadd.f32 %v439, %v468
      %v479 = vadd.f32 %v440, %v468
      %v480 = vadd.f32 %v441, %v468
      %v481 = vadd.f32 %v442, %v468
      %v482 = vadd.f32 %v443, %v468
      %v483 = vadd.f32 %v444, %v468
      %v484 = vadd.f32 %v445, %v468
      %v485 = vadd.f32 %v446, %v468
      %v486 = vadd.f32 %v447, %v468
      %v487 = vadd.f32 %v448, %v468
      %v488 = vadd.f32 %v449, %v468
      %v489 = vadd.f32 %v450, %v468
      %v490 = vadd.f32 %v451, %v468
      %v491 = vadd.f32 %v452, %v468
      %v492 = vadd.f32 %v453, %v468
      %v493 = vadd.f32 %v454, %v468
      %v494 = vadd.f32 %v455, %v468
      %v495 = vadd.f32 %v456, %v468
      %v496 = vadd.f32 %v457, %v468
      %v497 = vadd.f32 %v458, %v468
      %v498 = vadd.f32 %v459, %v468
      %v499 = vadd.f32 %v460, %v468
      %v500 = vadd.f32 %v461, %v468
      %v501 = vadd.f32 %v462, %v468
      %v502 = vmax.f32 %v470, 0.0
      %v503 = vmax.f32 %v471, 0.0
      %v504 = vmax.f32 %v472, 0.0
      %v505 = vmax.f32 %v473, 0.0
      %v506 = vmax.f32 %v474, 0.0
      %v507 = vmax.f32 %v475, 0.0
      %v508 = vmax.f32 %v476, 0.0
      %v509 = vmax.f32 %v477, 0.0
      %v510 = vmax.f32 %v478, 0.0
      %v511 = vmax.f32 %v479, 0.0
      %v512 = vmax.f32 %v480, 0.0
      %v513 = vmax.f32 %v481, 0.0
      %v514 = vmax.f32 %v482, 0.0
      %v515 = vmax.f32 %v483, 0.0
      %v516 = vmax.f32 %v484, 0.0
      %v517 = vmax.f32 %v485, 0.0
      %v518 = vmax.f32 %v486, 0.0
      %v519 = vmax.f32 %v487, 0.0
      %v520 = vmax.f32 %v488, 0.0
      %v521 = vmax.f32 %v489, 0.0
      %v522 = vmax.f32 %v490, 0.0
      %v523 = vmax.f32 %v491, 0.0
      %v524 = vmax.f32 %v492, 0.0
      %v525 = vmax.f32 %v493, 0.0
      %v526 = vmax.f32 %v494, 0.0
      %v527 = vmax.f32 %v495, 0.0
      %v528 = vmax.f32 %v496, 0.0
      %v529 = vmax.f32 %v497, 0.0
      %v530 = vmax.f32 %v498, 0.0
      %v531 = vmax.f32 %v499, 0.0
      %v532 = vmax.f32 %v500, 0.0
      %v533 = vmax.f32 %v501, 0.0
      %v534 = vld [vmem:[%s4] sm:$0xff]
      %v535 = vld [vmem:[%s4 + $0x8] sm:$0xff]
      %vm536 = vcmask 130048
      %v538 = vsel %vm536, %v502, 0
      %v541 = vsel %vm536, %v503, 0
      %v544 = vsel %vm536, %v504, 0
      %v547 = vsel %vm536, %v505, 0
      %v550 = vsel %vm536, %v506, 0
      %v553 = vsel %vm536, %v507, 0
      %v556 = vsel %vm536, %v508, 0
      %v559 = vsel %vm536, %v509, 0
      %v562 = vsel %vm536, %v510, 0
      %v565 = vsel %vm536, %v511, 0
      %v568 = vsel %vm536, %v512, 0
      %v571 = vsel %vm536, %v513, 0
      %v574 = vsel %vm536, %v514, 0
      %v577 = vsel %vm536, %v515, 0
      %v580 = vsel %vm536, %v516, 0
      %v583 = vsel %vm536, %v517, 0
      %v586 = vsel %vm536, %v518, 0
      %v589 = vsel %vm536, %v519, 0
      %v592 = vsel %vm536, %v520, 0
      %v595 = vsel %vm536, %v521, 0
      %v598 = vsel %vm536, %v522, 0
      %v601 = vsel %vm536, %v523, 0
      %v604 = vsel %vm536, %v524, 0
      %v607 = vsel %vm536, %v525, 0
      %v610 = vsel %vm536, %v526, 0
      %v613 = vsel %vm536, %v527, 0
      %v616 = vsel %vm536, %v528, 0
      %v619 = vsel %vm536, %v529, 0
      %v622 = vsel %vm536, %v530, 0
      %v625 = vsel %vm536, %v531, 0
      %v628 = vsel %vm536, %v532, 0
      %v631 = vsel %vm536, %v533, 0
      %633 = vmatprep.subr.mxu0 0.0
      %634 = vmatpush1.msra.mxu0 0.0
      %635 = vmatprep.subr.mxu0 0.0
      %636 = vmatpush1.msra.mxu0 0.0
      %637 = vmatprep.subr.mxu0 0.0
      %638 = vmatpush1.msra.mxu0 0.0
      %639 = vmatprep.subr.mxu0 0.0
      %640 = vmatpush1.msra.mxu0 0.0
      %641 = vmatprep.subr.mxu0 0.0
      %642 = vmatpush1.msra.mxu0 0.0
      %643 = vmatprep.subr.mxu0 0.0
      %644 = vmatpush1.msra.mxu0 0.0
      %645 = vmatprep.subr.mxu0 0.0
      %646 = vmatpush1.msra.mxu0 0.0
      %647 = vmatprep.subr.mxu0 0.0
      %648 = vmatpush1.msra.mxu0 0.0
      %649 = vmatprep.subr.mxu0 0.0
      %650 = vmatpush1.msra.mxu0 0.0
      %651 = vmatprep.subr.mxu0 0.0
      %652 = vmatpush1.msra.mxu0 0.0
      %653 = vmatprep.subr.mxu0 0.0
      %654 = vmatpush1.msra.mxu0 0.0
      %655 = vmatprep.subr.mxu0 0.0
      %656 = vmatpush1.msra.mxu0 0.0
      %657 = vmatprep.subr.mxu0 0.0
      %658 = vmatpush1.msra.mxu0 0.0
      %659 = vmatprep.subr.mxu0 0.0
      %660 = vmatpush1.msra.mxu0 0.0
      %661 = vmatprep.subr.mxu0 0.0
      %662 = vmatpush1.msra.mxu0 %v535
      %663 = vmatprep.subr.mxu0 0.0
      %664 = vmatpush1.msra.mxu0 %v534
      %665 = vmatprep.subr.mxu0 0.0
      %666 = vmatpush2.msra.mxu0 0.0
      %667 = vmatprep.subr.mxu0 0.0
      %668 = vmatpush2.msra.mxu0 0.0
      %669 = vmatprep.subr.mxu0 0.0
      %670 = vmatpush2.msra.mxu0 0.0
      %671 = vmatprep.subr.mxu0 0.0
      %672 = vmatpush2.msra.mxu0 0.0
      %673 = vmatprep.subr.mxu0 0.0
      %674 = vmatpush2.msra.mxu0 0.0
      %675 = vmatprep.subr.mxu0 0.0
      %676 = vmatpush2.msra.mxu0 0.0
      %677 = vmatprep.subr.mxu0 0.0
      %678 = vmatpush2.msra.mxu0 0.0
      %679 = vmatprep.subr.mxu0 0.0
      %680 = vmatpush2.msra.mxu0 0.0
      %681 = vmatprep.subr.mxu0 0.0
      %682 = vmatpush2.msra.mxu0 0.0
      %683 = vmatprep.subr.mxu0 0.0
      %684 = vmatpush2.msra.mxu0 0.0
      %685 = vmatprep.subr.mxu0 0.0
      %686 = vmatpush2.msra.mxu0 0.0
      %687 = vmatprep.subr.mxu0 0.0
      %688 = vmatpush2.msra.mxu0 0.0
      %689 = vmatprep.subr.mxu0 0.0
      %690 = vmatpush2.msra.mxu0 0.0
      %691 = vmatprep.subr.mxu0 0.0
      %692 = vmatpush2.msra.mxu0 0.0
      %693 = vmatprep.subr.mxu0 0.0
      %694 = vmatpush2.msra.mxu0 0.0
      %695 = vmatprep.subr.mxu0 0.0
      %696 = vmatpush2.msra.mxu0 0.0
      %697 = vmatprep.mubr.f32.mxu0 0.0
      %698 = vmatmul.mubr.f32.gmra.mxu0 %v538
      %v699 = vpop.f32.mrf.mxu0
      %v700 = vadd.f32 0.0, %v699
      %v701 = vpop.f32.mrf.mxu0
      %702 = vmatprep.mubr.f32.mxu0 0.0
      %703 = vmatmul.mubr.f32.gmra.mxu0 %v541
      %v704 = vpop.f32.mrf.mxu0
      %v705 = vadd.f32 0.0, %v704
      %v706 = vpop.f32.mrf.mxu0
      %707 = vmatprep.mubr.f32.mxu0 0.0
      %708 = vmatmul.mubr.f32.gmra.mxu0 %v544
      %v709 = vpop.f32.mrf.mxu0
      %v710 = vadd.f32 0.0, %v709
      %v711 = vpop.f32.mrf.mxu0
      %712 = vmatprep.mubr.f32.mxu0 0.0
      %713 = vmatmul.mubr.f32.gmra.mxu0 %v547
      %v714 = vpop.f32.mrf.mxu0
      %v715 = vadd.f32 0.0, %v714
      %v716 = vpop.f32.mrf.mxu0
      %717 = vmatprep.mubr.f32.mxu0 0.0
      %718 = vmatmul.mubr.f32.gmra.mxu0 %v550
      %v719 = vpop.f32.mrf.mxu0
      %v720 = vadd.f32 0.0, %v719
      %v721 = vpop.f32.mrf.mxu0
      %722 = vmatprep.mubr.f32.mxu0 0.0
      %723 = vmatmul.mubr.f32.gmra.mxu0 %v553
      %v724 = vpop.f32.mrf.mxu0
      %v725 = vadd.f32 0.0, %v724
      %v726 = vpop.f32.mrf.mxu0
      %727 = vmatprep.mubr.f32.mxu0 0.0
      %728 = vmatmul.mubr.f32.gmra.mxu0 %v556
      %v729 = vpop.f32.mrf.mxu0
      %v730 = vadd.f32 0.0, %v729
      %v731 = vpop.f32.mrf.mxu0
      %732 = vmatprep.mubr.f32.mxu0 0.0
      %733 = vmatmul.mubr.f32.gmra.mxu0 %v559
      %v734 = vpop.f32.mrf.mxu0
      %v735 = vadd.f32 0.0, %v734
      %v736 = vpop.f32.mrf.mxu0
      %737 = vmatprep.mubr.f32.mxu0 0.0
      %738 = vmatmul.mubr.f32.gmra.mxu0 %v562
      %v739 = vpop.f32.mrf.mxu0
      %v740 = vadd.f32 0.0, %v739
      %v741 = vpop.f32.mrf.mxu0
      %742 = vmatprep.mubr.f32.mxu0 0.0
      %743 = vmatmul.mubr.f32.gmra.mxu0 %v565
      %v744 = vpop.f32.mrf.mxu0
      %v745 = vadd.f32 0.0, %v744
      %v746 = vpop.f32.mrf.mxu0
      %747 = vmatprep.mubr.f32.mxu0 0.0
      %748 = vmatmul.mubr.f32.gmra.mxu0 %v568
      %v749 = vpop.f32.mrf.mxu0
      %v750 = vadd.f32 0.0, %v749
      %v751 = vpop.f32.mrf.mxu0
      %752 = vmatprep.mubr.f32.mxu0 0.0
      %753 = vmatmul.mubr.f32.gmra.mxu0 %v571
      %v754 = vpop.f32.mrf.mxu0
      %v755 = vadd.f32 0.0, %v754
      %v756 = vpop.f32.mrf.mxu0
      %757 = vmatprep.mubr.f32.mxu0 0.0
      %758 = vmatmul.mubr.f32.gmra.mxu0 %v574
      %v759 = vpop.f32.mrf.mxu0
      %v760 = vadd.f32 0.0, %v759
      %v761 = vpop.f32.mrf.mxu0
      %762 = vmatprep.mubr.f32.mxu0 0.0
      %763 = vmatmul.mubr.f32.gmra.mxu0 %v577
      %v764 = vpop.f32.mrf.mxu0
      %v765 = vadd.f32 0.0, %v764
      %v766 = vpop.f32.mrf.mxu0
      %767 = vmatprep.mubr.f32.mxu0 0.0
      %768 = vmatmul.mubr.f32.gmra.mxu0 %v580
      %v769 = vpop.f32.mrf.mxu0
      %v770 = vadd.f32 0.0, %v769
      %v771 = vpop.f32.mrf.mxu0
      %772 = vmatprep.mubr.f32.mxu0 0.0
      %773 = vmatmul.mubr.f32.gmra.mxu0 %v583
      %v774 = vpop.f32.mrf.mxu0
      %v775 = vadd.f32 0.0, %v774
      %v776 = vpop.f32.mrf.mxu0
      %777 = vmatprep.mubr.f32.mxu0 0.0
      %778 = vmatmul.mubr.f32.gmra.mxu0 %v586
      %v779 = vpop.f32.mrf.mxu0
      %v780 = vadd.f32 0.0, %v779
      %v781 = vpop.f32.mrf.mxu0
      %782 = vmatprep.mubr.f32.mxu0 0.0
      %783 = vmatmul.mubr.f32.gmra.mxu0 %v589
      %v784 = vpop.f32.mrf.mxu0
      %v785 = vadd.f32 0.0, %v784
      %v786 = vpop.f32.mrf.mxu0
      %787 = vmatprep.mubr.f32.mxu0 0.0
      %788 = vmatmul.mubr.f32.gmra.mxu0 %v592
      %v789 = vpop.f32.mrf.mxu0
      %v790 = vadd.f32 0.0, %v789
      %v791 = vpop.f32.mrf.mxu0
      %792 = vmatprep.mubr.f32.mxu0 0.0
      %793 = vmatmul.mubr.f32.gmra.mxu0 %v595
      %v794 = vpop.f32.mrf.mxu0
      %v795 = vadd.f32 0.0, %v794
      %v796 = vpop.f32.mrf.mxu0
      %797 = vmatprep.mubr.f32.mxu0 0.0
      %798 = vmatmul.mubr.f32.gmra.mxu0 %v598
      %v799 = vpop.f32.mrf.mxu0
      %v800 = vadd.f32 0.0, %v799
      %v801 = vpop.f32.mrf.mxu0
      %802 = vmatprep.mubr.f32.mxu0 0.0
      %803 = vmatmul.mubr.f32.gmra.mxu0 %v601
      %v804 = vpop.f32.mrf.mxu0
      %v805 = vadd.f32 0.0, %v804
      %v806 = vpop.f32.mrf.mxu0
      %807 = vmatprep.mubr.f32.mxu0 0.0
      %808 = vmatmul.mubr.f32.gmra.mxu0 %v604
      %v809 = vpop.f32.mrf.mxu0
      %v810 = vadd.f32 0.0, %v809
      %v811 = vpop.f32.mrf.mxu0
      %812 = vmatprep.mubr.f32.mxu0 0.0
      %813 = vmatmul.mubr.f32.gmra.mxu0 %v607
      %v814 = vpop.f32.mrf.mxu0
      %v815 = vadd.f32 0.0, %v814
      %v816 = vpop.f32.mrf.mxu0
      %817 = vmatprep.mubr.f32.mxu0 0.0
      %818 = vmatmul.mubr.f32.gmra.mxu0 %v610
      %v819 = vpop.f32.mrf.mxu0
      %v820 = vadd.f32 0.0, %v819
      %v821 = vpop.f32.mrf.mxu0
      %822 = vmatprep.mubr.f32.mxu0 0.0
      %823 = vmatmul.mubr.f32.gmra.mxu0 %v613
      %v824 = vpop.f32.mrf.mxu0
      %v825 = vadd.f32 0.0, %v824
      %v826 = vpop.f32.mrf.mxu0
      %827 = vmatprep.mubr.f32.mxu0 0.0
      %828 = vmatmul.mubr.f32.gmra.mxu0 %v616
      %v829 = vpop.f32.mrf.mxu0
      %v830 = vadd.f32 0.0, %v829
      %v831 = vpop.f32.mrf.mxu0
      %832 = vmatprep.mubr.f32.mxu0 0.0
      %833 = vmatmul.mubr.f32.gmra.mxu0 %v619
      %v834 = vpop.f32.mrf.mxu0
      %v835 = vadd.f32 0.0, %v834
      %v836 = vpop.f32.mrf.mxu0
      %837 = vmatprep.mubr.f32.mxu0 0.0
      %838 = vmatmul.mubr.f32.gmra.mxu0 %v622
      %v839 = vpop.f32.mrf.mxu0
      %v840 = vadd.f32 0.0, %v839
      %v841 = vpop.f32.mrf.mxu0
      %842 = vmatprep.mubr.f32.mxu0 0.0
      %843 = vmatmul.mubr.f32.gmra.mxu0 %v625
      %v844 = vpop.f32.mrf.mxu0
      %v845 = vadd.f32 0.0, %v844
      %v846 = vpop.f32.mrf.mxu0
      %847 = vmatprep.mubr.f32.mxu0 0.0
      %848 = vmatmul.mubr.f32.gmra.mxu0 %v628
      %v849 = vpop.f32.mrf.mxu0
      %v850 = vadd.f32 0.0, %v849
      %v851 = vpop.f32.mrf.mxu0
      %852 = vmatprep.mubr.f32.mxu0 0.0
      %853 = vmatmul.mubr.f32.gmra.mxu0 %v631
      %v854 = vpop.f32.mrf.mxu0
      %v855 = vadd.f32 0.0, %v854
      %v856 = vpop.f32.mrf.mxu0
      %857 = vdwg.mxu0
      %v858 = vld [vmem:[%s370] sm:$0xff]
      %v859 = vld [vmem:[%s370 + $0x8] sm:$0xff]
      %v860 = vld [vmem:[%s370 + $0x10] sm:$0xff]
      %v861 = vld [vmem:[%s370 + $0x18] sm:$0xff]
      %v862 = vld [vmem:[%s370 + $0x20] sm:$0xff]
      %v863 = vld [vmem:[%s370 + $0x28] sm:$0xff]
      %v864 = vld [vmem:[%s370 + $0x30] sm:$0xff]
      %v865 = vld [vmem:[%s370 + $0x38] sm:$0xff]
      %v866 = vld [vmem:[%s370 + $0x40] sm:$0xff]
      %v867 = vld [vmem:[%s370 + $0x48] sm:$0xff]
      %v868 = vld [vmem:[%s370 + $0x50] sm:$0xff]
      %v869 = vld [vmem:[%s370 + $0x58] sm:$0xff]
      %v870 = vld [vmem:[%s370 + $0x60] sm:$0xff]
      %v871 = vld [vmem:[%s370 + $0x68] sm:$0xff]
      %v872 = vld [vmem:[%s370 + $0x70] sm:$0xff]
      %v873 = vld [vmem:[%s370 + $0x78] sm:$0xff]
      %v874 = vld [vmem:[%s370 + $0x80] sm:$0xff]
      %v875 = vld [vmem:[%s370 + $0x88] sm:$0xff]
      %v876 = vld [vmem:[%s370 + $0x90] sm:$0xff]
      %v877 = vld [vmem:[%s370 + $0x98] sm:$0xff]
      %v878 = vld [vmem:[%s370 + $0xa0] sm:$0xff]
      %v879 = vld [vmem:[%s370 + $0xa8] sm:$0xff]
      %v880 = vld [vmem:[%s370 + $0xb0] sm:$0xff]
      %v881 = vld [vmem:[%s370 + $0xb8] sm:$0xff]
      %v882 = vld [vmem:[%s370 + $0xc0] sm:$0xff]
      %v883 = vld [vmem:[%s370 + $0xc8] sm:$0xff]
      %v884 = vld [vmem:[%s370 + $0xd0] sm:$0xff]
      %v885 = vld [vmem:[%s370 + $0xd8] sm:$0xff]
      %v886 = vld [vmem:[%s370 + $0xe0] sm:$0xff]
      %v887 = vld [vmem:[%s370 + $0xe8] sm:$0xff]
      %v888 = vld [vmem:[%s370 + $0xf0] sm:$0xff]
      %v889 = vld [vmem:[%s370 + $0xf8] sm:$0xff]
      %v890 = vld [vmem:[%s5] sm:$0xff]
      %v891 = vld [vmem:[%s5 + $0x8] sm:$0xff]
      %v893 = vsel %vm536, %v858, 0
      %v896 = vsel %vm536, %v859, 0
      %v899 = vsel %vm536, %v860, 0
      %v902 = vsel %vm536, %v861, 0
      %v905 = vsel %vm536, %v862, 0
      %v908 = vsel %vm536, %v863, 0
      %v911 = vsel %vm536, %v864, 0
      %v914 = vsel %vm536, %v865, 0
      %v917 = vsel %vm536, %v866, 0
      %v920 = vsel %vm536, %v867, 0
      %v923 = vsel %vm536, %v868, 0
      %v926 = vsel %vm536, %v869, 0
      %v929 = vsel %vm536, %v870, 0
      %v932 = vsel %vm536, %v871, 0
      %v935 = vsel %vm536, %v872, 0
      %v938 = vsel %vm536, %v873, 0
      %v941 = vsel %vm536, %v874, 0
      %v944 = vsel %vm536, %v875, 0
      %v947 = vsel %vm536, %v876, 0
      %v950 = vsel %vm536, %v877, 0
      %v953 = vsel %vm536, %v878, 0
      %v956 = vsel %vm536, %v879, 0
      %v959 = vsel %vm536, %v880, 0
      %v962 = vsel %vm536, %v881, 0
      %v965 = vsel %vm536, %v882, 0
      %v968 = vsel %vm536, %v883, 0
      %v971 = vsel %vm536, %v884, 0
      %v974 = vsel %vm536, %v885, 0
      %v977 = vsel %vm536, %v886, 0
      %v980 = vsel %vm536, %v887, 0
      %v983 = vsel %vm536, %v888, 0
      %v986 = vsel %vm536, %v889, 0
      %988 = vmatprep.subr.mxu0 0.0
      %989 = vmatpush1.msra.mxu0 0.0
      %990 = vmatprep.subr.mxu0 0.0
      %991 = vmatpush1.msra.mxu0 0.0
      %992 = vmatprep.subr.mxu0 0.0
      %993 = vmatpush1.msra.mxu0 0.0
      %994 = vmatprep.subr.mxu0 0.0
      %995 = vmatpush1.msra.mxu0 0.0
      %996 = vmatprep.subr.mxu0 0.0
      %997 = vmatpush1.msra.mxu0 0.0
      %998 = vmatprep.subr.mxu0 0.0
      %999 = vmatpush1.msra.mxu0 0.0
      %1000 = vmatprep.subr.mxu0 0.0
      %1001 = vmatpush1.msra.mxu0 0.0
      %1002 = vmatprep.subr.mxu0 0.0
      %1003 = vmatpush1.msra.mxu0 0.0
      %1004 = vmatprep.subr.mxu0 0.0
      %1005 = vmatpush1.msra.mxu0 0.0
      %1006 = vmatprep.subr.mxu0 0.0
      %1007 = vmatpush1.msra.mxu0 0.0
      %1008 = vmatprep.subr.mxu0 0.0
      %1009 = vmatpush1.msra.mxu0 0.0
      %1010 = vmatprep.subr.mxu0 0.0
      %1011 = vmatpush1.msra.mxu0 0.0
      %1012 = vmatprep.subr.mxu0 0.0
      %1013 = vmatpush1.msra.mxu0 0.0
      %1014 = vmatprep.subr.mxu0 0.0
      %1015 = vmatpush1.msra.mxu0 0.0
      %1016 = vmatprep.subr.mxu0 0.0
      %1017 = vmatpush1.msra.mxu0 %v891
      %1018 = vmatprep.subr.mxu0 0.0
      %1019 = vmatpush1.msra.mxu0 %v890
      %1020 = vmatprep.subr.mxu0 0.0
      %1021 = vmatpush2.msra.mxu0 0.0
      %1022 = vmatprep.subr.mxu0 0.0
      %1023 = vmatpush2.msra.mxu0 0.0
      %1024 = vmatprep.subr.mxu0 0.0
      %1025 = vmatpush2.msra.mxu0 0.0
      %1026 = vmatprep.subr.mxu0 0.0
      %1027 = vmatpush2.msra.mxu0 0.0
      %1028 = vmatprep.subr.mxu0 0.0
      %1029 = vmatpush2.msra.mxu0 0.0
      %1030 = vmatprep.subr.mxu0 0.0
      %1031 = vmatpush2.msra.mxu0 0.0
      %1032 = vmatprep.subr.mxu0 0.0
      %1033 = vmatpush2.msra.mxu0 0.0
      %1034 = vmatprep.subr.mxu0 0.0
      %1035 = vmatpush2.msra.mxu0 0.0
      %1036 = vmatprep.subr.mxu0 0.0
      %1037 = vmatpush2.msra.mxu0 0.0
      %1038 = vmatprep.subr.mxu0 0.0
      %1039 = vmatpush2.msra.mxu0 0.0
      %1040 = vmatprep.subr.mxu0 0.0
      %1041 = vmatpush2.msra.mxu0 0.0
      %1042 = vmatprep.subr.mxu0 0.0
      %1043 = vmatpush2.msra.mxu0 0.0
      %1044 = vmatprep.subr.mxu0 0.0
      %1045 = vmatpush2.msra.mxu0 0.0
      %1046 = vmatprep.subr.mxu0 0.0
      %1047 = vmatpush2.msra.mxu0 0.0
      %1048 = vmatprep.subr.mxu0 0.0
      %1049 = vmatpush2.msra.mxu0 0.0
      %1050 = vmatprep.subr.mxu0 0.0
      %1051 = vmatpush2.msra.mxu0 0.0
      %1052 = vmatprep.mubr.f32.mxu0 0.0
      %1053 = vmatmul.mubr.f32.gmra.mxu0 %v893
      %v1054 = vpop.f32.mrf.mxu0
      %v1055 = vadd.f32 0.0, %v1054
      %v1056 = vpop.f32.mrf.mxu0
      %1057 = vmatprep.mubr.f32.mxu0 0.0
      %1058 = vmatmul.mubr.f32.gmra.mxu0 %v896
      %v1059 = vpop.f32.mrf.mxu0
      %v1060 = vadd.f32 0.0, %v1059
      %v1061 = vpop.f32.mrf.mxu0
      %1062 = vmatprep.mubr.f32.mxu0 0.0
      %1063 = vmatmul.mubr.f32.gmra.mxu0 %v899
      %v1064 = vpop.f32.mrf.mxu0
      %v1065 = vadd.f32 0.0, %v1064
      %v1066 = vpop.f32.mrf.mxu0
      %1067 = vmatprep.mubr.f32.mxu0 0.0
      %1068 = vmatmul.mubr.f32.gmra.mxu0 %v902
      %v1069 = vpop.f32.mrf.mxu0
      %v1070 = vadd.f32 0.0, %v1069
      %v1071 = vpop.f32.mrf.mxu0
      %1072 = vmatprep.mubr.f32.mxu0 0.0
      %1073 = vmatmul.mubr.f32.gmra.mxu0 %v905
      %v1074 = vpop.f32.mrf.mxu0
      %v1075 = vadd.f32 0.0, %v1074
      %v1076 = vpop.f32.mrf.mxu0
      %1077 = vmatprep.mubr.f32.mxu0 0.0
      %1078 = vmatmul.mubr.f32.gmra.mxu0 %v908
      %v1079 = vpop.f32.mrf.mxu0
      %v1080 = vadd.f32 0.0, %v1079
      %v1081 = vpop.f32.mrf.mxu0
      %1082 = vmatprep.mubr.f32.mxu0 0.0
      %1083 = vmatmul.mubr.f32.gmra.mxu0 %v911
      %v1084 = vpop.f32.mrf.mxu0
      %v1085 = vadd.f32 0.0, %v1084
      %v1086 = vpop.f32.mrf.mxu0
      %1087 = vmatprep.mubr.f32.mxu0 0.0
      %1088 = vmatmul.mubr.f32.gmra.mxu0 %v914
      %v1089 = vpop.f32.mrf.mxu0
      %v1090 = vadd.f32 0.0, %v1089
      %v1091 = vpop.f32.mrf.mxu0
      %1092 = vmatprep.mubr.f32.mxu0 0.0
      %1093 = vmatmul.mubr.f32.gmra.mxu0 %v917
      %v1094 = vpop.f32.mrf.mxu0
      %v1095 = vadd.f32 0.0, %v1094
      %v1096 = vpop.f32.mrf.mxu0
      %1097 = vmatprep.mubr.f32.mxu0 0.0
      %1098 = vmatmul.mubr.f32.gmra.mxu0 %v920
      %v1099 = vpop.f32.mrf.mxu0
      %v1100 = vadd.f32 0.0, %v1099
      %v1101 = vpop.f32.mrf.mxu0
      %1102 = vmatprep.mubr.f32.mxu0 0.0
      %1103 = vmatmul.mubr.f32.gmra.mxu0 %v923
      %v1104 = vpop.f32.mrf.mxu0
      %v1105 = vadd.f32 0.0, %v1104
      %v1106 = vpop.f32.mrf.mxu0
      %1107 = vmatprep.mubr.f32.mxu0 0.0
      %1108 = vmatmul.mubr.f32.gmra.mxu0 %v926
      %v1109 = vpop.f32.mrf.mxu0
      %v1110 = vadd.f32 0.0, %v1109
      %v1111 = vpop.f32.mrf.mxu0
      %1112 = vmatprep.mubr.f32.mxu0 0.0
      %1113 = vmatmul.mubr.f32.gmra.mxu0 %v929
      %v1114 = vpop.f32.mrf.mxu0
      %v1115 = vadd.f32 0.0, %v1114
      %v1116 = vpop.f32.mrf.mxu0
      %1117 = vmatprep.mubr.f32.mxu0 0.0
      %1118 = vmatmul.mubr.f32.gmra.mxu0 %v932
      %v1119 = vpop.f32.mrf.mxu0
      %v1120 = vadd.f32 0.0, %v1119
      %v1121 = vpop.f32.mrf.mxu0
      %1122 = vmatprep.mubr.f32.mxu0 0.0
      %1123 = vmatmul.mubr.f32.gmra.mxu0 %v935
      %v1124 = vpop.f32.mrf.mxu0
      %v1125 = vadd.f32 0.0, %v1124
      %v1126 = vpop.f32.mrf.mxu0
      %1127 = vmatprep.mubr.f32.mxu0 0.0
      %1128 = vmatmul.mubr.f32.gmra.mxu0 %v938
      %v1129 = vpop.f32.mrf.mxu0
      %v1130 = vadd.f32 0.0, %v1129
      %v1131 = vpop.f32.mrf.mxu0
      %1132 = vmatprep.mubr.f32.mxu0 0.0
      %1133 = vmatmul.mubr.f32.gmra.mxu0 %v941
      %v1134 = vpop.f32.mrf.mxu0
      %v1135 = vadd.f32 0.0, %v1134
      %v1136 = vpop.f32.mrf.mxu0
      %1137 = vmatprep.mubr.f32.mxu0 0.0
      %1138 = vmatmul.mubr.f32.gmra.mxu0 %v944
      %v1139 = vpop.f32.mrf.mxu0
      %v1140 = vadd.f32 0.0, %v1139
      %v1141 = vpop.f32.mrf.mxu0
      %1142 = vmatprep.mubr.f32.mxu0 0.0
      %1143 = vmatmul.mubr.f32.gmra.mxu0 %v947
      %v1144 = vpop.f32.mrf.mxu0
      %v1145 = vadd.f32 0.0, %v1144
      %v1146 = vpop.f32.mrf.mxu0
      %1147 = vmatprep.mubr.f32.mxu0 0.0
      %1148 = vmatmul.mubr.f32.gmra.mxu0 %v950
      %v1149 = vpop.f32.mrf.mxu0
      %v1150 = vadd.f32 0.0, %v1149
      %v1151 = vpop.f32.mrf.mxu0
      %1152 = vmatprep.mubr.f32.mxu0 0.0
      %1153 = vmatmul.mubr.f32.gmra.mxu0 %v953
      %v1154 = vpop.f32.mrf.mxu0
      %v1155 = vadd.f32 0.0, %v1154
      %v1156 = vpop.f32.mrf.mxu0
      %1157 = vmatprep.mubr.f32.mxu0 0.0
      %1158 = vmatmul.mubr.f32.gmra.mxu0 %v956
      %v1159 = vpop.f32.mrf.mxu0
      %v1160 = vadd.f32 0.0, %v1159
      %v1161 = vpop.f32.mrf.mxu0
      %1162 = vmatprep.mubr.f32.mxu0 0.0
      %1163 = vmatmul.mubr.f32.gmra.mxu0 %v959
      %v1164 = vpop.f32.mrf.mxu0
      %v1165 = vadd.f32 0.0, %v1164
      %v1166 = vpop.f32.mrf.mxu0
      %1167 = vmatprep.mubr.f32.mxu0 0.0
      %1168 = vmatmul.mubr.f32.gmra.mxu0 %v962
      %v1169 = vpop.f32.mrf.mxu0
      %v1170 = vadd.f32 0.0, %v1169
      %v1171 = vpop.f32.mrf.mxu0
      %1172 = vmatprep.mubr.f32.mxu0 0.0
      %1173 = vmatmul.mubr.f32.gmra.mxu0 %v965
      %v1174 = vpop.f32.mrf.mxu0
      %v1175 = vadd.f32 0.0, %v1174
      %v1176 = vpop.f32.mrf.mxu0
      %1177 = vmatprep.mubr.f32.mxu0 0.0
      %1178 = vmatmul.mubr.f32.gmra.mxu0 %v968
      %v1179 = vpop.f32.mrf.mxu0
      %v1180 = vadd.f32 0.0, %v1179
      %v1181 = vpop.f32.mrf.mxu0
      %1182 = vmatprep.mubr.f32.mxu0 0.0
      %1183 = vmatmul.mubr.f32.gmra.mxu0 %v971
      %v1184 = vpop.f32.mrf.mxu0
      %v1185 = vadd.f32 0.0, %v1184
      %v1186 = vpop.f32.mrf.mxu0
      %1187 = vmatprep.mubr.f32.mxu0 0.0
      %1188 = vmatmul.mubr.f32.gmra.mxu0 %v974
      %v1189 = vpop.f32.mrf.mxu0
      %v1190 = vadd.f32 0.0, %v1189
      %v1191 = vpop.f32.mrf.mxu0
      %1192 = vmatprep.mubr.f32.mxu0 0.0
      %1193 = vmatmul.mubr.f32.gmra.mxu0 %v977
      %v1194 = vpop.f32.mrf.mxu0
      %v1195 = vadd.f32 0.0, %v1194
      %v1196 = vpop.f32.mrf.mxu0
      %1197 = vmatprep.mubr.f32.mxu0 0.0
      %1198 = vmatmul.mubr.f32.gmra.mxu0 %v980
      %v1199 = vpop.f32.mrf.mxu0
      %v1200 = vadd.f32 0.0, %v1199
      %v1201 = vpop.f32.mrf.mxu0
      %1202 = vmatprep.mubr.f32.mxu0 0.0
      %1203 = vmatmul.mubr.f32.gmra.mxu0 %v983
      %v1204 = vpop.f32.mrf.mxu0
      %v1205 = vadd.f32 0.0, %v1204
      %v1206 = vpop.f32.mrf.mxu0
      %1207 = vmatprep.mubr.f32.mxu0 0.0
      %1208 = vmatmul.mubr.f32.gmra.mxu0 %v986
      %v1209 = vpop.f32.mrf.mxu0
      %v1210 = vadd.f32 0.0, %v1209
      %v1211 = vpop.f32.mrf.mxu0
      %1212 = vdwg.mxu0
      %vm1213 = vcmask 261120
      %1214 = vst.msk [vmem:[%s376] sm:$0xff] %vm1213, %v700
      %1215 = vst.msk [vmem:[%s376 + $0x8] sm:$0xff] %vm1213, %v705
      %1216 = vst.msk [vmem:[%s376 + $0x10] sm:$0xff] %vm1213, %v710
      %1217 = vst.msk [vmem:[%s376 + $0x18] sm:$0xff] %vm1213, %v715
      %1218 = vst.msk [vmem:[%s376 + $0x20] sm:$0xff] %vm1213, %v720
      %1219 = vst.msk [vmem:[%s376 + $0x28] sm:$0xff] %vm1213, %v725
      %1220 = vst.msk [vmem:[%s376 + $0x30] sm:$0xff] %vm1213, %v730
      %1221 = vst.msk [vmem:[%s376 + $0x38] sm:$0xff] %vm1213, %v735
      %1222 = vst.msk [vmem:[%s376 + $0x40] sm:$0xff] %vm1213, %v740
      %1223 = vst.msk [vmem:[%s376 + $0x48] sm:$0xff] %vm1213, %v745
      %1224 = vst.msk [vmem:[%s376 + $0x50] sm:$0xff] %vm1213, %v750
      %1225 = vst.msk [vmem:[%s376 + $0x58] sm:$0xff] %vm1213, %v755
      %1226 = vst.msk [vmem:[%s376 + $0x60] sm:$0xff] %vm1213, %v760
      %1227 = vst.msk [vmem:[%s376 + $0x68] sm:$0xff] %vm1213, %v765
      %1228 = vst.msk [vmem:[%s376 + $0x70] sm:$0xff] %vm1213, %v770
      %1229 = vst.msk [vmem:[%s376 + $0x78] sm:$0xff] %vm1213, %v775
      %1230 = vst.msk [vmem:[%s376 + $0x80] sm:$0xff] %vm1213, %v780
      %1231 = vst.msk [vmem:[%s376 + $0x88] sm:$0xff] %vm1213, %v785
      %1232 = vst.msk [vmem:[%s376 + $0x90] sm:$0xff] %vm1213, %v790
      %1233 = vst.msk [vmem:[%s376 + $0x98] sm:$0xff] %vm1213, %v795
      %1234 = vst.msk [vmem:[%s376 + $0xa0] sm:$0xff] %vm1213, %v800
      %1235 = vst.msk [vmem:[%s376 + $0xa8] sm:$0xff] %vm1213, %v805
      %1236 = vst.msk [vmem:[%s376 + $0xb0] sm:$0xff] %vm1213, %v810
      %1237 = vst.msk [vmem:[%s376 + $0xb8] sm:$0xff] %vm1213, %v815
      %1238 = vst.msk [vmem:[%s376 + $0xc0] sm:$0xff] %vm1213, %v820
      %1239 = vst.msk [vmem:[%s376 + $0xc8] sm:$0xff] %vm1213, %v825
      %1240 = vst.msk [vmem:[%s376 + $0xd0] sm:$0xff] %vm1213, %v830
      %1241 = vst.msk [vmem:[%s376 + $0xd8] sm:$0xff] %vm1213, %v835
      %1242 = vst.msk [vmem:[%s376 + $0xe0] sm:$0xff] %vm1213, %v840
      %1243 = vst.msk [vmem:[%s376 + $0xe8] sm:$0xff] %vm1213, %v845
      %1244 = vst.msk [vmem:[%s376 + $0xf0] sm:$0xff] %vm1213, %v850
      %1245 = vst.msk [vmem:[%s376 + $0xf8] sm:$0xff] %vm1213, %v855
      %1246 = vst.msk [vmem:[%s382] sm:$0xff] %vm1213, %v1055
      %1247 = vst.msk [vmem:[%s382 + $0x8] sm:$0xff] %vm1213, %v1060
      %1248 = vst.msk [vmem:[%s382 + $0x10] sm:$0xff] %vm1213, %v1065
      %1249 = vst.msk [vmem:[%s382 + $0x18] sm:$0xff] %vm1213, %v1070
      %1250 = vst.msk [vmem:[%s382 + $0x20] sm:$0xff] %vm1213, %v1075
      %1251 = vst.msk [vmem:[%s382 + $0x28] sm:$0xff] %vm1213, %v1080
      %1252 = vst.msk [vmem:[%s382 + $0x30] sm:$0xff] %vm1213, %v1085
      %1253 = vst.msk [vmem:[%s382 + $0x38] sm:$0xff] %vm1213, %v1090
      %1254 = vst.msk [vmem:[%s382 + $0x40] sm:$0xff] %vm1213, %v1095
      %1255 = vst.msk [vmem:[%s382 + $0x48] sm:$0xff] %vm1213, %v1100
      %1256 = vst.msk [vmem:[%s382 + $0x50] sm:$0xff] %vm1213, %v1105
      %1257 = vst.msk [vmem:[%s382 + $0x58] sm:$0xff] %vm1213, %v1110
      %1258 = vst.msk [vmem:[%s382 + $0x60] sm:$0xff] %vm1213, %v1115
      %1259 = vst.msk [vmem:[%s382 + $0x68] sm:$0xff] %vm1213, %v1120
      %1260 = vst.msk [vmem:[%s382 + $0x70] sm:$0xff] %vm1213, %v1125
      %1261 = vst.msk [vmem:[%s382 + $0x78] sm:$0xff] %vm1213, %v1130
      %1262 = vst.msk [vmem:[%s382 + $0x80] sm:$0xff] %vm1213, %v1135
      %1263 = vst.msk [vmem:[%s382 + $0x88] sm:$0xff] %vm1213, %v1140
      %1264 = vst.msk [vmem:[%s382 + $0x90] sm:$0xff] %vm1213, %v1145
      %1265 = vst.msk [vmem:[%s382 + $0x98] sm:$0xff] %vm1213, %v1150
      %1266 = vst.msk [vmem:[%s382 + $0xa0] sm:$0xff] %vm1213, %v1155
      %1267 = vst.msk [vmem:[%s382 + $0xa8] sm:$0xff] %vm1213, %v1160
      %1268 = vst.msk [vmem:[%s382 + $0xb0] sm:$0xff] %vm1213, %v1165
      %1269 = vst.msk [vmem:[%s382 + $0xb8] sm:$0xff] %vm1213, %v1170
      %1270 = vst.msk [vmem:[%s382 + $0xc0] sm:$0xff] %vm1213, %v1175
      %1271 = vst.msk [vmem:[%s382 + $0xc8] sm:$0xff] %vm1213, %v1180
      %1272 = vst.msk [vmem:[%s382 + $0xd0] sm:$0xff] %vm1213, %v1185
      %1273 = vst.msk [vmem:[%s382 + $0xd8] sm:$0xff] %vm1213, %v1190
      %1274 = vst.msk [vmem:[%s382 + $0xe0] sm:$0xff] %vm1213, %v1195
      %1275 = vst.msk [vmem:[%s382 + $0xe8] sm:$0xff] %vm1213, %v1200
      %1276 = vst.msk [vmem:[%s382 + $0xf0] sm:$0xff] %vm1213, %v1205
      %1277 = vst.msk [vmem:[%s382 + $0xf8] sm:$0xff] %vm1213, %v1210
      %v1278 = vsel %vm1213, %v700, 0.0
      %v1279 = vsel %vm1213, %v705, 0.0
      %v1280 = vadd.f32 %v1278, %v1279
      %v1281 = vsel %vm1213, %v710, 0.0
      %v1282 = vadd.f32 %v1280, %v1281
      %v1283 = vsel %vm1213, %v715, 0.0
      %v1284 = vadd.f32 %v1282, %v1283
      %v1285 = vsel %vm1213, %v720, 0.0
      %v1286 = vadd.f32 %v1284, %v1285
      %v1287 = vsel %vm1213, %v725, 0.0
      %v1288 = vadd.f32 %v1286, %v1287
      %v1289 = vsel %vm1213, %v730, 0.0
      %v1290 = vadd.f32 %v1288, %v1289
      %v1291 = vsel %vm1213, %v735, 0.0
      %v1292 = vadd.f32 %v1290, %v1291
      %v1293 = vsel %vm1213, %v740, 0.0
      %v1294 = vadd.f32 %v1292, %v1293
      %v1295 = vsel %vm1213, %v745, 0.0
      %v1296 = vadd.f32 %v1294, %v1295
      %v1297 = vsel %vm1213, %v750, 0.0
      %v1298 = vadd.f32 %v1296, %v1297
      %v1299 = vsel %vm1213, %v755, 0.0
      %v1300 = vadd.f32 %v1298, %v1299
      %v1301 = vsel %vm1213, %v760, 0.0
      %v1302 = vadd.f32 %v1300, %v1301
      %v1303 = vsel %vm1213, %v765, 0.0
      %v1304 = vadd.f32 %v1302, %v1303
      %v1305 = vsel %vm1213, %v770, 0.0
      %v1306 = vadd.f32 %v1304, %v1305
      %v1307 = vsel %vm1213, %v775, 0.0
      %v1308 = vadd.f32 %v1306, %v1307
      %v1309 = vsel %vm1213, %v780, 0.0
      %v1310 = vadd.f32 %v1308, %v1309
      %v1311 = vsel %vm1213, %v785, 0.0
      %v1312 = vadd.f32 %v1310, %v1311
      %v1313 = vsel %vm1213, %v790, 0.0
      %v1314 = vadd.f32 %v1312, %v1313
      %v1315 = vsel %vm1213, %v795, 0.0
      %v1316 = vadd.f32 %v1314, %v1315
      %v1317 = vsel %vm1213, %v800, 0.0
      %v1318 = vadd.f32 %v1316, %v1317
      %v1319 = vsel %vm1213, %v805, 0.0
      %v1320 = vadd.f32 %v1318, %v1319
      %v1321 = vsel %vm1213, %v810, 0.0
      %v1322 = vadd.f32 %v1320, %v1321
      %v1323 = vsel %vm1213, %v815, 0.0
      %v1324 = vadd.f32 %v1322, %v1323
      %v1325 = vsel %vm1213, %v820, 0.0
      %v1326 = vadd.f32 %v1324, %v1325
      %v1327 = vsel %vm1213, %v825, 0.0
      %v1328 = vadd.f32 %v1326, %v1327
      %v1329 = vsel %vm1213, %v830, 0.0
      %v1330 = vadd.f32 %v1328, %v1329
      %v1331 = vsel %vm1213, %v835, 0.0
      %v1332 = vadd.f32 %v1330, %v1331
      %v1333 = vsel %vm1213, %v840, 0.0
      %v1334 = vadd.f32 %v1332, %v1333
      %v1335 = vsel %vm1213, %v845, 0.0
      %v1336 = vadd.f32 %v1334, %v1335
      %v1337 = vsel %vm1213, %v850, 0.0
      %v1338 = vadd.f32 %v1336, %v1337
      %v1339 = vsel %vm1213, %v855, 0.0
      %v1340 = vadd.f32 %v1338, %v1339
      %v1341 = vrot.slane %v1340, 4
      %v1342 = vadd.f32 %v1340, %v1341
      %v1343 = vrot.slane %v1342, 2
      %v1344 = vadd.f32 %v1342, %v1343
      %v1345 = vrot.slane %v1344, 1
      %v1346 = vadd.f32 %v1344, %v1345
      %vm1347 = vcmask 253952
      %1348 = vst.msk [vmem:[%s387] sm:$0x1] %vm1347, %v1346
      %v1349 = vmul.f32 %v700, %v700
      %v1350 = vmul.f32 %v705, %v705
      %v1351 = vmul.f32 %v710, %v710
      %v1352 = vmul.f32 %v715, %v715
      %v1353 = vmul.f32 %v720, %v720
      %v1354 = vmul.f32 %v725, %v725
      %v1355 = vmul.f32 %v730, %v730
      %v1356 = vmul.f32 %v735, %v735
      %v1357 = vmul.f32 %v740, %v740
      %v1358 = vmul.f32 %v745, %v745
      %v1359 = vmul.f32 %v750, %v750
      %v1360 = vmul.f32 %v755, %v755
      %v1361 = vmul.f32 %v760, %v760
      %v1362 = vmul.f32 %v765, %v765
      %v1363 = vmul.f32 %v770, %v770
      %v1364 = vmul.f32 %v775, %v775
      %v1365 = vmul.f32 %v780, %v780
      %v1366 = vmul.f32 %v785, %v785
      %v1367 = vmul.f32 %v790, %v790
      %v1368 = vmul.f32 %v795, %v795
      %v1369 = vmul.f32 %v800, %v800
      %v1370 = vmul.f32 %v805, %v805
      %v1371 = vmul.f32 %v810, %v810
      %v1372 = vmul.f32 %v815, %v815
      %v1373 = vmul.f32 %v820, %v820
      %v1374 = vmul.f32 %v825, %v825
      %v1375 = vmul.f32 %v830, %v830
      %v1376 = vmul.f32 %v835, %v835
      %v1377 = vmul.f32 %v840, %v840
      %v1378 = vmul.f32 %v845, %v845
      %v1379 = vmul.f32 %v850, %v850
      %v1380 = vmul.f32 %v855, %v855
      %v1381 = vsel %vm1213, %v1349, 0.0
      %v1382 = vsel %vm1213, %v1350, 0.0
      %v1383 = vadd.f32 %v1381, %v1382
      %v1384 = vsel %vm1213, %v1351, 0.0
      %v1385 = vadd.f32 %v1383, %v1384
      %v1386 = vsel %vm1213, %v1352, 0.0
      %v1387 = vadd.f32 %v1385, %v1386
      %v1388 = vsel %vm1213, %v1353, 0.0
      %v1389 = vadd.f32 %v1387, %v1388
      %v1390 = vsel %vm1213, %v1354, 0.0
      %v1391 = vadd.f32 %v1389, %v1390
      %v1392 = vsel %vm1213, %v1355, 0.0
      %v1393 = vadd.f32 %v1391, %v1392
      %v1394 = vsel %vm1213, %v1356, 0.0
      %v1395 = vadd.f32 %v1393, %v1394
      %v1396 = vsel %vm1213, %v1357, 0.0
      %v1397 = vadd.f32 %v1395, %v1396
      %v1398 = vsel %vm1213, %v1358, 0.0
      %v1399 = vadd.f32 %v1397, %v1398
      %v1400 = vsel %vm1213, %v1359, 0.0
      %v1401 = vadd.f32 %v1399, %v1400
      %v1402 = vsel %vm1213, %v1360, 0.0
      %v1403 = vadd.f32 %v1401, %v1402
      %v1404 = vsel %vm1213, %v1361, 0.0
      %v1405 = vadd.f32 %v1403, %v1404
      %v1406 = vsel %vm1213, %v1362, 0.0
      %v1407 = vadd.f32 %v1405, %v1406
      %v1408 = vsel %vm1213, %v1363, 0.0
      %v1409 = vadd.f32 %v1407, %v1408
      %v1410 = vsel %vm1213, %v1364, 0.0
      %v1411 = vadd.f32 %v1409, %v1410
      %v1412 = vsel %vm1213, %v1365, 0.0
      %v1413 = vadd.f32 %v1411, %v1412
      %v1414 = vsel %vm1213, %v1366, 0.0
      %v1415 = vadd.f32 %v1413, %v1414
      %v1416 = vsel %vm1213, %v1367, 0.0
      %v1417 = vadd.f32 %v1415, %v1416
      %v1418 = vsel %vm1213, %v1368, 0.0
      %v1419 = vadd.f32 %v1417, %v1418
      %v1420 = vsel %vm1213, %v1369, 0.0
      %v1421 = vadd.f32 %v1419, %v1420
      %v1422 = vsel %vm1213, %v1370, 0.0
      %v1423 = vadd.f32 %v1421, %v1422
      %v1424 = vsel %vm1213, %v1371, 0.0
      %v1425 = vadd.f32 %v1423, %v1424
      %v1426 = vsel %vm1213, %v1372, 0.0
      %v1427 = vadd.f32 %v1425, %v1426
      %v1428 = vsel %vm1213, %v1373, 0.0
      %v1429 = vadd.f32 %v1427, %v1428
      %v1430 = vsel %vm1213, %v1374, 0.0
      %v1431 = vadd.f32 %v1429, %v1430
      %v1432 = vsel %vm1213, %v1375, 0.0
      %v1433 = vadd.f32 %v1431, %v1432
      %v1434 = vsel %vm1213, %v1376, 0.0
      %v1435 = vadd.f32 %v1433, %v1434
      %v1436 = vsel %vm1213, %v1377, 0.0
      %v1437 = vadd.f32 %v1435, %v1436
      %v1438 = vsel %vm1213, %v1378, 0.0
      %v1439 = vadd.f32 %v1437, %v1438
      %v1440 = vsel %vm1213, %v1379, 0.0
      %v1441 = vadd.f32 %v1439, %v1440
      %v1442 = vsel %vm1213, %v1380, 0.0
      %v1443 = vadd.f32 %v1441, %v1442
      %v1444 = vrot.slane %v1443, 4
      %v1445 = vadd.f32 %v1443, %v1444
      %v1446 = vrot.slane %v1445, 2
      %v1447 = vadd.f32 %v1445, %v1446
      %v1448 = vrot.slane %v1447, 1
      %v1449 = vadd.f32 %v1447, %v1448
      %1450 = vst.msk [vmem:[%s387 + $0x1] sm:$0x1] %vm1347, %v1449
      %v1451 = vsel %vm1213, %v1055, 0.0
      %v1452 = vsel %vm1213, %v1060, 0.0
      %v1453 = vadd.f32 %v1451, %v1452
      %v1454 = vsel %vm1213, %v1065, 0.0
      %v1455 = vadd.f32 %v1453, %v1454
      %v1456 = vsel %vm1213, %v1070, 0.0
      %v1457 = vadd.f32 %v1455, %v1456
      %v1458 = vsel %vm1213, %v1075, 0.0
      %v1459 = vadd.f32 %v1457, %v1458
      %v1460 = vsel %vm1213, %v1080, 0.0
      %v1461 = vadd.f32 %v1459, %v1460
      %v1462 = vsel %vm1213, %v1085, 0.0
      %v1463 = vadd.f32 %v1461, %v1462
      %v1464 = vsel %vm1213, %v1090, 0.0
      %v1465 = vadd.f32 %v1463, %v1464
      %v1466 = vsel %vm1213, %v1095, 0.0
      %v1467 = vadd.f32 %v1465, %v1466
      %v1468 = vsel %vm1213, %v1100, 0.0
      %v1469 = vadd.f32 %v1467, %v1468
      %v1470 = vsel %vm1213, %v1105, 0.0
      %v1471 = vadd.f32 %v1469, %v1470
      %v1472 = vsel %vm1213, %v1110, 0.0
      %v1473 = vadd.f32 %v1471, %v1472
      %v1474 = vsel %vm1213, %v1115, 0.0
      %v1475 = vadd.f32 %v1473, %v1474
      %v1476 = vsel %vm1213, %v1120, 0.0
      %v1477 = vadd.f32 %v1475, %v1476
      %v1478 = vsel %vm1213, %v1125, 0.0
      %v1479 = vadd.f32 %v1477, %v1478
      %v1480 = vsel %vm1213, %v1130, 0.0
      %v1481 = vadd.f32 %v1479, %v1480
      %v1482 = vsel %vm1213, %v1135, 0.0
      %v1483 = vadd.f32 %v1481, %v1482
      %v1484 = vsel %vm1213, %v1140, 0.0
      %v1485 = vadd.f32 %v1483, %v1484
      %v1486 = vsel %vm1213, %v1145, 0.0
      %v1487 = vadd.f32 %v1485, %v1486
      %v1488 = vsel %vm1213, %v1150, 0.0
      %v1489 = vadd.f32 %v1487, %v1488
      %v1490 = vsel %vm1213, %v1155, 0.0
      %v1491 = vadd.f32 %v1489, %v1490
      %v1492 = vsel %vm1213, %v1160, 0.0
      %v1493 = vadd.f32 %v1491, %v1492
      %v1494 = vsel %vm1213, %v1165, 0.0
      %v1495 = vadd.f32 %v1493, %v1494
      %v1496 = vsel %vm1213, %v1170, 0.0
      %v1497 = vadd.f32 %v1495, %v1496
      %v1498 = vsel %vm1213, %v1175, 0.0
      %v1499 = vadd.f32 %v1497, %v1498
      %v1500 = vsel %vm1213, %v1180, 0.0
      %v1501 = vadd.f32 %v1499, %v1500
      %v1502 = vsel %vm1213, %v1185, 0.0
      %v1503 = vadd.f32 %v1501, %v1502
      %v1504 = vsel %vm1213, %v1190, 0.0
      %v1505 = vadd.f32 %v1503, %v1504
      %v1506 = vsel %vm1213, %v1195, 0.0
      %v1507 = vadd.f32 %v1505, %v1506
      %v1508 = vsel %vm1213, %v1200, 0.0
      %v1509 = vadd.f32 %v1507, %v1508
      %v1510 = vsel %vm1213, %v1205, 0.0
      %v1511 = vadd.f32 %v1509, %v1510
      %v1512 = vsel %vm1213, %v1210, 0.0
      %v1513 = vadd.f32 %v1511, %v1512
      %v1514 = vrot.slane %v1513, 4
      %v1515 = vadd.f32 %v1513, %v1514
      %v1516 = vrot.slane %v1515, 2
      %v1517 = vadd.f32 %v1515, %v1516
      %v1518 = vrot.slane %v1517, 1
      %v1519 = vadd.f32 %v1517, %v1518
      %1520 = vst.msk [vmem:[%s391] sm:$0x1] %vm1347, %v1519
      %v1521 = vmul.f32 %v1055, %v1055
      %v1522 = vmul.f32 %v1060, %v1060
      %v1523 = vmul.f32 %v1065, %v1065
      %v1524 = vmul.f32 %v1070, %v1070
      %v1525 = vmul.f32 %v1075, %v1075
      %v1526 = vmul.f32 %v1080, %v1080
      %v1527 = vmul.f32 %v1085, %v1085
      %v1528 = vmul.f32 %v1090, %v1090
      %v1529 = vmul.f32 %v1095, %v1095
      %v1530 = vmul.f32 %v1100, %v1100
      %v1531 = vmul.f32 %v1105, %v1105
      %v1532 = vmul.f32 %v1110, %v1110
      %v1533 = vmul.f32 %v1115, %v1115
      %v1534 = vmul.f32 %v1120, %v1120
      %v1535 = vmul.f32 %v1125, %v1125
      %v1536 = vmul.f32 %v1130, %v1130
      %v1537 = vmul.f32 %v1135, %v1135
      %v1538 = vmul.f32 %v1140, %v1140
      %v1539 = vmul.f32 %v1145, %v1145
      %v1540 = vmul.f32 %v1150, %v1150
      %v1541 = vmul.f32 %v1155, %v1155
      %v1542 = vmul.f32 %v1160, %v1160
      %v1543 = vmul.f32 %v1165, %v1165
      %v1544 = vmul.f32 %v1170, %v1170
      %v1545 = vmul.f32 %v1175, %v1175
      %v1546 = vmul.f32 %v1180, %v1180
      %v1547 = vmul.f32 %v1185, %v1185
      %v1548 = vmul.f32 %v1190, %v1190
      %v1549 = vmul.f32 %v1195, %v1195
      %v1550 = vmul.f32 %v1200, %v1200
      %v1551 = vmul.f32 %v1205, %v1205
      %v1552 = vmul.f32 %v1210, %v1210
      %v1553 = vsel %vm1213, %v1521, 0.0
      %v1554 = vsel %vm1213, %v1522, 0.0
      %v1555 = vadd.f32 %v1553, %v1554
      %v1556 = vsel %vm1213, %v1523, 0.0
      %v1557 = vadd.f32 %v1555, %v1556
      %v1558 = vsel %vm1213, %v1524, 0.0
      %v1559 = vadd.f32 %v1557, %v1558
      %v1560 = vsel %vm1213, %v1525, 0.0
      %v1561 = vadd.f32 %v1559, %v1560
      %v1562 = vsel %vm1213, %v1526, 0.0
      %v1563 = vadd.f32 %v1561, %v1562
      %v1564 = vsel %vm1213, %v1527, 0.0
      %v1565 = vadd.f32 %v1563, %v1564
      %v1566 = vsel %vm1213, %v1528, 0.0
      %v1567 = vadd.f32 %v1565, %v1566
      %v1568 = vsel %vm1213, %v1529, 0.0
      %v1569 = vadd.f32 %v1567, %v1568
      %v1570 = vsel %vm1213, %v1530, 0.0
      %v1571 = vadd.f32 %v1569, %v1570
      %v1572 = vsel %vm1213, %v1531, 0.0
      %v1573 = vadd.f32 %v1571, %v1572
      %v1574 = vsel %vm1213, %v1532, 0.0
      %v1575 = vadd.f32 %v1573, %v1574
      %v1576 = vsel %vm1213, %v1533, 0.0
      %v1577 = vadd.f32 %v1575, %v1576
      %v1578 = vsel %vm1213, %v1534, 0.0
      %v1579 = vadd.f32 %v1577, %v1578
      %v1580 = vsel %vm1213, %v1535, 0.0
      %v1581 = vadd.f32 %v1579, %v1580
      %v1582 = vsel %vm1213, %v1536, 0.0
      %v1583 = vadd.f32 %v1581, %v1582
      %v1584 = vsel %vm1213, %v1537, 0.0
      %v1585 = vadd.f32 %v1583, %v1584
      %v1586 = vsel %vm1213, %v1538, 0.0
      %v1587 = vadd.f32 %v1585, %v1586
      %v1588 = vsel %vm1213, %v1539, 0.0
      %v1589 = vadd.f32 %v1587, %v1588
      %v1590 = vsel %vm1213, %v1540, 0.0
      %v1591 = vadd.f32 %v1589, %v1590
      %v1592 = vsel %vm1213, %v1541, 0.0
      %v1593 = vadd.f32 %v1591, %v1592
      %v1594 = vsel %vm1213, %v1542, 0.0
      %v1595 = vadd.f32 %v1593, %v1594
      %v1596 = vsel %vm1213, %v1543, 0.0
      %v1597 = vadd.f32 %v1595, %v1596
      %v1598 = vsel %vm1213, %v1544, 0.0
      %v1599 = vadd.f32 %v1597, %v1598
      %v1600 = vsel %vm1213, %v1545, 0.0
      %v1601 = vadd.f32 %v1599, %v1600
      %v1602 = vsel %vm1213, %v1546, 0.0
      %v1603 = vadd.f32 %v1601, %v1602
      %v1604 = vsel %vm1213, %v1547, 0.0
      %v1605 = vadd.f32 %v1603, %v1604
      %v1606 = vsel %vm1213, %v1548, 0.0
      %v1607 = vadd.f32 %v1605, %v1606
      %v1608 = vsel %vm1213, %v1549, 0.0
      %v1609 = vadd.f32 %v1607, %v1608
      %v1610 = vsel %vm1213, %v1550, 0.0
      %v1611 = vadd.f32 %v1609, %v1610
      %v1612 = vsel %vm1213, %v1551, 0.0
      %v1613 = vadd.f32 %v1611, %v1612
      %v1614 = vsel %vm1213, %v1552, 0.0
      %v1615 = vadd.f32 %v1613, %v1614
      %v1616 = vrot.slane %v1615, 4
      %v1617 = vadd.f32 %v1615, %v1616
      %v1618 = vrot.slane %v1617, 2
      %v1619 = vadd.f32 %v1617, %v1618
      %v1620 = vrot.slane %v1619, 1
      %v1621 = vadd.f32 %v1619, %v1620
      %1622 = vst.msk [vmem:[%s391 + $0x1] sm:$0x1] %vm1347, %v1621
      %s1623 = smul.u32 32, %s21
      %p1624 = scmp.lt.s32.totalorder %s1623, 63
      %s1625 = scalar_select %p1624, %s1623, 63
      %s1626 = smul.addr %s1625, 8
      %s1627 = scalar_lea.vmem %s6, %s1626
      %s1628 = smul.u32 32, %s21
      %p1629 = scmp.lt.s32.totalorder %s1628, 63
      %s1630 = scalar_select %p1629, %s1628, 63
      %s1631 = smul.addr %s1630, 8
      %s1632 = scalar_lea.vmem %s7, %s1631
      %p1633 = scmp.lt.s32.totalorder %s21, 1
      %s1634 = scalar_select %p1633, %s21, 1
      %s1635 = smul.addr %s1634, 2
      %s1636 = scalar_lea.vmem %s8, %s1635
      %p1637 = scmp.lt.s32.totalorder %s21, 1
      %s1638 = scalar_select %p1637, %s21, 1
      %s1639 = smul.addr %s1638, 2
      %s1640 = scalar_lea.vmem %s9, %s1639
      // Predicated region
      $region45: #{bottleneck_forward.6} parent=43 // pred_check
        %p1641 = pneg %p175
      $region46: #{bottleneck_forward.6} parent=43 // pred_check_branch
        %1643 = sbr.rel (%p1641) target = $region48
      $region47: #{bottleneck_forward.6} parent=43 // pred_region
        %s1644 = smul.u32 32, %s21
      $region48: #{bottleneck_forward.6} parent=43 // pred_fallthru
        _
      // Predicated region
      $region49: #{bottleneck_forward.6} parent=43 // pred_check
        %p1645 = pneg %p201
      $region50: #{bottleneck_forward.6} parent=43 // pred_check_branch
        %1647 = sbr.rel (%p1645) target = $region52
      $region51: #{bottleneck_forward.6} parent=43 // pred_region
        %s1648 = smul.u32 32, %s21
      $region52: #{bottleneck_forward.6} parent=43 // pred_fallthru
        _
      // Predicated region
      $region53: #{bottleneck_forward.6} parent=43 // pred_check
        %p1649 = pneg %p227
      $region54: #{bottleneck_forward.6} parent=43 // pred_check_branch
        %1651 = sbr.rel (%p1649) target = $region56
      $region55: #{bottleneck_forward.6} parent=43 // pred_region
        _
      $region56: #{bottleneck_forward.6} parent=43 // pred_fallthru
        _
      // Predicated region
      $region57: #{bottleneck_forward.6} parent=43 // pred_check
        %p1652 = pneg %p253
      $region58: #{bottleneck_forward.6} parent=43 // pred_check_branch
        %1654 = sbr.rel (%p1652) target = $region60
      $region59: #{bottleneck_forward.6} parent=43 // pred_region
        _
      $region60: #{bottleneck_forward.6} parent=43 // pred_fallthru
        _
    $region44: #{bottleneck_forward.6} parent=5 // pred_fallthru
      _
    %p1655 = scmp.le.s32.totalorder 2, %s16
    // Predicated region
    $region61: #{bottleneck_forward.6} parent=5 // pred_check
      %p1656 = pneg %p1655
    $region62: #{bottleneck_forward.6} parent=5 // pred_check_branch
      %1658 = sbr.rel (%p1656) target = $region64
    $region63: #{bottleneck_forward.6} parent=5 // pred_region
      %s1659 = ssub.s32 %s16, 2
      // Predicated region
      $region65: #{bottleneck_forward.6} parent=63 // pred_check
        %p1660 = pneg %p181
      $region66: #{bottleneck_forward.6} parent=63 // pred_check_branch
        %1662 = sbr.rel (%p1660) target = $region68
      $region67: #{bottleneck_forward.6} parent=63 // pred_region
        %s1663 = smul.u32 32, %s22
        %p1664 = scmp.lt.s32.totalorder %s1663, 63
        %s1665 = scalar_select %p1664, %s1663, 63
        %s1666 = smul.addr %s1665, 8
        %s1667 = scalar_lea.vmem %s6, %s1666
      $region68: #{bottleneck_forward.6} parent=63 // pred_fallthru
        _
      // Predicated region
      $region69: #{bottleneck_forward.6} parent=63 // pred_check
        %p1668 = pneg %p207
      $region70: #{bottleneck_forward.6} parent=63 // pred_check_branch
        %1670 = sbr.rel (%p1668) target = $region72
      $region71: #{bottleneck_forward.6} parent=63 // pred_region
        %s1671 = smul.u32 32, %s22
        %p1672 = scmp.lt.s32.totalorder %s1671, 63
        %s1673 = scalar_select %p1672, %s1671, 63
        %s1674 = smul.addr %s1673, 8
        %s1675 = scalar_lea.vmem %s7, %s1674
      $region72: #{bottleneck_forward.6} parent=63 // pred_fallthru
        _
      // Predicated region
      $region73: #{bottleneck_forward.6} parent=63 // pred_check
        %p1676 = pneg %p233
      $region74: #{bottleneck_forward.6} parent=63 // pred_check_branch
        %1678 = sbr.rel (%p1676) target = $region76
      $region75: #{bottleneck_forward.6} parent=63 // pred_region
        %p1679 = scmp.lt.s32.totalorder %s22, 1
        %s1680 = scalar_select %p1679, %s22, 1
        %s1681 = smul.addr %s1680, 2
        %s1682 = scalar_lea.vmem %s8, %s1681
      $region76: #{bottleneck_forward.6} parent=63 // pred_fallthru
        _
      // Predicated region
      $region77: #{bottleneck_forward.6} parent=63 // pred_check
        %p1683 = pneg %p259
      $region78: #{bottleneck_forward.6} parent=63 // pred_check_branch
        %1685 = sbr.rel (%p1683) target = $region80
      $region79: #{bottleneck_forward.6} parent=63 // pred_region
        %p1686 = scmp.lt.s32.totalorder %s22, 1
        %s1687 = scalar_select %p1686, %s22, 1
        %s1688 = smul.addr %s1687, 2
        %s1689 = scalar_lea.vmem %s9, %s1688
      $region80: #{bottleneck_forward.6} parent=63 // pred_fallthru
        _
    $region64: #{bottleneck_forward.6} parent=5 // pred_fallthru
      _
  $region6: #{bottleneck_forward.6} parent=0 // loop_footer
    %s20 = sadd.s32 1, %s16
  $region7: #{bottleneck_forward.6} parent=0 // loop_footer_branch
    %15 = sbr.rel target = $region3
  $region8: #{bottleneck_forward.6} parent=0 // loop_exit
    _

// kernel: bottleneck_forward.7
$region0: #{bottleneck_forward.7}
  #allocation0 [shape = 'u32[]', space=smem, size = 0x4, offset = 0x4, fixed_abs, tag = 'smem constant byte address 0x4 - core index']
  #allocation1 [shape = 'u32[144,128]{1,0:T(1,128)}', space=vmem, size = 0x12000, scoped, tag = 'internal scratch']
  %s0 = inlined_call_operand.vmem [shape: f32[512,32], index: 0, kind: input, shape index: {}]
  %s1 = inlined_call_operand.vmem [shape: f32[512,32], index: 1, kind: input, shape index: {}]
  %s2 = inlined_call_operand.vmem [shape: f32[1,32], index: 2, kind: input, shape index: {}]
  %s3 = inlined_call_operand.vmem [shape: f32[1,32], index: 3, kind: input, shape index: {}]
  %s4 = inlined_call_operand.vmem [shape: f32[1,32], index: 4, kind: input, shape index: {}]
  %s5 = inlined_call_operand.vmem [shape: f32[1,32], index: 5, kind: input, shape index: {}]
  %s6 = inlined_call_operand.hbm [shape: f32[512,32], index: 6, kind: output, shape index: {}]
  %s7 = sld [smem:[#allocation0]]
  $region57: #{bottleneck_forward.7} parent=0
    _
  %s9 = ssub.s32 1, %s7
  %s10 = scalar_select 0, %s9, %s7
  $region1: #{bottleneck_forward.7} parent=0
    #allocation2 [shape = 'u8[262144]{0}', space=vmem, size = 0x40000, scoped, tag = 'output window, operand 0']
    #allocation3 [shape = 's32[2]{0}', space=sflag, size = 0x8, scoped, tag = 'scoped memory for bottleneck_forward.7']
    %11 = vsyncpa [#allocation3], 0
    %s12 = scalar_lea.sflag [#allocation3], 1
    %13 = vsyncpa %s12, 0
    loop: start=0, step=1, limit=4
    $region2: #{bottleneck_forward.7} parent=1 // loop_pre_header
      _
    $region3: #{bottleneck_forward.7} parent=1 // loop_header
      %s15 = sphi 0, %s19
      %p16 = scmp.ge.s32.totalorder %s15, 4
      %s25 = sphi 0, %s27
      %s28 = sphi 0, %s25
      %s29 = sphi 0, %s28
      %s45 = sphi 0, %s29
      %s51 = sphi 0, %s53
      %s54 = sphi 0, %s51
      %s55 = sphi 0, %s54
      %s71 = sphi 0, %s55
      %s75 = sphi 0, %s75
      %s77 = sphi 0, %s75
      %s78 = sphi 0, %s77
      %s92 = sphi 0, %s78
      %s96 = sphi 0, %s96
      %s98 = sphi 0, %s96
      %s99 = sphi 0, %s98
      %s113 = sphi 0, %s99
      %s117 = sphi 0, %s117
      %s119 = sphi 0, %s117
      %s120 = sphi 0, %s119
      %s134 = sphi 0, %s120
      %s138 = sphi 0, %s138
      %s140 = sphi 0, %s138
      %s141 = sphi 0, %s140
      %s155 = sphi 0, %s141
      %s161 = sphi 0, %s163
      %s164 = sphi 0, %s161
      %s165 = sphi 0, %s164
      %s181 = sphi 0, %s165
    $region4: #{bottleneck_forward.7} parent=1 // loop_header_branch
      %18 = sbr.rel (%p16) target = $region8
    $region5: #{bottleneck_forward.7} parent=1 // loop_body
      %s20 = ssub.s32 %s15, 1
      %s21 = ssub.s32 %s15, 2
      %s22 = sadd.s32 %s15, 1
      %s23 = ssub.s32 %s15, %s22
      %p24 = scmp.eq.s32.totalorder %s23, 0
      %s26 = sadd.s32 %s25, 1
      %s27 = scalar_select %p24, %s25, %s26
      %p30 = pneg %p24
      %p31 = scmp.eq.s32.totalorder %s15, 1
      %p32 = por %p30, %p31
      %p33 = scmp.ne.s32.totalorder %s25, %s28
      %p34 = scmp.eq.s32.totalorder %s15, 0
      %p35 = por %p33, %p34
      %p36 = scmp.ne.s32.totalorder %s25, %s28
      %p37 = scmp.eq.s32.totalorder %s20, 1
      %p38 = por %p36, %p37
      %p39 = scmp.ne.s32.totalorder %s28, %s29
      %p40 = scmp.eq.s32.totalorder %s20, 0
      %p41 = por %p39, %p40
      %p42 = scmp.ne.s32.totalorder %s28, %s29
      %p43 = scmp.eq.s32.totalorder %s21, 1
      %p44 = por %p42, %p43
      %p46 = scmp.ne.s32.totalorder %s29, %s45
      %p47 = scmp.eq.s32.totalorder %s21, 0
      %p48 = por %p46, %p47
      %s49 = ssub.s32 %s15, %s22
      %p50 = scmp.eq.s32.totalorder %s49, 0
      %s52 = sadd.s32 %s51, 1
      %s53 = scalar_select %p50, %s51, %s52
      %p56 = pneg %p50
      %p57 = scmp.eq.s32.totalorder %s15, 1
      %p58 = por %p56, %p57
      %p59 = scmp.ne.s32.totalorder %s51, %s54
      %p60 = scmp.eq.s32.totalorder %s15, 0
      %p61 = por %p59, %p60
      %p62 = scmp.ne.s32.totalorder %s51, %s54
      %p63 = scmp.eq.s32.totalorder %s20, 1
      %p64 = por %p62, %p63
      %p65 = scmp.ne.s32.totalorder %s54, %s55
      %p66 = scmp.eq.s32.totalorder %s20, 0
      %p67 = por %p65, %p66
      %p68 = scmp.ne.s32.totalorder %s54, %s55
      %p69 = scmp.eq.s32.totalorder %s21, 1
      %p70 = por %p68, %p69
      %p72 = scmp.ne.s32.totalorder %s55, %s71
      %p73 = scmp.eq.s32.totalorder %s21, 0
      %p74 = por %p72, %p73
      %s76 = sadd.s32 %s75, 1
      %p79 = scmp.eq.s32.totalorder %s15, 1
      %p80 = scmp.ne.s32.totalorder %s75, %s77
      %p81 = scmp.eq.s32.totalorder %s15, 0
      %p82 = por %p80, %p81
      %p83 = scmp.ne.s32.totalorder %s75, %s77
      %p84 = scmp.eq.s32.totalorder %s20, 1
      %p85 = por %p83, %p84
      %p86 = scmp.ne.s32.totalorder %s77, %s78
      %p87 = scmp.eq.s32.totalorder %s20, 0
      %p88 = por %p86, %p87
      %p89 = scmp.ne.s32.totalorder %s77, %s78
      %p90 = scmp.eq.s32.totalorder %s21, 1
      %p91 = por %p89, %p90
      %p93 = scmp.ne.s32.totalorder %s78, %s92
      %p94 = scmp.eq.s32.totalorder %s21, 0
      %p95 = por %p93, %p94
      %s97 = sadd.s32 %s96, 1
      %p100 = scmp.eq.s32.totalorder %s15, 1
      %p101 = scmp.ne.s32.totalorder %s96, %s98
      %p102 = scmp.eq.s32.totalorder %s15, 0
      %p103 = por %p101, %p102
      %p104 = scmp.ne.s32.totalorder %s96, %s98
      %p105 = scmp.eq.s32.totalorder %s20, 1
      %p106 = por %p104, %p105
      %p107 = scmp.ne.s32.totalorder %s98, %s99
      %p108 = scmp.eq.s32.totalorder %s20, 0
      %p109 = por %p107, %p108
      %p110 = scmp.ne.s32.totalorder %s98, %s99
      %p111 = scmp.eq.s32.totalorder %s21, 1
      %p112 = por %p110, %p111
      %p114 = scmp.ne.s32.totalorder %s99, %s113
      %p115 = scmp.eq.s32.totalorder %s21, 0
      %p116 = por %p114, %p115
      %s118 = sadd.s32 %s117, 1
      %p121 = scmp.eq.s32.totalorder %s15, 1
      %p122 = scmp.ne.s32.totalorder %s117, %s119
      %p123 = scmp.eq.s32.totalorder %s15, 0
      %p124 = por %p122, %p123
      %p125 = scmp.ne.s32.totalorder %s117, %s119
      %p126 = scmp.eq.s32.totalorder %s20, 1
      %p127 = por %p125, %p126
      %p128 = scmp.ne.s32.totalorder %s119, %s120
      %p129 = scmp.eq.s32.totalorder %s20, 0
      %p130 = por %p128, %p129
      %p131 = scmp.ne.s32.totalorder %s119, %s120
      %p132 = scmp.eq.s32.totalorder %s21, 1
      %p133 = por %p131, %p132
      %p135 = scmp.ne.s32.totalorder %s120, %s134
      %p136 = scmp.eq.s32.totalorder %s21, 0
      %p137 = por %p135, %p136
      %s139 = sadd.s32 %s138, 1
      %p142 = scmp.eq.s32.totalorder %s15, 1
      %p143 = scmp.ne.s32.totalorder %s138, %s140
      %p144 = scmp.eq.s32.totalorder %s15, 0
      %p145 = por %p143, %p144
      %p146 = scmp.ne.s32.totalorder %s138, %s140
      %p147 = scmp.eq.s32.totalorder %s20, 1
      %p148 = por %p146, %p147
      %p149 = scmp.ne.s32.totalorder %s140, %s141
      %p150 = scmp.eq.s32.totalorder %s20, 0
      %p151 = por %p149, %p150
      %p152 = scmp.ne.s32.totalorder %s140, %s141
      %p153 = scmp.eq.s32.totalorder %s21, 1
      %p154 = por %p152, %p153
      %p156 = scmp.ne.s32.totalorder %s141, %s155
      %p157 = scmp.eq.s32.totalorder %s21, 0
      %p158 = por %p156, %p157
      %s159 = ssub.s32 %s15, %s22
      %p160 = scmp.eq.s32.totalorder %s159, 0
      %s162 = sadd.s32 %s161, 1
      %s163 = scalar_select %p160, %s161, %s162
      %p166 = pneg %p160
      %p167 = scmp.eq.s32.totalorder %s15, 1
      %p168 = por %p166, %p167
      %p169 = scmp.ne.s32.totalorder %s161, %s164
      %p170 = scmp.eq.s32.totalorder %s15, 0
      %p171 = por %p169, %p170
      %p172 = scmp.ne.s32.totalorder %s161, %s164
      %p173 = scmp.eq.s32.totalorder %s20, 1
      %p174 = por %p172, %p173
      %p175 = scmp.ne.s32.totalorder %s164, %s165
      %p176 = scmp.eq.s32.totalorder %s20, 0
      %p177 = por %p175, %p176
      %p178 = scmp.ne.s32.totalorder %s164, %s165
      %p179 = scmp.eq.s32.totalorder %s21, 1
      %p180 = por %p178, %p179
      %p182 = scmp.ne.s32.totalorder %s165, %s181
      %p183 = scmp.eq.s32.totalorder %s21, 0
      %p184 = por %p182, %p183
      %p185 = scmp.le.s32.totalorder 1, %s15
      %p186 = scmp.lt.s32.totalorder %s15, 3
      %p187 = pnand %p185, %p186
      %p188 = pneg %p187
      // Predicated region
      $region9: #{bottleneck_forward.7} parent=5 // pred_check
        _
      $region10: #{bottleneck_forward.7} parent=5 // pred_check_branch
        %190 = sbr.rel (%p187) target = $region12
      $region11: #{bottleneck_forward.7} parent=5 // pred_region
        %s191 = ssub.s32 %s15, 1
        // Predicated region
        $region13: #{bottleneck_forward.7} parent=11 // pred_check
          %p192 = pneg %p88
        $region14: #{bottleneck_forward.7} parent=11 // pred_check_branch
          %194 = sbr.rel (%p192) target = $region16
        $region15: #{bottleneck_forward.7} parent=11 // pred_region
          _
        $region16: #{bottleneck_forward.7} parent=11 // pred_fallthru
          _
        // Predicated region
        $region17: #{bottleneck_forward.7} parent=11 // pred_check
          %p195 = pneg %p109
        $region18: #{bottleneck_forward.7} parent=11 // pred_check_branch
          %197 = sbr.rel (%p195) target = $region20
        $region19: #{bottleneck_forward.7} parent=11 // pred_region
          _
        $region20: #{bottleneck_forward.7} parent=11 // pred_fallthru
          _
        // Predicated region
        $region21: #{bottleneck_forward.7} parent=11 // pred_check
          %p198 = pneg %p130
        $region22: #{bottleneck_forward.7} parent=11 // pred_check_branch
          %200 = sbr.rel (%p198) target = $region24
        $region23: #{bottleneck_forward.7} parent=11 // pred_region
          _
        $region24: #{bottleneck_forward.7} parent=11 // pred_fallthru
          _
        // Predicated region
        $region25: #{bottleneck_forward.7} parent=11 // pred_check
          %p201 = pneg %p151
        $region26: #{bottleneck_forward.7} parent=11 // pred_check_branch
          %203 = sbr.rel (%p201) target = $region28
        $region27: #{bottleneck_forward.7} parent=11 // pred_region
          _
        $region28: #{bottleneck_forward.7} parent=11 // pred_fallthru
          _
      $region12: #{bottleneck_forward.7} parent=5 // pred_fallthru
        _
      %p204 = scmp.lt.s32.totalorder %s15, 2
      // Predicated region
      $region29: #{bottleneck_forward.7} parent=5 // pred_check
        %p205 = pneg %p204
      $region30: #{bottleneck_forward.7} parent=5 // pred_check_branch
        %207 = sbr.rel (%p205) target = $region32
      $region31: #{bottleneck_forward.7} parent=5 // pred_region
        // Predicated region
        $region33: #{bottleneck_forward.7} parent=31 // pred_check
          %p208 = pneg %p35
        $region34: #{bottleneck_forward.7} parent=31 // pred_check_branch
          %210 = sbr.rel (%p208) target = $region36
        $region35: #{bottleneck_forward.7} parent=31 // pred_region
          %s211 = smul.u32 32, %s15
          %p212 = scmp.lt.s32.totalorder %s211, 63
          %s213 = scalar_select %p212, %s211, 63
          %s214 = smul.addr %s213, 8
          %s215 = scalar_lea.vmem %s0, %s214
          %s216 = smul.u32 32, %s15
        $region36: #{bottleneck_forward.7} parent=31 // pred_fallthru
          _
        // Predicated region
        $region37: #{bottleneck_forward.7} parent=31 // pred_check
          %p217 = pneg %p61
        $region38: #{bottleneck_forward.7} parent=31 // pred_check_branch
          %219 = sbr.rel (%p217) target = $region40
        $region39: #{bottleneck_forward.7} parent=31 // pred_region
          %s220 = smul.u32 32, %s15
          %p221 = scmp.lt.s32.totalorder %s220, 63
          %s222 = scalar_select %p221, %s220, 63
          %s223 = smul.addr %s222, 8
          %s224 = scalar_lea.vmem %s1, %s223
          %s225 = smul.u32 32, %s15
        $region40: #{bottleneck_forward.7} parent=31 // pred_fallthru
          _
      $region32: #{bottleneck_forward.7} parent=5 // pred_fallthru
        _
      %p226 = scmp.le.s32.totalorder 1, %s15
      %p227 = scmp.lt.s32.totalorder %s15, 3
      %p228 = pnand %p226, %p227
      %p229 = pneg %p228
      // Predicated region
      $region41: #{bottleneck_forward.7} parent=5 // pred_check
        _
      $region42: #{bottleneck_forward.7} parent=5 // pred_check_branch
        %231 = sbr.rel (%p228) target = $region44
      $region43: #{bottleneck_forward.7} parent=5 // pred_region
        %s232 = ssub.s32 %s15, 1
        %s233 = smul.u32 32, %s20
        %p234 = scmp.lt.s32.totalorder %s233, 63
        %s235 = scalar_select %p234, %s233, 63
        %s236 = smul.addr %s235, 8
        %s237 = scalar_lea.vmem %s0, %s236
        %p238 = pneg %p41
        %p239 = pneg %p38
        %s240 = smul.u32 32, %s20
        %p241 = scmp.lt.s32.totalorder %s240, 63
        %s242 = scalar_select %p241, %s240, 63
        %s243 = smul.addr %s242, 8
        %s244 = scalar_lea.vmem %s1, %s243
        %p245 = pneg %p67
        %p246 = pneg %p64
        %p247 = pneg %p88
        %p248 = pneg %p85
        %p249 = pneg %p109
        %p250 = pneg %p106
        %p251 = pneg %p130
        %p252 = pneg %p127
        %p253 = pneg %p151
        %p254 = pneg %p148
        %p255 = pneg %p177
        %p256 = pneg %p174
        %s257 = sand.u32 %s164, 1
        %s258 = scalar_lea.sflag [#allocation3], %s257
        %s259 = sand.u32 %s164, 1
        %s260 = smul.addr %s259, 256
        %s261 = scalar_lea.vmem [#allocation2], %s260
        %s262 = smul.u32 32, %s20
        %p263 = scmp.lt.s32.totalorder %s262, 63
        %s264 = scalar_select %p263, %s262, 63
        %s265 = smul.addr %s264, 8
        %s266 = scalar_lea.vmem %s0, %s265
        %s267 = smul.u32 32, %s20
        %s268 = smul.u32 32, %s20
        %p269 = scmp.lt.s32.totalorder %s268, 63
        %s270 = scalar_select %p269, %s268, 63
        %s271 = smul.addr %s270, 8
        %s272 = scalar_lea.vmem %s1, %s271
        %s273 = smul.u32 32, %s20
        %s274 = smul.u32 32, %s20
        %v275 = vld [vmem:[%s266] sm:$0xff]
        %v276 = vld [vmem:[%s266 + $0x8] sm:$0xff]
        %v277 = vld [vmem:[%s266 + $0x10] sm:$0xff]
        %v278 = vld [vmem:[%s266 + $0x18] sm:$0xff]
        %v279 = vld [vmem:[%s266 + $0x20] sm:$0xff]
        %v280 = vld [vmem:[%s266 + $0x28] sm:$0xff]
        %v281 = vld [vmem:[%s266 + $0x30] sm:$0xff]
        %v282 = vld [vmem:[%s266 + $0x38] sm:$0xff]
        %v283 = vld [vmem:[%s266 + $0x40] sm:$0xff]
        %v284 = vld [vmem:[%s266 + $0x48] sm:$0xff]
        %v285 = vld [vmem:[%s266 + $0x50] sm:$0xff]
        %v286 = vld [vmem:[%s266 + $0x58] sm:$0xff]
        %v287 = vld [vmem:[%s266 + $0x60] sm:$0xff]
        %v288 = vld [vmem:[%s266 + $0x68] sm:$0xff]
        %v289 = vld [vmem:[%s266 + $0x70] sm:$0xff]
        %v290 = vld [vmem:[%s266 + $0x78] sm:$0xff]
        %v291 = vld [vmem:[%s266 + $0x80] sm:$0xff]
        %v292 = vld [vmem:[%s266 + $0x88] sm:$0xff]
        %v293 = vld [vmem:[%s266 + $0x90] sm:$0xff]
        %v294 = vld [vmem:[%s266 + $0x98] sm:$0xff]
        %v295 = vld [vmem:[%s266 + $0xa0] sm:$0xff]
        %v296 = vld [vmem:[%s266 + $0xa8] sm:$0xff]
        %v297 = vld [vmem:[%s266 + $0xb0] sm:$0xff]
        %v298 = vld [vmem:[%s266 + $0xb8] sm:$0xff]
        %v299 = vld [vmem:[%s266 + $0xc0] sm:$0xff]
        %v300 = vld [vmem:[%s266 + $0xc8] sm:$0xff]
        %v301 = vld [vmem:[%s266 + $0xd0] sm:$0xff]
        %v302 = vld [vmem:[%s266 + $0xd8] sm:$0xff]
        %v303 = vld [vmem:[%s266 + $0xe0] sm:$0xff]
        %v304 = vld [vmem:[%s266 + $0xe8] sm:$0xff]
        %v305 = vld [vmem:[%s266 + $0xf0] sm:$0xff]
        %v306 = vld [vmem:[%s266 + $0xf8] sm:$0xff]
        %v307 = vld [vmem:[%s2] sm:$0x1]
        %v309 = vlaneseq
        %v310 = vshrl.u32 %v309, 7
        %v311 = vsub.s32 0, %v310
        %v312 = vrot.slane %v307, %v311
        %v314 = vmul.f32 %v275, %v312
        %v315 = vmul.f32 %v276, %v312
        %v316 = vmul.f32 %v277, %v312
        %v317 = vmul.f32 %v278, %v312
        %v318 = vmul.f32 %v279, %v312
        %v319 = vmul.f32 %v280, %v312
        %v320 = vmul.f32 %v281, %v312
        %v321 = vmul.f32 %v282, %v312
        %v322 = vmul.f32 %v283, %v312
        %v323 = vmul.f32 %v284, %v312
        %v324 = vmul.f32 %v285, %v312
        %v325 = vmul.f32 %v286, %v312
        %v326 = vmul.f32 %v287, %v312
        %v327 = vmul.f32 %v288, %v312
        %v328 = vmul.f32 %v289, %v312
        %v329 = vmul.f32 %v290, %v312
        %v330 = vmul.f32 %v291, %v312
        %v331 = vmul.f32 %v292, %v312
        %v332 = vmul.f32 %v293, %v312
        %v333 = vmul.f32 %v294, %v312
        %v334 = vmul.f32 %v295, %v312
        %v335 = vmul.f32 %v296, %v312
        %v336 = vmul.f32 %v297, %v312
        %v337 = vmul.f32 %v298, %v312
        %v338 = vmul.f32 %v299, %v312
        %v339 = vmul.f32 %v300, %v312
        %v340 = vmul.f32 %v301, %v312
        %v341 = vmul.f32 %v302, %v312
        %v342 = vmul.f32 %v303, %v312
        %v343 = vmul.f32 %v304, %v312
        %v344 = vmul.f32 %v305, %v312
        %v345 = vmul.f32 %v306, %v312
        %v346 = vld [vmem:[%s3] sm:$0x1]
        %v348 = vlaneseq
        %v349 = vshrl.u32 %v348, 7
        %v350 = vsub.s32 0, %v349
        %v351 = vrot.slane %v346, %v350
        %v353 = vadd.f32 %v314, %v351
        %v354 = vadd.f32 %v315, %v351
        %v355 = vadd.f32 %v316, %v351
        %v356 = vadd.f32 %v317, %v351
        %v357 = vadd.f32 %v318, %v351
        %v358 = vadd.f32 %v319, %v351
        %v359 = vadd.f32 %v320, %v351
        %v360 = vadd.f32 %v321, %v351
        %v361 = vadd.f32 %v322, %v351
        %v362 = vadd.f32 %v323, %v351
        %v363 = vadd.f32 %v324, %v351
        %v364 = vadd.f32 %v325, %v351
        %v365 = vadd.f32 %v326, %v351
        %v366 = vadd.f32 %v327, %v351
        %v367 = vadd.f32 %v328, %v351
        %v368 = vadd.f32 %v329, %v351
        %v369 = vadd.f32 %v330, %v351
        %v370 = vadd.f32 %v331, %v351
        %v371 = vadd.f32 %v332, %v351
        %v372 = vadd.f32 %v333, %v351
        %v373 = vadd.f32 %v334, %v351
        %v374 = vadd.f32 %v335, %v351
        %v375 = vadd.f32 %v336, %v351
        %v376 = vadd.f32 %v337, %v351
        %v377 = vadd.f32 %v338, %v351
        %v378 = vadd.f32 %v339, %v351
        %v379 = vadd.f32 %v340, %v351
        %v380 = vadd.f32 %v341, %v351
        %v381 = vadd.f32 %v342, %v351
        %v382 = vadd.f32 %v343, %v351
        %v383 = vadd.f32 %v344, %v351
        %v384 = vadd.f32 %v345, %v351
        %v385 = vld [vmem:[%s272] sm:$0xff]
        %v386 = vld [vmem:[%s272 + $0x8] sm:$0xff]
        %v387 = vld [vmem:[%s272 + $0x10] sm:$0xff]
        %v388 = vld [vmem:[%s272 + $0x18] sm:$0xff]
        %v389 = vld [vmem:[%s272 + $0x20] sm:$0xff]
        %v390 = vld [vmem:[%s272 + $0x28] sm:$0xff]
        %v391 = vld [vmem:[%s272 + $0x30] sm:$0xff]
        %v392 = vld [vmem:[%s272 + $0x38] sm:$0xff]
        %v393 = vld [vmem:[%s272 + $0x40] sm:$0xff]
        %v394 = vld [vmem:[%s272 + $0x48] sm:$0xff]
        %v395 = vld [vmem:[%s272 + $0x50] sm:$0xff]
        %v396 = vld [vmem:[%s272 + $0x58] sm:$0xff]
        %v397 = vld [vmem:[%s272 + $0x60] sm:$0xff]
        %v398 = vld [vmem:[%s272 + $0x68] sm:$0xff]
        %v399 = vld [vmem:[%s272 + $0x70] sm:$0xff]
        %v400 = vld [vmem:[%s272 + $0x78] sm:$0xff]
        %v401 = vld [vmem:[%s272 + $0x80] sm:$0xff]
        %v402 = vld [vmem:[%s272 + $0x88] sm:$0xff]
        %v403 = vld [vmem:[%s272 + $0x90] sm:$0xff]
        %v404 = vld [vmem:[%s272 + $0x98] sm:$0xff]
        %v405 = vld [vmem:[%s272 + $0xa0] sm:$0xff]
        %v406 = vld [vmem:[%s272 + $0xa8] sm:$0xff]
        %v407 = vld [vmem:[%s272 + $0xb0] sm:$0xff]
        %v408 = vld [vmem:[%s272 + $0xb8] sm:$0xff]
        %v409 = vld [vmem:[%s272 + $0xc0] sm:$0xff]
        %v410 = vld [vmem:[%s272 + $0xc8] sm:$0xff]
        %v411 = vld [vmem:[%s272 + $0xd0] sm:$0xff]
        %v412 = vld [vmem:[%s272 + $0xd8] sm:$0xff]
        %v413 = vld [vmem:[%s272 + $0xe0] sm:$0xff]
        %v414 = vld [vmem:[%s272 + $0xe8] sm:$0xff]
        %v415 = vld [vmem:[%s272 + $0xf0] sm:$0xff]
        %v416 = vld [vmem:[%s272 + $0xf8] sm:$0xff]
        %v417 = vld [vmem:[%s4] sm:$0x1]
        %v419 = vlaneseq
        %v420 = vshrl.u32 %v419, 7
        %v421 = vsub.s32 0, %v420
        %v422 = vrot.slane %v417, %v421
        %v424 = vmul.f32 %v385, %v422
        %v425 = vmul.f32 %v386, %v422
        %v426 = vmul.f32 %v387, %v422
        %v427 = vmul.f32 %v388, %v422
        %v428 = vmul.f32 %v389, %v422
        %v429 = vmul.f32 %v390, %v422
        %v430 = vmul.f32 %v391, %v422
        %v431 = vmul.f32 %v392, %v422
        %v432 = vmul.f32 %v393, %v422
        %v433 = vmul.f32 %v394, %v422
        %v434 = vmul.f32 %v395, %v422
        %v435 = vmul.f32 %v396, %v422
        %v436 = vmul.f32 %v397, %v422
        %v437 = vmul.f32 %v398, %v422
        %v438 = vmul.f32 %v399, %v422
        %v439 = vmul.f32 %v400, %v422
        %v440 = vmul.f32 %v401, %v422
        %v441 = vmul.f32 %v402, %v422
        %v442 = vmul.f32 %v403, %v422
        %v443 = vmul.f32 %v404, %v422
        %v444 = vmul.f32 %v405, %v422
        %v445 = vmul.f32 %v406, %v422
        %v446 = vmul.f32 %v407, %v422
        %v447 = vmul.f32 %v408, %v422
        %v448 = vmul.f32 %v409, %v422
        %v449 = vmul.f32 %v410, %v422
        %v450 = vmul.f32 %v411, %v422
        %v451 = vmul.f32 %v412, %v422
        %v452 = vmul.f32 %v413, %v422
        %v453 = vmul.f32 %v414, %v422
        %v454 = vmul.f32 %v415, %v422
        %v455 = vmul.f32 %v416, %v422
        %v456 = vadd.f32 %v353, %v424
        %v457 = vadd.f32 %v354, %v425
        %v458 = vadd.f32 %v355, %v426
        %v459 = vadd.f32 %v356, %v427
        %v460 = vadd.f32 %v357, %v428
        %v461 = vadd.f32 %v358, %v429
        %v462 = vadd.f32 %v359, %v430
        %v463 = vadd.f32 %v360, %v431
        %v464 = vadd.f32 %v361, %v432
        %v465 = vadd.f32 %v362, %v433
        %v466 = vadd.f32 %v363, %v434
        %v467 = vadd.f32 %v364, %v435
        %v468 = vadd.f32 %v365, %v436
        %v469 = vadd.f32 %v366, %v437
        %v470 = vadd.f32 %v367, %v438
        %v471 = vadd.f32 %v368, %v439
        %v472 = vadd.f32 %v369, %v440
        %v473 = vadd.f32 %v370, %v441
        %v474 = vadd.f32 %v371, %v442
        %v475 = vadd.f32 %v372, %v443
        %v476 = vadd.f32 %v373, %v444
        %v477 = vadd.f32 %v374, %v445
        %v478 = vadd.f32 %v375, %v446
        %v479 = vadd.f32 %v376, %v447
        %v480 = vadd.f32 %v377, %v448
        %v481 = vadd.f32 %v378, %v449
        %v482 = vadd.f32 %v379, %v450
        %v483 = vadd.f32 %v380, %v451
        %v484 = vadd.f32 %v381, %v452
        %v485 = vadd.f32 %v382, %v453
        %v486 = vadd.f32 %v383, %v454
        %v487 = vadd.f32 %v384, %v455
        %v488 = vld [vmem:[%s5] sm:$0x1]
        %v490 = vlaneseq
        %v491 = vshrl.u32 %v490, 7
        %v492 = vsub.s32 0, %v491
        %v493 = vrot.slane %v488, %v492
        %v495 = vadd.f32 %v456, %v493
        %v496 = vadd.f32 %v457, %v493
        %v497 = vadd.f32 %v458, %v493
        %v498 = vadd.f32 %v459, %v493
        %v499 = vadd.f32 %v460, %v493
        %v500 = vadd.f32 %v461, %v493
        %v501 = vadd.f32 %v462, %v493
        %v502 = vadd.f32 %v463, %v493
        %v503 = vadd.f32 %v464, %v493
        %v504 = vadd.f32 %v465, %v493
        %v505 = vadd.f32 %v466, %v493
        %v506 = vadd.f32 %v467, %v493
        %v507 = vadd.f32 %v468, %v493
        %v508 = vadd.f32 %v469, %v493
        %v509 = vadd.f32 %v470, %v493
        %v510 = vadd.f32 %v471, %v493
        %v511 = vadd.f32 %v472, %v493
        %v512 = vadd.f32 %v473, %v493
        %v513 = vadd.f32 %v474, %v493
        %v514 = vadd.f32 %v475, %v493
        %v515 = vadd.f32 %v476, %v493
        %v516 = vadd.f32 %v477, %v493
        %v517 = vadd.f32 %v478, %v493
        %v518 = vadd.f32 %v479, %v493
        %v519 = vadd.f32 %v480, %v493
        %v520 = vadd.f32 %v481, %v493
        %v521 = vadd.f32 %v482, %v493
        %v522 = vadd.f32 %v483, %v493
        %v523 = vadd.f32 %v484, %v493
        %v524 = vadd.f32 %v485, %v493
        %v525 = vadd.f32 %v486, %v493
        %v526 = vadd.f32 %v487, %v493
        %v527 = vmax.f32 %v495, 0.0
        %v528 = vmax.f32 %v496, 0.0
        %v529 = vmax.f32 %v497, 0.0
        %v530 = vmax.f32 %v498, 0.0
        %v531 = vmax.f32 %v499, 0.0
        %v532 = vmax.f32 %v500, 0.0
        %v533 = vmax.f32 %v501, 0.0
        %v534 = vmax.f32 %v502, 0.0
        %v535 = vmax.f32 %v503, 0.0
        %v536 = vmax.f32 %v504, 0.0
        %v537 = vmax.f32 %v505, 0.0
        %v538 = vmax.f32 %v506, 0.0
        %v539 = vmax.f32 %v507, 0.0
        %v540 = vmax.f32 %v508, 0.0
        %v541 = vmax.f32 %v509, 0.0
        %v542 = vmax.f32 %v510, 0.0
        %v543 = vmax.f32 %v511, 0.0
        %v544 = vmax.f32 %v512, 0.0
        %v545 = vmax.f32 %v513, 0.0
        %v546 = vmax.f32 %v514, 0.0
        %v547 = vmax.f32 %v515, 0.0
        %v548 = vmax.f32 %v516, 0.0
        %v549 = vmax.f32 %v517, 0.0
        %v550 = vmax.f32 %v518, 0.0
        %v551 = vmax.f32 %v519, 0.0
        %v552 = vmax.f32 %v520, 0.0
        %v553 = vmax.f32 %v521, 0.0
        %v554 = vmax.f32 %v522, 0.0
        %v555 = vmax.f32 %v523, 0.0
        %v556 = vmax.f32 %v524, 0.0
        %v557 = vmax.f32 %v525, 0.0
        %v558 = vmax.f32 %v526, 0.0
        %vm559 = vcmask 261120
        %560 = vst.msk [vmem:[%s261] sm:$0xff] %vm559, %v527
        %561 = vst.msk [vmem:[%s261 + $0x8] sm:$0xff] %vm559, %v528
        %562 = vst.msk [vmem:[%s261 + $0x10] sm:$0xff] %vm559, %v529
        %563 = vst.msk [vmem:[%s261 + $0x18] sm:$0xff] %vm559, %v530
        %564 = vst.msk [vmem:[%s261 + $0x20] sm:$0xff] %vm559, %v531
        %565 = vst.msk [vmem:[%s261 + $0x28] sm:$0xff] %vm559, %v532
        %566 = vst.msk [vmem:[%s261 + $0x30] sm:$0xff] %vm559, %v533
        %567 = vst.msk [vmem:[%s261 + $0x38] sm:$0xff] %vm559, %v534
        %568 = vst.msk [vmem:[%s261 + $0x40] sm:$0xff] %vm559, %v535
        %569 = vst.msk [vmem:[%s261 + $0x48] sm:$0xff] %vm559, %v536
        %570 = vst.msk [vmem:[%s261 + $0x50] sm:$0xff] %vm559, %v537
        %571 = vst.msk [vmem:[%s261 + $0x58] sm:$0xff] %vm559, %v538
        %572 = vst.msk [vmem:[%s261 + $0x60] sm:$0xff] %vm559, %v539
        %573 = vst.msk [vmem:[%s261 + $0x68] sm:$0xff] %vm559, %v540
        %574 = vst.msk [vmem:[%s261 + $0x70] sm:$0xff] %vm559, %v541
        %575 = vst.msk [vmem:[%s261 + $0x78] sm:$0xff] %vm559, %v542
        %576 = vst.msk [vmem:[%s261 + $0x80] sm:$0xff] %vm559, %v543
        %577 = vst.msk [vmem:[%s261 + $0x88] sm:$0xff] %vm559, %v544
        %578 = vst.msk [vmem:[%s261 + $0x90] sm:$0xff] %vm559, %v545
        %579 = vst.msk [vmem:[%s261 + $0x98] sm:$0xff] %vm559, %v546
        %580 = vst.msk [vmem:[%s261 + $0xa0] sm:$0xff] %vm559, %v547
        %581 = vst.msk [vmem:[%s261 + $0xa8] sm:$0xff] %vm559, %v548
        %582 = vst.msk [vmem:[%s261 + $0xb0] sm:$0xff] %vm559, %v549
        %583 = vst.msk [vmem:[%s261 + $0xb8] sm:$0xff] %vm559, %v550
        %584 = vst.msk [vmem:[%s261 + $0xc0] sm:$0xff] %vm559, %v551
        %585 = vst.msk [vmem:[%s261 + $0xc8] sm:$0xff] %vm559, %v552
        %586 = vst.msk [vmem:[%s261 + $0xd0] sm:$0xff] %vm559, %v553
        %587 = vst.msk [vmem:[%s261 + $0xd8] sm:$0xff] %vm559, %v554
        %588 = vst.msk [vmem:[%s261 + $0xe0] sm:$0xff] %vm559, %v555
        %589 = vst.msk [vmem:[%s261 + $0xe8] sm:$0xff] %vm559, %v556
        %590 = vst.msk [vmem:[%s261 + $0xf0] sm:$0xff] %vm559, %v557
        %591 = vst.msk [vmem:[%s261 + $0xf8] sm:$0xff] %vm559, %v558
        %s592 = sand.u32 %s164, 1
        %s593 = scalar_lea.sflag [#allocation3], %s592
        %s594 = sand.u32 %s164, 1
        %s595 = smul.addr %s594, 256
        %s596 = scalar_lea.vmem [#allocation2], %s595
        // Predicated region
        $region45: #{bottleneck_forward.7} parent=43 // pred_check
          %p597 = pneg %p174
        $region46: #{bottleneck_forward.7} parent=43 // pred_check_branch
          %599 = sbr.rel (%p597) target = $region48
        $region47: #{bottleneck_forward.7} parent=43 // pred_region
          %s600 = smul.u32 32, %s20
          %s602 = ssub.s32 4096, 4096
          %603 = vsyncadd %s593, %s602
          %s604 = smul.addr %s600, 128
          %s605 = scalar_lea.hbm %s6, %s604
          %s606 = sshll.u32 %s596, 4
          %s607 = int_to_ptr.vmem [resolvable:$true] %s606
          %612 = dma.vmem_to_hbm [thread:$0]  %s607, 4096, %s605, %s593, 128, 128, 8
        $region48: #{bottleneck_forward.7} parent=43 // pred_fallthru
          _
      $region44: #{bottleneck_forward.7} parent=5 // pred_fallthru
        _
      %p613 = scmp.le.s32.totalorder 2, %s15
      // Predicated region
      $region49: #{bottleneck_forward.7} parent=5 // pred_check
        %p614 = pneg %p613
      $region50: #{bottleneck_forward.7} parent=5 // pred_check_branch
        %616 = sbr.rel (%p614) target = $region52
      $region51: #{bottleneck_forward.7} parent=5 // pred_region
        %s617 = ssub.s32 %s15, 2
        // Predicated region
        $region53: #{bottleneck_forward.7} parent=51 // pred_check
          %p618 = pneg %p180
        $region54: #{bottleneck_forward.7} parent=51 // pred_check_branch
          %620 = sbr.rel (%p618) target = $region56
        $region55: #{bottleneck_forward.7} parent=51 // pred_region
          %s621 = sand.u32 %s165, 1
          %s622 = scalar_lea.sflag [#allocation3], %s621
          %s623 = sand.u32 %s165, 1
          %s624 = smul.addr %s623, 256
          %s625 = scalar_lea.vmem [#allocation2], %s624
          %626 = dma.done %s622, 4096
        $region56: #{bottleneck_forward.7} parent=51 // pred_fallthru
          _
      $region52: #{bottleneck_forward.7} parent=5 // pred_fallthru
        _
    $region6: #{bottleneck_forward.7} parent=1 // loop_footer
      %s19 = sadd.s32 1, %s15
    $region7: #{bottleneck_forward.7} parent=1 // loop_footer_branch
      %14 = sbr.rel target = $region3
    $region8: #{bottleneck_forward.7} parent=1 // loop_exit
      _
    %627 = vsyncpa [#allocation3], 1
    %s628 = scalar_lea.sflag [#allocation3], 1
    %629 = vsyncpa %s628, 1

// kernel: bottleneck_forward.5
$region0: #{bottleneck_forward.5}
  #allocation0 [shape = 'u32[]', space=smem, size = 0x4, offset = 0x4, fixed_abs, tag = 'smem constant byte address 0x4 - core index']
  #allocation1 [shape = 'u32[144,128]{1,0:T(1,128)}', space=vmem, size = 0x12000, scoped, tag = 'internal scratch']
  #allocation2 [shape = 'f32[304,16]{1,0:T(8,128)}', space=vmem, size = 0x26000, scoped, tag = 'scratch operand']
  %s0 = inlined_call_operand.vmem [shape: f32[2,256,16], index: 0, kind: input, shape index: {}]
  %s1 = inlined_call_operand.vmem [shape: f32[9,16,16], index: 1, kind: input, shape index: {}]
  %s2 = inlined_call_operand.vmem [shape: f32[1,16], index: 2, kind: input, shape index: {}]
  %s3 = inlined_call_operand.vmem [shape: f32[1,16], index: 3, kind: input, shape index: {}]
  %s4 = inlined_call_operand.vmem [shape: f32[256,2], index: 4, kind: input, shape index: {}]
  %s5 = inlined_call_operand.vmem [shape: f32[2,256,16], index: 5, kind: output, shape index: {0}]
  %s6 = inlined_call_operand.vmem [shape: f32[2,2,16], index: 6, kind: output, shape index: {1}]
  %7 = xla_tuple %s5, %s6
  %s8 = sld [smem:[#allocation0]]
  $region61: #{bottleneck_forward.5} parent=0
    _
  %s10 = ssub.s32 1, %s8
  %s11 = scalar_select 0, %s10, %s8
  loop: start=0, step=1, limit=4
  $region2: #{bottleneck_forward.5} parent=0 // loop_pre_header
    _
  $region3: #{bottleneck_forward.5} parent=0 // loop_header
    %s13 = sphi 0, %s17
    %p14 = scmp.ge.s32.totalorder %s13, 4
    %s23 = sphi 0, %s25
    %s26 = sphi 0, %s23
    %s27 = sphi 0, %s26
    %s43 = sphi 0, %s27
    %s47 = sphi 0, %s47
    %s49 = sphi 0, %s47
    %s50 = sphi 0, %s49
    %s64 = sphi 0, %s50
    %s68 = sphi 0, %s68
    %s70 = sphi 0, %s68
    %s71 = sphi 0, %s70
    %s85 = sphi 0, %s71
    %s89 = sphi 0, %s89
    %s91 = sphi 0, %s89
    %s92 = sphi 0, %s91
    %s106 = sphi 0, %s92
    %s110 = sphi 0, %s110
    %s112 = sphi 0, %s110
    %s113 = sphi 0, %s112
    %s127 = sphi 0, %s113
    %s133 = sphi 0, %s135
    %s136 = sphi 0, %s133
    %s137 = sphi 0, %s136
    %s153 = sphi 0, %s137
    %s159 = sphi 0, %s161
    %s162 = sphi 0, %s159
    %s163 = sphi 0, %s162
    %s179 = sphi 0, %s163
  $region4: #{bottleneck_forward.5} parent=0 // loop_header_branch
    %16 = sbr.rel (%p14) target = $region8
  $region5: #{bottleneck_forward.5} parent=0 // loop_body
    %s18 = ssub.s32 %s13, 1
    %s19 = ssub.s32 %s13, 2
    %s20 = sadd.s32 %s13, 1
    %s21 = ssub.s32 %s13, %s20
    %p22 = scmp.eq.s32.totalorder %s21, 0
    %s24 = sadd.s32 %s23, 1
    %s25 = scalar_select %p22, %s23, %s24
    %p28 = pneg %p22
    %p29 = scmp.eq.s32.totalorder %s13, 1
    %p30 = por %p28, %p29
    %p31 = scmp.ne.s32.totalorder %s23, %s26
    %p32 = scmp.eq.s32.totalorder %s13, 0
    %p33 = por %p31, %p32
    %p34 = scmp.ne.s32.totalorder %s23, %s26
    %p35 = scmp.eq.s32.totalorder %s18, 1
    %p36 = por %p34, %p35
    %p37 = scmp.ne.s32.totalorder %s26, %s27
    %p38 = scmp.eq.s32.totalorder %s18, 0
    %p39 = por %p37, %p38
    %p40 = scmp.ne.s32.totalorder %s26, %s27
    %p41 = scmp.eq.s32.totalorder %s19, 1
    %p42 = por %p40, %p41
    %p44 = scmp.ne.s32.totalorder %s27, %s43
    %p45 = scmp.eq.s32.totalorder %s19, 0
    %p46 = por %p44, %p45
    %s48 = sadd.s32 %s47, 1
    %p51 = scmp.eq.s32.totalorder %s13, 1
    %p52 = scmp.ne.s32.totalorder %s47, %s49
    %p53 = scmp.eq.s32.totalorder %s13, 0
    %p54 = por %p52, %p53
    %p55 = scmp.ne.s32.totalorder %s47, %s49
    %p56 = scmp.eq.s32.totalorder %s18, 1
    %p57 = por %p55, %p56
    %p58 = scmp.ne.s32.totalorder %s49, %s50
    %p59 = scmp.eq.s32.totalorder %s18, 0
    %p60 = por %p58, %p59
    %p61 = scmp.ne.s32.totalorder %s49, %s50
    %p62 = scmp.eq.s32.totalorder %s19, 1
    %p63 = por %p61, %p62
    %p65 = scmp.ne.s32.totalorder %s50, %s64
    %p66 = scmp.eq.s32.totalorder %s19, 0
    %p67 = por %p65, %p66
    %s69 = sadd.s32 %s68, 1
    %p72 = scmp.eq.s32.totalorder %s13, 1
    %p73 = scmp.ne.s32.totalorder %s68, %s70
    %p74 = scmp.eq.s32.totalorder %s13, 0
    %p75 = por %p73, %p74
    %p76 = scmp.ne.s32.totalorder %s68, %s70
    %p77 = scmp.eq.s32.totalorder %s18, 1
    %p78 = por %p76, %p77
    %p79 = scmp.ne.s32.totalorder %s70, %s71
    %p80 = scmp.eq.s32.totalorder %s18, 0
    %p81 = por %p79, %p80
    %p82 = scmp.ne.s32.totalorder %s70, %s71
    %p83 = scmp.eq.s32.totalorder %s19, 1
    %p84 = por %p82, %p83
    %p86 = scmp.ne.s32.totalorder %s71, %s85
    %p87 = scmp.eq.s32.totalorder %s19, 0
    %p88 = por %p86, %p87
    %s90 = sadd.s32 %s89, 1
    %p93 = scmp.eq.s32.totalorder %s13, 1
    %p94 = scmp.ne.s32.totalorder %s89, %s91
    %p95 = scmp.eq.s32.totalorder %s13, 0
    %p96 = por %p94, %p95
    %p97 = scmp.ne.s32.totalorder %s89, %s91
    %p98 = scmp.eq.s32.totalorder %s18, 1
    %p99 = por %p97, %p98
    %p100 = scmp.ne.s32.totalorder %s91, %s92
    %p101 = scmp.eq.s32.totalorder %s18, 0
    %p102 = por %p100, %p101
    %p103 = scmp.ne.s32.totalorder %s91, %s92
    %p104 = scmp.eq.s32.totalorder %s19, 1
    %p105 = por %p103, %p104
    %p107 = scmp.ne.s32.totalorder %s92, %s106
    %p108 = scmp.eq.s32.totalorder %s19, 0
    %p109 = por %p107, %p108
    %s111 = sadd.s32 %s110, 1
    %p114 = scmp.eq.s32.totalorder %s13, 1
    %p115 = scmp.ne.s32.totalorder %s110, %s112
    %p116 = scmp.eq.s32.totalorder %s13, 0
    %p117 = por %p115, %p116
    %p118 = scmp.ne.s32.totalorder %s110, %s112
    %p119 = scmp.eq.s32.totalorder %s18, 1
    %p120 = por %p118, %p119
    %p121 = scmp.ne.s32.totalorder %s112, %s113
    %p122 = scmp.eq.s32.totalorder %s18, 0
    %p123 = por %p121, %p122
    %p124 = scmp.ne.s32.totalorder %s112, %s113
    %p125 = scmp.eq.s32.totalorder %s19, 1
    %p126 = por %p124, %p125
    %p128 = scmp.ne.s32.totalorder %s113, %s127
    %p129 = scmp.eq.s32.totalorder %s19, 0
    %p130 = por %p128, %p129
    %s131 = ssub.s32 %s13, %s20
    %p132 = scmp.eq.s32.totalorder %s131, 0
    %s134 = sadd.s32 %s133, 1
    %s135 = scalar_select %p132, %s133, %s134
    %p138 = pneg %p132
    %p139 = scmp.eq.s32.totalorder %s13, 1
    %p140 = por %p138, %p139
    %p141 = scmp.ne.s32.totalorder %s133, %s136
    %p142 = scmp.eq.s32.totalorder %s13, 0
    %p143 = por %p141, %p142
    %p144 = scmp.ne.s32.totalorder %s133, %s136
    %p145 = scmp.eq.s32.totalorder %s18, 1
    %p146 = por %p144, %p145
    %p147 = scmp.ne.s32.totalorder %s136, %s137
    %p148 = scmp.eq.s32.totalorder %s18, 0
    %p149 = por %p147, %p148
    %p150 = scmp.ne.s32.totalorder %s136, %s137
    %p151 = scmp.eq.s32.totalorder %s19, 1
    %p152 = por %p150, %p151
    %p154 = scmp.ne.s32.totalorder %s137, %s153
    %p155 = scmp.eq.s32.totalorder %s19, 0
    %p156 = por %p154, %p155
    %s157 = ssub.s32 %s13, %s20
    %p158 = scmp.eq.s32.totalorder %s157, 0
    %s160 = sadd.s32 %s159, 1
    %s161 = scalar_select %p158, %s159, %s160
    %p164 = pneg %p158
    %p165 = scmp.eq.s32.totalorder %s13, 1
    %p166 = por %p164, %p165
    %p167 = scmp.ne.s32.totalorder %s159, %s162
    %p168 = scmp.eq.s32.totalorder %s13, 0
    %p169 = por %p167, %p168
    %p170 = scmp.ne.s32.totalorder %s159, %s162
    %p171 = scmp.eq.s32.totalorder %s18, 1
    %p172 = por %p170, %p171
    %p173 = scmp.ne.s32.totalorder %s162, %s163
    %p174 = scmp.eq.s32.totalorder %s18, 0
    %p175 = por %p173, %p174
    %p176 = scmp.ne.s32.totalorder %s162, %s163
    %p177 = scmp.eq.s32.totalorder %s19, 1
    %p178 = por %p176, %p177
    %p180 = scmp.ne.s32.totalorder %s163, %s179
    %p181 = scmp.eq.s32.totalorder %s19, 0
    %p182 = por %p180, %p181
    %p183 = scmp.le.s32.totalorder 1, %s13
    %p184 = scmp.lt.s32.totalorder %s13, 3
    %p185 = pnand %p183, %p184
    %p186 = pneg %p185
    // Predicated region
    $region9: #{bottleneck_forward.5} parent=5 // pred_check
      _
    $region10: #{bottleneck_forward.5} parent=5 // pred_check_branch
      %188 = sbr.rel (%p185) target = $region12
    $region11: #{bottleneck_forward.5} parent=5 // pred_region
      %s189 = ssub.s32 %s13, 1
      // Predicated region
      $region13: #{bottleneck_forward.5} parent=11 // pred_check
        %p190 = pneg %p60
      $region14: #{bottleneck_forward.5} parent=11 // pred_check_branch
        %192 = sbr.rel (%p190) target = $region16
      $region15: #{bottleneck_forward.5} parent=11 // pred_region
        _
      $region16: #{bottleneck_forward.5} parent=11 // pred_fallthru
        _
      // Predicated region
      $region17: #{bottleneck_forward.5} parent=11 // pred_check
        %p193 = pneg %p81
      $region18: #{bottleneck_forward.5} parent=11 // pred_check_branch
        %195 = sbr.rel (%p193) target = $region20
      $region19: #{bottleneck_forward.5} parent=11 // pred_region
        _
      $region20: #{bottleneck_forward.5} parent=11 // pred_fallthru
        _
      // Predicated region
      $region21: #{bottleneck_forward.5} parent=11 // pred_check
        %p196 = pneg %p102
      $region22: #{bottleneck_forward.5} parent=11 // pred_check_branch
        %198 = sbr.rel (%p196) target = $region24
      $region23: #{bottleneck_forward.5} parent=11 // pred_region
        _
      $region24: #{bottleneck_forward.5} parent=11 // pred_fallthru
        _
      // Predicated region
      $region25: #{bottleneck_forward.5} parent=11 // pred_check
        %p199 = pneg %p123
      $region26: #{bottleneck_forward.5} parent=11 // pred_check_branch
        %201 = sbr.rel (%p199) target = $region28
      $region27: #{bottleneck_forward.5} parent=11 // pred_region
        _
      $region28: #{bottleneck_forward.5} parent=11 // pred_fallthru
        _
    $region12: #{bottleneck_forward.5} parent=5 // pred_fallthru
      _
    %p202 = scmp.lt.s32.totalorder %s13, 2
    // Predicated region
    $region29: #{bottleneck_forward.5} parent=5 // pred_check
      %p203 = pneg %p202
    $region30: #{bottleneck_forward.5} parent=5 // pred_check_branch
      %205 = sbr.rel (%p203) target = $region32
    $region31: #{bottleneck_forward.5} parent=5 // pred_region
      // Predicated region
      $region33: #{bottleneck_forward.5} parent=31 // pred_check
        %p206 = pneg %p33
      $region34: #{bottleneck_forward.5} parent=31 // pred_check_branch
        %208 = sbr.rel (%p206) target = $region36
      $region35: #{bottleneck_forward.5} parent=31 // pred_region
        %p209 = scmp.lt.s32.totalorder %s13, 1
        %s210 = scalar_select %p209, %s13, 1
        %s211 = smul.addr %s210, 32
        %s212 = smul.addr %s211, 8
        %s213 = scalar_lea.vmem %s0, %s212
      $region36: #{bottleneck_forward.5} parent=31 // pred_fallthru
        _
    $region32: #{bottleneck_forward.5} parent=5 // pred_fallthru
      _
    %p214 = scmp.le.s32.totalorder 1, %s13
    %p215 = scmp.lt.s32.totalorder %s13, 3
    %p216 = pnand %p214, %p215
    %p217 = pneg %p216
    // Predicated region
    $region37: #{bottleneck_forward.5} parent=5 // pred_check
      _
    $region38: #{bottleneck_forward.5} parent=5 // pred_check_branch
      %219 = sbr.rel (%p216) target = $region40
    $region39: #{bottleneck_forward.5} parent=5 // pred_region
      %s220 = ssub.s32 %s13, 1
      %p221 = scmp.lt.s32.totalorder %s18, 1
      %s222 = scalar_select %p221, %s18, 1
      %s223 = smul.addr %s222, 32
      %s224 = smul.addr %s223, 8
      %s225 = scalar_lea.vmem %s0, %s224
      %p226 = pneg %p39
      %p227 = pneg %p36
      %p228 = pneg %p60
      %p229 = pneg %p57
      %p230 = pneg %p81
      %p231 = pneg %p78
      %p232 = pneg %p102
      %p233 = pneg %p99
      %p234 = pneg %p123
      %p235 = pneg %p120
      %p236 = pneg %p149
      %p237 = pneg %p146
      %p238 = scmp.lt.s32.totalorder %s18, 1
      %s239 = scalar_select %p238, %s18, 1
      %s240 = smul.addr %s239, 32
      %s241 = smul.addr %s240, 8
      %s242 = scalar_lea.vmem %s5, %s241
      %p243 = pneg %p175
      %p244 = pneg %p172
      %p245 = scmp.lt.s32.totalorder %s18, 1
      %s246 = scalar_select %p245, %s18, 1
      %s247 = smul.addr %s246, 2
      %s248 = scalar_lea.vmem %s6, %s247
      %p249 = scmp.lt.s32.totalorder %s18, 1
      %s250 = scalar_select %p249, %s18, 1
      %s251 = smul.addr %s250, 32
      %s252 = smul.addr %s251, 8
      %s253 = scalar_lea.vmem %s0, %s252
      %p254 = scmp.lt.s32.totalorder %s18, 1
      %s255 = scalar_select %p254, %s18, 1
      %s256 = smul.addr %s255, 32
      %s257 = smul.addr %s256, 8
      %s258 = scalar_lea.vmem %s5, %s257
      %p259 = scmp.lt.s32.totalorder %s18, 1
      %s260 = scalar_select %p259, %s18, 1
      %s261 = smul.addr %s260, 2
      %s262 = scalar_lea.vmem %s6, %s261
      %v263 = vld [vmem:[%s253] sm:$0xff]
      %v264 = vld [vmem:[%s253 + $0x8] sm:$0xff]
      %v265 = vld [vmem:[%s253 + $0x10] sm:$0xff]
      %v266 = vld [vmem:[%s253 + $0x18] sm:$0xff]
      %v267 = vld [vmem:[%s253 + $0x20] sm:$0xff]
      %v268 = vld [vmem:[%s253 + $0x28] sm:$0xff]
      %v269 = vld [vmem:[%s253 + $0x30] sm:$0xff]
      %v270 = vld [vmem:[%s253 + $0x38] sm:$0xff]
      %v271 = vld [vmem:[%s253 + $0x40] sm:$0xff]
      %v272 = vld [vmem:[%s253 + $0x48] sm:$0xff]
      %v273 = vld [vmem:[%s253 + $0x50] sm:$0xff]
      %v274 = vld [vmem:[%s253 + $0x58] sm:$0xff]
      %v275 = vld [vmem:[%s253 + $0x60] sm:$0xff]
      %v276 = vld [vmem:[%s253 + $0x68] sm:$0xff]
      %v277 = vld [vmem:[%s253 + $0x70] sm:$0xff]
      %v278 = vld [vmem:[%s253 + $0x78] sm:$0xff]
      %v279 = vld [vmem:[%s253 + $0x80] sm:$0xff]
      %v280 = vld [vmem:[%s253 + $0x88] sm:$0xff]
      %v281 = vld [vmem:[%s253 + $0x90] sm:$0xff]
      %v282 = vld [vmem:[%s253 + $0x98] sm:$0xff]
      %v283 = vld [vmem:[%s253 + $0xa0] sm:$0xff]
      %v284 = vld [vmem:[%s253 + $0xa8] sm:$0xff]
      %v285 = vld [vmem:[%s253 + $0xb0] sm:$0xff]
      %v286 = vld [vmem:[%s253 + $0xb8] sm:$0xff]
      %v287 = vld [vmem:[%s253 + $0xc0] sm:$0xff]
      %v288 = vld [vmem:[%s253 + $0xc8] sm:$0xff]
      %v289 = vld [vmem:[%s253 + $0xd0] sm:$0xff]
      %v290 = vld [vmem:[%s253 + $0xd8] sm:$0xff]
      %v291 = vld [vmem:[%s253 + $0xe0] sm:$0xff]
      %v292 = vld [vmem:[%s253 + $0xe8] sm:$0xff]
      %v293 = vld [vmem:[%s253 + $0xf0] sm:$0xff]
      %v294 = vld [vmem:[%s253 + $0xf8] sm:$0xff]
      %v295 = vld [vmem:[%s2] sm:$0x1]
      %v297 = vlaneseq
      %v298 = vshrl.u32 %v297, 7
      %v299 = vsub.s32 0, %v298
      %v300 = vrot.slane %v295, %v299
      %v302 = vmul.f32 %v263, %v300
      %v303 = vmul.f32 %v264, %v300
      %v304 = vmul.f32 %v265, %v300
      %v305 = vmul.f32 %v266, %v300
      %v306 = vmul.f32 %v267, %v300
      %v307 = vmul.f32 %v268, %v300
      %v308 = vmul.f32 %v269, %v300
      %v309 = vmul.f32 %v270, %v300
      %v310 = vmul.f32 %v271, %v300
      %v311 = vmul.f32 %v272, %v300
      %v312 = vmul.f32 %v273, %v300
      %v313 = vmul.f32 %v274, %v300
      %v314 = vmul.f32 %v275, %v300
      %v315 = vmul.f32 %v276, %v300
      %v316 = vmul.f32 %v277, %v300
      %v317 = vmul.f32 %v278, %v300
      %v318 = vmul.f32 %v279, %v300
      %v319 = vmul.f32 %v280, %v300
      %v320 = vmul.f32 %v281, %v300
      %v321 = vmul.f32 %v282, %v300
      %v322 = vmul.f32 %v283, %v300
      %v323 = vmul.f32 %v284, %v300
      %v324 = vmul.f32 %v285, %v300
      %v325 = vmul.f32 %v286, %v300
      %v326 = vmul.f32 %v287, %v300
      %v327 = vmul.f32 %v288, %v300
      %v328 = vmul.f32 %v289, %v300
      %v329 = vmul.f32 %v290, %v300
      %v330 = vmul.f32 %v291, %v300
      %v331 = vmul.f32 %v292, %v300
      %v332 = vmul.f32 %v293, %v300
      %v333 = vmul.f32 %v294, %v300
      %v334 = vld [vmem:[%s3] sm:$0x1]
      %v336 = vlaneseq
      %v337 = vshrl.u32 %v336, 7
      %v338 = vsub.s32 0, %v337
      %v339 = vrot.slane %v334, %v338
      %v341 = vadd.f32 %v302, %v339
      %v342 = vadd.f32 %v303, %v339
      %v343 = vadd.f32 %v304, %v339
      %v344 = vadd.f32 %v305, %v339
      %v345 = vadd.f32 %v306, %v339
      %v346 = vadd.f32 %v307, %v339
      %v347 = vadd.f32 %v308, %v339
      %v348 = vadd.f32 %v309, %v339
      %v349 = vadd.f32 %v310, %v339
      %v350 = vadd.f32 %v311, %v339
      %v351 = vadd.f32 %v312, %v339
      %v352 = vadd.f32 %v313, %v339
      %v353 = vadd.f32 %v314, %v339
      %v354 = vadd.f32 %v315, %v339
      %v355 = vadd.f32 %v316, %v339
      %v356 = vadd.f32 %v317, %v339
      %v357 = vadd.f32 %v318, %v339
      %v358 = vadd.f32 %v319, %v339
      %v359 = vadd.f32 %v320, %v339
      %v360 = vadd.f32 %v321, %v339
      %v361 = vadd.f32 %v322, %v339
      %v362 = vadd.f32 %v323, %v339
      %v363 = vadd.f32 %v324, %v339
      %v364 = vadd.f32 %v325, %v339
      %v365 = vadd.f32 %v326, %v339
      %v366 = vadd.f32 %v327, %v339
      %v367 = vadd.f32 %v328, %v339
      %v368 = vadd.f32 %v329, %v339
      %v369 = vadd.f32 %v330, %v339
      %v370 = vadd.f32 %v331, %v339
      %v371 = vadd.f32 %v332, %v339
      %v372 = vadd.f32 %v333, %v339
      %v373 = vmax.f32 %v341, 0.0
      %v374 = vmax.f32 %v342, 0.0
      %v375 = vmax.f32 %v343, 0.0
      %v376 = vmax.f32 %v344, 0.0
      %v377 = vmax.f32 %v345, 0.0
      %v378 = vmax.f32 %v346, 0.0
      %v379 = vmax.f32 %v347, 0.0
      %v380 = vmax.f32 %v348, 0.0
      %v381 = vmax.f32 %v349, 0.0
      %v382 = vmax.f32 %v350, 0.0
      %v383 = vmax.f32 %v351, 0.0
      %v384 = vmax.f32 %v352, 0.0
      %v385 = vmax.f32 %v353, 0.0
      %v386 = vmax.f32 %v354, 0.0
      %v387 = vmax.f32 %v355, 0.0
      %v388 = vmax.f32 %v356, 0.0
      %v389 = vmax.f32 %v357, 0.0
      %v390 = vmax.f32 %v358, 0.0
      %v391 = vmax.f32 %v359, 0.0
      %v392 = vmax.f32 %v360, 0.0
      %v393 = vmax.f32 %v361, 0.0
      %v394 = vmax.f32 %v362, 0.0
      %v395 = vmax.f32 %v363, 0.0
      %v396 = vmax.f32 %v364, 0.0
      %v397 = vmax.f32 %v365, 0.0
      %v398 = vmax.f32 %v366, 0.0
      %v399 = vmax.f32 %v367, 0.0
      %v400 = vmax.f32 %v368, 0.0
      %v401 = vmax.f32 %v369, 0.0
      %v402 = vmax.f32 %v370, 0.0
      %v403 = vmax.f32 %v371, 0.0
      %v404 = vmax.f32 %v372, 0.0
      %vm405 = vcmask 130048
      %406 = vst.msk [vmem:[#allocation2] sm:$0xff] %vm405, 0.0
      %407 = vst.msk [vmem:[#allocation2 + $0x8] sm:$0xff] %vm405, 0.0
      %408 = vst.msk [vmem:[#allocation2 + $0x10] sm:$0xff] %vm405, 0.0
      %409 = vst.msk [vmem:[#allocation2 + $0x18] sm:$0xff] %vm405, 0.0
      %410 = vst.msk [vmem:[#allocation2 + $0x20] sm:$0xff] %vm405, 0.0
      %411 = vst.msk [vmem:[#allocation2 + $0x28] sm:$0xff] %vm405, 0.0
      %412 = vst.msk [vmem:[#allocation2 + $0x30] sm:$0xff] %vm405, 0.0
      %413 = vst.msk [vmem:[#allocation2 + $0x38] sm:$0xff] %vm405, 0.0
      %414 = vst.msk [vmem:[#allocation2 + $0x40] sm:$0xff] %vm405, 0.0
      %415 = vst.msk [vmem:[#allocation2 + $0x48] sm:$0xff] %vm405, 0.0
      %416 = vst.msk [vmem:[#allocation2 + $0x50] sm:$0xff] %vm405, 0.0
      %417 = vst.msk [vmem:[#allocation2 + $0x58] sm:$0xff] %vm405, 0.0
      %418 = vst.msk [vmem:[#allocation2 + $0x60] sm:$0xff] %vm405, 0.0
      %419 = vst.msk [vmem:[#allocation2 + $0x68] sm:$0xff] %vm405, 0.0
      %420 = vst.msk [vmem:[#allocation2 + $0x70] sm:$0xff] %vm405, 0.0
      %421 = vst.msk [vmem:[#allocation2 + $0x78] sm:$0xff] %vm405, 0.0
      %422 = vst.msk [vmem:[#allocation2 + $0x80] sm:$0xff] %vm405, 0.0
      %423 = vst.msk [vmem:[#allocation2 + $0x88] sm:$0xff] %vm405, 0.0
      %424 = vst.msk [vmem:[#allocation2 + $0x90] sm:$0xff] %vm405, 0.0
      %425 = vst.msk [vmem:[#allocation2 + $0x98] sm:$0xff] %vm405, 0.0
      %426 = vst.msk [vmem:[#allocation2 + $0xa0] sm:$0xff] %vm405, 0.0
      %427 = vst.msk [vmem:[#allocation2 + $0xa8] sm:$0xff] %vm405, 0.0
      %428 = vst.msk [vmem:[#allocation2 + $0xb0] sm:$0xff] %vm405, 0.0
      %429 = vst.msk [vmem:[#allocation2 + $0xb8] sm:$0xff] %vm405, 0.0
      %430 = vst.msk [vmem:[#allocation2 + $0xc0] sm:$0xff] %vm405, 0.0
      %431 = vst.msk [vmem:[#allocation2 + $0xc8] sm:$0xff] %vm405, 0.0
      %432 = vst.msk [vmem:[#allocation2 + $0xd0] sm:$0xff] %vm405, 0.0
      %433 = vst.msk [vmem:[#allocation2 + $0xd8] sm:$0xff] %vm405, 0.0
      %434 = vst.msk [vmem:[#allocation2 + $0xe0] sm:$0xff] %vm405, 0.0
      %435 = vst.msk [vmem:[#allocation2 + $0xe8] sm:$0xff] %vm405, 0.0
      %436 = vst.msk [vmem:[#allocation2 + $0xf0] sm:$0xff] %vm405, 0.0
      %437 = vst.msk [vmem:[#allocation2 + $0xf8] sm:$0xff] %vm405, 0.0
      %438 = vst.msk [vmem:[#allocation2 + $0x100] sm:$0xff] %vm405, 0.0
      %439 = vst.msk [vmem:[#allocation2 + $0x108] sm:$0xff] %vm405, 0.0
      %440 = vst.msk [vmem:[#allocation2 + $0x110] sm:$0xff] %vm405, 0.0
      %441 = vst.msk [vmem:[#allocation2 + $0x118] sm:$0xff] %vm405, 0.0
      %442 = vst.msk [vmem:[#allocation2 + $0x120] sm:$0xff] %vm405, 0.0
      %443 = vst.msk [vmem:[#allocation2 + $0x128] sm:$0xff] %vm405, 0.0
      %444 = vst.msk [vmem:[#allocation2 + $0x18] sm:$0xff] %vm405, %v373
      %445 = vst.msk [vmem:[#allocation2 + $0x20] sm:$0xff] %vm405, %v374
      %446 = vst.msk [vmem:[#allocation2 + $0x28] sm:$0xff] %vm405, %v375
      %447 = vst.msk [vmem:[#allocation2 + $0x30] sm:$0xff] %vm405, %v376
      %448 = vst.msk [vmem:[#allocation2 + $0x38] sm:$0xff] %vm405, %v377
      %449 = vst.msk [vmem:[#allocation2 + $0x40] sm:$0xff] %vm405, %v378
      %450 = vst.msk [vmem:[#allocation2 + $0x48] sm:$0xff] %vm405, %v379
      %451 = vst.msk [vmem:[#allocation2 + $0x50] sm:$0xff] %vm405, %v380
      %452 = vst.msk [vmem:[#allocation2 + $0x58] sm:$0xff] %vm405, %v381
      %453 = vst.msk [vmem:[#allocation2 + $0x60] sm:$0xff] %vm405, %v382
      %454 = vst.msk [vmem:[#allocation2 + $0x68] sm:$0xff] %vm405, %v383
      %455 = vst.msk [vmem:[#allocation2 + $0x70] sm:$0xff] %vm405, %v384
      %456 = vst.msk [vmem:[#allocation2 + $0x78] sm:$0xff] %vm405, %v385
      %457 = vst.msk [vmem:[#allocation2 + $0x80] sm:$0xff] %vm405, %v386
      %458 = vst.msk [vmem:[#allocation2 + $0x88] sm:$0xff] %vm405, %v387
      %459 = vst.msk [vmem:[#allocation2 + $0x90] sm:$0xff] %vm405, %v388
      %460 = vst.msk [vmem:[#allocation2 + $0x98] sm:$0xff] %vm405, %v389
      %461 = vst.msk [vmem:[#allocation2 + $0xa0] sm:$0xff] %vm405, %v390
      %462 = vst.msk [vmem:[#allocation2 + $0xa8] sm:$0xff] %vm405, %v391
      %463 = vst.msk [vmem:[#allocation2 + $0xb0] sm:$0xff] %vm405, %v392
      %464 = vst.msk [vmem:[#allocation2 + $0xb8] sm:$0xff] %vm405, %v393
      %465 = vst.msk [vmem:[#allocation2 + $0xc0] sm:$0xff] %vm405, %v394
      %466 = vst.msk [vmem:[#allocation2 + $0xc8] sm:$0xff] %vm405, %v395
      %467 = vst.msk [vmem:[#allocation2 + $0xd0] sm:$0xff] %vm405, %v396
      %468 = vst.msk [vmem:[#allocation2 + $0xd8] sm:$0xff] %vm405, %v397
      %469 = vst.msk [vmem:[#allocation2 + $0xe0] sm:$0xff] %vm405, %v398
      %470 = vst.msk [vmem:[#allocation2 + $0xe8] sm:$0xff] %vm405, %v399
      %471 = vst.msk [vmem:[#allocation2 + $0xf0] sm:$0xff] %vm405, %v400
      %472 = vst.msk [vmem:[#allocation2 + $0xf8] sm:$0xff] %vm405, %v401
      %473 = vst.msk [vmem:[#allocation2 + $0x100] sm:$0xff] %vm405, %v402
      %474 = vst.msk [vmem:[#allocation2 + $0x108] sm:$0xff] %vm405, %v403
      %475 = vst.msk [vmem:[#allocation2 + $0x110] sm:$0xff] %vm405, %v404
      %v476 = vld [vmem:[#allocation2 + $0x7] sm:$0xff]
      %v477 = vld [vmem:[#allocation2 + $0xf] sm:$0xff]
      %v478 = vld [vmem:[#allocation2 + $0x17] sm:$0xff]
      %v479 = vld [vmem:[#allocation2 + $0x1f] sm:$0xff]
      %v480 = vld [vmem:[#allocation2 + $0x27] sm:$0xff]
      %v481 = vld [vmem:[#allocation2 + $0x2f] sm:$0xff]
      %v482 = vld [vmem:[#allocation2 + $0x37] sm:$0xff]
      %v483 = vld [vmem:[#allocation2 + $0x3f] sm:$0xff]
      %v484 = vld [vmem:[#allocation2 + $0x47] sm:$0xff]
      %v485 = vld [vmem:[#allocation2 + $0x4f] sm:$0xff]
      %v486 = vld [vmem:[#allocation2 + $0x57] sm:$0xff]
      %v487 = vld [vmem:[#allocation2 + $0x5f] sm:$0xff]
      %v488 = vld [vmem:[#allocation2 + $0x67] sm:$0xff]
      %v489 = vld [vmem:[#allocation2 + $0x6f] sm:$0xff]
      %v490 = vld [vmem:[#allocation2 + $0x77] sm:$0xff]
      %v491 = vld [vmem:[#allocation2 + $0x7f] sm:$0xff]
      %v492 = vld [vmem:[#allocation2 + $0x87] sm:$0xff]
      %v493 = vld [vmem:[#allocation2 + $0x8f] sm:$0xff]
      %v494 = vld [vmem:[#allocation2 + $0x97] sm:$0xff]
      %v495 = vld [vmem:[#allocation2 + $0x9f] sm:$0xff]
      %v496 = vld [vmem:[#allocation2 + $0xa7] sm:$0xff]
      %v497 = vld [vmem:[#allocation2 + $0xaf] sm:$0xff]
      %v498 = vld [vmem:[#allocation2 + $0xb7] sm:$0xff]
      %v499 = vld [vmem:[#allocation2 + $0xbf] sm:$0xff]
      %v500 = vld [vmem:[#allocation2 + $0xc7] sm:$0xff]
      %v501 = vld [vmem:[#allocation2 + $0xcf] sm:$0xff]
      %v502 = vld [vmem:[#allocation2 + $0xd7] sm:$0xff]
      %v503 = vld [vmem:[#allocation2 + $0xdf] sm:$0xff]
      %v504 = vld [vmem:[#allocation2 + $0xe7] sm:$0xff]
      %v505 = vld [vmem:[#allocation2 + $0xef] sm:$0xff]
      %v506 = vld [vmem:[#allocation2 + $0xf7] sm:$0xff]
      %v507 = vld [vmem:[#allocation2 + $0xff] sm:$0xff]
      %v508 = vld [vmem:[%s4] sm:$0xff]
      %v509 = vld [vmem:[%s4 + $0x8] sm:$0xff]
      %v510 = vld [vmem:[%s4 + $0x10] sm:$0xff]
      %v511 = vld [vmem:[%s4 + $0x18] sm:$0xff]
      %v512 = vld [vmem:[%s4 + $0x20] sm:$0xff]
      %v513 = vld [vmem:[%s4 + $0x28] sm:$0xff]
      %v514 = vld [vmem:[%s4 + $0x30] sm:$0xff]
      %v515 = vld [vmem:[%s4 + $0x38] sm:$0xff]
      %v516 = vld [vmem:[%s4 + $0x40] sm:$0xff]
      %v517 = vld [vmem:[%s4 + $0x48] sm:$0xff]
      %v518 = vld [vmem:[%s4 + $0x50] sm:$0xff]
      %v519 = vld [vmem:[%s4 + $0x58] sm:$0xff]
      %v520 = vld [vmem:[%s4 + $0x60] sm:$0xff]
      %v521 = vld [vmem:[%s4 + $0x68] sm:$0xff]
      %v522 = vld [vmem:[%s4 + $0x70] sm:$0xff]
      %v523 = vld [vmem:[%s4 + $0x78] sm:$0xff]
      %v524 = vld [vmem:[%s4 + $0x80] sm:$0xff]
      %v525 = vld [vmem:[%s4 + $0x88] sm:$0xff]
      %v526 = vld [vmem:[%s4 + $0x90] sm:$0xff]
      %v527 = vld [vmem:[%s4 + $0x98] sm:$0xff]
      %v528 = vld [vmem:[%s4 + $0xa0] sm:$0xff]
      %v529 = vld [vmem:[%s4 + $0xa8] sm:$0xff]
      %v530 = vld [vmem:[%s4 + $0xb0] sm:$0xff]
      %v531 = vld [vmem:[%s4 + $0xb8] sm:$0xff]
      %v532 = vld [vmem:[%s4 + $0xc0] sm:$0xff]
      %v533 = vld [vmem:[%s4 + $0xc8] sm:$0xff]
      %v534 = vld [vmem:[%s4 + $0xd0] sm:$0xff]
      %v535 = vld [vmem:[%s4 + $0xd8] sm:$0xff]
      %v536 = vld [vmem:[%s4 + $0xe0] sm:$0xff]
      %v537 = vld [vmem:[%s4 + $0xe8] sm:$0xff]
      %v538 = vld [vmem:[%s4 + $0xf0] sm:$0xff]
      %v539 = vld [vmem:[%s4 + $0xf8] sm:$0xff]
      %541 = vset.pattern.permute.xlu0 0
      %542 = vperm.xlu0 %541, %v508
      %v543 = vpop.permute.xlu0 %542
      %546 = vset.pattern.permute.xlu0 0
      %547 = vperm.xlu0 %546, %v509
      %v548 = vpop.permute.xlu0 %547
      %551 = vset.pattern.permute.xlu0 0
      %552 = vperm.xlu0 %551, %v510
      %v553 = vpop.permute.xlu0 %552
      %556 = vset.pattern.permute.xlu0 0
      %557 = vperm.xlu0 %556, %v511
      %v558 = vpop.permute.xlu0 %557
      %561 = vset.pattern.permute.xlu0 0
      %562 = vperm.xlu0 %561, %v512
      %v563 = vpop.permute.xlu0 %562
      %566 = vset.pattern.permute.xlu0 0
      %567 = vperm.xlu0 %566, %v513
      %v568 = vpop.permute.xlu0 %567
      %571 = vset.pattern.permute.xlu0 0
      %572 = vperm.xlu0 %571, %v514
      %v573 = vpop.permute.xlu0 %572
      %576 = vset.pattern.permute.xlu0 0
      %577 = vperm.xlu0 %576, %v515
      %v578 = vpop.permute.xlu0 %577
      %581 = vset.pattern.permute.xlu0 0
      %582 = vperm.xlu0 %581, %v516
      %v583 = vpop.permute.xlu0 %582
      %586 = vset.pattern.permute.xlu0 0
      %587 = vperm.xlu0 %586, %v517
      %v588 = vpop.permute.xlu0 %587
      %591 = vset.pattern.permute.xlu0 0
      %592 = vperm.xlu0 %591, %v518
      %v593 = vpop.permute.xlu0 %592
      %596 = vset.pattern.permute.xlu0 0
      %597 = vperm.xlu0 %596, %v519
      %v598 = vpop.permute.xlu0 %597
      %601 = vset.pattern.permute.xlu0 0
      %602 = vperm.xlu0 %601, %v520
      %v603 = vpop.permute.xlu0 %602
      %606 = vset.pattern.permute.xlu0 0
      %607 = vperm.xlu0 %606, %v521
      %v608 = vpop.permute.xlu0 %607
      %611 = vset.pattern.permute.xlu0 0
      %612 = vperm.xlu0 %611, %v522
      %v613 = vpop.permute.xlu0 %612
      %616 = vset.pattern.permute.xlu0 0
      %617 = vperm.xlu0 %616, %v523
      %v618 = vpop.permute.xlu0 %617
      %621 = vset.pattern.permute.xlu0 0
      %622 = vperm.xlu0 %621, %v524
      %v623 = vpop.permute.xlu0 %622
      %626 = vset.pattern.permute.xlu0 0
      %627 = vperm.xlu0 %626, %v525
      %v628 = vpop.permute.xlu0 %627
      %631 = vset.pattern.permute.xlu0 0
      %632 = vperm.xlu0 %631, %v526
      %v633 = vpop.permute.xlu0 %632
      %636 = vset.pattern.permute.xlu0 0
      %637 = vperm.xlu0 %636, %v527
      %v638 = vpop.permute.xlu0 %637
      %641 = vset.pattern.permute.xlu0 0
      %642 = vperm.xlu0 %641, %v528
      %v643 = vpop.permute.xlu0 %642
      %646 = vset.pattern.permute.xlu0 0
      %647 = vperm.xlu0 %646, %v529
      %v648 = vpop.permute.xlu0 %647
      %651 = vset.pattern.permute.xlu0 0
      %652 = vperm.xlu0 %651, %v530
      %v653 = vpop.permute.xlu0 %652
      %656 = vset.pattern.permute.xlu0 0
      %657 = vperm.xlu0 %656, %v531
      %v658 = vpop.permute.xlu0 %657
      %661 = vset.pattern.permute.xlu0 0
      %662 = vperm.xlu0 %661, %v532
      %v663 = vpop.permute.xlu0 %662
      %666 = vset.pattern.permute.xlu0 0
      %667 = vperm.xlu0 %666, %v533
      %v668 = vpop.permute.xlu0 %667
      %671 = vset.pattern.permute.xlu0 0
      %672 = vperm.xlu0 %671, %v534
      %v673 = vpop.permute.xlu0 %672
      %676 = vset.pattern.permute.xlu0 0
      %677 = vperm.xlu0 %676, %v535
      %v678 = vpop.permute.xlu0 %677
      %681 = vset.pattern.permute.xlu0 0
      %682 = vperm.xlu0 %681, %v536
      %v683 = vpop.permute.xlu0 %682
      %686 = vset.pattern.permute.xlu0 0
      %687 = vperm.xlu0 %686, %v537
      %v688 = vpop.permute.xlu0 %687
      %691 = vset.pattern.permute.xlu0 0
      %692 = vperm.xlu0 %691, %v538
      %v693 = vpop.permute.xlu0 %692
      %696 = vset.pattern.permute.xlu0 0
      %697 = vperm.xlu0 %696, %v539
      %v698 = vpop.permute.xlu0 %697
      %v700 = vmul.f32 %v476, %v543
      %v701 = vmul.f32 %v477, %v548
      %v702 = vmul.f32 %v478, %v553
      %v703 = vmul.f32 %v479, %v558
      %v704 = vmul.f32 %v480, %v563
      %v705 = vmul.f32 %v481, %v568
      %v706 = vmul.f32 %v482, %v573
      %v707 = vmul.f32 %v483, %v578
      %v708 = vmul.f32 %v484, %v583
      %v709 = vmul.f32 %v485, %v588
      %v710 = vmul.f32 %v486, %v593
      %v711 = vmul.f32 %v487, %v598
      %v712 = vmul.f32 %v488, %v603
      %v713 = vmul.f32 %v489, %v608
      %v714 = vmul.f32 %v490, %v613
      %v715 = vmul.f32 %v491, %v618
      %v716 = vmul.f32 %v492, %v623
      %v717 = vmul.f32 %v493, %v628
      %v718 = vmul.f32 %v494, %v633
      %v719 = vmul.f32 %v495, %v638
      %v720 = vmul.f32 %v496, %v643
      %v721 = vmul.f32 %v497, %v648
      %v722 = vmul.f32 %v498, %v653
      %v723 = vmul.f32 %v499, %v658
      %v724 = vmul.f32 %v500, %v663
      %v725 = vmul.f32 %v501, %v668
      %v726 = vmul.f32 %v502, %v673
      %v727 = vmul.f32 %v503, %v678
      %v728 = vmul.f32 %v504, %v683
      %v729 = vmul.f32 %v505, %v688
      %v730 = vmul.f32 %v506, %v693
      %v731 = vmul.f32 %v507, %v698
      %v732 = vld [vmem:[%s1] sm:$0xff]
      %v733 = vld [vmem:[%s1 + $0x8] sm:$0xff]
      %v734 = vld [vmem:[#allocation2 + $0x8] sm:$0xff]
      %v735 = vld [vmem:[#allocation2 + $0x10] sm:$0xff]
      %v736 = vld [vmem:[#allocation2 + $0x18] sm:$0xff]
      %v737 = vld [vmem:[#allocation2 + $0x20] sm:$0xff]
      %v738 = vld [vmem:[#allocation2 + $0x28] sm:$0xff]
      %v739 = vld [vmem:[#allocation2 + $0x30] sm:$0xff]
      %v740 = vld [vmem:[#allocation2 + $0x38] sm:$0xff]
      %v741 = vld [vmem:[#allocation2 + $0x40] sm:$0xff]
      %v742 = vld [vmem:[#allocation2 + $0x48] sm:$0xff]
      %v743 = vld [vmem:[#allocation2 + $0x50] sm:$0xff]
      %v744 = vld [vmem:[#allocation2 + $0x58] sm:$0xff]
      %v745 = vld [vmem:[#allocation2 + $0x60] sm:$0xff]
      %v746 = vld [vmem:[#allocation2 + $0x68] sm:$0xff]
      %v747 = vld [vmem:[#allocation2 + $0x70] sm:$0xff]
      %v748 = vld [vmem:[#allocation2 + $0x78] sm:$0xff]
      %v749 = vld [vmem:[#allocation2 + $0x80] sm:$0xff]
      %v750 = vld [vmem:[#allocation2 + $0x88] sm:$0xff]
      %v751 = vld [vmem:[#allocation2 + $0x90] sm:$0xff]
      %v752 = vld [vmem:[#allocation2 + $0x98] sm:$0xff]
      %v753 = vld [vmem:[#allocation2 + $0xa0] sm:$0xff]
      %v754 = vld [vmem:[#allocation2 + $0xa8] sm:$0xff]
      %v755 = vld [vmem:[#allocation2 + $0xb0] sm:$0xff]
      %v756 = vld [vmem:[#allocation2 + $0xb8] sm:$0xff]
      %v757 = vld [vmem:[#allocation2 + $0xc0] sm:$0xff]
      %v758 = vld [vmem:[#allocation2 + $0xc8] sm:$0xff]
      %v759 = vld [vmem:[#allocation2 + $0xd0] sm:$0xff]
      %v760 = vld [vmem:[#allocation2 + $0xd8] sm:$0xff]
      %v761 = vld [vmem:[#allocation2 + $0xe0] sm:$0xff]
      %v762 = vld [vmem:[#allocation2 + $0xe8] sm:$0xff]
      %v763 = vld [vmem:[#allocation2 + $0xf0] sm:$0xff]
      %v764 = vld [vmem:[#allocation2 + $0xf8] sm:$0xff]
      %v765 = vld [vmem:[#allocation2 + $0x100] sm:$0xff]
      %s766 = scalar_lea.vmem %s1, 16
      %v767 = vld [vmem:[%s766] sm:$0xff]
      %v768 = vld [vmem:[%s766 + $0x8] sm:$0xff]
      %v770 = vsel %vm405, %v734, 0
      %v773 = vsel %vm405, %v735, 0
      %v776 = vsel %vm405, %v736, 0
      %v779 = vsel %vm405, %v737, 0
      %v782 = vsel %vm405, %v738, 0
      %v785 = vsel %vm405, %v739, 0
      %v788 = vsel %vm405, %v740, 0
      %v791 = vsel %vm405, %v741, 0
      %v794 = vsel %vm405, %v742, 0
      %v797 = vsel %vm405, %v743, 0
      %v800 = vsel %vm405, %v744, 0
      %v803 = vsel %vm405, %v745, 0
      %v806 = vsel %vm405, %v746, 0
      %v809 = vsel %vm405, %v747, 0
      %v812 = vsel %vm405, %v748, 0
      %v815 = vsel %vm405, %v749, 0
      %v818 = vsel %vm405, %v750, 0
      %v821 = vsel %vm405, %v751, 0
      %v824 = vsel %vm405, %v752, 0
      %v827 = vsel %vm405, %v753, 0
      %v830 = vsel %vm405, %v754, 0
      %v833 = vsel %vm405, %v755, 0
      %v836 = vsel %vm405, %v756, 0
      %v839 = vsel %vm405, %v757, 0
      %v842 = vsel %vm405, %v758, 0
      %v845 = vsel %vm405, %v759, 0
      %v848 = vsel %vm405, %v760, 0
      %v851 = vsel %vm405, %v761, 0
      %v854 = vsel %vm405, %v762, 0
      %v857 = vsel %vm405, %v763, 0
      %v860 = vsel %vm405, %v764, 0
      %v863 = vsel %vm405, %v765, 0
      %865 = vmatprep.subr.mxu0 0.0
      %866 = vmatpush1.msra.mxu0 0.0
      %867 = vmatprep.subr.mxu0 0.0
      %868 = vmatpush1.msra.mxu0 0.0
      %869 = vmatprep.subr.mxu0 0.0
      %870 = vmatpush1.msra.mxu0 0.0
      %871 = vmatprep.subr.mxu0 0.0
      %872 = vmatpush1.msra.mxu0 0.0
      %873 = vmatprep.subr.mxu0 0.0
      %874 = vmatpush1.msra.mxu0 0.0
      %875 = vmatprep.subr.mxu0 0.0
      %876 = vmatpush1.msra.mxu0 0.0
      %877 = vmatprep.subr.mxu0 0.0
      %878 = vmatpush1.msra.mxu0 0.0
      %879 = vmatprep.subr.mxu0 0.0
      %880 = vmatpush1.msra.mxu0 0.0
      %881 = vmatprep.subr.mxu0 0.0
      %882 = vmatpush1.msra.mxu0 0.0
      %883 = vmatprep.subr.mxu0 0.0
      %884 = vmatpush1.msra.mxu0 0.0
      %885 = vmatprep.subr.mxu0 0.0
      %886 = vmatpush1.msra.mxu0 0.0
      %887 = vmatprep.subr.mxu0 0.0
      %888 = vmatpush1.msra.mxu0 0.0
      %889 = vmatprep.subr.mxu0 0.0
      %890 = vmatpush1.msra.mxu0 0.0
      %891 = vmatprep.subr.mxu0 0.0
      %892 = vmatpush1.msra.mxu0 0.0
      %893 = vmatprep.subr.mxu0 0.0
      %894 = vmatpush1.msra.mxu0 %v768
      %895 = vmatprep.subr.mxu0 0.0
      %896 = vmatpush1.msra.mxu0 %v767
      %897 = vmatprep.subr.mxu0 0.0
      %898 = vmatpush2.msra.mxu0 0.0
      %899 = vmatprep.subr.mxu0 0.0
      %900 = vmatpush2.msra.mxu0 0.0
      %901 = vmatprep.subr.mxu0 0.0
      %902 = vmatpush2.msra.mxu0 0.0
      %903 = vmatprep.subr.mxu0 0.0
      %904 = vmatpush2.msra.mxu0 0.0
      %905 = vmatprep.subr.mxu0 0.0
      %906 = vmatpush2.msra.mxu0 0.0
      %907 = vmatprep.subr.mxu0 0.0
      %908 = vmatpush2.msra.mxu0 0.0
      %909 = vmatprep.subr.mxu0 0.0
      %910 = vmatpush2.msra.mxu0 0.0
      %911 = vmatprep.subr.mxu0 0.0
      %912 = vmatpush2.msra.mxu0 0.0
      %913 = vmatprep.subr.mxu0 0.0
      %914 = vmatpush2.msra.mxu0 0.0
      %915 = vmatprep.subr.mxu0 0.0
      %916 = vmatpush2.msra.mxu0 0.0
      %917 = vmatprep.subr.mxu0 0.0
      %918 = vmatpush2.msra.mxu0 0.0
      %919 = vmatprep.subr.mxu0 0.0
      %920 = vmatpush2.msra.mxu0 0.0
      %921 = vmatprep.subr.mxu0 0.0
      %922 = vmatpush2.msra.mxu0 0.0
      %923 = vmatprep.subr.mxu0 0.0
      %924 = vmatpush2.msra.mxu0 0.0
      %925 = vmatprep.subr.mxu0 0.0
      %926 = vmatpush2.msra.mxu0 0.0
      %927 = vmatprep.subr.mxu0 0.0
      %928 = vmatpush2.msra.mxu0 0.0
      %929 = vmatprep.mubr.f32.mxu0 0.0
      %930 = vmatmul.mubr.f32.gmra.mxu0 %v770
      %v931 = vpop.f32.mrf.mxu0
      %v932 = vadd.f32 0.0, %v931
      %v933 = vpop.f32.mrf.mxu0
      %934 = vmatprep.mubr.f32.mxu0 0.0
      %935 = vmatmul.mubr.f32.gmra.mxu0 %v773
      %v936 = vpop.f32.mrf.mxu0
      %v937 = vadd.f32 0.0, %v936
      %v938 = vpop.f32.mrf.mxu0
      %939 = vmatprep.mubr.f32.mxu0 0.0
      %940 = vmatmul.mubr.f32.gmra.mxu0 %v776
      %v941 = vpop.f32.mrf.mxu0
      %v942 = vadd.f32 0.0, %v941
      %v943 = vpop.f32.mrf.mxu0
      %944 = vmatprep.mubr.f32.mxu0 0.0
      %945 = vmatmul.mubr.f32.gmra.mxu0 %v779
      %v946 = vpop.f32.mrf.mxu0
      %v947 = vadd.f32 0.0, %v946
      %v948 = vpop.f32.mrf.mxu0
      %949 = vmatprep.mubr.f32.mxu0 0.0
      %950 = vmatmul.mubr.f32.gmra.mxu0 %v782
      %v951 = vpop.f32.mrf.mxu0
      %v952 = vadd.f32 0.0, %v951
      %v953 = vpop.f32.mrf.mxu0
      %954 = vmatprep.mubr.f32.mxu0 0.0
      %955 = vmatmul.mubr.f32.gmra.mxu0 %v785
      %v956 = vpop.f32.mrf.mxu0
      %v957 = vadd.f32 0.0, %v956
      %v958 = vpop.f32.mrf.mxu0
      %959 = vmatprep.mubr.f32.mxu0 0.0
      %960 = vmatmul.mubr.f32.gmra.mxu0 %v788
      %v961 = vpop.f32.mrf.mxu0
      %v962 = vadd.f32 0.0, %v961
      %v963 = vpop.f32.mrf.mxu0
      %964 = vmatprep.mubr.f32.mxu0 0.0
      %965 = vmatmul.mubr.f32.gmra.mxu0 %v791
      %v966 = vpop.f32.mrf.mxu0
      %v967 = vadd.f32 0.0, %v966
      %v968 = vpop.f32.mrf.mxu0
      %969 = vmatprep.mubr.f32.mxu0 0.0
      %970 = vmatmul.mubr.f32.gmra.mxu0 %v794
      %v971 = vpop.f32.mrf.mxu0
      %v972 = vadd.f32 0.0, %v971
      %v973 = vpop.f32.mrf.mxu0
      %974 = vmatprep.mubr.f32.mxu0 0.0
      %975 = vmatmul.mubr.f32.gmra.mxu0 %v797
      %v976 = vpop.f32.mrf.mxu0
      %v977 = vadd.f32 0.0, %v976
      %v978 = vpop.f32.mrf.mxu0
      %979 = vmatprep.mubr.f32.mxu0 0.0
      %980 = vmatmul.mubr.f32.gmra.mxu0 %v800
      %v981 = vpop.f32.mrf.mxu0
      %v982 = vadd.f32 0.0, %v981
      %v983 = vpop.f32.mrf.mxu0
      %984 = vmatprep.mubr.f32.mxu0 0.0
      %985 = vmatmul.mubr.f32.gmra.mxu0 %v803
      %v986 = vpop.f32.mrf.mxu0
      %v987 = vadd.f32 0.0, %v986
      %v988 = vpop.f32.mrf.mxu0
      %989 = vmatprep.mubr.f32.mxu0 0.0
      %990 = vmatmul.mubr.f32.gmra.mxu0 %v806
      %v991 = vpop.f32.mrf.mxu0
      %v992 = vadd.f32 0.0, %v991
      %v993 = vpop.f32.mrf.mxu0
      %994 = vmatprep.mubr.f32.mxu0 0.0
      %995 = vmatmul.mubr.f32.gmra.mxu0 %v809
      %v996 = vpop.f32.mrf.mxu0
      %v997 = vadd.f32 0.0, %v996
      %v998 = vpop.f32.mrf.mxu0
      %999 = vmatprep.mubr.f32.mxu0 0.0
      %1000 = vmatmul.mubr.f32.gmra.mxu0 %v812
      %v1001 = vpop.f32.mrf.mxu0
      %v1002 = vadd.f32 0.0, %v1001
      %v1003 = vpop.f32.mrf.mxu0
      %1004 = vmatprep.mubr.f32.mxu0 0.0
      %1005 = vmatmul.mubr.f32.gmra.mxu0 %v815
      %v1006 = vpop.f32.mrf.mxu0
      %v1007 = vadd.f32 0.0, %v1006
      %v1008 = vpop.f32.mrf.mxu0
      %1009 = vmatprep.mubr.f32.mxu0 0.0
      %1010 = vmatmul.mubr.f32.gmra.mxu0 %v818
      %v1011 = vpop.f32.mrf.mxu0
      %v1012 = vadd.f32 0.0, %v1011
      %v1013 = vpop.f32.mrf.mxu0
      %1014 = vmatprep.mubr.f32.mxu0 0.0
      %1015 = vmatmul.mubr.f32.gmra.mxu0 %v821
      %v1016 = vpop.f32.mrf.mxu0
      %v1017 = vadd.f32 0.0, %v1016
      %v1018 = vpop.f32.mrf.mxu0
      %1019 = vmatprep.mubr.f32.mxu0 0.0
      %1020 = vmatmul.mubr.f32.gmra.mxu0 %v824
      %v1021 = vpop.f32.mrf.mxu0
      %v1022 = vadd.f32 0.0, %v1021
      %v1023 = vpop.f32.mrf.mxu0
      %1024 = vmatprep.mubr.f32.mxu0 0.0
      %1025 = vmatmul.mubr.f32.gmra.mxu0 %v827
      %v1026 = vpop.f32.mrf.mxu0
      %v1027 = vadd.f32 0.0, %v1026
      %v1028 = vpop.f32.mrf.mxu0
      %1029 = vmatprep.mubr.f32.mxu0 0.0
      %1030 = vmatmul.mubr.f32.gmra.mxu0 %v830
      %v1031 = vpop.f32.mrf.mxu0
      %v1032 = vadd.f32 0.0, %v1031
      %v1033 = vpop.f32.mrf.mxu0
      %1034 = vmatprep.mubr.f32.mxu0 0.0
      %1035 = vmatmul.mubr.f32.gmra.mxu0 %v833
      %v1036 = vpop.f32.mrf.mxu0
      %v1037 = vadd.f32 0.0, %v1036
      %v1038 = vpop.f32.mrf.mxu0
      %1039 = vmatprep.mubr.f32.mxu0 0.0
      %1040 = vmatmul.mubr.f32.gmra.mxu0 %v836
      %v1041 = vpop.f32.mrf.mxu0
      %v1042 = vadd.f32 0.0, %v1041
      %v1043 = vpop.f32.mrf.mxu0
      %1044 = vmatprep.mubr.f32.mxu0 0.0
      %1045 = vmatmul.mubr.f32.gmra.mxu0 %v839
      %v1046 = vpop.f32.mrf.mxu0
      %v1047 = vadd.f32 0.0, %v1046
      %v1048 = vpop.f32.mrf.mxu0
      %1049 = vmatprep.mubr.f32.mxu0 0.0
      %1050 = vmatmul.mubr.f32.gmra.mxu0 %v842
      %v1051 = vpop.f32.mrf.mxu0
      %v1052 = vadd.f32 0.0, %v1051
      %v1053 = vpop.f32.mrf.mxu0
      %1054 = vmatprep.mubr.f32.mxu0 0.0
      %1055 = vmatmul.mubr.f32.gmra.mxu0 %v845
      %v1056 = vpop.f32.mrf.mxu0
      %v1057 = vadd.f32 0.0, %v1056
      %v1058 = vpop.f32.mrf.mxu0
      %1059 = vmatprep.mubr.f32.mxu0 0.0
      %1060 = vmatmul.mubr.f32.gmra.mxu0 %v848
      %v1061 = vpop.f32.mrf.mxu0
      %v1062 = vadd.f32 0.0, %v1061
      %v1063 = vpop.f32.mrf.mxu0
      %1064 = vmatprep.mubr.f32.mxu0 0.0
      %1065 = vmatmul.mubr.f32.gmra.mxu0 %v851
      %v1066 = vpop.f32.mrf.mxu0
      %v1067 = vadd.f32 0.0, %v1066
      %v1068 = vpop.f32.mrf.mxu0
      %1069 = vmatprep.mubr.f32.mxu0 0.0
      %1070 = vmatmul.mubr.f32.gmra.mxu0 %v854
      %v1071 = vpop.f32.mrf.mxu0
      %v1072 = vadd.f32 0.0, %v1071
      %v1073 = vpop.f32.mrf.mxu0
      %1074 = vmatprep.mubr.f32.mxu0 0.0
      %1075 = vmatmul.mubr.f32.gmra.mxu0 %v857
      %v1076 = vpop.f32.mrf.mxu0
      %v1077 = vadd.f32 0.0, %v1076
      %v1078 = vpop.f32.mrf.mxu0
      %1079 = vmatprep.mubr.f32.mxu0 0.0
      %1080 = vmatmul.mubr.f32.gmra.mxu0 %v860
      %v1081 = vpop.f32.mrf.mxu0
      %v1082 = vadd.f32 0.0, %v1081
      %v1083 = vpop.f32.mrf.mxu0
      %1084 = vmatprep.mubr.f32.mxu0 0.0
      %1085 = vmatmul.mubr.f32.gmra.mxu0 %v863
      %v1086 = vpop.f32.mrf.mxu0
      %v1087 = vadd.f32 0.0, %v1086
      %v1088 = vpop.f32.mrf.mxu0
      %1089 = vdwg.mxu0
      %v1091 = vsel %vm405, %v700, 0
      %v1094 = vsel %vm405, %v701, 0
      %v1097 = vsel %vm405, %v702, 0
      %v1100 = vsel %vm405, %v703, 0
      %v1103 = vsel %vm405, %v704, 0
      %v1106 = vsel %vm405, %v705, 0
      %v1109 = vsel %vm405, %v706, 0
      %v1112 = vsel %vm405, %v707, 0
      %v1115 = vsel %vm405, %v708, 0
      %v1118 = vsel %vm405, %v709, 0
      %v1121 = vsel %vm405, %v710, 0
      %v1124 = vsel %vm405, %v711, 0
      %v1127 = vsel %vm405, %v712, 0
      %v1130 = vsel %vm405, %v713, 0
      %v1133 = vsel %vm405, %v714, 0
      %v1136 = vsel %vm405, %v715, 0
      %v1139 = vsel %vm405, %v716, 0
      %v1142 = vsel %vm405, %v717, 0
      %v1145 = vsel %vm405, %v718, 0
      %v1148 = vsel %vm405, %v719, 0
      %v1151 = vsel %vm405, %v720, 0
      %v1154 = vsel %vm405, %v721, 0
      %v1157 = vsel %vm405, %v722, 0
      %v1160 = vsel %vm405, %v723, 0
      %v1163 = vsel %vm405, %v724, 0
      %v1166 = vsel %vm405, %v725, 0
      %v1169 = vsel %vm405, %v726, 0
      %v1172 = vsel %vm405, %v727, 0
      %v1175 = vsel %vm405, %v728, 0
      %v1178 = vsel %vm405, %v729, 0
      %v1181 = vsel %vm405, %v730, 0
      %v1184 = vsel %vm405, %v731, 0
      %1186 = vmatprep.subr.mxu0 0.0
      %1187 = vmatpush1.msra.mxu0 0.0
      %1188 = vmatprep.subr.mxu0 0.0
      %1189 = vmatpush1.msra.mxu0 0.0
      %1190 = vmatprep.subr.mxu0 0.0
      %1191 = vmatpush1.msra.mxu0 0.0
      %1192 = vmatprep.subr.mxu0 0.0
      %1193 = vmatpush1.msra.mxu0 0.0
      %1194 = vmatprep.subr.mxu0 0.0
      %1195 = vmatpush1.msra.mxu0 0.0
      %1196 = vmatprep.subr.mxu0 0.0
      %1197 = vmatpush1.msra.mxu0 0.0
      %1198 = vmatprep.subr.mxu0 0.0
      %1199 = vmatpush1.msra.mxu0 0.0
      %1200 = vmatprep.subr.mxu0 0.0
      %1201 = vmatpush1.msra.mxu0 0.0
      %1202 = vmatprep.subr.mxu0 0.0
      %1203 = vmatpush1.msra.mxu0 0.0
      %1204 = vmatprep.subr.mxu0 0.0
      %1205 = vmatpush1.msra.mxu0 0.0
      %1206 = vmatprep.subr.mxu0 0.0
      %1207 = vmatpush1.msra.mxu0 0.0
      %1208 = vmatprep.subr.mxu0 0.0
      %1209 = vmatpush1.msra.mxu0 0.0
      %1210 = vmatprep.subr.mxu0 0.0
      %1211 = vmatpush1.msra.mxu0 0.0
      %1212 = vmatprep.subr.mxu0 0.0
      %1213 = vmatpush1.msra.mxu0 0.0
      %1214 = vmatprep.subr.mxu0 0.0
      %1215 = vmatpush1.msra.mxu0 %v733
      %1216 = vmatprep.subr.mxu0 0.0
      %1217 = vmatpush1.msra.mxu0 %v732
      %1218 = vmatprep.subr.mxu0 0.0
      %1219 = vmatpush2.msra.mxu0 0.0
      %1220 = vmatprep.subr.mxu0 0.0
      %1221 = vmatpush2.msra.mxu0 0.0
      %1222 = vmatprep.subr.mxu0 0.0
      %1223 = vmatpush2.msra.mxu0 0.0
      %1224 = vmatprep.subr.mxu0 0.0
      %1225 = vmatpush2.msra.mxu0 0.0
      %1226 = vmatprep.subr.mxu0 0.0
      %1227 = vmatpush2.msra.mxu0 0.0
      %1228 = vmatprep.subr.mxu0 0.0
      %1229 = vmatpush2.msra.mxu0 0.0
      %1230 = vmatprep.subr.mxu0 0.0
      %1231 = vmatpush2.msra.mxu0 0.0
      %1232 = vmatprep.subr.mxu0 0.0
      %1233 = vmatpush2.msra.mxu0 0.0
      %1234 = vmatprep.subr.mxu0 0.0
      %1235 = vmatpush2.msra.mxu0 0.0
      %1236 = vmatprep.subr.mxu0 0.0
      %1237 = vmatpush2.msra.mxu0 0.0
      %1238 = vmatprep.subr.mxu0 0.0
      %1239 = vmatpush2.msra.mxu0 0.0
      %1240 = vmatprep.subr.mxu0 0.0
      %1241 = vmatpush2.msra.mxu0 0.0
      %1242 = vmatprep.subr.mxu0 0.0
      %1243 = vmatpush2.msra.mxu0 0.0
      %1244 = vmatprep.subr.mxu0 0.0
      %1245 = vmatpush2.msra.mxu0 0.0
      %1246 = vmatprep.subr.mxu0 0.0
      %1247 = vmatpush2.msra.mxu0 0.0
      %1248 = vmatprep.subr.mxu0 0.0
      %1249 = vmatpush2.msra.mxu0 0.0
      %1250 = vmatprep.mubr.f32.mxu0 0.0
      %1251 = vmatmul.mubr.f32.gmra.mxu0 %v1091
      %v1252 = vpop.f32.mrf.mxu0
      %v1253 = vadd.f32 %v932, %v1252
      %v1254 = vpop.f32.mrf.mxu0
      %1255 = vmatprep.mubr.f32.mxu0 0.0
      %1256 = vmatmul.mubr.f32.gmra.mxu0 %v1094
      %v1257 = vpop.f32.mrf.mxu0
      %v1258 = vadd.f32 %v937, %v1257
      %v1259 = vpop.f32.mrf.mxu0
      %1260 = vmatprep.mubr.f32.mxu0 0.0
      %1261 = vmatmul.mubr.f32.gmra.mxu0 %v1097
      %v1262 = vpop.f32.mrf.mxu0
      %v1263 = vadd.f32 %v942, %v1262
      %v1264 = vpop.f32.mrf.mxu0
      %1265 = vmatprep.mubr.f32.mxu0 0.0
      %1266 = vmatmul.mubr.f32.gmra.mxu0 %v1100
      %v1267 = vpop.f32.mrf.mxu0
      %v1268 = vadd.f32 %v947, %v1267
      %v1269 = vpop.f32.mrf.mxu0
      %1270 = vmatprep.mubr.f32.mxu0 0.0
      %1271 = vmatmul.mubr.f32.gmra.mxu0 %v1103
      %v1272 = vpop.f32.mrf.mxu0
      %v1273 = vadd.f32 %v952, %v1272
      %v1274 = vpop.f32.mrf.mxu0
      %1275 = vmatprep.mubr.f32.mxu0 0.0
      %1276 = vmatmul.mubr.f32.gmra.mxu0 %v1106
      %v1277 = vpop.f32.mrf.mxu0
      %v1278 = vadd.f32 %v957, %v1277
      %v1279 = vpop.f32.mrf.mxu0
      %1280 = vmatprep.mubr.f32.mxu0 0.0
      %1281 = vmatmul.mubr.f32.gmra.mxu0 %v1109
      %v1282 = vpop.f32.mrf.mxu0
      %v1283 = vadd.f32 %v962, %v1282
      %v1284 = vpop.f32.mrf.mxu0
      %1285 = vmatprep.mubr.f32.mxu0 0.0
      %1286 = vmatmul.mubr.f32.gmra.mxu0 %v1112
      %v1287 = vpop.f32.mrf.mxu0
      %v1288 = vadd.f32 %v967, %v1287
      %v1289 = vpop.f32.mrf.mxu0
      %1290 = vmatprep.mubr.f32.mxu0 0.0
      %1291 = vmatmul.mubr.f32.gmra.mxu0 %v1115
      %v1292 = vpop.f32.mrf.mxu0
      %v1293 = vadd.f32 %v972, %v1292
      %v1294 = vpop.f32.mrf.mxu0
      %1295 = vmatprep.mubr.f32.mxu0 0.0
      %1296 = vmatmul.mubr.f32.gmra.mxu0 %v1118
      %v1297 = vpop.f32.mrf.mxu0
      %v1298 = vadd.f32 %v977, %v1297
      %v1299 = vpop.f32.mrf.mxu0
      %1300 = vmatprep.mubr.f32.mxu0 0.0
      %1301 = vmatmul.mubr.f32.gmra.mxu0 %v1121
      %v1302 = vpop.f32.mrf.mxu0
      %v1303 = vadd.f32 %v982, %v1302
      %v1304 = vpop.f32.mrf.mxu0
      %1305 = vmatprep.mubr.f32.mxu0 0.0
      %1306 = vmatmul.mubr.f32.gmra.mxu0 %v1124
      %v1307 = vpop.f32.mrf.mxu0
      %v1308 = vadd.f32 %v987, %v1307
      %v1309 = vpop.f32.mrf.mxu0
      %1310 = vmatprep.mubr.f32.mxu0 0.0
      %1311 = vmatmul.mubr.f32.gmra.mxu0 %v1127
      %v1312 = vpop.f32.mrf.mxu0
      %v1313 = vadd.f32 %v992, %v1312
      %v1314 = vpop.f32.mrf.mxu0
      %1315 = vmatprep.mubr.f32.mxu0 0.0
      %1316 = vmatmul.mubr.f32.gmra.mxu0 %v1130
      %v1317 = vpop.f32.mrf.mxu0
      %v1318 = vadd.f32 %v997, %v1317
      %v1319 = vpop.f32.mrf.mxu0
      %1320 = vmatprep.mubr.f32.mxu0 0.0
      %1321 = vmatmul.mubr.f32.gmra.mxu0 %v1133
      %v1322 = vpop.f32.mrf.mxu0
      %v1323 = vadd.f32 %v1002, %v1322
      %v1324 = vpop.f32.mrf.mxu0
      %1325 = vmatprep.mubr.f32.mxu0 0.0
      %1326 = vmatmul.mubr.f32.gmra.mxu0 %v1136
      %v1327 = vpop.f32.mrf.mxu0
      %v1328 = vadd.f32 %v1007, %v1327
      %v1329 = vpop.f32.mrf.mxu0
      %1330 = vmatprep.mubr.f32.mxu0 0.0
      %1331 = vmatmul.mubr.f32.gmra.mxu0 %v1139
      %v1332 = vpop.f32.mrf.mxu0
      %v1333 = vadd.f32 %v1012, %v1332
      %v1334 = vpop.f32.mrf.mxu0
      %1335 = vmatprep.mubr.f32.mxu0 0.0
      %1336 = vmatmul.mubr.f32.gmra.mxu0 %v1142
      %v1337 = vpop.f32.mrf.mxu0
      %v1338 = vadd.f32 %v1017, %v1337
      %v1339 = vpop.f32.mrf.mxu0
      %1340 = vmatprep.mubr.f32.mxu0 0.0
      %1341 = vmatmul.mubr.f32.gmra.mxu0 %v1145
      %v1342 = vpop.f32.mrf.mxu0
      %v1343 = vadd.f32 %v1022, %v1342
      %v1344 = vpop.f32.mrf.mxu0
      %1345 = vmatprep.mubr.f32.mxu0 0.0
      %1346 = vmatmul.mubr.f32.gmra.mxu0 %v1148
      %v1347 = vpop.f32.mrf.mxu0
      %v1348 = vadd.f32 %v1027, %v1347
      %v1349 = vpop.f32.mrf.mxu0
      %1350 = vmatprep.mubr.f32.mxu0 0.0
      %1351 = vmatmul.mubr.f32.gmra.mxu0 %v1151
      %v1352 = vpop.f32.mrf.mxu0
      %v1353 = vadd.f32 %v1032, %v1352
      %v1354 = vpop.f32.mrf.mxu0
      %1355 = vmatprep.mubr.f32.mxu0 0.0
      %1356 = vmatmul.mubr.f32.gmra.mxu0 %v1154
      %v1357 = vpop.f32.mrf.mxu0
      %v1358 = vadd.f32 %v1037, %v1357
      %v1359 = vpop.f32.mrf.mxu0
      %1360 = vmatprep.mubr.f32.mxu0 0.0
      %1361 = vmatmul.mubr.f32.gmra.mxu0 %v1157
      %v1362 = vpop.f32.mrf.mxu0
      %v1363 = vadd.f32 %v1042, %v1362
      %v1364 = vpop.f32.mrf.mxu0
      %1365 = vmatprep.mubr.f32.mxu0 0.0
      %1366 = vmatmul.mubr.f32.gmra.mxu0 %v1160
      %v1367 = vpop.f32.mrf.mxu0
      %v1368 = vadd.f32 %v1047, %v1367
      %v1369 = vpop.f32.mrf.mxu0
      %1370 = vmatprep.mubr.f32.mxu0 0.0
      %1371 = vmatmul.mubr.f32.gmra.mxu0 %v1163
      %v1372 = vpop.f32.mrf.mxu0
      %v1373 = vadd.f32 %v1052, %v1372
      %v1374 = vpop.f32.mrf.mxu0
      %1375 = vmatprep.mubr.f32.mxu0 0.0
      %1376 = vmatmul.mubr.f32.gmra.mxu0 %v1166
      %v1377 = vpop.f32.mrf.mxu0
      %v1378 = vadd.f32 %v1057, %v1377
      %v1379 = vpop.f32.mrf.mxu0
      %1380 = vmatprep.mubr.f32.mxu0 0.0
      %1381 = vmatmul.mubr.f32.gmra.mxu0 %v1169
      %v1382 = vpop.f32.mrf.mxu0
      %v1383 = vadd.f32 %v1062, %v1382
      %v1384 = vpop.f32.mrf.mxu0
      %1385 = vmatprep.mubr.f32.mxu0 0.0
      %1386 = vmatmul.mubr.f32.gmra.mxu0 %v1172
      %v1387 = vpop.f32.mrf.mxu0
      %v1388 = vadd.f32 %v1067, %v1387
      %v1389 = vpop.f32.mrf.mxu0
      %1390 = vmatprep.mubr.f32.mxu0 0.0
      %1391 = vmatmul.mubr.f32.gmra.mxu0 %v1175
      %v1392 = vpop.f32.mrf.mxu0
      %v1393 = vadd.f32 %v1072, %v1392
      %v1394 = vpop.f32.mrf.mxu0
      %1395 = vmatprep.mubr.f32.mxu0 0.0
      %1396 = vmatmul.mubr.f32.gmra.mxu0 %v1178
      %v1397 = vpop.f32.mrf.mxu0
      %v1398 = vadd.f32 %v1077, %v1397
      %v1399 = vpop.f32.mrf.mxu0
      %1400 = vmatprep.mubr.f32.mxu0 0.0
      %1401 = vmatmul.mubr.f32.gmra.mxu0 %v1181
      %v1402 = vpop.f32.mrf.mxu0
      %v1403 = vadd.f32 %v1082, %v1402
      %v1404 = vpop.f32.mrf.mxu0
      %1405 = vmatprep.mubr.f32.mxu0 0.0
      %1406 = vmatmul.mubr.f32.gmra.mxu0 %v1184
      %v1407 = vpop.f32.mrf.mxu0
      %v1408 = vadd.f32 %v1087, %v1407
      %v1409 = vpop.f32.mrf.mxu0
      %1410 = vdwg.mxu0
      %v1411 = vld [vmem:[#allocation2 + $0x9] sm:$0xff]
      %v1412 = vld [vmem:[#allocation2 + $0x11] sm:$0xff]
      %v1413 = vld [vmem:[#allocation2 + $0x19] sm:$0xff]
      %v1414 = vld [vmem:[#allocation2 + $0x21] sm:$0xff]
      %v1415 = vld [vmem:[#allocation2 + $0x29] sm:$0xff]
      %v1416 = vld [vmem:[#allocation2 + $0x31] sm:$0xff]
      %v1417 = vld [vmem:[#allocation2 + $0x39] sm:$0xff]
      %v1418 = vld [vmem:[#allocation2 + $0x41] sm:$0xff]
      %v1419 = vld [vmem:[#allocation2 + $0x49] sm:$0xff]
      %v1420 = vld [vmem:[#allocation2 + $0x51] sm:$0xff]
      %v1421 = vld [vmem:[#allocation2 + $0x59] sm:$0xff]
      %v1422 = vld [vmem:[#allocation2 + $0x61] sm:$0xff]
      %v1423 = vld [vmem:[#allocation2 + $0x69] sm:$0xff]
      %v1424 = vld [vmem:[#allocation2 + $0x71] sm:$0xff]
      %v1425 = vld [vmem:[#allocation2 + $0x79] sm:$0xff]
      %v1426 = vld [vmem:[#allocation2 + $0x81] sm:$0xff]
      %v1427 = vld [vmem:[#allocation2 + $0x89] sm:$0xff]
      %v1428 = vld [vmem:[#allocation2 + $0x91] sm:$0xff]
      %v1429 = vld [vmem:[#allocation2 + $0x99] sm:$0xff]
      %v1430 = vld [vmem:[#allocation2 + $0xa1] sm:$0xff]
      %v1431 = vld [vmem:[#allocation2 + $0xa9] sm:$0xff]
      %v1432 = vld [vmem:[#allocation2 + $0xb1] sm:$0xff]
      %v1433 = vld [vmem:[#allocation2 + $0xb9] sm:$0xff]
      %v1434 = vld [vmem:[#allocation2 + $0xc1] sm:$0xff]
      %v1435 = vld [vmem:[#allocation2 + $0xc9] sm:$0xff]
      %v1436 = vld [vmem:[#allocation2 + $0xd1] sm:$0xff]
      %v1437 = vld [vmem:[#allocation2 + $0xd9] sm:$0xff]
      %v1438 = vld [vmem:[#allocation2 + $0xe1] sm:$0xff]
      %v1439 = vld [vmem:[#allocation2 + $0xe9] sm:$0xff]
      %v1440 = vld [vmem:[#allocation2 + $0xf1] sm:$0xff]
      %v1441 = vld [vmem:[#allocation2 + $0xf9] sm:$0xff]
      %v1442 = vld [vmem:[#allocation2 + $0x101] sm:$0xff]
      %1443 = vset.pattern.permute.xlu0 1
      %1444 = vperm.xlu0 %1443, %v508
      %v1445 = vpop.permute.xlu0 %1444
      %1447 = vset.pattern.permute.xlu0 1
      %1448 = vperm.xlu0 %1447, %v509
      %v1449 = vpop.permute.xlu0 %1448
      %1451 = vset.pattern.permute.xlu0 1
      %1452 = vperm.xlu0 %1451, %v510
      %v1453 = vpop.permute.xlu0 %1452
      %1455 = vset.pattern.permute.xlu0 1
      %1456 = vperm.xlu0 %1455, %v511
      %v1457 = vpop.permute.xlu0 %1456
      %1459 = vset.pattern.permute.xlu0 1
      %1460 = vperm.xlu0 %1459, %v512
      %v1461 = vpop.permute.xlu0 %1460
      %1463 = vset.pattern.permute.xlu0 1
      %1464 = vperm.xlu0 %1463, %v513
      %v1465 = vpop.permute.xlu0 %1464
      %1467 = vset.pattern.permute.xlu0 1
      %1468 = vperm.xlu0 %1467, %v514
      %v1469 = vpop.permute.xlu0 %1468
      %1471 = vset.pattern.permute.xlu0 1
      %1472 = vperm.xlu0 %1471, %v515
      %v1473 = vpop.permute.xlu0 %1472
      %1475 = vset.pattern.permute.xlu0 1
      %1476 = vperm.xlu0 %1475, %v516
      %v1477 = vpop.permute.xlu0 %1476
      %1479 = vset.pattern.permute.xlu0 1
      %1480 = vperm.xlu0 %1479, %v517
      %v1481 = vpop.permute.xlu0 %1480
      %1483 = vset.pattern.permute.xlu0 1
      %1484 = vperm.xlu0 %1483, %v518
      %v1485 = vpop.permute.xlu0 %1484
      %1487 = vset.pattern.permute.xlu0 1
      %1488 = vperm.xlu0 %1487, %v519
      %v1489 = vpop.permute.xlu0 %1488
      %1491 = vset.pattern.permute.xlu0 1
      %1492 = vperm.xlu0 %1491, %v520
      %v1493 = vpop.permute.xlu0 %1492
      %1495 = vset.pattern.permute.xlu0 1
      %1496 = vperm.xlu0 %1495, %v521
      %v1497 = vpop.permute.xlu0 %1496
      %1499 = vset.pattern.permute.xlu0 1
      %1500 = vperm.xlu0 %1499, %v522
      %v1501 = vpop.permute.xlu0 %1500
      %1503 = vset.pattern.permute.xlu0 1
      %1504 = vperm.xlu0 %1503, %v523
      %v1505 = vpop.permute.xlu0 %1504
      %1507 = vset.pattern.permute.xlu0 1
      %1508 = vperm.xlu0 %1507, %v524
      %v1509 = vpop.permute.xlu0 %1508
      %1511 = vset.pattern.permute.xlu0 1
      %1512 = vperm.xlu0 %1511, %v525
      %v1513 = vpop.permute.xlu0 %1512
      %1515 = vset.pattern.permute.xlu0 1
      %1516 = vperm.xlu0 %1515, %v526
      %v1517 = vpop.permute.xlu0 %1516
      %1519 = vset.pattern.permute.xlu0 1
      %1520 = vperm.xlu0 %1519, %v527
      %v1521 = vpop.permute.xlu0 %1520
      %1523 = vset.pattern.permute.xlu0 1
      %1524 = vperm.xlu0 %1523, %v528
      %v1525 = vpop.permute.xlu0 %1524
      %1527 = vset.pattern.permute.xlu0 1
      %1528 = vperm.xlu0 %1527, %v529
      %v1529 = vpop.permute.xlu0 %1528
      %1531 = vset.pattern.permute.xlu0 1
      %1532 = vperm.xlu0 %1531, %v530
      %v1533 = vpop.permute.xlu0 %1532
      %1535 = vset.pattern.permute.xlu0 1
      %1536 = vperm.xlu0 %1535, %v531
      %v1537 = vpop.permute.xlu0 %1536
      %1539 = vset.pattern.permute.xlu0 1
      %1540 = vperm.xlu0 %1539, %v532
      %v1541 = vpop.permute.xlu0 %1540
      %1543 = vset.pattern.permute.xlu0 1
      %1544 = vperm.xlu0 %1543, %v533
      %v1545 = vpop.permute.xlu0 %1544
      %1547 = vset.pattern.permute.xlu0 1
      %1548 = vperm.xlu0 %1547, %v534
      %v1549 = vpop.permute.xlu0 %1548
      %1551 = vset.pattern.permute.xlu0 1
      %1552 = vperm.xlu0 %1551, %v535
      %v1553 = vpop.permute.xlu0 %1552
      %1555 = vset.pattern.permute.xlu0 1
      %1556 = vperm.xlu0 %1555, %v536
      %v1557 = vpop.permute.xlu0 %1556
      %1559 = vset.pattern.permute.xlu0 1
      %1560 = vperm.xlu0 %1559, %v537
      %v1561 = vpop.permute.xlu0 %1560
      %1563 = vset.pattern.permute.xlu0 1
      %1564 = vperm.xlu0 %1563, %v538
      %v1565 = vpop.permute.xlu0 %1564
      %1567 = vset.pattern.permute.xlu0 1
      %1568 = vperm.xlu0 %1567, %v539
      %v1569 = vpop.permute.xlu0 %1568
      %v1571 = vmul.f32 %v1411, %v1445
      %v1572 = vmul.f32 %v1412, %v1449
      %v1573 = vmul.f32 %v1413, %v1453
      %v1574 = vmul.f32 %v1414, %v1457
      %v1575 = vmul.f32 %v1415, %v1461
      %v1576 = vmul.f32 %v1416, %v1465
      %v1577 = vmul.f32 %v1417, %v1469
      %v1578 = vmul.f32 %v1418, %v1473
      %v1579 = vmul.f32 %v1419, %v1477
      %v1580 = vmul.f32 %v1420, %v1481
      %v1581 = vmul.f32 %v1421, %v1485
      %v1582 = vmul.f32 %v1422, %v1489
      %v1583 = vmul.f32 %v1423, %v1493
      %v1584 = vmul.f32 %v1424, %v1497
      %v1585 = vmul.f32 %v1425, %v1501
      %v1586 = vmul.f32 %v1426, %v1505
      %v1587 = vmul.f32 %v1427, %v1509
      %v1588 = vmul.f32 %v1428, %v1513
      %v1589 = vmul.f32 %v1429, %v1517
      %v1590 = vmul.f32 %v1430, %v1521
      %v1591 = vmul.f32 %v1431, %v1525
      %v1592 = vmul.f32 %v1432, %v1529
      %v1593 = vmul.f32 %v1433, %v1533
      %v1594 = vmul.f32 %v1434, %v1537
      %v1595 = vmul.f32 %v1435, %v1541
      %v1596 = vmul.f32 %v1436, %v1545
      %v1597 = vmul.f32 %v1437, %v1549
      %v1598 = vmul.f32 %v1438, %v1553
      %v1599 = vmul.f32 %v1439, %v1557
      %v1600 = vmul.f32 %v1440, %v1561
      %v1601 = vmul.f32 %v1441, %v1565
      %v1602 = vmul.f32 %v1442, %v1569
      %s1603 = scalar_lea.vmem %s1, 32
      %v1604 = vld [vmem:[%s1603] sm:$0xff]
      %v1605 = vld [vmem:[%s1603 + $0x8] sm:$0xff]
      %v1607 = vsel %vm405, %v1571, 0
      %v1610 = vsel %vm405, %v1572, 0
      %v1613 = vsel %vm405, %v1573, 0
      %v1616 = vsel %vm405, %v1574, 0
      %v1619 = vsel %vm405, %v1575, 0
      %v1622 = vsel %vm405, %v1576, 0
      %v1625 = vsel %vm405, %v1577, 0
      %v1628 = vsel %vm405, %v1578, 0
      %v1631 = vsel %vm405, %v1579, 0
      %v1634 = vsel %vm405, %v1580, 0
      %v1637 = vsel %vm405, %v1581, 0
      %v1640 = vsel %vm405, %v1582, 0
      %v1643 = vsel %vm405, %v1583, 0
      %v1646 = vsel %vm405, %v1584, 0
      %v1649 = vsel %vm405, %v1585, 0
      %v1652 = vsel %vm405, %v1586, 0
      %v1655 = vsel %vm405, %v1587, 0
      %v1658 = vsel %vm405, %v1588, 0
      %v1661 = vsel %vm405, %v1589, 0
      %v1664 = vsel %vm405, %v1590, 0
      %v1667 = vsel %vm405, %v1591, 0
      %v1670 = vsel %vm405, %v1592, 0
      %v1673 = vsel %vm405, %v1593, 0
      %v1676 = vsel %vm405, %v1594, 0
      %v1679 = vsel %vm405, %v1595, 0
      %v1682 = vsel %vm405, %v1596, 0
      %v1685 = vsel %vm405, %v1597, 0
      %v1688 = vsel %vm405, %v1598, 0
      %v1691 = vsel %vm405, %v1599, 0
      %v1694 = vsel %vm405, %v1600, 0
      %v1697 = vsel %vm405, %v1601, 0
      %v1700 = vsel %vm405, %v1602, 0
      %1702 = vmatprep.subr.mxu0 0.0
      %1703 = vmatpush1.msra.mxu0 0.0
      %1704 = vmatprep.subr.mxu0 0.0
      %1705 = vmatpush1.msra.mxu0 0.0
      %1706 = vmatprep.subr.mxu0 0.0
      %1707 = vmatpush1.msra.mxu0 0.0
      %1708 = vmatprep.subr.mxu0 0.0
      %1709 = vmatpush1.msra.mxu0 0.0
      %1710 = vmatprep.subr.mxu0 0.0
      %1711 = vmatpush1.msra.mxu0 0.0
      %1712 = vmatprep.subr.mxu0 0.0
      %1713 = vmatpush1.msra.mxu0 0.0
      %1714 = vmatprep.subr.mxu0 0.0
      %1715 = vmatpush1.msra.mxu0 0.0
      %1716 = vmatprep.subr.mxu0 0.0
      %1717 = vmatpush1.msra.mxu0 0.0
      %1718 = vmatprep.subr.mxu0 0.0
      %1719 = vmatpush1.msra.mxu0 0.0
      %1720 = vmatprep.subr.mxu0 0.0
      %1721 = vmatpush1.msra.mxu0 0.0
      %1722 = vmatprep.subr.mxu0 0.0
      %1723 = vmatpush1.msra.mxu0 0.0
      %1724 = vmatprep.subr.mxu0 0.0
      %1725 = vmatpush1.msra.mxu0 0.0
      %1726 = vmatprep.subr.mxu0 0.0
      %1727 = vmatpush1.msra.mxu0 0.0
      %1728 = vmatprep.subr.mxu0 0.0
      %1729 = vmatpush1.msra.mxu0 0.0
      %1730 = vmatprep.subr.mxu0 0.0
      %1731 = vmatpush1.msra.mxu0 %v1605
      %1732 = vmatprep.subr.mxu0 0.0
      %1733 = vmatpush1.msra.mxu0 %v1604
      %1734 = vmatprep.subr.mxu0 0.0
      %1735 = vmatpush2.msra.mxu0 0.0
      %1736 = vmatprep.subr.mxu0 0.0
      %1737 = vmatpush2.msra.mxu0 0.0
      %1738 = vmatprep.subr.mxu0 0.0
      %1739 = vmatpush2.msra.mxu0 0.0
      %1740 = vmatprep.subr.mxu0 0.0
      %1741 = vmatpush2.msra.mxu0 0.0
      %1742 = vmatprep.subr.mxu0 0.0
      %1743 = vmatpush2.msra.mxu0 0.0
      %1744 = vmatprep.subr.mxu0 0.0
      %1745 = vmatpush2.msra.mxu0 0.0
      %1746 = vmatprep.subr.mxu0 0.0
      %1747 = vmatpush2.msra.mxu0 0.0
      %1748 = vmatprep.subr.mxu0 0.0
      %1749 = vmatpush2.msra.mxu0 0.0
      %1750 = vmatprep.subr.mxu0 0.0
      %1751 = vmatpush2.msra.mxu0 0.0
      %1752 = vmatprep.subr.mxu0 0.0
      %1753 = vmatpush2.msra.mxu0 0.0
      %1754 = vmatprep.subr.mxu0 0.0
      %1755 = vmatpush2.msra.mxu0 0.0
      %1756 = vmatprep.subr.mxu0 0.0
      %1757 = vmatpush2.msra.mxu0 0.0
      %1758 = vmatprep.subr.mxu0 0.0
      %1759 = vmatpush2.msra.mxu0 0.0
      %1760 = vmatprep.subr.mxu0 0.0
      %1761 = vmatpush2.msra.mxu0 0.0
      %1762 = vmatprep.subr.mxu0 0.0
      %1763 = vmatpush2.msra.mxu0 0.0
      %1764 = vmatprep.subr.mxu0 0.0
      %1765 = vmatpush2.msra.mxu0 0.0
      %1766 = vmatprep.mubr.f32.mxu0 0.0
      %1767 = vmatmul.mubr.f32.gmra.mxu0 %v1607
      %v1768 = vpop.f32.mrf.mxu0
      %v1769 = vadd.f32 0.0, %v1768
      %v1770 = vpop.f32.mrf.mxu0
      %1771 = vmatprep.mubr.f32.mxu0 0.0
      %1772 = vmatmul.mubr.f32.gmra.mxu0 %v1610
      %v1773 = vpop.f32.mrf.mxu0
      %v1774 = vadd.f32 0.0, %v1773
      %v1775 = vpop.f32.mrf.mxu0
      %1776 = vmatprep.mubr.f32.mxu0 0.0
      %1777 = vmatmul.mubr.f32.gmra.mxu0 %v1613
      %v1778 = vpop.f32.mrf.mxu0
      %v1779 = vadd.f32 0.0, %v1778
      %v1780 = vpop.f32.mrf.mxu0
      %1781 = vmatprep.mubr.f32.mxu0 0.0
      %1782 = vmatmul.mubr.f32.gmra.mxu0 %v1616
      %v1783 = vpop.f32.mrf.mxu0
      %v1784 = vadd.f32 0.0, %v1783
      %v1785 = vpop.f32.mrf.mxu0
      %1786 = vmatprep.mubr.f32.mxu0 0.0
      %1787 = vmatmul.mubr.f32.gmra.mxu0 %v1619
      %v1788 = vpop.f32.mrf.mxu0
      %v1789 = vadd.f32 0.0, %v1788
      %v1790 = vpop.f32.mrf.mxu0
      %1791 = vmatprep.mubr.f32.mxu0 0.0
      %1792 = vmatmul.mubr.f32.gmra.mxu0 %v1622
      %v1793 = vpop.f32.mrf.mxu0
      %v1794 = vadd.f32 0.0, %v1793
      %v1795 = vpop.f32.mrf.mxu0
      %1796 = vmatprep.mubr.f32.mxu0 0.0
      %1797 = vmatmul.mubr.f32.gmra.mxu0 %v1625
      %v1798 = vpop.f32.mrf.mxu0
      %v1799 = vadd.f32 0.0, %v1798
      %v1800 = vpop.f32.mrf.mxu0
      %1801 = vmatprep.mubr.f32.mxu0 0.0
      %1802 = vmatmul.mubr.f32.gmra.mxu0 %v1628
      %v1803 = vpop.f32.mrf.mxu0
      %v1804 = vadd.f32 0.0, %v1803
      %v1805 = vpop.f32.mrf.mxu0
      %1806 = vmatprep.mubr.f32.mxu0 0.0
      %1807 = vmatmul.mubr.f32.gmra.mxu0 %v1631
      %v1808 = vpop.f32.mrf.mxu0
      %v1809 = vadd.f32 0.0, %v1808
      %v1810 = vpop.f32.mrf.mxu0
      %1811 = vmatprep.mubr.f32.mxu0 0.0
      %1812 = vmatmul.mubr.f32.gmra.mxu0 %v1634
      %v1813 = vpop.f32.mrf.mxu0
      %v1814 = vadd.f32 0.0, %v1813
      %v1815 = vpop.f32.mrf.mxu0
      %1816 = vmatprep.mubr.f32.mxu0 0.0
      %1817 = vmatmul.mubr.f32.gmra.mxu0 %v1637
      %v1818 = vpop.f32.mrf.mxu0
      %v1819 = vadd.f32 0.0, %v1818
      %v1820 = vpop.f32.mrf.mxu0
      %1821 = vmatprep.mubr.f32.mxu0 0.0
      %1822 = vmatmul.mubr.f32.gmra.mxu0 %v1640
      %v1823 = vpop.f32.mrf.mxu0
      %v1824 = vadd.f32 0.0, %v1823
      %v1825 = vpop.f32.mrf.mxu0
      %1826 = vmatprep.mubr.f32.mxu0 0.0
      %1827 = vmatmul.mubr.f32.gmra.mxu0 %v1643
      %v1828 = vpop.f32.mrf.mxu0
      %v1829 = vadd.f32 0.0, %v1828
      %v1830 = vpop.f32.mrf.mxu0
      %1831 = vmatprep.mubr.f32.mxu0 0.0
      %1832 = vmatmul.mubr.f32.gmra.mxu0 %v1646
      %v1833 = vpop.f32.mrf.mxu0
      %v1834 = vadd.f32 0.0, %v1833
      %v1835 = vpop.f32.mrf.mxu0
      %1836 = vmatprep.mubr.f32.mxu0 0.0
      %1837 = vmatmul.mubr.f32.gmra.mxu0 %v1649
      %v1838 = vpop.f32.mrf.mxu0
      %v1839 = vadd.f32 0.0, %v1838
      %v1840 = vpop.f32.mrf.mxu0
      %1841 = vmatprep.mubr.f32.mxu0 0.0
      %1842 = vmatmul.mubr.f32.gmra.mxu0 %v1652
      %v1843 = vpop.f32.mrf.mxu0
      %v1844 = vadd.f32 0.0, %v1843
      %v1845 = vpop.f32.mrf.mxu0
      %1846 = vmatprep.mubr.f32.mxu0 0.0
      %1847 = vmatmul.mubr.f32.gmra.mxu0 %v1655
      %v1848 = vpop.f32.mrf.mxu0
      %v1849 = vadd.f32 0.0, %v1848
      %v1850 = vpop.f32.mrf.mxu0
      %1851 = vmatprep.mubr.f32.mxu0 0.0
      %1852 = vmatmul.mubr.f32.gmra.mxu0 %v1658
      %v1853 = vpop.f32.mrf.mxu0
      %v1854 = vadd.f32 0.0, %v1853
      %v1855 = vpop.f32.mrf.mxu0
      %1856 = vmatprep.mubr.f32.mxu0 0.0
      %1857 = vmatmul.mubr.f32.gmra.mxu0 %v1661
      %v1858 = vpop.f32.mrf.mxu0
      %v1859 = vadd.f32 0.0, %v1858
      %v1860 = vpop.f32.mrf.mxu0
      %1861 = vmatprep.mubr.f32.mxu0 0.0
      %1862 = vmatmul.mubr.f32.gmra.mxu0 %v1664
      %v1863 = vpop.f32.mrf.mxu0
      %v1864 = vadd.f32 0.0, %v1863
      %v1865 = vpop.f32.mrf.mxu0
      %1866 = vmatprep.mubr.f32.mxu0 0.0
      %1867 = vmatmul.mubr.f32.gmra.mxu0 %v1667
      %v1868 = vpop.f32.mrf.mxu0
      %v1869 = vadd.f32 0.0, %v1868
      %v1870 = vpop.f32.mrf.mxu0
      %1871 = vmatprep.mubr.f32.mxu0 0.0
      %1872 = vmatmul.mubr.f32.gmra.mxu0 %v1670
      %v1873 = vpop.f32.mrf.mxu0
      %v1874 = vadd.f32 0.0, %v1873
      %v1875 = vpop.f32.mrf.mxu0
      %1876 = vmatprep.mubr.f32.mxu0 0.0
      %1877 = vmatmul.mubr.f32.gmra.mxu0 %v1673
      %v1878 = vpop.f32.mrf.mxu0
      %v1879 = vadd.f32 0.0, %v1878
      %v1880 = vpop.f32.mrf.mxu0
      %1881 = vmatprep.mubr.f32.mxu0 0.0
      %1882 = vmatmul.mubr.f32.gmra.mxu0 %v1676
      %v1883 = vpop.f32.mrf.mxu0
      %v1884 = vadd.f32 0.0, %v1883
      %v1885 = vpop.f32.mrf.mxu0
      %1886 = vmatprep.mubr.f32.mxu0 0.0
      %1887 = vmatmul.mubr.f32.gmra.mxu0 %v1679
      %v1888 = vpop.f32.mrf.mxu0
      %v1889 = vadd.f32 0.0, %v1888
      %v1890 = vpop.f32.mrf.mxu0
      %1891 = vmatprep.mubr.f32.mxu0 0.0
      %1892 = vmatmul.mubr.f32.gmra.mxu0 %v1682
      %v1893 = vpop.f32.mrf.mxu0
      %v1894 = vadd.f32 0.0, %v1893
      %v1895 = vpop.f32.mrf.mxu0
      %1896 = vmatprep.mubr.f32.mxu0 0.0
      %1897 = vmatmul.mubr.f32.gmra.mxu0 %v1685
      %v1898 = vpop.f32.mrf.mxu0
      %v1899 = vadd.f32 0.0, %v1898
      %v1900 = vpop.f32.mrf.mxu0
      %1901 = vmatprep.mubr.f32.mxu0 0.0
      %1902 = vmatmul.mubr.f32.gmra.mxu0 %v1688
      %v1903 = vpop.f32.mrf.mxu0
      %v1904 = vadd.f32 0.0, %v1903
      %v1905 = vpop.f32.mrf.mxu0
      %1906 = vmatprep.mubr.f32.mxu0 0.0
      %1907 = vmatmul.mubr.f32.gmra.mxu0 %v1691
      %v1908 = vpop.f32.mrf.mxu0
      %v1909 = vadd.f32 0.0, %v1908
      %v1910 = vpop.f32.mrf.mxu0
      %1911 = vmatprep.mubr.f32.mxu0 0.0
      %1912 = vmatmul.mubr.f32.gmra.mxu0 %v1694
      %v1913 = vpop.f32.mrf.mxu0
      %v1914 = vadd.f32 0.0, %v1913
      %v1915 = vpop.f32.mrf.mxu0
      %1916 = vmatprep.mubr.f32.mxu0 0.0
      %1917 = vmatmul.mubr.f32.gmra.mxu0 %v1697
      %v1918 = vpop.f32.mrf.mxu0
      %v1919 = vadd.f32 0.0, %v1918
      %v1920 = vpop.f32.mrf.mxu0
      %1921 = vmatprep.mubr.f32.mxu0 0.0
      %1922 = vmatmul.mubr.f32.gmra.mxu0 %v1700
      %v1923 = vpop.f32.mrf.mxu0
      %v1924 = vadd.f32 0.0, %v1923
      %v1925 = vpop.f32.mrf.mxu0
      %1926 = vdwg.mxu0
      %v1927 = vadd.f32 %v1253, %v1769
      %v1928 = vadd.f32 %v1258, %v1774
      %v1929 = vadd.f32 %v1263, %v1779
      %v1930 = vadd.f32 %v1268, %v1784
      %v1931 = vadd.f32 %v1273, %v1789
      %v1932 = vadd.f32 %v1278, %v1794
      %v1933 = vadd.f32 %v1283, %v1799
      %v1934 = vadd.f32 %v1288, %v1804
      %v1935 = vadd.f32 %v1293, %v1809
      %v1936 = vadd.f32 %v1298, %v1814
      %v1937 = vadd.f32 %v1303, %v1819
      %v1938 = vadd.f32 %v1308, %v1824
      %v1939 = vadd.f32 %v1313, %v1829
      %v1940 = vadd.f32 %v1318, %v1834
      %v1941 = vadd.f32 %v1323, %v1839
      %v1942 = vadd.f32 %v1328, %v1844
      %v1943 = vadd.f32 %v1333, %v1849
      %v1944 = vadd.f32 %v1338, %v1854
      %v1945 = vadd.f32 %v1343, %v1859
      %v1946 = vadd.f32 %v1348, %v1864
      %v1947 = vadd.f32 %v1353, %v1869
      %v1948 = vadd.f32 %v1358, %v1874
      %v1949 = vadd.f32 %v1363, %v1879
      %v1950 = vadd.f32 %v1368, %v1884
      %v1951 = vadd.f32 %v1373, %v1889
      %v1952 = vadd.f32 %v1378, %v1894
      %v1953 = vadd.f32 %v1383, %v1899
      %v1954 = vadd.f32 %v1388, %v1904
      %v1955 = vadd.f32 %v1393, %v1909
      %v1956 = vadd.f32 %v1398, %v1914
      %v1957 = vadd.f32 %v1403, %v1919
      %v1958 = vadd.f32 %v1408, %v1924
      %v1959 = vld [vmem:[#allocation2 + $0x17] sm:$0xff]
      %v1960 = vld [vmem:[#allocation2 + $0x1f] sm:$0xff]
      %v1961 = vld [vmem:[#allocation2 + $0x27] sm:$0xff]
      %v1962 = vld [vmem:[#allocation2 + $0x2f] sm:$0xff]
      %v1963 = vld [vmem:[#allocation2 + $0x37] sm:$0xff]
      %v1964 = vld [vmem:[#allocation2 + $0x3f] sm:$0xff]
      %v1965 = vld [vmem:[#allocation2 + $0x47] sm:$0xff]
      %v1966 = vld [vmem:[#allocation2 + $0x4f] sm:$0xff]
      %v1967 = vld [vmem:[#allocation2 + $0x57] sm:$0xff]
      %v1968 = vld [vmem:[#allocation2 + $0x5f] sm:$0xff]
      %v1969 = vld [vmem:[#allocation2 + $0x67] sm:$0xff]
      %v1970 = vld [vmem:[#allocation2 + $0x6f] sm:$0xff]
      %v1971 = vld [vmem:[#allocation2 + $0x77] sm:$0xff]
      %v1972 = vld [vmem:[#allocation2 + $0x7f] sm:$0xff]
      %v1973 = vld [vmem:[#allocation2 + $0x87] sm:$0xff]
      %v1974 = vld [vmem:[#allocation2 + $0x8f] sm:$0xff]
      %v1975 = vld [vmem:[#allocation2 + $0x97] sm:$0xff]
      %v1976 = vld [vmem:[#allocation2 + $0x9f] sm:$0xff]
      %v1977 = vld [vmem:[#allocation2 + $0xa7] sm:$0xff]
      %v1978 = vld [vmem:[#allocation2 + $0xaf] sm:$0xff]
      %v1979 = vld [vmem:[#allocation2 + $0xb7] sm:$0xff]
      %v1980 = vld [vmem:[#allocation2 + $0xbf] sm:$0xff]
      %v1981 = vld [vmem:[#allocation2 + $0xc7] sm:$0xff]
      %v1982 = vld [vmem:[#allocation2 + $0xcf] sm:$0xff]
      %v1983 = vld [vmem:[#allocation2 + $0xd7] sm:$0xff]
      %v1984 = vld [vmem:[#allocation2 + $0xdf] sm:$0xff]
      %v1985 = vld [vmem:[#allocation2 + $0xe7] sm:$0xff]
      %v1986 = vld [vmem:[#allocation2 + $0xef] sm:$0xff]
      %v1987 = vld [vmem:[#allocation2 + $0xf7] sm:$0xff]
      %v1988 = vld [vmem:[#allocation2 + $0xff] sm:$0xff]
      %v1989 = vld [vmem:[#allocation2 + $0x107] sm:$0xff]
      %v1990 = vld [vmem:[#allocation2 + $0x10f] sm:$0xff]
      %v1991 = vmul.f32 %v1959, %v543
      %v1992 = vmul.f32 %v1960, %v548
      %v1993 = vmul.f32 %v1961, %v553
      %v1994 = vmul.f32 %v1962, %v558
      %v1995 = vmul.f32 %v1963, %v563
      %v1996 = vmul.f32 %v1964, %v568
      %v1997 = vmul.f32 %v1965, %v573
      %v1998 = vmul.f32 %v1966, %v578
      %v1999 = vmul.f32 %v1967, %v583
      %v2000 = vmul.f32 %v1968, %v588
      %v2001 = vmul.f32 %v1969, %v593
      %v2002 = vmul.f32 %v1970, %v598
      %v2003 = vmul.f32 %v1971, %v603
      %v2004 = vmul.f32 %v1972, %v608
      %v2005 = vmul.f32 %v1973, %v613
      %v2006 = vmul.f32 %v1974, %v618
      %v2007 = vmul.f32 %v1975, %v623
      %v2008 = vmul.f32 %v1976, %v628
      %v2009 = vmul.f32 %v1977, %v633
      %v2010 = vmul.f32 %v1978, %v638
      %v2011 = vmul.f32 %v1979, %v643
      %v2012 = vmul.f32 %v1980, %v648
      %v2013 = vmul.f32 %v1981, %v653
      %v2014 = vmul.f32 %v1982, %v658
      %v2015 = vmul.f32 %v1983, %v663
      %v2016 = vmul.f32 %v1984, %v668
      %v2017 = vmul.f32 %v1985, %v673
      %v2018 = vmul.f32 %v1986, %v678
      %v2019 = vmul.f32 %v1987, %v683
      %v2020 = vmul.f32 %v1988, %v688
      %v2021 = vmul.f32 %v1989, %v693
      %v2022 = vmul.f32 %v1990, %v698
      %s2023 = scalar_lea.vmem %s1, 48
      %v2024 = vld [vmem:[%s2023] sm:$0xff]
      %v2025 = vld [vmem:[%s2023 + $0x8] sm:$0xff]
      %v2027 = vsel %vm405, %v1991, 0
      %v2030 = vsel %vm405, %v1992, 0
      %v2033 = vsel %vm405, %v1993, 0
      %v2036 = vsel %vm405, %v1994, 0
      %v2039 = vsel %vm405, %v1995, 0
      %v2042 = vsel %vm405, %v1996, 0
      %v2045 = vsel %vm405, %v1997, 0
      %v2048 = vsel %vm405, %v1998, 0
      %v2051 = vsel %vm405, %v1999, 0
      %v2054 = vsel %vm405, %v2000, 0
      %v2057 = vsel %vm405, %v2001, 0
      %v2060 = vsel %vm405, %v2002, 0
      %v2063 = vsel %vm405, %v2003, 0
      %v2066 = vsel %vm405, %v2004, 0
      %v2069 = vsel %vm405, %v2005, 0
      %v2072 = vsel %vm405, %v2006, 0
      %v2075 = vsel %vm405, %v2007, 0
      %v2078 = vsel %vm405, %v2008, 0
      %v2081 = vsel %vm405, %v2009, 0
      %v2084 = vsel %vm405, %v2010, 0
      %v2087 = vsel %vm405, %v2011, 0
      %v2090 = vsel %vm405, %v2012, 0
      %v2093 = vsel %vm405, %v2013, 0
      %v2096 = vsel %vm405, %v2014, 0
      %v2099 = vsel %vm405, %v2015, 0
      %v2102 = vsel %vm405, %v2016, 0
      %v2105 = vsel %vm405, %v2017, 0
      %v2108 = vsel %vm405, %v2018, 0
      %v2111 = vsel %vm405, %v2019, 0
      %v2114 = vsel %vm405, %v2020, 0
      %v2117 = vsel %vm405, %v2021, 0
      %v2120 = vsel %vm405, %v2022, 0
      %2122 = vmatprep.subr.mxu0 0.0
      %2123 = vmatpush1.msra.mxu0 0.0
      %2124 = vmatprep.subr.mxu0 0.0
      %2125 = vmatpush1.msra.mxu0 0.0
      %2126 = vmatprep.subr.mxu0 0.0
      %2127 = vmatpush1.msra.mxu0 0.0
      %2128 = vmatprep.subr.mxu0 0.0
      %2129 = vmatpush1.msra.mxu0 0.0
      %2130 = vmatprep.subr.mxu0 0.0
      %2131 = vmatpush1.msra.mxu0 0.0
      %2132 = vmatprep.subr.mxu0 0.0
      %2133 = vmatpush1.msra.mxu0 0.0
      %2134 = vmatprep.subr.mxu0 0.0
      %2135 = vmatpush1.msra.mxu0 0.0
      %2136 = vmatprep.subr.mxu0 0.0
      %2137 = vmatpush1.msra.mxu0 0.0
      %2138 = vmatprep.subr.mxu0 0.0
      %2139 = vmatpush1.msra.mxu0 0.0
      %2140 = vmatprep.subr.mxu0 0.0
      %2141 = vmatpush1.msra.mxu0 0.0
      %2142 = vmatprep.subr.mxu0 0.0
      %2143 = vmatpush1.msra.mxu0 0.0
      %2144 = vmatprep.subr.mxu0 0.0
      %2145 = vmatpush1.msra.mxu0 0.0
      %2146 = vmatprep.subr.mxu0 0.0
      %2147 = vmatpush1.msra.mxu0 0.0
      %2148 = vmatprep.subr.mxu0 0.0
      %2149 = vmatpush1.msra.mxu0 0.0
      %2150 = vmatprep.subr.mxu0 0.0
      %2151 = vmatpush1.msra.mxu0 %v2025
      %2152 = vmatprep.subr.mxu0 0.0
      %2153 = vmatpush1.msra.mxu0 %v2024
      %2154 = vmatprep.subr.mxu0 0.0
      %2155 = vmatpush2.msra.mxu0 0.0
      %2156 = vmatprep.subr.mxu0 0.0
      %2157 = vmatpush2.msra.mxu0 0.0
      %2158 = vmatprep.subr.mxu0 0.0
      %2159 = vmatpush2.msra.mxu0 0.0
      %2160 = vmatprep.subr.mxu0 0.0
      %2161 = vmatpush2.msra.mxu0 0.0
      %2162 = vmatprep.subr.mxu0 0.0
      %2163 = vmatpush2.msra.mxu0 0.0
      %2164 = vmatprep.subr.mxu0 0.0
      %2165 = vmatpush2.msra.mxu0 0.0
      %2166 = vmatprep.subr.mxu0 0.0
      %2167 = vmatpush2.msra.mxu0 0.0
      %2168 = vmatprep.subr.mxu0 0.0
      %2169 = vmatpush2.msra.mxu0 0.0
      %2170 = vmatprep.subr.mxu0 0.0
      %2171 = vmatpush2.msra.mxu0 0.0
      %2172 = vmatprep.subr.mxu0 0.0
      %2173 = vmatpush2.msra.mxu0 0.0
      %2174 = vmatprep.subr.mxu0 0.0
      %2175 = vmatpush2.msra.mxu0 0.0
      %2176 = vmatprep.subr.mxu0 0.0
      %2177 = vmatpush2.msra.mxu0 0.0
      %2178 = vmatprep.subr.mxu0 0.0
      %2179 = vmatpush2.msra.mxu0 0.0
      %2180 = vmatprep.subr.mxu0 0.0
      %2181 = vmatpush2.msra.mxu0 0.0
      %2182 = vmatprep.subr.mxu0 0.0
      %2183 = vmatpush2.msra.mxu0 0.0
      %2184 = vmatprep.subr.mxu0 0.0
      %2185 = vmatpush2.msra.mxu0 0.0
      %2186 = vmatprep.mubr.f32.mxu0 0.0
      %2187 = vmatmul.mubr.f32.gmra.mxu0 %v2027
      %v2188 = vpop.f32.mrf.mxu0
      %v2189 = vadd.f32 0.0, %v2188
      %v2190 = vpop.f32.mrf.mxu0
      %2191 = vmatprep.mubr.f32.mxu0 0.0
      %2192 = vmatmul.mubr.f32.gmra.mxu0 %v2030
      %v2193 = vpop.f32.mrf.mxu0
      %v2194 = vadd.f32 0.0, %v2193
      %v2195 = vpop.f32.mrf.mxu0
      %2196 = vmatprep.mubr.f32.mxu0 0.0
      %2197 = vmatmul.mubr.f32.gmra.mxu0 %v2033
      %v2198 = vpop.f32.mrf.mxu0
      %v2199 = vadd.f32 0.0, %v2198
      %v2200 = vpop.f32.mrf.mxu0
      %2201 = vmatprep.mubr.f32.mxu0 0.0
      %2202 = vmatmul.mubr.f32.gmra.mxu0 %v2036
      %v2203 = vpop.f32.mrf.mxu0
      %v2204 = vadd.f32 0.0, %v2203
      %v2205 = vpop.f32.mrf.mxu0
      %2206 = vmatprep.mubr.f32.mxu0 0.0
      %2207 = vmatmul.mubr.f32.gmra.mxu0 %v2039
      %v2208 = vpop.f32.mrf.mxu0
      %v2209 = vadd.f32 0.0, %v2208
      %v2210 = vpop.f32.mrf.mxu0
      %2211 = vmatprep.mubr.f32.mxu0 0.0
      %2212 = vmatmul.mubr.f32.gmra.mxu0 %v2042
      %v2213 = vpop.f32.mrf.mxu0
      %v2214 = vadd.f32 0.0, %v2213
      %v2215 = vpop.f32.mrf.mxu0
      %2216 = vmatprep.mubr.f32.mxu0 0.0
      %2217 = vmatmul.mubr.f32.gmra.mxu0 %v2045
      %v2218 = vpop.f32.mrf.mxu0
      %v2219 = vadd.f32 0.0, %v2218
      %v2220 = vpop.f32.mrf.mxu0
      %2221 = vmatprep.mubr.f32.mxu0 0.0
      %2222 = vmatmul.mubr.f32.gmra.mxu0 %v2048
      %v2223 = vpop.f32.mrf.mxu0
      %v2224 = vadd.f32 0.0, %v2223
      %v2225 = vpop.f32.mrf.mxu0
      %2226 = vmatprep.mubr.f32.mxu0 0.0
      %2227 = vmatmul.mubr.f32.gmra.mxu0 %v2051
      %v2228 = vpop.f32.mrf.mxu0
      %v2229 = vadd.f32 0.0, %v2228
      %v2230 = vpop.f32.mrf.mxu0
      %2231 = vmatprep.mubr.f32.mxu0 0.0
      %2232 = vmatmul.mubr.f32.gmra.mxu0 %v2054
      %v2233 = vpop.f32.mrf.mxu0
      %v2234 = vadd.f32 0.0, %v2233
      %v2235 = vpop.f32.mrf.mxu0
      %2236 = vmatprep.mubr.f32.mxu0 0.0
      %2237 = vmatmul.mubr.f32.gmra.mxu0 %v2057
      %v2238 = vpop.f32.mrf.mxu0
      %v2239 = vadd.f32 0.0, %v2238
      %v2240 = vpop.f32.mrf.mxu0
      %2241 = vmatprep.mubr.f32.mxu0 0.0
      %2242 = vmatmul.mubr.f32.gmra.mxu0 %v2060
      %v2243 = vpop.f32.mrf.mxu0
      %v2244 = vadd.f32 0.0, %v2243
      %v2245 = vpop.f32.mrf.mxu0
      %2246 = vmatprep.mubr.f32.mxu0 0.0
      %2247 = vmatmul.mubr.f32.gmra.mxu0 %v2063
      %v2248 = vpop.f32.mrf.mxu0
      %v2249 = vadd.f32 0.0, %v2248
      %v2250 = vpop.f32.mrf.mxu0
      %2251 = vmatprep.mubr.f32.mxu0 0.0
      %2252 = vmatmul.mubr.f32.gmra.mxu0 %v2066
      %v2253 = vpop.f32.mrf.mxu0
      %v2254 = vadd.f32 0.0, %v2253
      %v2255 = vpop.f32.mrf.mxu0
      %2256 = vmatprep.mubr.f32.mxu0 0.0
      %2257 = vmatmul.mubr.f32.gmra.mxu0 %v2069
      %v2258 = vpop.f32.mrf.mxu0
      %v2259 = vadd.f32 0.0, %v2258
      %v2260 = vpop.f32.mrf.mxu0
      %2261 = vmatprep.mubr.f32.mxu0 0.0
      %2262 = vmatmul.mubr.f32.gmra.mxu0 %v2072
      %v2263 = vpop.f32.mrf.mxu0
      %v2264 = vadd.f32 0.0, %v2263
      %v2265 = vpop.f32.mrf.mxu0
      %2266 = vmatprep.mubr.f32.mxu0 0.0
      %2267 = vmatmul.mubr.f32.gmra.mxu0 %v2075
      %v2268 = vpop.f32.mrf.mxu0
      %v2269 = vadd.f32 0.0, %v2268
      %v2270 = vpop.f32.mrf.mxu0
      %2271 = vmatprep.mubr.f32.mxu0 0.0
      %2272 = vmatmul.mubr.f32.gmra.mxu0 %v2078
      %v2273 = vpop.f32.mrf.mxu0
      %v2274 = vadd.f32 0.0, %v2273
      %v2275 = vpop.f32.mrf.mxu0
      %2276 = vmatprep.mubr.f32.mxu0 0.0
      %2277 = vmatmul.mubr.f32.gmra.mxu0 %v2081
      %v2278 = vpop.f32.mrf.mxu0
      %v2279 = vadd.f32 0.0, %v2278
      %v2280 = vpop.f32.mrf.mxu0
      %2281 = vmatprep.mubr.f32.mxu0 0.0
      %2282 = vmatmul.mubr.f32.gmra.mxu0 %v2084
      %v2283 = vpop.f32.mrf.mxu0
      %v2284 = vadd.f32 0.0, %v2283
      %v2285 = vpop.f32.mrf.mxu0
      %2286 = vmatprep.mubr.f32.mxu0 0.0
      %2287 = vmatmul.mubr.f32.gmra.mxu0 %v2087
      %v2288 = vpop.f32.mrf.mxu0
      %v2289 = vadd.f32 0.0, %v2288
      %v2290 = vpop.f32.mrf.mxu0
      %2291 = vmatprep.mubr.f32.mxu0 0.0
      %2292 = vmatmul.mubr.f32.gmra.mxu0 %v2090
      %v2293 = vpop.f32.mrf.mxu0
      %v2294 = vadd.f32 0.0, %v2293
      %v2295 = vpop.f32.mrf.mxu0
      %2296 = vmatprep.mubr.f32.mxu0 0.0
      %2297 = vmatmul.mubr.f32.gmra.mxu0 %v2093
      %v2298 = vpop.f32.mrf.mxu0
      %v2299 = vadd.f32 0.0, %v2298
      %v2300 = vpop.f32.mrf.mxu0
      %2301 = vmatprep.mubr.f32.mxu0 0.0
      %2302 = vmatmul.mubr.f32.gmra.mxu0 %v2096
      %v2303 = vpop.f32.mrf.mxu0
      %v2304 = vadd.f32 0.0, %v2303
      %v2305 = vpop.f32.mrf.mxu0
      %2306 = vmatprep.mubr.f32.mxu0 0.0
      %2307 = vmatmul.mubr.f32.gmra.mxu0 %v2099
      %v2308 = vpop.f32.mrf.mxu0
      %v2309 = vadd.f32 0.0, %v2308
      %v2310 = vpop.f32.mrf.mxu0
      %2311 = vmatprep.mubr.f32.mxu0 0.0
      %2312 = vmatmul.mubr.f32.gmra.mxu0 %v2102
      %v2313 = vpop.f32.mrf.mxu0
      %v2314 = vadd.f32 0.0, %v2313
      %v2315 = vpop.f32.mrf.mxu0
      %2316 = vmatprep.mubr.f32.mxu0 0.0
      %2317 = vmatmul.mubr.f32.gmra.mxu0 %v2105
      %v2318 = vpop.f32.mrf.mxu0
      %v2319 = vadd.f32 0.0, %v2318
      %v2320 = vpop.f32.mrf.mxu0
      %2321 = vmatprep.mubr.f32.mxu0 0.0
      %2322 = vmatmul.mubr.f32.gmra.mxu0 %v2108
      %v2323 = vpop.f32.mrf.mxu0
      %v2324 = vadd.f32 0.0, %v2323
      %v2325 = vpop.f32.mrf.mxu0
      %2326 = vmatprep.mubr.f32.mxu0 0.0
      %2327 = vmatmul.mubr.f32.gmra.mxu0 %v2111
      %v2328 = vpop.f32.mrf.mxu0
      %v2329 = vadd.f32 0.0, %v2328
      %v2330 = vpop.f32.mrf.mxu0
      %2331 = vmatprep.mubr.f32.mxu0 0.0
      %2332 = vmatmul.mubr.f32.gmra.mxu0 %v2114
      %v2333 = vpop.f32.mrf.mxu0
      %v2334 = vadd.f32 0.0, %v2333
      %v2335 = vpop.f32.mrf.mxu0
      %2336 = vmatprep.mubr.f32.mxu0 0.0
      %2337 = vmatmul.mubr.f32.gmra.mxu0 %v2117
      %v2338 = vpop.f32.mrf.mxu0
      %v2339 = vadd.f32 0.0, %v2338
      %v2340 = vpop.f32.mrf.mxu0
      %2341 = vmatprep.mubr.f32.mxu0 0.0
      %2342 = vmatmul.mubr.f32.gmra.mxu0 %v2120
      %v2343 = vpop.f32.mrf.mxu0
      %v2344 = vadd.f32 0.0, %v2343
      %v2345 = vpop.f32.mrf.mxu0
      %2346 = vdwg.mxu0
      %v2347 = vadd.f32 %v1927, %v2189
      %v2348 = vadd.f32 %v1928, %v2194
      %v2349 = vadd.f32 %v1929, %v2199
      %v2350 = vadd.f32 %v1930, %v2204
      %v2351 = vadd.f32 %v1931, %v2209
      %v2352 = vadd.f32 %v1932, %v2214
      %v2353 = vadd.f32 %v1933, %v2219
      %v2354 = vadd.f32 %v1934, %v2224
      %v2355 = vadd.f32 %v1935, %v2229
      %v2356 = vadd.f32 %v1936, %v2234
      %v2357 = vadd.f32 %v1937, %v2239
      %v2358 = vadd.f32 %v1938, %v2244
      %v2359 = vadd.f32 %v1939, %v2249
      %v2360 = vadd.f32 %v1940, %v2254
      %v2361 = vadd.f32 %v1941, %v2259
      %v2362 = vadd.f32 %v1942, %v2264
      %v2363 = vadd.f32 %v1943, %v2269
      %v2364 = vadd.f32 %v1944, %v2274
      %v2365 = vadd.f32 %v1945, %v2279
      %v2366 = vadd.f32 %v1946, %v2284
      %v2367 = vadd.f32 %v1947, %v2289
      %v2368 = vadd.f32 %v1948, %v2294
      %v2369 = vadd.f32 %v1949, %v2299
      %v2370 = vadd.f32 %v1950, %v2304
      %v2371 = vadd.f32 %v1951, %v2309
      %v2372 = vadd.f32 %v1952, %v2314
      %v2373 = vadd.f32 %v1953, %v2319
      %v2374 = vadd.f32 %v1954, %v2324
      %v2375 = vadd.f32 %v1955, %v2329
      %v2376 = vadd.f32 %v1956, %v2334
      %v2377 = vadd.f32 %v1957, %v2339
      %v2378 = vadd.f32 %v1958, %v2344
      %v2379 = vld [vmem:[#allocation2 + $0x18] sm:$0xff]
      %v2380 = vld [vmem:[#allocation2 + $0x20] sm:$0xff]
      %v2381 = vld [vmem:[#allocation2 + $0x28] sm:$0xff]
      %v2382 = vld [vmem:[#allocation2 + $0x30] sm:$0xff]
      %v2383 = vld [vmem:[#allocation2 + $0x38] sm:$0xff]
      %v2384 = vld [vmem:[#allocation2 + $0x40] sm:$0xff]
      %v2385 = vld [vmem:[#allocation2 + $0x48] sm:$0xff]
      %v2386 = vld [vmem:[#allocation2 + $0x50] sm:$0xff]
      %v2387 = vld [vmem:[#allocation2 + $0x58] sm:$0xff]
      %v2388 = vld [vmem:[#allocation2 + $0x60] sm:$0xff]
      %v2389 = vld [vmem:[#allocation2 + $0x68] sm:$0xff]
      %v2390 = vld [vmem:[#allocation2 + $0x70] sm:$0xff]
      %v2391 = vld [vmem:[#allocation2 + $0x78] sm:$0xff]
      %v2392 = vld [vmem:[#allocation2 + $0x80] sm:$0xff]
      %v2393 = vld [vmem:[#allocation2 + $0x88] sm:$0xff]
      %v2394 = vld [vmem:[#allocation2 + $0x90] sm:$0xff]
      %v2395 = vld [vmem:[#allocation2 + $0x98] sm:$0xff]
      %v2396 = vld [vmem:[#allocation2 + $0xa0] sm:$0xff]
      %v2397 = vld [vmem:[#allocation2 + $0xa8] sm:$0xff]
      %v2398 = vld [vmem:[#allocation2 + $0xb0] sm:$0xff]
      %v2399 = vld [vmem:[#allocation2 + $0xb8] sm:$0xff]
      %v2400 = vld [vmem:[#allocation2 + $0xc0] sm:$0xff]
      %v2401 = vld [vmem:[#allocation2 + $0xc8] sm:$0xff]
      %v2402 = vld [vmem:[#allocation2 + $0xd0] sm:$0xff]
      %v2403 = vld [vmem:[#allocation2 + $0xd8] sm:$0xff]
      %v2404 = vld [vmem:[#allocation2 + $0xe0] sm:$0xff]
      %v2405 = vld [vmem:[#allocation2 + $0xe8] sm:$0xff]
      %v2406 = vld [vmem:[#allocation2 + $0xf0] sm:$0xff]
      %v2407 = vld [vmem:[#allocation2 + $0xf8] sm:$0xff]
      %v2408 = vld [vmem:[#allocation2 + $0x100] sm:$0xff]
      %v2409 = vld [vmem:[#allocation2 + $0x108] sm:$0xff]
      %v2410 = vld [vmem:[#allocation2 + $0x110] sm:$0xff]
      %s2411 = scalar_lea.vmem %s1, 64
      %v2412 = vld [vmem:[%s2411] sm:$0xff]
      %v2413 = vld [vmem:[%s2411 + $0x8] sm:$0xff]
      %v2415 = vsel %vm405, %v2379, 0
      %v2418 = vsel %vm405, %v2380, 0
      %v2421 = vsel %vm405, %v2381, 0
      %v2424 = vsel %vm405, %v2382, 0
      %v2427 = vsel %vm405, %v2383, 0
      %v2430 = vsel %vm405, %v2384, 0
      %v2433 = vsel %vm405, %v2385, 0
      %v2436 = vsel %vm405, %v2386, 0
      %v2439 = vsel %vm405, %v2387, 0
      %v2442 = vsel %vm405, %v2388, 0
      %v2445 = vsel %vm405, %v2389, 0
      %v2448 = vsel %vm405, %v2390, 0
      %v2451 = vsel %vm405, %v2391, 0
      %v2454 = vsel %vm405, %v2392, 0
      %v2457 = vsel %vm405, %v2393, 0
      %v2460 = vsel %vm405, %v2394, 0
      %v2463 = vsel %vm405, %v2395, 0
      %v2466 = vsel %vm405, %v2396, 0
      %v2469 = vsel %vm405, %v2397, 0
      %v2472 = vsel %vm405, %v2398, 0
      %v2475 = vsel %vm405, %v2399, 0
      %v2478 = vsel %vm405, %v2400, 0
      %v2481 = vsel %vm405, %v2401, 0
      %v2484 = vsel %vm405, %v2402, 0
      %v2487 = vsel %vm405, %v2403, 0
      %v2490 = vsel %vm405, %v2404, 0
      %v2493 = vsel %vm405, %v2405, 0
      %v2496 = vsel %vm405, %v2406, 0
      %v2499 = vsel %vm405, %v2407, 0
      %v2502 = vsel %vm405, %v2408, 0
      %v2505 = vsel %vm405, %v2409, 0
      %v2508 = vsel %vm405, %v2410, 0
      %2510 = vmatprep.subr.mxu0 0.0
      %2511 = vmatpush1.msra.mxu0 0.0
      %2512 = vmatprep.subr.mxu0 0.0
      %2513 = vmatpush1.msra.mxu0 0.0
      %2514 = vmatprep.subr.mxu0 0.0
      %2515 = vmatpush1.msra.mxu0 0.0
      %2516 = vmatprep.subr.mxu0 0.0
      %2517 = vmatpush1.msra.mxu0 0.0
      %2518 = vmatprep.subr.mxu0 0.0
      %2519 = vmatpush1.msra.mxu0 0.0
      %2520 = vmatprep.subr.mxu0 0.0
      %2521 = vmatpush1.msra.mxu0 0.0
      %2522 = vmatprep.subr.mxu0 0.0
      %2523 = vmatpush1.msra.mxu0 0.0
      %2524 = vmatprep.subr.mxu0 0.0
      %2525 = vmatpush1.msra.mxu0 0.0
      %2526 = vmatprep.subr.mxu0 0.0
      %2527 = vmatpush1.msra.mxu0 0.0
      %2528 = vmatprep.subr.mxu0 0.0
      %2529 = vmatpush1.msra.mxu0 0.0
      %2530 = vmatprep.subr.mxu0 0.0
      %2531 = vmatpush1.msra.mxu0 0.0
      %2532 = vmatprep.subr.mxu0 0.0
      %2533 = vmatpush1.msra.mxu0 0.0
      %2534 = vmatprep.subr.mxu0 0.0
      %2535 = vmatpush1.msra.mxu0 0.0
      %2536 = vmatprep.subr.mxu0 0.0
      %2537 = vmatpush1.msra.mxu0 0.0
      %2538 = vmatprep.subr.mxu0 0.0
      %2539 = vmatpush1.msra.mxu0 %v2413
      %2540 = vmatprep.subr.mxu0 0.0
      %2541 = vmatpush1.msra.mxu0 %v2412
      %2542 = vmatprep.subr.mxu0 0.0
      %2543 = vmatpush2.msra.mxu0 0.0
      %2544 = vmatprep.subr.mxu0 0.0
      %2545 = vmatpush2.msra.mxu0 0.0
      %2546 = vmatprep.subr.mxu0 0.0
      %2547 = vmatpush2.msra.mxu0 0.0
      %2548 = vmatprep.subr.mxu0 0.0
      %2549 = vmatpush2.msra.mxu0 0.0
      %2550 = vmatprep.subr.mxu0 0.0
      %2551 = vmatpush2.msra.mxu0 0.0
      %2552 = vmatprep.subr.mxu0 0.0
      %2553 = vmatpush2.msra.mxu0 0.0
      %2554 = vmatprep.subr.mxu0 0.0
      %2555 = vmatpush2.msra.mxu0 0.0
      %2556 = vmatprep.subr.mxu0 0.0
      %2557 = vmatpush2.msra.mxu0 0.0
      %2558 = vmatprep.subr.mxu0 0.0
      %2559 = vmatpush2.msra.mxu0 0.0
      %2560 = vmatprep.subr.mxu0 0.0
      %2561 = vmatpush2.msra.mxu0 0.0
      %2562 = vmatprep.subr.mxu0 0.0
      %2563 = vmatpush2.msra.mxu0 0.0
      %2564 = vmatprep.subr.mxu0 0.0
      %2565 = vmatpush2.msra.mxu0 0.0
      %2566 = vmatprep.subr.mxu0 0.0
      %2567 = vmatpush2.msra.mxu0 0.0
      %2568 = vmatprep.subr.mxu0 0.0
      %2569 = vmatpush2.msra.mxu0 0.0
      %2570 = vmatprep.subr.mxu0 0.0
      %2571 = vmatpush2.msra.mxu0 0.0
      %2572 = vmatprep.subr.mxu0 0.0
      %2573 = vmatpush2.msra.mxu0 0.0
      %2574 = vmatprep.mubr.f32.mxu0 0.0
      %2575 = vmatmul.mubr.f32.gmra.mxu0 %v2415
      %v2576 = vpop.f32.mrf.mxu0
      %v2577 = vadd.f32 0.0, %v2576
      %v2578 = vpop.f32.mrf.mxu0
      %2579 = vmatprep.mubr.f32.mxu0 0.0
      %2580 = vmatmul.mubr.f32.gmra.mxu0 %v2418
      %v2581 = vpop.f32.mrf.mxu0
      %v2582 = vadd.f32 0.0, %v2581
      %v2583 = vpop.f32.mrf.mxu0
      %2584 = vmatprep.mubr.f32.mxu0 0.0
      %2585 = vmatmul.mubr.f32.gmra.mxu0 %v2421
      %v2586 = vpop.f32.mrf.mxu0
      %v2587 = vadd.f32 0.0, %v2586
      %v2588 = vpop.f32.mrf.mxu0
      %2589 = vmatprep.mubr.f32.mxu0 0.0
      %2590 = vmatmul.mubr.f32.gmra.mxu0 %v2424
      %v2591 = vpop.f32.mrf.mxu0
      %v2592 = vadd.f32 0.0, %v2591
      %v2593 = vpop.f32.mrf.mxu0
      %2594 = vmatprep.mubr.f32.mxu0 0.0
      %2595 = vmatmul.mubr.f32.gmra.mxu0 %v2427
      %v2596 = vpop.f32.mrf.mxu0
      %v2597 = vadd.f32 0.0, %v2596
      %v2598 = vpop.f32.mrf.mxu0
      %2599 = vmatprep.mubr.f32.mxu0 0.0
      %2600 = vmatmul.mubr.f32.gmra.mxu0 %v2430
      %v2601 = vpop.f32.mrf.mxu0
      %v2602 = vadd.f32 0.0, %v2601
      %v2603 = vpop.f32.mrf.mxu0
      %2604 = vmatprep.mubr.f32.mxu0 0.0
      %2605 = vmatmul.mubr.f32.gmra.mxu0 %v2433
      %v2606 = vpop.f32.mrf.mxu0
      %v2607 = vadd.f32 0.0, %v2606
      %v2608 = vpop.f32.mrf.mxu0
      %2609 = vmatprep.mubr.f32.mxu0 0.0
      %2610 = vmatmul.mubr.f32.gmra.mxu0 %v2436
      %v2611 = vpop.f32.mrf.mxu0
      %v2612 = vadd.f32 0.0, %v2611
      %v2613 = vpop.f32.mrf.mxu0
      %2614 = vmatprep.mubr.f32.mxu0 0.0
      %2615 = vmatmul.mubr.f32.gmra.mxu0 %v2439
      %v2616 = vpop.f32.mrf.mxu0
      %v2617 = vadd.f32 0.0, %v2616
      %v2618 = vpop.f32.mrf.mxu0
      %2619 = vmatprep.mubr.f32.mxu0 0.0
      %2620 = vmatmul.mubr.f32.gmra.mxu0 %v2442
      %v2621 = vpop.f32.mrf.mxu0
      %v2622 = vadd.f32 0.0, %v2621
      %v2623 = vpop.f32.mrf.mxu0
      %2624 = vmatprep.mubr.f32.mxu0 0.0
      %2625 = vmatmul.mubr.f32.gmra.mxu0 %v2445
      %v2626 = vpop.f32.mrf.mxu0
      %v2627 = vadd.f32 0.0, %v2626
      %v2628 = vpop.f32.mrf.mxu0
      %2629 = vmatprep.mubr.f32.mxu0 0.0
      %2630 = vmatmul.mubr.f32.gmra.mxu0 %v2448
      %v2631 = vpop.f32.mrf.mxu0
      %v2632 = vadd.f32 0.0, %v2631
      %v2633 = vpop.f32.mrf.mxu0
      %2634 = vmatprep.mubr.f32.mxu0 0.0
      %2635 = vmatmul.mubr.f32.gmra.mxu0 %v2451
      %v2636 = vpop.f32.mrf.mxu0
      %v2637 = vadd.f32 0.0, %v2636
      %v2638 = vpop.f32.mrf.mxu0
      %2639 = vmatprep.mubr.f32.mxu0 0.0
      %2640 = vmatmul.mubr.f32.gmra.mxu0 %v2454
      %v2641 = vpop.f32.mrf.mxu0
      %v2642 = vadd.f32 0.0, %v2641
      %v2643 = vpop.f32.mrf.mxu0
      %2644 = vmatprep.mubr.f32.mxu0 0.0
      %2645 = vmatmul.mubr.f32.gmra.mxu0 %v2457
      %v2646 = vpop.f32.mrf.mxu0
      %v2647 = vadd.f32 0.0, %v2646
      %v2648 = vpop.f32.mrf.mxu0
      %2649 = vmatprep.mubr.f32.mxu0 0.0
      %2650 = vmatmul.mubr.f32.gmra.mxu0 %v2460
      %v2651 = vpop.f32.mrf.mxu0
      %v2652 = vadd.f32 0.0, %v2651
      %v2653 = vpop.f32.mrf.mxu0
      %2654 = vmatprep.mubr.f32.mxu0 0.0
      %2655 = vmatmul.mubr.f32.gmra.mxu0 %v2463
      %v2656 = vpop.f32.mrf.mxu0
      %v2657 = vadd.f32 0.0, %v2656
      %v2658 = vpop.f32.mrf.mxu0
      %2659 = vmatprep.mubr.f32.mxu0 0.0
      %2660 = vmatmul.mubr.f32.gmra.mxu0 %v2466
      %v2661 = vpop.f32.mrf.mxu0
      %v2662 = vadd.f32 0.0, %v2661
      %v2663 = vpop.f32.mrf.mxu0
      %2664 = vmatprep.mubr.f32.mxu0 0.0
      %2665 = vmatmul.mubr.f32.gmra.mxu0 %v2469
      %v2666 = vpop.f32.mrf.mxu0
      %v2667 = vadd.f32 0.0, %v2666
      %v2668 = vpop.f32.mrf.mxu0
      %2669 = vmatprep.mubr.f32.mxu0 0.0
      %2670 = vmatmul.mubr.f32.gmra.mxu0 %v2472
      %v2671 = vpop.f32.mrf.mxu0
      %v2672 = vadd.f32 0.0, %v2671
      %v2673 = vpop.f32.mrf.mxu0
      %2674 = vmatprep.mubr.f32.mxu0 0.0
      %2675 = vmatmul.mubr.f32.gmra.mxu0 %v2475
      %v2676 = vpop.f32.mrf.mxu0
      %v2677 = vadd.f32 0.0, %v2676
      %v2678 = vpop.f32.mrf.mxu0
      %2679 = vmatprep.mubr.f32.mxu0 0.0
      %2680 = vmatmul.mubr.f32.gmra.mxu0 %v2478
      %v2681 = vpop.f32.mrf.mxu0
      %v2682 = vadd.f32 0.0, %v2681
      %v2683 = vpop.f32.mrf.mxu0
      %2684 = vmatprep.mubr.f32.mxu0 0.0
      %2685 = vmatmul.mubr.f32.gmra.mxu0 %v2481
      %v2686 = vpop.f32.mrf.mxu0
      %v2687 = vadd.f32 0.0, %v2686
      %v2688 = vpop.f32.mrf.mxu0
      %2689 = vmatprep.mubr.f32.mxu0 0.0
      %2690 = vmatmul.mubr.f32.gmra.mxu0 %v2484
      %v2691 = vpop.f32.mrf.mxu0
      %v2692 = vadd.f32 0.0, %v2691
      %v2693 = vpop.f32.mrf.mxu0
      %2694 = vmatprep.mubr.f32.mxu0 0.0
      %2695 = vmatmul.mubr.f32.gmra.mxu0 %v2487
      %v2696 = vpop.f32.mrf.mxu0
      %v2697 = vadd.f32 0.0, %v2696
      %v2698 = vpop.f32.mrf.mxu0
      %2699 = vmatprep.mubr.f32.mxu0 0.0
      %2700 = vmatmul.mubr.f32.gmra.mxu0 %v2490
      %v2701 = vpop.f32.mrf.mxu0
      %v2702 = vadd.f32 0.0, %v2701
      %v2703 = vpop.f32.mrf.mxu0
      %2704 = vmatprep.mubr.f32.mxu0 0.0
      %2705 = vmatmul.mubr.f32.gmra.mxu0 %v2493
      %v2706 = vpop.f32.mrf.mxu0
      %v2707 = vadd.f32 0.0, %v2706
      %v2708 = vpop.f32.mrf.mxu0
      %2709 = vmatprep.mubr.f32.mxu0 0.0
      %2710 = vmatmul.mubr.f32.gmra.mxu0 %v2496
      %v2711 = vpop.f32.mrf.mxu0
      %v2712 = vadd.f32 0.0, %v2711
      %v2713 = vpop.f32.mrf.mxu0
      %2714 = vmatprep.mubr.f32.mxu0 0.0
      %2715 = vmatmul.mubr.f32.gmra.mxu0 %v2499
      %v2716 = vpop.f32.mrf.mxu0
      %v2717 = vadd.f32 0.0, %v2716
      %v2718 = vpop.f32.mrf.mxu0
      %2719 = vmatprep.mubr.f32.mxu0 0.0
      %2720 = vmatmul.mubr.f32.gmra.mxu0 %v2502
      %v2721 = vpop.f32.mrf.mxu0
      %v2722 = vadd.f32 0.0, %v2721
      %v2723 = vpop.f32.mrf.mxu0
      %2724 = vmatprep.mubr.f32.mxu0 0.0
      %2725 = vmatmul.mubr.f32.gmra.mxu0 %v2505
      %v2726 = vpop.f32.mrf.mxu0
      %v2727 = vadd.f32 0.0, %v2726
      %v2728 = vpop.f32.mrf.mxu0
      %2729 = vmatprep.mubr.f32.mxu0 0.0
      %2730 = vmatmul.mubr.f32.gmra.mxu0 %v2508
      %v2731 = vpop.f32.mrf.mxu0
      %v2732 = vadd.f32 0.0, %v2731
      %v2733 = vpop.f32.mrf.mxu0
      %2734 = vdwg.mxu0
      %v2735 = vadd.f32 %v2347, %v2577
      %v2736 = vadd.f32 %v2348, %v2582
      %v2737 = vadd.f32 %v2349, %v2587
      %v2738 = vadd.f32 %v2350, %v2592
      %v2739 = vadd.f32 %v2351, %v2597
      %v2740 = vadd.f32 %v2352, %v2602
      %v2741 = vadd.f32 %v2353, %v2607
      %v2742 = vadd.f32 %v2354, %v2612
      %v2743 = vadd.f32 %v2355, %v2617
      %v2744 = vadd.f32 %v2356, %v2622
      %v2745 = vadd.f32 %v2357, %v2627
      %v2746 = vadd.f32 %v2358, %v2632
      %v2747 = vadd.f32 %v2359, %v2637
      %v2748 = vadd.f32 %v2360, %v2642
      %v2749 = vadd.f32 %v2361, %v2647
      %v2750 = vadd.f32 %v2362, %v2652
      %v2751 = vadd.f32 %v2363, %v2657
      %v2752 = vadd.f32 %v2364, %v2662
      %v2753 = vadd.f32 %v2365, %v2667
      %v2754 = vadd.f32 %v2366, %v2672
      %v2755 = vadd.f32 %v2367, %v2677
      %v2756 = vadd.f32 %v2368, %v2682
      %v2757 = vadd.f32 %v2369, %v2687
      %v2758 = vadd.f32 %v2370, %v2692
      %v2759 = vadd.f32 %v2371, %v2697
      %v2760 = vadd.f32 %v2372, %v2702
      %v2761 = vadd.f32 %v2373, %v2707
      %v2762 = vadd.f32 %v2374, %v2712
      %v2763 = vadd.f32 %v2375, %v2717
      %v2764 = vadd.f32 %v2376, %v2722
      %v2765 = vadd.f32 %v2377, %v2727
      %v2766 = vadd.f32 %v2378, %v2732
      %v2767 = vld [vmem:[#allocation2 + $0x19] sm:$0xff]
      %v2768 = vld [vmem:[#allocation2 + $0x21] sm:$0xff]
      %v2769 = vld [vmem:[#allocation2 + $0x29] sm:$0xff]
      %v2770 = vld [vmem:[#allocation2 + $0x31] sm:$0xff]
      %v2771 = vld [vmem:[#allocation2 + $0x39] sm:$0xff]
      %v2772 = vld [vmem:[#allocation2 + $0x41] sm:$0xff]
      %v2773 = vld [vmem:[#allocation2 + $0x49] sm:$0xff]
      %v2774 = vld [vmem:[#allocation2 + $0x51] sm:$0xff]
      %v2775 = vld [vmem:[#allocation2 + $0x59] sm:$0xff]
      %v2776 = vld [vmem:[#allocation2 + $0x61] sm:$0xff]
      %v2777 = vld [vmem:[#allocation2 + $0x69] sm:$0xff]
      %v2778 = vld [vmem:[#allocation2 + $0x71] sm:$0xff]
      %v2779 = vld [vmem:[#allocation2 + $0x79] sm:$0xff]
      %v2780 = vld [vmem:[#allocation2 + $0x81] sm:$0xff]
      %v2781 = vld [vmem:[#allocation2 + $0x89] sm:$0xff]
      %v2782 = vld [vmem:[#allocation2 + $0x91] sm:$0xff]
      %v2783 = vld [vmem:[#allocation2 + $0x99] sm:$0xff]
      %v2784 = vld [vmem:[#allocation2 + $0xa1] sm:$0xff]
      %v2785 = vld [vmem:[#allocation2 + $0xa9] sm:$0xff]
      %v2786 = vld [vmem:[#allocation2 + $0xb1] sm:$0xff]
      %v2787 = vld [vmem:[#allocation2 + $0xb9] sm:$0xff]
      %v2788 = vld [vmem:[#allocation2 + $0xc1] sm:$0xff]
      %v2789 = vld [vmem:[#allocation2 + $0xc9] sm:$0xff]
      %v2790 = vld [vmem:[#allocation2 + $0xd1] sm:$0xff]
      %v2791 = vld [vmem:[#allocation2 + $0xd9] sm:$0xff]
      %v2792 = vld [vmem:[#allocation2 + $0xe1] sm:$0xff]
      %v2793 = vld [vmem:[#allocation2 + $0xe9] sm:$0xff]
      %v2794 = vld [vmem:[#allocation2 + $0xf1] sm:$0xff]
      %v2795 = vld [vmem:[#allocation2 + $0xf9] sm:$0xff]
      %v2796 = vld [vmem:[#allocation2 + $0x101] sm:$0xff]
      %v2797 = vld [vmem:[#allocation2 + $0x109] sm:$0xff]
      %v2798 = vld [vmem:[#allocation2 + $0x111] sm:$0xff]
      %v2799 = vmul.f32 %v2767, %v1445
      %v2800 = vmul.f32 %v2768, %v1449
      %v2801 = vmul.f32 %v2769, %v1453
      %v2802 = vmul.f32 %v2770, %v1457
      %v2803 = vmul.f32 %v2771, %v1461
      %v2804 = vmul.f32 %v2772, %v1465
      %v2805 = vmul.f32 %v2773, %v1469
      %v2806 = vmul.f32 %v2774, %v1473
      %v2807 = vmul.f32 %v2775, %v1477
      %v2808 = vmul.f32 %v2776, %v1481
      %v2809 = vmul.f32 %v2777, %v1485
      %v2810 = vmul.f32 %v2778, %v1489
      %v2811 = vmul.f32 %v2779, %v1493
      %v2812 = vmul.f32 %v2780, %v1497
      %v2813 = vmul.f32 %v2781, %v1501
      %v2814 = vmul.f32 %v2782, %v1505
      %v2815 = vmul.f32 %v2783, %v1509
      %v2816 = vmul.f32 %v2784, %v1513
      %v2817 = vmul.f32 %v2785, %v1517
      %v2818 = vmul.f32 %v2786, %v1521
      %v2819 = vmul.f32 %v2787, %v1525
      %v2820 = vmul.f32 %v2788, %v1529
      %v2821 = vmul.f32 %v2789, %v1533
      %v2822 = vmul.f32 %v2790, %v1537
      %v2823 = vmul.f32 %v2791, %v1541
      %v2824 = vmul.f32 %v2792, %v1545
      %v2825 = vmul.f32 %v2793, %v1549
      %v2826 = vmul.f32 %v2794, %v1553
      %v2827 = vmul.f32 %v2795, %v1557
      %v2828 = vmul.f32 %v2796, %v1561
      %v2829 = vmul.f32 %v2797, %v1565
      %v2830 = vmul.f32 %v2798, %v1569
      %s2831 = scalar_lea.vmem %s1, 80
      %v2832 = vld [vmem:[%s2831] sm:$0xff]
      %v2833 = vld [vmem:[%s2831 + $0x8] sm:$0xff]
      %v2835 = vsel %vm405, %v2799, 0
      %v2838 = vsel %vm405, %v2800, 0
      %v2841 = vsel %vm405, %v2801, 0
      %v2844 = vsel %vm405, %v2802, 0
      %v2847 = vsel %vm405, %v2803, 0
      %v2850 = vsel %vm405, %v2804, 0
      %v2853 = vsel %vm405, %v2805, 0
      %v2856 = vsel %vm405, %v2806, 0
      %v2859 = vsel %vm405, %v2807, 0
      %v2862 = vsel %vm405, %v2808, 0
      %v2865 = vsel %vm405, %v2809, 0
      %v2868 = vsel %vm405, %v2810, 0
      %v2871 = vsel %vm405, %v2811, 0
      %v2874 = vsel %vm405, %v2812, 0
      %v2877 = vsel %vm405, %v2813, 0
      %v2880 = vsel %vm405, %v2814, 0
      %v2883 = vsel %vm405, %v2815, 0
      %v2886 = vsel %vm405, %v2816, 0
      %v2889 = vsel %vm405, %v2817, 0
      %v2892 = vsel %vm405, %v2818, 0
      %v2895 = vsel %vm405, %v2819, 0
      %v2898 = vsel %vm405, %v2820, 0
      %v2901 = vsel %vm405, %v2821, 0
      %v2904 = vsel %vm405, %v2822, 0
      %v2907 = vsel %vm405, %v2823, 0
      %v2910 = vsel %vm405, %v2824, 0
      %v2913 = vsel %vm405, %v2825, 0
      %v2916 = vsel %vm405, %v2826, 0
      %v2919 = vsel %vm405, %v2827, 0
      %v2922 = vsel %vm405, %v2828, 0
      %v2925 = vsel %vm405, %v2829, 0
      %v2928 = vsel %vm405, %v2830, 0
      %2930 = vmatprep.subr.mxu0 0.0
      %2931 = vmatpush1.msra.mxu0 0.0
      %2932 = vmatprep.subr.mxu0 0.0
      %2933 = vmatpush1.msra.mxu0 0.0
      %2934 = vmatprep.subr.mxu0 0.0
      %2935 = vmatpush1.msra.mxu0 0.0
      %2936 = vmatprep.subr.mxu0 0.0
      %2937 = vmatpush1.msra.mxu0 0.0
      %2938 = vmatprep.subr.mxu0 0.0
      %2939 = vmatpush1.msra.mxu0 0.0
      %2940 = vmatprep.subr.mxu0 0.0
      %2941 = vmatpush1.msra.mxu0 0.0
      %2942 = vmatprep.subr.mxu0 0.0
      %2943 = vmatpush1.msra.mxu0 0.0
      %2944 = vmatprep.subr.mxu0 0.0
      %2945 = vmatpush1.msra.mxu0 0.0
      %2946 = vmatprep.subr.mxu0 0.0
      %2947 = vmatpush1.msra.mxu0 0.0
      %2948 = vmatprep.subr.mxu0 0.0
      %2949 = vmatpush1.msra.mxu0 0.0
      %2950 = vmatprep.subr.mxu0 0.0
      %2951 = vmatpush1.msra.mxu0 0.0
      %2952 = vmatprep.subr.mxu0 0.0
      %2953 = vmatpush1.msra.mxu0 0.0
      %2954 = vmatprep.subr.mxu0 0.0
      %2955 = vmatpush1.msra.mxu0 0.0
      %2956 = vmatprep.subr.mxu0 0.0
      %2957 = vmatpush1.msra.mxu0 0.0
      %2958 = vmatprep.subr.mxu0 0.0
      %2959 = vmatpush1.msra.mxu0 %v2833
      %2960 = vmatprep.subr.mxu0 0.0
      %2961 = vmatpush1.msra.mxu0 %v2832
      %2962 = vmatprep.subr.mxu0 0.0
      %2963 = vmatpush2.msra.mxu0 0.0
      %2964 = vmatprep.subr.mxu0 0.0
      %2965 = vmatpush2.msra.mxu0 0.0
      %2966 = vmatprep.subr.mxu0 0.0
      %2967 = vmatpush2.msra.mxu0 0.0
      %2968 = vmatprep.subr.mxu0 0.0
      %2969 = vmatpush2.msra.mxu0 0.0
      %2970 = vmatprep.subr.mxu0 0.0
      %2971 = vmatpush2.msra.mxu0 0.0
      %2972 = vmatprep.subr.mxu0 0.0
      %2973 = vmatpush2.msra.mxu0 0.0
      %2974 = vmatprep.subr.mxu0 0.0
      %2975 = vmatpush2.msra.mxu0 0.0
      %2976 = vmatprep.subr.mxu0 0.0
      %2977 = vmatpush2.msra.mxu0 0.0
      %2978 = vmatprep.subr.mxu0 0.0
      %2979 = vmatpush2.msra.mxu0 0.0
      %2980 = vmatprep.subr.mxu0 0.0
      %2981 = vmatpush2.msra.mxu0 0.0
      %2982 = vmatprep.subr.mxu0 0.0
      %2983 = vmatpush2.msra.mxu0 0.0
      %2984 = vmatprep.subr.mxu0 0.0
      %2985 = vmatpush2.msra.mxu0 0.0
      %2986 = vmatprep.subr.mxu0 0.0
      %2987 = vmatpush2.msra.mxu0 0.0
      %2988 = vmatprep.subr.mxu0 0.0
      %2989 = vmatpush2.msra.mxu0 0.0
      %2990 = vmatprep.subr.mxu0 0.0
      %2991 = vmatpush2.msra.mxu0 0.0
      %2992 = vmatprep.subr.mxu0 0.0
      %2993 = vmatpush2.msra.mxu0 0.0
      %2994 = vmatprep.mubr.f32.mxu0 0.0
      %2995 = vmatmul.mubr.f32.gmra.mxu0 %v2835
      %v2996 = vpop.f32.mrf.mxu0
      %v2997 = vadd.f32 0.0, %v2996
      %v2998 = vpop.f32.mrf.mxu0
      %2999 = vmatprep.mubr.f32.mxu0 0.0
      %3000 = vmatmul.mubr.f32.gmra.mxu0 %v2838
      %v3001 = vpop.f32.mrf.mxu0
      %v3002 = vadd.f32 0.0, %v3001
      %v3003 = vpop.f32.mrf.mxu0
      %3004 = vmatprep.mubr.f32.mxu0 0.0
      %3005 = vmatmul.mubr.f32.gmra.mxu0 %v2841
      %v3006 = vpop.f32.mrf.mxu0
      %v3007 = vadd.f32 0.0, %v3006
      %v3008 = vpop.f32.mrf.mxu0
      %3009 = vmatprep.mubr.f32.mxu0 0.0
      %3010 = vmatmul.mubr.f32.gmra.mxu0 %v2844
      %v3011 = vpop.f32.mrf.mxu0
      %v3012 = vadd.f32 0.0, %v3011
      %v3013 = vpop.f32.mrf.mxu0
      %3014 = vmatprep.mubr.f32.mxu0 0.0
      %3015 = vmatmul.mubr.f32.gmra.mxu0 %v2847
      %v3016 = vpop.f32.mrf.mxu0
      %v3017 = vadd.f32 0.0, %v3016
      %v3018 = vpop.f32.mrf.mxu0
      %3019 = vmatprep.mubr.f32.mxu0 0.0
      %3020 = vmatmul.mubr.f32.gmra.mxu0 %v2850
      %v3021 = vpop.f32.mrf.mxu0
      %v3022 = vadd.f32 0.0, %v3021
      %v3023 = vpop.f32.mrf.mxu0
      %3024 = vmatprep.mubr.f32.mxu0 0.0
      %3025 = vmatmul.mubr.f32.gmra.mxu0 %v2853
      %v3026 = vpop.f32.mrf.mxu0
      %v3027 = vadd.f32 0.0, %v3026
      %v3028 = vpop.f32.mrf.mxu0
      %3029 = vmatprep.mubr.f32.mxu0 0.0
      %3030 = vmatmul.mubr.f32.gmra.mxu0 %v2856
      %v3031 = vpop.f32.mrf.mxu0
      %v3032 = vadd.f32 0.0, %v3031
      %v3033 = vpop.f32.mrf.mxu0
      %3034 = vmatprep.mubr.f32.mxu0 0.0
      %3035 = vmatmul.mubr.f32.gmra.mxu0 %v2859
      %v3036 = vpop.f32.mrf.mxu0
      %v3037 = vadd.f32 0.0, %v3036
      %v3038 = vpop.f32.mrf.mxu0
      %3039 = vmatprep.mubr.f32.mxu0 0.0
      %3040 = vmatmul.mubr.f32.gmra.mxu0 %v2862
      %v3041 = vpop.f32.mrf.mxu0
      %v3042 = vadd.f32 0.0, %v3041
      %v3043 = vpop.f32.mrf.mxu0
      %3044 = vmatprep.mubr.f32.mxu0 0.0
      %3045 = vmatmul.mubr.f32.gmra.mxu0 %v2865
      %v3046 = vpop.f32.mrf.mxu0
      %v3047 = vadd.f32 0.0, %v3046
      %v3048 = vpop.f32.mrf.mxu0
      %3049 = vmatprep.mubr.f32.mxu0 0.0
      %3050 = vmatmul.mubr.f32.gmra.mxu0 %v2868
      %v3051 = vpop.f32.mrf.mxu0
      %v3052 = vadd.f32 0.0, %v3051
      %v3053 = vpop.f32.mrf.mxu0
      %3054 = vmatprep.mubr.f32.mxu0 0.0
      %3055 = vmatmul.mubr.f32.gmra.mxu0 %v2871
      %v3056 = vpop.f32.mrf.mxu0
      %v3057 = vadd.f32 0.0, %v3056
      %v3058 = vpop.f32.mrf.mxu0
      %3059 = vmatprep.mubr.f32.mxu0 0.0
      %3060 = vmatmul.mubr.f32.gmra.mxu0 %v2874
      %v3061 = vpop.f32.mrf.mxu0
      %v3062 = vadd.f32 0.0, %v3061
      %v3063 = vpop.f32.mrf.mxu0
      %3064 = vmatprep.mubr.f32.mxu0 0.0
      %3065 = vmatmul.mubr.f32.gmra.mxu0 %v2877
      %v3066 = vpop.f32.mrf.mxu0
      %v3067 = vadd.f32 0.0, %v3066
      %v3068 = vpop.f32.mrf.mxu0
      %3069 = vmatprep.mubr.f32.mxu0 0.0
      %3070 = vmatmul.mubr.f32.gmra.mxu0 %v2880
      %v3071 = vpop.f32.mrf.mxu0
      %v3072 = vadd.f32 0.0, %v3071
      %v3073 = vpop.f32.mrf.mxu0
      %3074 = vmatprep.mubr.f32.mxu0 0.0
      %3075 = vmatmul.mubr.f32.gmra.mxu0 %v2883
      %v3076 = vpop.f32.mrf.mxu0
      %v3077 = vadd.f32 0.0, %v3076
      %v3078 = vpop.f32.mrf.mxu0
      %3079 = vmatprep.mubr.f32.mxu0 0.0
      %3080 = vmatmul.mubr.f32.gmra.mxu0 %v2886
      %v3081 = vpop.f32.mrf.mxu0
      %v3082 = vadd.f32 0.0, %v3081
      %v3083 = vpop.f32.mrf.mxu0
      %3084 = vmatprep.mubr.f32.mxu0 0.0
      %3085 = vmatmul.mubr.f32.gmra.mxu0 %v2889
      %v3086 = vpop.f32.mrf.mxu0
      %v3087 = vadd.f32 0.0, %v3086
      %v3088 = vpop.f32.mrf.mxu0
      %3089 = vmatprep.mubr.f32.mxu0 0.0
      %3090 = vmatmul.mubr.f32.gmra.mxu0 %v2892
      %v3091 = vpop.f32.mrf.mxu0
      %v3092 = vadd.f32 0.0, %v3091
      %v3093 = vpop.f32.mrf.mxu0
      %3094 = vmatprep.mubr.f32.mxu0 0.0
      %3095 = vmatmul.mubr.f32.gmra.mxu0 %v2895
      %v3096 = vpop.f32.mrf.mxu0
      %v3097 = vadd.f32 0.0, %v3096
      %v3098 = vpop.f32.mrf.mxu0
      %3099 = vmatprep.mubr.f32.mxu0 0.0
      %3100 = vmatmul.mubr.f32.gmra.mxu0 %v2898
      %v3101 = vpop.f32.mrf.mxu0
      %v3102 = vadd.f32 0.0, %v3101
      %v3103 = vpop.f32.mrf.mxu0
      %3104 = vmatprep.mubr.f32.mxu0 0.0
      %3105 = vmatmul.mubr.f32.gmra.mxu0 %v2901
      %v3106 = vpop.f32.mrf.mxu0
      %v3107 = vadd.f32 0.0, %v3106
      %v3108 = vpop.f32.mrf.mxu0
      %3109 = vmatprep.mubr.f32.mxu0 0.0
      %3110 = vmatmul.mubr.f32.gmra.mxu0 %v2904
      %v3111 = vpop.f32.mrf.mxu0
      %v3112 = vadd.f32 0.0, %v3111
      %v3113 = vpop.f32.mrf.mxu0
      %3114 = vmatprep.mubr.f32.mxu0 0.0
      %3115 = vmatmul.mubr.f32.gmra.mxu0 %v2907
      %v3116 = vpop.f32.mrf.mxu0
      %v3117 = vadd.f32 0.0, %v3116
      %v3118 = vpop.f32.mrf.mxu0
      %3119 = vmatprep.mubr.f32.mxu0 0.0
      %3120 = vmatmul.mubr.f32.gmra.mxu0 %v2910
      %v3121 = vpop.f32.mrf.mxu0
      %v3122 = vadd.f32 0.0, %v3121
      %v3123 = vpop.f32.mrf.mxu0
      %3124 = vmatprep.mubr.f32.mxu0 0.0
      %3125 = vmatmul.mubr.f32.gmra.mxu0 %v2913
      %v3126 = vpop.f32.mrf.mxu0
      %v3127 = vadd.f32 0.0, %v3126
      %v3128 = vpop.f32.mrf.mxu0
      %3129 = vmatprep.mubr.f32.mxu0 0.0
      %3130 = vmatmul.mubr.f32.gmra.mxu0 %v2916
      %v3131 = vpop.f32.mrf.mxu0
      %v3132 = vadd.f32 0.0, %v3131
      %v3133 = vpop.f32.mrf.mxu0
      %3134 = vmatprep.mubr.f32.mxu0 0.0
      %3135 = vmatmul.mubr.f32.gmra.mxu0 %v2919
      %v3136 = vpop.f32.mrf.mxu0
      %v3137 = vadd.f32 0.0, %v3136
      %v3138 = vpop.f32.mrf.mxu0
      %3139 = vmatprep.mubr.f32.mxu0 0.0
      %3140 = vmatmul.mubr.f32.gmra.mxu0 %v2922
      %v3141 = vpop.f32.mrf.mxu0
      %v3142 = vadd.f32 0.0, %v3141
      %v3143 = vpop.f32.mrf.mxu0
      %3144 = vmatprep.mubr.f32.mxu0 0.0
      %3145 = vmatmul.mubr.f32.gmra.mxu0 %v2925
      %v3146 = vpop.f32.mrf.mxu0
      %v3147 = vadd.f32 0.0, %v3146
      %v3148 = vpop.f32.mrf.mxu0
      %3149 = vmatprep.mubr.f32.mxu0 0.0
      %3150 = vmatmul.mubr.f32.gmra.mxu0 %v2928
      %v3151 = vpop.f32.mrf.mxu0
      %v3152 = vadd.f32 0.0, %v3151
      %v3153 = vpop.f32.mrf.mxu0
      %3154 = vdwg.mxu0
      %v3155 = vadd.f32 %v2735, %v2997
      %v3156 = vadd.f32 %v2736, %v3002
      %v3157 = vadd.f32 %v2737, %v3007
      %v3158 = vadd.f32 %v2738, %v3012
      %v3159 = vadd.f32 %v2739, %v3017
      %v3160 = vadd.f32 %v2740, %v3022
      %v3161 = vadd.f32 %v2741, %v3027
      %v3162 = vadd.f32 %v2742, %v3032
      %v3163 = vadd.f32 %v2743, %v3037
      %v3164 = vadd.f32 %v2744, %v3042
      %v3165 = vadd.f32 %v2745, %v3047
      %v3166 = vadd.f32 %v2746, %v3052
      %v3167 = vadd.f32 %v2747, %v3057
      %v3168 = vadd.f32 %v2748, %v3062
      %v3169 = vadd.f32 %v2749, %v3067
      %v3170 = vadd.f32 %v2750, %v3072
      %v3171 = vadd.f32 %v2751, %v3077
      %v3172 = vadd.f32 %v2752, %v3082
      %v3173 = vadd.f32 %v2753, %v3087
      %v3174 = vadd.f32 %v2754, %v3092
      %v3175 = vadd.f32 %v2755, %v3097
      %v3176 = vadd.f32 %v2756, %v3102
      %v3177 = vadd.f32 %v2757, %v3107
      %v3178 = vadd.f32 %v2758, %v3112
      %v3179 = vadd.f32 %v2759, %v3117
      %v3180 = vadd.f32 %v2760, %v3122
      %v3181 = vadd.f32 %v2761, %v3127
      %v3182 = vadd.f32 %v2762, %v3132
      %v3183 = vadd.f32 %v2763, %v3137
      %v3184 = vadd.f32 %v2764, %v3142
      %v3185 = vadd.f32 %v2765, %v3147
      %v3186 = vadd.f32 %v2766, %v3152
      %v3187 = vld [vmem:[#allocation2 + $0x27] sm:$0xff]
      %v3188 = vld [vmem:[#allocation2 + $0x2f] sm:$0xff]
      %v3189 = vld [vmem:[#allocation2 + $0x37] sm:$0xff]
      %v3190 = vld [vmem:[#allocation2 + $0x3f] sm:$0xff]
      %v3191 = vld [vmem:[#allocation2 + $0x47] sm:$0xff]
      %v3192 = vld [vmem:[#allocation2 + $0x4f] sm:$0xff]
      %v3193 = vld [vmem:[#allocation2 + $0x57] sm:$0xff]
      %v3194 = vld [vmem:[#allocation2 + $0x5f] sm:$0xff]
      %v3195 = vld [vmem:[#allocation2 + $0x67] sm:$0xff]
      %v3196 = vld [vmem:[#allocation2 + $0x6f] sm:$0xff]
      %v3197 = vld [vmem:[#allocation2 + $0x77] sm:$0xff]
      %v3198 = vld [vmem:[#allocation2 + $0x7f] sm:$0xff]
      %v3199 = vld [vmem:[#allocation2 + $0x87] sm:$0xff]
      %v3200 = vld [vmem:[#allocation2 + $0x8f] sm:$0xff]
      %v3201 = vld [vmem:[#allocation2 + $0x97] sm:$0xff]
      %v3202 = vld [vmem:[#allocation2 + $0x9f] sm:$0xff]
      %v3203 = vld [vmem:[#allocation2 + $0xa7] sm:$0xff]
      %v3204 = vld [vmem:[#allocation2 + $0xaf] sm:$0xff]
      %v3205 = vld [vmem:[#allocation2 + $0xb7] sm:$0xff]
      %v3206 = vld [vmem:[#allocation2 + $0xbf] sm:$0xff]
      %v3207 = vld [vmem:[#allocation2 + $0xc7] sm:$0xff]
      %v3208 = vld [vmem:[#allocation2 + $0xcf] sm:$0xff]
      %v3209 = vld [vmem:[#allocation2 + $0xd7] sm:$0xff]
      %v3210 = vld [vmem:[#allocation2 + $0xdf] sm:$0xff]
      %v3211 = vld [vmem:[#allocation2 + $0xe7] sm:$0xff]
      %v3212 = vld [vmem:[#allocation2 + $0xef] sm:$0xff]
      %v3213 = vld [vmem:[#allocation2 + $0xf7] sm:$0xff]
      %v3214 = vld [vmem:[#allocation2 + $0xff] sm:$0xff]
      %v3215 = vld [vmem:[#allocation2 + $0x107] sm:$0xff]
      %v3216 = vld [vmem:[#allocation2 + $0x10f] sm:$0xff]
      %v3217 = vld [vmem:[#allocation2 + $0x117] sm:$0xff]
      %v3218 = vld [vmem:[#allocation2 + $0x11f] sm:$0xff]
      %v3219 = vmul.f32 %v3187, %v543
      %v3220 = vmul.f32 %v3188, %v548
      %v3221 = vmul.f32 %v3189, %v553
      %v3222 = vmul.f32 %v3190, %v558
      %v3223 = vmul.f32 %v3191, %v563
      %v3224 = vmul.f32 %v3192, %v568
      %v3225 = vmul.f32 %v3193, %v573
      %v3226 = vmul.f32 %v3194, %v578
      %v3227 = vmul.f32 %v3195, %v583
      %v3228 = vmul.f32 %v3196, %v588
      %v3229 = vmul.f32 %v3197, %v593
      %v3230 = vmul.f32 %v3198, %v598
      %v3231 = vmul.f32 %v3199, %v603
      %v3232 = vmul.f32 %v3200, %v608
      %v3233 = vmul.f32 %v3201, %v613
      %v3234 = vmul.f32 %v3202, %v618
      %v3235 = vmul.f32 %v3203, %v623
      %v3236 = vmul.f32 %v3204, %v628
      %v3237 = vmul.f32 %v3205, %v633
      %v3238 = vmul.f32 %v3206, %v638
      %v3239 = vmul.f32 %v3207, %v643
      %v3240 = vmul.f32 %v3208, %v648
      %v3241 = vmul.f32 %v3209, %v653
      %v3242 = vmul.f32 %v3210, %v658
      %v3243 = vmul.f32 %v3211, %v663
      %v3244 = vmul.f32 %v3212, %v668
      %v3245 = vmul.f32 %v3213, %v673
      %v3246 = vmul.f32 %v3214, %v678
      %v3247 = vmul.f32 %v3215, %v683
      %v3248 = vmul.f32 %v3216, %v688
      %v3249 = vmul.f32 %v3217, %v693
      %v3250 = vmul.f32 %v3218, %v698
      %s3251 = scalar_lea.vmem %s1, 96
      %v3252 = vld [vmem:[%s3251] sm:$0xff]
      %v3253 = vld [vmem:[%s3251 + $0x8] sm:$0xff]
      %v3255 = vsel %vm405, %v3219, 0
      %v3258 = vsel %vm405, %v3220, 0
      %v3261 = vsel %vm405, %v3221, 0
      %v3264 = vsel %vm405, %v3222, 0
      %v3267 = vsel %vm405, %v3223, 0
      %v3270 = vsel %vm405, %v3224, 0
      %v3273 = vsel %vm405, %v3225, 0
      %v3276 = vsel %vm405, %v3226, 0
      %v3279 = vsel %vm405, %v3227, 0
      %v3282 = vsel %vm405, %v3228, 0
      %v3285 = vsel %vm405, %v3229, 0
      %v3288 = vsel %vm405, %v3230, 0
      %v3291 = vsel %vm405, %v3231, 0
      %v3294 = vsel %vm405, %v3232, 0
      %v3297 = vsel %vm405, %v3233, 0
      %v3300 = vsel %vm405, %v3234, 0
      %v3303 = vsel %vm405, %v3235, 0
      %v3306 = vsel %vm405, %v3236, 0
      %v3309 = vsel %vm405, %v3237, 0
      %v3312 = vsel %vm405, %v3238, 0
      %v3315 = vsel %vm405, %v3239, 0
      %v3318 = vsel %vm405, %v3240, 0
      %v3321 = vsel %vm405, %v3241, 0
      %v3324 = vsel %vm405, %v3242, 0
      %v3327 = vsel %vm405, %v3243, 0
      %v3330 = vsel %vm405, %v3244, 0
      %v3333 = vsel %vm405, %v3245, 0
      %v3336 = vsel %vm405, %v3246, 0
      %v3339 = vsel %vm405, %v3247, 0
      %v3342 = vsel %vm405, %v3248, 0
      %v3345 = vsel %vm405, %v3249, 0
      %v3348 = vsel %vm405, %v3250, 0
      %3350 = vmatprep.subr.mxu0 0.0
      %3351 = vmatpush1.msra.mxu0 0.0
      %3352 = vmatprep.subr.mxu0 0.0
      %3353 = vmatpush1.msra.mxu0 0.0
      %3354 = vmatprep.subr.mxu0 0.0
      %3355 = vmatpush1.msra.mxu0 0.0
      %3356 = vmatprep.subr.mxu0 0.0
      %3357 = vmatpush1.msra.mxu0 0.0
      %3358 = vmatprep.subr.mxu0 0.0
      %3359 = vmatpush1.msra.mxu0 0.0
      %3360 = vmatprep.subr.mxu0 0.0
      %3361 = vmatpush1.msra.mxu0 0.0
      %3362 = vmatprep.subr.mxu0 0.0
      %3363 = vmatpush1.msra.mxu0 0.0
      %3364 = vmatprep.subr.mxu0 0.0
      %3365 = vmatpush1.msra.mxu0 0.0
      %3366 = vmatprep.subr.mxu0 0.0
      %3367 = vmatpush1.msra.mxu0 0.0
      %3368 = vmatprep.subr.mxu0 0.0
      %3369 = vmatpush1.msra.mxu0 0.0
      %3370 = vmatprep.subr.mxu0 0.0
      %3371 = vmatpush1.msra.mxu0 0.0
      %3372 = vmatprep.subr.mxu0 0.0
      %3373 = vmatpush1.msra.mxu0 0.0
      %3374 = vmatprep.subr.mxu0 0.0
      %3375 = vmatpush1.msra.mxu0 0.0
      %3376 = vmatprep.subr.mxu0 0.0
      %3377 = vmatpush1.msra.mxu0 0.0
      %3378 = vmatprep.subr.mxu0 0.0
      %3379 = vmatpush1.msra.mxu0 %v3253
      %3380 = vmatprep.subr.mxu0 0.0
      %3381 = vmatpush1.msra.mxu0 %v3252
      %3382 = vmatprep.subr.mxu0 0.0
      %3383 = vmatpush2.msra.mxu0 0.0
      %3384 = vmatprep.subr.mxu0 0.0
      %3385 = vmatpush2.msra.mxu0 0.0
      %3386 = vmatprep.subr.mxu0 0.0
      %3387 = vmatpush2.msra.mxu0 0.0
      %3388 = vmatprep.subr.mxu0 0.0
      %3389 = vmatpush2.msra.mxu0 0.0
      %3390 = vmatprep.subr.mxu0 0.0
      %3391 = vmatpush2.msra.mxu0 0.0
      %3392 = vmatprep.subr.mxu0 0.0
      %3393 = vmatpush2.msra.mxu0 0.0
      %3394 = vmatprep.subr.mxu0 0.0
      %3395 = vmatpush2.msra.mxu0 0.0
      %3396 = vmatprep.subr.mxu0 0.0
      %3397 = vmatpush2.msra.mxu0 0.0
      %3398 = vmatprep.subr.mxu0 0.0
      %3399 = vmatpush2.msra.mxu0 0.0
      %3400 = vmatprep.subr.mxu0 0.0
      %3401 = vmatpush2.msra.mxu0 0.0
      %3402 = vmatprep.subr.mxu0 0.0
      %3403 = vmatpush2.msra.mxu0 0.0
      %3404 = vmatprep.subr.mxu0 0.0
      %3405 = vmatpush2.msra.mxu0 0.0
      %3406 = vmatprep.subr.mxu0 0.0
      %3407 = vmatpush2.msra.mxu0 0.0
      %3408 = vmatprep.subr.mxu0 0.0
      %3409 = vmatpush2.msra.mxu0 0.0
      %3410 = vmatprep.subr.mxu0 0.0
      %3411 = vmatpush2.msra.mxu0 0.0
      %3412 = vmatprep.subr.mxu0 0.0
      %3413 = vmatpush2.msra.mxu0 0.0
      %3414 = vmatprep.mubr.f32.mxu0 0.0
      %3415 = vmatmul.mubr.f32.gmra.mxu0 %v3255
      %v3416 = vpop.f32.mrf.mxu0
      %v3417 = vadd.f32 0.0, %v3416
      %v3418 = vpop.f32.mrf.mxu0
      %3419 = vmatprep.mubr.f32.mxu0 0.0
      %3420 = vmatmul.mubr.f32.gmra.mxu0 %v3258
      %v3421 = vpop.f32.mrf.mxu0
      %v3422 = vadd.f32 0.0, %v3421
      %v3423 = vpop.f32.mrf.mxu0
      %3424 = vmatprep.mubr.f32.mxu0 0.0
      %3425 = vmatmul.mubr.f32.gmra.mxu0 %v3261
      %v3426 = vpop.f32.mrf.mxu0
      %v3427 = vadd.f32 0.0, %v3426
      %v3428 = vpop.f32.mrf.mxu0
      %3429 = vmatprep.mubr.f32.mxu0 0.0
      %3430 = vmatmul.mubr.f32.gmra.mxu0 %v3264
      %v3431 = vpop.f32.mrf.mxu0
      %v3432 = vadd.f32 0.0, %v3431
      %v3433 = vpop.f32.mrf.mxu0
      %3434 = vmatprep.mubr.f32.mxu0 0.0
      %3435 = vmatmul.mubr.f32.gmra.mxu0 %v3267
      %v3436 = vpop.f32.mrf.mxu0
      %v3437 = vadd.f32 0.0, %v3436
      %v3438 = vpop.f32.mrf.mxu0
      %3439 = vmatprep.mubr.f32.mxu0 0.0
      %3440 = vmatmul.mubr.f32.gmra.mxu0 %v3270
      %v3441 = vpop.f32.mrf.mxu0
      %v3442 = vadd.f32 0.0, %v3441
      %v3443 = vpop.f32.mrf.mxu0
      %3444 = vmatprep.mubr.f32.mxu0 0.0
      %3445 = vmatmul.mubr.f32.gmra.mxu0 %v3273
      %v3446 = vpop.f32.mrf.mxu0
      %v3447 = vadd.f32 0.0, %v3446
      %v3448 = vpop.f32.mrf.mxu0
      %3449 = vmatprep.mubr.f32.mxu0 0.0
      %3450 = vmatmul.mubr.f32.gmra.mxu0 %v3276
      %v3451 = vpop.f32.mrf.mxu0
      %v3452 = vadd.f32 0.0, %v3451
      %v3453 = vpop.f32.mrf.mxu0
      %3454 = vmatprep.mubr.f32.mxu0 0.0
      %3455 = vmatmul.mubr.f32.gmra.mxu0 %v3279
      %v3456 = vpop.f32.mrf.mxu0
      %v3457 = vadd.f32 0.0, %v3456
      %v3458 = vpop.f32.mrf.mxu0
      %3459 = vmatprep.mubr.f32.mxu0 0.0
      %3460 = vmatmul.mubr.f32.gmra.mxu0 %v3282
      %v3461 = vpop.f32.mrf.mxu0
      %v3462 = vadd.f32 0.0, %v3461
      %v3463 = vpop.f32.mrf.mxu0
      %3464 = vmatprep.mubr.f32.mxu0 0.0
      %3465 = vmatmul.mubr.f32.gmra.mxu0 %v3285
      %v3466 = vpop.f32.mrf.mxu0
      %v3467 = vadd.f32 0.0, %v3466
      %v3468 = vpop.f32.mrf.mxu0
      %3469 = vmatprep.mubr.f32.mxu0 0.0
      %3470 = vmatmul.mubr.f32.gmra.mxu0 %v3288
      %v3471 = vpop.f32.mrf.mxu0
      %v3472 = vadd.f32 0.0, %v3471
      %v3473 = vpop.f32.mrf.mxu0
      %3474 = vmatprep.mubr.f32.mxu0 0.0
      %3475 = vmatmul.mubr.f32.gmra.mxu0 %v3291
      %v3476 = vpop.f32.mrf.mxu0
      %v3477 = vadd.f32 0.0, %v3476
      %v3478 = vpop.f32.mrf.mxu0
      %3479 = vmatprep.mubr.f32.mxu0 0.0
      %3480 = vmatmul.mubr.f32.gmra.mxu0 %v3294
      %v3481 = vpop.f32.mrf.mxu0
      %v3482 = vadd.f32 0.0, %v3481
      %v3483 = vpop.f32.mrf.mxu0
      %3484 = vmatprep.mubr.f32.mxu0 0.0
      %3485 = vmatmul.mubr.f32.gmra.mxu0 %v3297
      %v3486 = vpop.f32.mrf.mxu0
      %v3487 = vadd.f32 0.0, %v3486
      %v3488 = vpop.f32.mrf.mxu0
      %3489 = vmatprep.mubr.f32.mxu0 0.0
      %3490 = vmatmul.mubr.f32.gmra.mxu0 %v3300
      %v3491 = vpop.f32.mrf.mxu0
      %v3492 = vadd.f32 0.0, %v3491
      %v3493 = vpop.f32.mrf.mxu0
      %3494 = vmatprep.mubr.f32.mxu0 0.0
      %3495 = vmatmul.mubr.f32.gmra.mxu0 %v3303
      %v3496 = vpop.f32.mrf.mxu0
      %v3497 = vadd.f32 0.0, %v3496
      %v3498 = vpop.f32.mrf.mxu0
      %3499 = vmatprep.mubr.f32.mxu0 0.0
      %3500 = vmatmul.mubr.f32.gmra.mxu0 %v3306
      %v3501 = vpop.f32.mrf.mxu0
      %v3502 = vadd.f32 0.0, %v3501
      %v3503 = vpop.f32.mrf.mxu0
      %3504 = vmatprep.mubr.f32.mxu0 0.0
      %3505 = vmatmul.mubr.f32.gmra.mxu0 %v3309
      %v3506 = vpop.f32.mrf.mxu0
      %v3507 = vadd.f32 0.0, %v3506
      %v3508 = vpop.f32.mrf.mxu0
      %3509 = vmatprep.mubr.f32.mxu0 0.0
      %3510 = vmatmul.mubr.f32.gmra.mxu0 %v3312
      %v3511 = vpop.f32.mrf.mxu0
      %v3512 = vadd.f32 0.0, %v3511
      %v3513 = vpop.f32.mrf.mxu0
      %3514 = vmatprep.mubr.f32.mxu0 0.0
      %3515 = vmatmul.mubr.f32.gmra.mxu0 %v3315
      %v3516 = vpop.f32.mrf.mxu0
      %v3517 = vadd.f32 0.0, %v3516
      %v3518 = vpop.f32.mrf.mxu0
      %3519 = vmatprep.mubr.f32.mxu0 0.0
      %3520 = vmatmul.mubr.f32.gmra.mxu0 %v3318
      %v3521 = vpop.f32.mrf.mxu0
      %v3522 = vadd.f32 0.0, %v3521
      %v3523 = vpop.f32.mrf.mxu0
      %3524 = vmatprep.mubr.f32.mxu0 0.0
      %3525 = vmatmul.mubr.f32.gmra.mxu0 %v3321
      %v3526 = vpop.f32.mrf.mxu0
      %v3527 = vadd.f32 0.0, %v3526
      %v3528 = vpop.f32.mrf.mxu0
      %3529 = vmatprep.mubr.f32.mxu0 0.0
      %3530 = vmatmul.mubr.f32.gmra.mxu0 %v3324
      %v3531 = vpop.f32.mrf.mxu0
      %v3532 = vadd.f32 0.0, %v3531
      %v3533 = vpop.f32.mrf.mxu0
      %3534 = vmatprep.mubr.f32.mxu0 0.0
      %3535 = vmatmul.mubr.f32.gmra.mxu0 %v3327
      %v3536 = vpop.f32.mrf.mxu0
      %v3537 = vadd.f32 0.0, %v3536
      %v3538 = vpop.f32.mrf.mxu0
      %3539 = vmatprep.mubr.f32.mxu0 0.0
      %3540 = vmatmul.mubr.f32.gmra.mxu0 %v3330
      %v3541 = vpop.f32.mrf.mxu0
      %v3542 = vadd.f32 0.0, %v3541
      %v3543 = vpop.f32.mrf.mxu0
      %3544 = vmatprep.mubr.f32.mxu0 0.0
      %3545 = vmatmul.mubr.f32.gmra.mxu0 %v3333
      %v3546 = vpop.f32.mrf.mxu0
      %v3547 = vadd.f32 0.0, %v3546
      %v3548 = vpop.f32.mrf.mxu0
      %3549 = vmatprep.mubr.f32.mxu0 0.0
      %3550 = vmatmul.mubr.f32.gmra.mxu0 %v3336
      %v3551 = vpop.f32.mrf.mxu0
      %v3552 = vadd.f32 0.0, %v3551
      %v3553 = vpop.f32.mrf.mxu0
      %3554 = vmatprep.mubr.f32.mxu0 0.0
      %3555 = vmatmul.mubr.f32.gmra.mxu0 %v3339
      %v3556 = vpop.f32.mrf.mxu0
      %v3557 = vadd.f32 0.0, %v3556
      %v3558 = vpop.f32.mrf.mxu0
      %3559 = vmatprep.mubr.f32.mxu0 0.0
      %3560 = vmatmul.mubr.f32.gmra.mxu0 %v3342
      %v3561 = vpop.f32.mrf.mxu0
      %v3562 = vadd.f32 0.0, %v3561
      %v3563 = vpop.f32.mrf.mxu0
      %3564 = vmatprep.mubr.f32.mxu0 0.0
      %3565 = vmatmul.mubr.f32.gmra.mxu0 %v3345
      %v3566 = vpop.f32.mrf.mxu0
      %v3567 = vadd.f32 0.0, %v3566
      %v3568 = vpop.f32.mrf.mxu0
      %3569 = vmatprep.mubr.f32.mxu0 0.0
      %3570 = vmatmul.mubr.f32.gmra.mxu0 %v3348
      %v3571 = vpop.f32.mrf.mxu0
      %v3572 = vadd.f32 0.0, %v3571
      %v3573 = vpop.f32.mrf.mxu0
      %3574 = vdwg.mxu0
      %v3575 = vadd.f32 %v3155, %v3417
      %v3576 = vadd.f32 %v3156, %v3422
      %v3577 = vadd.f32 %v3157, %v3427
      %v3578 = vadd.f32 %v3158, %v3432
      %v3579 = vadd.f32 %v3159, %v3437
      %v3580 = vadd.f32 %v3160, %v3442
      %v3581 = vadd.f32 %v3161, %v3447
      %v3582 = vadd.f32 %v3162, %v3452
      %v3583 = vadd.f32 %v3163, %v3457
      %v3584 = vadd.f32 %v3164, %v3462
      %v3585 = vadd.f32 %v3165, %v3467
      %v3586 = vadd.f32 %v3166, %v3472
      %v3587 = vadd.f32 %v3167, %v3477
      %v3588 = vadd.f32 %v3168, %v3482
      %v3589 = vadd.f32 %v3169, %v3487
      %v3590 = vadd.f32 %v3170, %v3492
      %v3591 = vadd.f32 %v3171, %v3497
      %v3592 = vadd.f32 %v3172, %v3502
      %v3593 = vadd.f32 %v3173, %v3507
      %v3594 = vadd.f32 %v3174, %v3512
      %v3595 = vadd.f32 %v3175, %v3517
      %v3596 = vadd.f32 %v3176, %v3522
      %v3597 = vadd.f32 %v3177, %v3527
      %v3598 = vadd.f32 %v3178, %v3532
      %v3599 = vadd.f32 %v3179, %v3537
      %v3600 = vadd.f32 %v3180, %v3542
      %v3601 = vadd.f32 %v3181, %v3547
      %v3602 = vadd.f32 %v3182, %v3552
      %v3603 = vadd.f32 %v3183, %v3557
      %v3604 = vadd.f32 %v3184, %v3562
      %v3605 = vadd.f32 %v3185, %v3567
      %v3606 = vadd.f32 %v3186, %v3572
      %v3607 = vld [vmem:[#allocation2 + $0x28] sm:$0xff]
      %v3608 = vld [vmem:[#allocation2 + $0x30] sm:$0xff]
      %v3609 = vld [vmem:[#allocation2 + $0x38] sm:$0xff]
      %v3610 = vld [vmem:[#allocation2 + $0x40] sm:$0xff]
      %v3611 = vld [vmem:[#allocation2 + $0x48] sm:$0xff]
      %v3612 = vld [vmem:[#allocation2 + $0x50] sm:$0xff]
      %v3613 = vld [vmem:[#allocation2 + $0x58] sm:$0xff]
      %v3614 = vld [vmem:[#allocation2 + $0x60] sm:$0xff]
      %v3615 = vld [vmem:[#allocation2 + $0x68] sm:$0xff]
      %v3616 = vld [vmem:[#allocation2 + $0x70] sm:$0xff]
      %v3617 = vld [vmem:[#allocation2 + $0x78] sm:$0xff]
      %v3618 = vld [vmem:[#allocation2 + $0x80] sm:$0xff]
      %v3619 = vld [vmem:[#allocation2 + $0x88] sm:$0xff]
      %v3620 = vld [vmem:[#allocation2 + $0x90] sm:$0xff]
      %v3621 = vld [vmem:[#allocation2 + $0x98] sm:$0xff]
      %v3622 = vld [vmem:[#allocation2 + $0xa0] sm:$0xff]
      %v3623 = vld [vmem:[#allocation2 + $0xa8] sm:$0xff]
      %v3624 = vld [vmem:[#allocation2 + $0xb0] sm:$0xff]
      %v3625 = vld [vmem:[#allocation2 + $0xb8] sm:$0xff]
      %v3626 = vld [vmem:[#allocation2 + $0xc0] sm:$0xff]
      %v3627 = vld [vmem:[#allocation2 + $0xc8] sm:$0xff]
      %v3628 = vld [vmem:[#allocation2 + $0xd0] sm:$0xff]
      %v3629 = vld [vmem:[#allocation2 + $0xd8] sm:$0xff]
      %v3630 = vld [vmem:[#allocation2 + $0xe0] sm:$0xff]
      %v3631 = vld [vmem:[#allocation2 + $0xe8] sm:$0xff]
      %v3632 = vld [vmem:[#allocation2 + $0xf0] sm:$0xff]
      %v3633 = vld [vmem:[#allocation2 + $0xf8] sm:$0xff]
      %v3634 = vld [vmem:[#allocation2 + $0x100] sm:$0xff]
      %v3635 = vld [vmem:[#allocation2 + $0x108] sm:$0xff]
      %v3636 = vld [vmem:[#allocation2 + $0x110] sm:$0xff]
      %v3637 = vld [vmem:[#allocation2 + $0x118] sm:$0xff]
      %v3638 = vld [vmem:[#allocation2 + $0x120] sm:$0xff]
      %s3639 = scalar_lea.vmem %s1, 112
      %v3640 = vld [vmem:[%s3639] sm:$0xff]
      %v3641 = vld [vmem:[%s3639 + $0x8] sm:$0xff]
      %v3643 = vsel %vm405, %v3607, 0
      %v3646 = vsel %vm405, %v3608, 0
      %v3649 = vsel %vm405, %v3609, 0
      %v3652 = vsel %vm405, %v3610, 0
      %v3655 = vsel %vm405, %v3611, 0
      %v3658 = vsel %vm405, %v3612, 0
      %v3661 = vsel %vm405, %v3613, 0
      %v3664 = vsel %vm405, %v3614, 0
      %v3667 = vsel %vm405, %v3615, 0
      %v3670 = vsel %vm405, %v3616, 0
      %v3673 = vsel %vm405, %v3617, 0
      %v3676 = vsel %vm405, %v3618, 0
      %v3679 = vsel %vm405, %v3619, 0
      %v3682 = vsel %vm405, %v3620, 0
      %v3685 = vsel %vm405, %v3621, 0
      %v3688 = vsel %vm405, %v3622, 0
      %v3691 = vsel %vm405, %v3623, 0
      %v3694 = vsel %vm405, %v3624, 0
      %v3697 = vsel %vm405, %v3625, 0
      %v3700 = vsel %vm405, %v3626, 0
      %v3703 = vsel %vm405, %v3627, 0
      %v3706 = vsel %vm405, %v3628, 0
      %v3709 = vsel %vm405, %v3629, 0
      %v3712 = vsel %vm405, %v3630, 0
      %v3715 = vsel %vm405, %v3631, 0
      %v3718 = vsel %vm405, %v3632, 0
      %v3721 = vsel %vm405, %v3633, 0
      %v3724 = vsel %vm405, %v3634, 0
      %v3727 = vsel %vm405, %v3635, 0
      %v3730 = vsel %vm405, %v3636, 0
      %v3733 = vsel %vm405, %v3637, 0
      %v3736 = vsel %vm405, %v3638, 0
      %3738 = vmatprep.subr.mxu0 0.0
      %3739 = vmatpush1.msra.mxu0 0.0
      %3740 = vmatprep.subr.mxu0 0.0
      %3741 = vmatpush1.msra.mxu0 0.0
      %3742 = vmatprep.subr.mxu0 0.0
      %3743 = vmatpush1.msra.mxu0 0.0
      %3744 = vmatprep.subr.mxu0 0.0
      %3745 = vmatpush1.msra.mxu0 0.0
      %3746 = vmatprep.subr.mxu0 0.0
      %3747 = vmatpush1.msra.mxu0 0.0
      %3748 = vmatprep.subr.mxu0 0.0
      %3749 = vmatpush1.msra.mxu0 0.0
      %3750 = vmatprep.subr.mxu0 0.0
      %3751 = vmatpush1.msra.mxu0 0.0
      %3752 = vmatprep.subr.mxu0 0.0
      %3753 = vmatpush1.msra.mxu0 0.0
      %3754 = vmatprep.subr.mxu0 0.0
      %3755 = vmatpush1.msra.mxu0 0.0
      %3756 = vmatprep.subr.mxu0 0.0
      %3757 = vmatpush1.msra.mxu0 0.0
      %3758 = vmatprep.subr.mxu0 0.0
      %3759 = vmatpush1.msra.mxu0 0.0
      %3760 = vmatprep.subr.mxu0 0.0
      %3761 = vmatpush1.msra.mxu0 0.0
      %3762 = vmatprep.subr.mxu0 0.0
      %3763 = vmatpush1.msra.mxu0 0.0
      %3764 = vmatprep.subr.mxu0 0.0
      %3765 = vmatpush1.msra.mxu0 0.0
      %3766 = vmatprep.subr.mxu0 0.0
      %3767 = vmatpush1.msra.mxu0 %v3641
      %3768 = vmatprep.subr.mxu0 0.0
      %3769 = vmatpush1.msra.mxu0 %v3640
      %3770 = vmatprep.subr.mxu0 0.0
      %3771 = vmatpush2.msra.mxu0 0.0
      %3772 = vmatprep.subr.mxu0 0.0
      %3773 = vmatpush2.msra.mxu0 0.0
      %3774 = vmatprep.subr.mxu0 0.0
      %3775 = vmatpush2.msra.mxu0 0.0
      %3776 = vmatprep.subr.mxu0 0.0
      %3777 = vmatpush2.msra.mxu0 0.0
      %3778 = vmatprep.subr.mxu0 0.0
      %3779 = vmatpush2.msra.mxu0 0.0
      %3780 = vmatprep.subr.mxu0 0.0
      %3781 = vmatpush2.msra.mxu0 0.0
      %3782 = vmatprep.subr.mxu0 0.0
      %3783 = vmatpush2.msra.mxu0 0.0
      %3784 = vmatprep.subr.mxu0 0.0
      %3785 = vmatpush2.msra.mxu0 0.0
      %3786 = vmatprep.subr.mxu0 0.0
      %3787 = vmatpush2.msra.mxu0 0.0
      %3788 = vmatprep.subr.mxu0 0.0
      %3789 = vmatpush2.msra.mxu0 0.0
      %3790 = vmatprep.subr.mxu0 0.0
      %3791 = vmatpush2.msra.mxu0 0.0
      %3792 = vmatprep.subr.mxu0 0.0
      %3793 = vmatpush2.msra.mxu0 0.0
      %3794 = vmatprep.subr.mxu0 0.0
      %3795 = vmatpush2.msra.mxu0 0.0
      %3796 = vmatprep.subr.mxu0 0.0
      %3797 = vmatpush2.msra.mxu0 0.0
      %3798 = vmatprep.subr.mxu0 0.0
      %3799 = vmatpush2.msra.mxu0 0.0
      %3800 = vmatprep.subr.mxu0 0.0
      %3801 = vmatpush2.msra.mxu0 0.0
      %3802 = vmatprep.mubr.f32.mxu0 0.0
      %3803 = vmatmul.mubr.f32.gmra.mxu0 %v3643
      %v3804 = vpop.f32.mrf.mxu0
      %v3805 = vadd.f32 0.0, %v3804
      %v3806 = vpop.f32.mrf.mxu0
      %3807 = vmatprep.mubr.f32.mxu0 0.0
      %3808 = vmatmul.mubr.f32.gmra.mxu0 %v3646
      %v3809 = vpop.f32.mrf.mxu0
      %v3810 = vadd.f32 0.0, %v3809
      %v3811 = vpop.f32.mrf.mxu0
      %3812 = vmatprep.mubr.f32.mxu0 0.0
      %3813 = vmatmul.mubr.f32.gmra.mxu0 %v3649
      %v3814 = vpop.f32.mrf.mxu0
      %v3815 = vadd.f32 0.0, %v3814
      %v3816 = vpop.f32.mrf.mxu0
      %3817 = vmatprep.mubr.f32.mxu0 0.0
      %3818 = vmatmul.mubr.f32.gmra.mxu0 %v3652
      %v3819 = vpop.f32.mrf.mxu0
      %v3820 = vadd.f32 0.0, %v3819
      %v3821 = vpop.f32.mrf.mxu0
      %3822 = vmatprep.mubr.f32.mxu0 0.0
      %3823 = vmatmul.mubr.f32.gmra.mxu0 %v3655
      %v3824 = vpop.f32.mrf.mxu0
      %v3825 = vadd.f32 0.0, %v3824
      %v3826 = vpop.f32.mrf.mxu0
      %3827 = vmatprep.mubr.f32.mxu0 0.0
      %3828 = vmatmul.mubr.f32.gmra.mxu0 %v3658
      %v3829 = vpop.f32.mrf.mxu0
      %v3830 = vadd.f32 0.0, %v3829
      %v3831 = vpop.f32.mrf.mxu0
      %3832 = vmatprep.mubr.f32.mxu0 0.0
      %3833 = vmatmul.mubr.f32.gmra.mxu0 %v3661
      %v3834 = vpop.f32.mrf.mxu0
      %v3835 = vadd.f32 0.0, %v3834
      %v3836 = vpop.f32.mrf.mxu0
      %3837 = vmatprep.mubr.f32.mxu0 0.0
      %3838 = vmatmul.mubr.f32.gmra.mxu0 %v3664
      %v3839 = vpop.f32.mrf.mxu0
      %v3840 = vadd.f32 0.0, %v3839
      %v3841 = vpop.f32.mrf.mxu0
      %3842 = vmatprep.mubr.f32.mxu0 0.0
      %3843 = vmatmul.mubr.f32.gmra.mxu0 %v3667
      %v3844 = vpop.f32.mrf.mxu0
      %v3845 = vadd.f32 0.0, %v3844
      %v3846 = vpop.f32.mrf.mxu0
      %3847 = vmatprep.mubr.f32.mxu0 0.0
      %3848 = vmatmul.mubr.f32.gmra.mxu0 %v3670
      %v3849 = vpop.f32.mrf.mxu0
      %v3850 = vadd.f32 0.0, %v3849
      %v3851 = vpop.f32.mrf.mxu0
      %3852 = vmatprep.mubr.f32.mxu0 0.0
      %3853 = vmatmul.mubr.f32.gmra.mxu0 %v3673
      %v3854 = vpop.f32.mrf.mxu0
      %v3855 = vadd.f32 0.0, %v3854
      %v3856 = vpop.f32.mrf.mxu0
      %3857 = vmatprep.mubr.f32.mxu0 0.0
      %3858 = vmatmul.mubr.f32.gmra.mxu0 %v3676
      %v3859 = vpop.f32.mrf.mxu0
      %v3860 = vadd.f32 0.0, %v3859
      %v3861 = vpop.f32.mrf.mxu0
      %3862 = vmatprep.mubr.f32.mxu0 0.0
      %3863 = vmatmul.mubr.f32.gmra.mxu0 %v3679
      %v3864 = vpop.f32.mrf.mxu0
      %v3865 = vadd.f32 0.0, %v3864
      %v3866 = vpop.f32.mrf.mxu0
      %3867 = vmatprep.mubr.f32.mxu0 0.0
      %3868 = vmatmul.mubr.f32.gmra.mxu0 %v3682
      %v3869 = vpop.f32.mrf.mxu0
      %v3870 = vadd.f32 0.0, %v3869
      %v3871 = vpop.f32.mrf.mxu0
      %3872 = vmatprep.mubr.f32.mxu0 0.0
      %3873 = vmatmul.mubr.f32.gmra.mxu0 %v3685
      %v3874 = vpop.f32.mrf.mxu0
      %v3875 = vadd.f32 0.0, %v3874
      %v3876 = vpop.f32.mrf.mxu0
      %3877 = vmatprep.mubr.f32.mxu0 0.0
      %3878 = vmatmul.mubr.f32.gmra.mxu0 %v3688
      %v3879 = vpop.f32.mrf.mxu0
      %v3880 = vadd.f32 0.0, %v3879
      %v3881 = vpop.f32.mrf.mxu0
      %3882 = vmatprep.mubr.f32.mxu0 0.0
      %3883 = vmatmul.mubr.f32.gmra.mxu0 %v3691
      %v3884 = vpop.f32.mrf.mxu0
      %v3885 = vadd.f32 0.0, %v3884
      %v3886 = vpop.f32.mrf.mxu0
      %3887 = vmatprep.mubr.f32.mxu0 0.0
      %3888 = vmatmul.mubr.f32.gmra.mxu0 %v3694
      %v3889 = vpop.f32.mrf.mxu0
      %v3890 = vadd.f32 0.0, %v3889
      %v3891 = vpop.f32.mrf.mxu0
      %3892 = vmatprep.mubr.f32.mxu0 0.0
      %3893 = vmatmul.mubr.f32.gmra.mxu0 %v3697
      %v3894 = vpop.f32.mrf.mxu0
      %v3895 = vadd.f32 0.0, %v3894
      %v3896 = vpop.f32.mrf.mxu0
      %3897 = vmatprep.mubr.f32.mxu0 0.0
      %3898 = vmatmul.mubr.f32.gmra.mxu0 %v3700
      %v3899 = vpop.f32.mrf.mxu0
      %v3900 = vadd.f32 0.0, %v3899
      %v3901 = vpop.f32.mrf.mxu0
      %3902 = vmatprep.mubr.f32.mxu0 0.0
      %3903 = vmatmul.mubr.f32.gmra.mxu0 %v3703
      %v3904 = vpop.f32.mrf.mxu0
      %v3905 = vadd.f32 0.0, %v3904
      %v3906 = vpop.f32.mrf.mxu0
      %3907 = vmatprep.mubr.f32.mxu0 0.0
      %3908 = vmatmul.mubr.f32.gmra.mxu0 %v3706
      %v3909 = vpop.f32.mrf.mxu0
      %v3910 = vadd.f32 0.0, %v3909
      %v3911 = vpop.f32.mrf.mxu0
      %3912 = vmatprep.mubr.f32.mxu0 0.0
      %3913 = vmatmul.mubr.f32.gmra.mxu0 %v3709
      %v3914 = vpop.f32.mrf.mxu0
      %v3915 = vadd.f32 0.0, %v3914
      %v3916 = vpop.f32.mrf.mxu0
      %3917 = vmatprep.mubr.f32.mxu0 0.0
      %3918 = vmatmul.mubr.f32.gmra.mxu0 %v3712
      %v3919 = vpop.f32.mrf.mxu0
      %v3920 = vadd.f32 0.0, %v3919
      %v3921 = vpop.f32.mrf.mxu0
      %3922 = vmatprep.mubr.f32.mxu0 0.0
      %3923 = vmatmul.mubr.f32.gmra.mxu0 %v3715
      %v3924 = vpop.f32.mrf.mxu0
      %v3925 = vadd.f32 0.0, %v3924
      %v3926 = vpop.f32.mrf.mxu0
      %3927 = vmatprep.mubr.f32.mxu0 0.0
      %3928 = vmatmul.mubr.f32.gmra.mxu0 %v3718
      %v3929 = vpop.f32.mrf.mxu0
      %v3930 = vadd.f32 0.0, %v3929
      %v3931 = vpop.f32.mrf.mxu0
      %3932 = vmatprep.mubr.f32.mxu0 0.0
      %3933 = vmatmul.mubr.f32.gmra.mxu0 %v3721
      %v3934 = vpop.f32.mrf.mxu0
      %v3935 = vadd.f32 0.0, %v3934
      %v3936 = vpop.f32.mrf.mxu0
      %3937 = vmatprep.mubr.f32.mxu0 0.0
      %3938 = vmatmul.mubr.f32.gmra.mxu0 %v3724
      %v3939 = vpop.f32.mrf.mxu0
      %v3940 = vadd.f32 0.0, %v3939
      %v3941 = vpop.f32.mrf.mxu0
      %3942 = vmatprep.mubr.f32.mxu0 0.0
      %3943 = vmatmul.mubr.f32.gmra.mxu0 %v3727
      %v3944 = vpop.f32.mrf.mxu0
      %v3945 = vadd.f32 0.0, %v3944
      %v3946 = vpop.f32.mrf.mxu0
      %3947 = vmatprep.mubr.f32.mxu0 0.0
      %3948 = vmatmul.mubr.f32.gmra.mxu0 %v3730
      %v3949 = vpop.f32.mrf.mxu0
      %v3950 = vadd.f32 0.0, %v3949
      %v3951 = vpop.f32.mrf.mxu0
      %3952 = vmatprep.mubr.f32.mxu0 0.0
      %3953 = vmatmul.mubr.f32.gmra.mxu0 %v3733
      %v3954 = vpop.f32.mrf.mxu0
      %v3955 = vadd.f32 0.0, %v3954
      %v3956 = vpop.f32.mrf.mxu0
      %3957 = vmatprep.mubr.f32.mxu0 0.0
      %3958 = vmatmul.mubr.f32.gmra.mxu0 %v3736
      %v3959 = vpop.f32.mrf.mxu0
      %v3960 = vadd.f32 0.0, %v3959
      %v3961 = vpop.f32.mrf.mxu0
      %3962 = vdwg.mxu0
      %v3963 = vadd.f32 %v3575, %v3805
      %v3964 = vadd.f32 %v3576, %v3810
      %v3965 = vadd.f32 %v3577, %v3815
      %v3966 = vadd.f32 %v3578, %v3820
      %v3967 = vadd.f32 %v3579, %v3825
      %v3968 = vadd.f32 %v3580, %v3830
      %v3969 = vadd.f32 %v3581, %v3835
      %v3970 = vadd.f32 %v3582, %v3840
      %v3971 = vadd.f32 %v3583, %v3845
      %v3972 = vadd.f32 %v3584, %v3850
      %v3973 = vadd.f32 %v3585, %v3855
      %v3974 = vadd.f32 %v3586, %v3860
      %v3975 = vadd.f32 %v3587, %v3865
      %v3976 = vadd.f32 %v3588, %v3870
      %v3977 = vadd.f32 %v3589, %v3875
      %v3978 = vadd.f32 %v3590, %v3880
      %v3979 = vadd.f32 %v3591, %v3885
      %v3980 = vadd.f32 %v3592, %v3890
      %v3981 = vadd.f32 %v3593, %v3895
      %v3982 = vadd.f32 %v3594, %v3900
      %v3983 = vadd.f32 %v3595, %v3905
      %v3984 = vadd.f32 %v3596, %v3910
      %v3985 = vadd.f32 %v3597, %v3915
      %v3986 = vadd.f32 %v3598, %v3920
      %v3987 = vadd.f32 %v3599, %v3925
      %v3988 = vadd.f32 %v3600, %v3930
      %v3989 = vadd.f32 %v3601, %v3935
      %v3990 = vadd.f32 %v3602, %v3940
      %v3991 = vadd.f32 %v3603, %v3945
      %v3992 = vadd.f32 %v3604, %v3950
      %v3993 = vadd.f32 %v3605, %v3955
      %v3994 = vadd.f32 %v3606, %v3960
      %v3995 = vld [vmem:[#allocation2 + $0x29] sm:$0xff]
      %v3996 = vld [vmem:[#allocation2 + $0x31] sm:$0xff]
      %v3997 = vld [vmem:[#allocation2 + $0x39] sm:$0xff]
      %v3998 = vld [vmem:[#allocation2 + $0x41] sm:$0xff]
      %v3999 = vld [vmem:[#allocation2 + $0x49] sm:$0xff]
      %v4000 = vld [vmem:[#allocation2 + $0x51] sm:$0xff]
      %v4001 = vld [vmem:[#allocation2 + $0x59] sm:$0xff]
      %v4002 = vld [vmem:[#allocation2 + $0x61] sm:$0xff]
      %v4003 = vld [vmem:[#allocation2 + $0x69] sm:$0xff]
      %v4004 = vld [vmem:[#allocation2 + $0x71] sm:$0xff]
      %v4005 = vld [vmem:[#allocation2 + $0x79] sm:$0xff]
      %v4006 = vld [vmem:[#allocation2 + $0x81] sm:$0xff]
      %v4007 = vld [vmem:[#allocation2 + $0x89] sm:$0xff]
      %v4008 = vld [vmem:[#allocation2 + $0x91] sm:$0xff]
      %v4009 = vld [vmem:[#allocation2 + $0x99] sm:$0xff]
      %v4010 = vld [vmem:[#allocation2 + $0xa1] sm:$0xff]
      %v4011 = vld [vmem:[#allocation2 + $0xa9] sm:$0xff]
      %v4012 = vld [vmem:[#allocation2 + $0xb1] sm:$0xff]
      %v4013 = vld [vmem:[#allocation2 + $0xb9] sm:$0xff]
      %v4014 = vld [vmem:[#allocation2 + $0xc1] sm:$0xff]
      %v4015 = vld [vmem:[#allocation2 + $0xc9] sm:$0xff]
      %v4016 = vld [vmem:[#allocation2 + $0xd1] sm:$0xff]
      %v4017 = vld [vmem:[#allocation2 + $0xd9] sm:$0xff]
      %v4018 = vld [vmem:[#allocation2 + $0xe1] sm:$0xff]
      %v4019 = vld [vmem:[#allocation2 + $0xe9] sm:$0xff]
      %v4020 = vld [vmem:[#allocation2 + $0xf1] sm:$0xff]
      %v4021 = vld [vmem:[#allocation2 + $0xf9] sm:$0xff]
      %v4022 = vld [vmem:[#allocation2 + $0x101] sm:$0xff]
      %v4023 = vld [vmem:[#allocation2 + $0x109] sm:$0xff]
      %v4024 = vld [vmem:[#allocation2 + $0x111] sm:$0xff]
      %v4025 = vld [vmem:[#allocation2 + $0x119] sm:$0xff]
      %v4026 = vld [vmem:[#allocation2 + $0x121] sm:$0xff]
      %v4027 = vmul.f32 %v3995, %v1445
      %v4028 = vmul.f32 %v3996, %v1449
      %v4029 = vmul.f32 %v3997, %v1453
      %v4030 = vmul.f32 %v3998, %v1457
      %v4031 = vmul.f32 %v3999, %v1461
      %v4032 = vmul.f32 %v4000, %v1465
      %v4033 = vmul.f32 %v4001, %v1469
      %v4034 = vmul.f32 %v4002, %v1473
      %v4035 = vmul.f32 %v4003, %v1477
      %v4036 = vmul.f32 %v4004, %v1481
      %v4037 = vmul.f32 %v4005, %v1485
      %v4038 = vmul.f32 %v4006, %v1489
      %v4039 = vmul.f32 %v4007, %v1493
      %v4040 = vmul.f32 %v4008, %v1497
      %v4041 = vmul.f32 %v4009, %v1501
      %v4042 = vmul.f32 %v4010, %v1505
      %v4043 = vmul.f32 %v4011, %v1509
      %v4044 = vmul.f32 %v4012, %v1513
      %v4045 = vmul.f32 %v4013, %v1517
      %v4046 = vmul.f32 %v4014, %v1521
      %v4047 = vmul.f32 %v4015, %v1525
      %v4048 = vmul.f32 %v4016, %v1529
      %v4049 = vmul.f32 %v4017, %v1533
      %v4050 = vmul.f32 %v4018, %v1537
      %v4051 = vmul.f32 %v4019, %v1541
      %v4052 = vmul.f32 %v4020, %v1545
      %v4053 = vmul.f32 %v4021, %v1549
      %v4054 = vmul.f32 %v4022, %v1553
      %v4055 = vmul.f32 %v4023, %v1557
      %v4056 = vmul.f32 %v4024, %v1561
      %v4057 = vmul.f32 %v4025, %v1565
      %v4058 = vmul.f32 %v4026, %v1569
      %s4059 = scalar_lea.vmem %s1, 128
      %v4060 = vld [vmem:[%s4059] sm:$0xff]
      %v4061 = vld [vmem:[%s4059 + $0x8] sm:$0xff]
      %v4063 = vsel %vm405, %v4027, 0
      %v4066 = vsel %vm405, %v4028, 0
      %v4069 = vsel %vm405, %v4029, 0
      %v4072 = vsel %vm405, %v4030, 0
      %v4075 = vsel %vm405, %v4031, 0
      %v4078 = vsel %vm405, %v4032, 0
      %v4081 = vsel %vm405, %v4033, 0
      %v4084 = vsel %vm405, %v4034, 0
      %v4087 = vsel %vm405, %v4035, 0
      %v4090 = vsel %vm405, %v4036, 0
      %v4093 = vsel %vm405, %v4037, 0
      %v4096 = vsel %vm405, %v4038, 0
      %v4099 = vsel %vm405, %v4039, 0
      %v4102 = vsel %vm405, %v4040, 0
      %v4105 = vsel %vm405, %v4041, 0
      %v4108 = vsel %vm405, %v4042, 0
      %v4111 = vsel %vm405, %v4043, 0
      %v4114 = vsel %vm405, %v4044, 0
      %v4117 = vsel %vm405, %v4045, 0
      %v4120 = vsel %vm405, %v4046, 0
      %v4123 = vsel %vm405, %v4047, 0
      %v4126 = vsel %vm405, %v4048, 0
      %v4129 = vsel %vm405, %v4049, 0
      %v4132 = vsel %vm405, %v4050, 0
      %v4135 = vsel %vm405, %v4051, 0
      %v4138 = vsel %vm405, %v4052, 0
      %v4141 = vsel %vm405, %v4053, 0
      %v4144 = vsel %vm405, %v4054, 0
      %v4147 = vsel %vm405, %v4055, 0
      %v4150 = vsel %vm405, %v4056, 0
      %v4153 = vsel %vm405, %v4057, 0
      %v4156 = vsel %vm405, %v4058, 0
      %4158 = vmatprep.subr.mxu0 0.0
      %4159 = vmatpush1.msra.mxu0 0.0
      %4160 = vmatprep.subr.mxu0 0.0
      %4161 = vmatpush1.msra.mxu0 0.0
      %4162 = vmatprep.subr.mxu0 0.0
      %4163 = vmatpush1.msra.mxu0 0.0
      %4164 = vmatprep.subr.mxu0 0.0
      %4165 = vmatpush1.msra.mxu0 0.0
      %4166 = vmatprep.subr.mxu0 0.0
      %4167 = vmatpush1.msra.mxu0 0.0
      %4168 = vmatprep.subr.mxu0 0.0
      %4169 = vmatpush1.msra.mxu0 0.0
      %4170 = vmatprep.subr.mxu0 0.0
      %4171 = vmatpush1.msra.mxu0 0.0
      %4172 = vmatprep.subr.mxu0 0.0
      %4173 = vmatpush1.msra.mxu0 0.0
      %4174 = vmatprep.subr.mxu0 0.0
      %4175 = vmatpush1.msra.mxu0 0.0
      %4176 = vmatprep.subr.mxu0 0.0
      %4177 = vmatpush1.msra.mxu0 0.0
      %4178 = vmatprep.subr.mxu0 0.0
      %4179 = vmatpush1.msra.mxu0 0.0
      %4180 = vmatprep.subr.mxu0 0.0
      %4181 = vmatpush1.msra.mxu0 0.0
      %4182 = vmatprep.subr.mxu0 0.0
      %4183 = vmatpush1.msra.mxu0 0.0
      %4184 = vmatprep.subr.mxu0 0.0
      %4185 = vmatpush1.msra.mxu0 0.0
      %4186 = vmatprep.subr.mxu0 0.0
      %4187 = vmatpush1.msra.mxu0 %v4061
      %4188 = vmatprep.subr.mxu0 0.0
      %4189 = vmatpush1.msra.mxu0 %v4060
      %4190 = vmatprep.subr.mxu0 0.0
      %4191 = vmatpush2.msra.mxu0 0.0
      %4192 = vmatprep.subr.mxu0 0.0
      %4193 = vmatpush2.msra.mxu0 0.0
      %4194 = vmatprep.subr.mxu0 0.0
      %4195 = vmatpush2.msra.mxu0 0.0
      %4196 = vmatprep.subr.mxu0 0.0
      %4197 = vmatpush2.msra.mxu0 0.0
      %4198 = vmatprep.subr.mxu0 0.0
      %4199 = vmatpush2.msra.mxu0 0.0
      %4200 = vmatprep.subr.mxu0 0.0
      %4201 = vmatpush2.msra.mxu0 0.0
      %4202 = vmatprep.subr.mxu0 0.0
      %4203 = vmatpush2.msra.mxu0 0.0
      %4204 = vmatprep.subr.mxu0 0.0
      %4205 = vmatpush2.msra.mxu0 0.0
      %4206 = vmatprep.subr.mxu0 0.0
      %4207 = vmatpush2.msra.mxu0 0.0
      %4208 = vmatprep.subr.mxu0 0.0
      %4209 = vmatpush2.msra.mxu0 0.0
      %4210 = vmatprep.subr.mxu0 0.0
      %4211 = vmatpush2.msra.mxu0 0.0
      %4212 = vmatprep.subr.mxu0 0.0
      %4213 = vmatpush2.msra.mxu0 0.0
      %4214 = vmatprep.subr.mxu0 0.0
      %4215 = vmatpush2.msra.mxu0 0.0
      %4216 = vmatprep.subr.mxu0 0.0
      %4217 = vmatpush2.msra.mxu0 0.0
      %4218 = vmatprep.subr.mxu0 0.0
      %4219 = vmatpush2.msra.mxu0 0.0
      %4220 = vmatprep.subr.mxu0 0.0
      %4221 = vmatpush2.msra.mxu0 0.0
      %4222 = vmatprep.mubr.f32.mxu0 0.0
      %4223 = vmatmul.mubr.f32.gmra.mxu0 %v4063
      %v4224 = vpop.f32.mrf.mxu0
      %v4225 = vadd.f32 0.0, %v4224
      %v4226 = vpop.f32.mrf.mxu0
      %4227 = vmatprep.mubr.f32.mxu0 0.0
      %4228 = vmatmul.mubr.f32.gmra.mxu0 %v4066
      %v4229 = vpop.f32.mrf.mxu0
      %v4230 = vadd.f32 0.0, %v4229
      %v4231 = vpop.f32.mrf.mxu0
      %4232 = vmatprep.mubr.f32.mxu0 0.0
      %4233 = vmatmul.mubr.f32.gmra.mxu0 %v4069
      %v4234 = vpop.f32.mrf.mxu0
      %v4235 = vadd.f32 0.0, %v4234
      %v4236 = vpop.f32.mrf.mxu0
      %4237 = vmatprep.mubr.f32.mxu0 0.0
      %4238 = vmatmul.mubr.f32.gmra.mxu0 %v4072
      %v4239 = vpop.f32.mrf.mxu0
      %v4240 = vadd.f32 0.0, %v4239
      %v4241 = vpop.f32.mrf.mxu0
      %4242 = vmatprep.mubr.f32.mxu0 0.0
      %4243 = vmatmul.mubr.f32.gmra.mxu0 %v4075
      %v4244 = vpop.f32.mrf.mxu0
      %v4245 = vadd.f32 0.0, %v4244
      %v4246 = vpop.f32.mrf.mxu0
      %4247 = vmatprep.mubr.f32.mxu0 0.0
      %4248 = vmatmul.mubr.f32.gmra.mxu0 %v4078
      %v4249 = vpop.f32.mrf.mxu0
      %v4250 = vadd.f32 0.0, %v4249
      %v4251 = vpop.f32.mrf.mxu0
      %4252 = vmatprep.mubr.f32.mxu0 0.0
      %4253 = vmatmul.mubr.f32.gmra.mxu0 %v4081
      %v4254 = vpop.f32.mrf.mxu0
      %v4255 = vadd.f32 0.0, %v4254
      %v4256 = vpop.f32.mrf.mxu0
      %4257 = vmatprep.mubr.f32.mxu0 0.0
      %4258 = vmatmul.mubr.f32.gmra.mxu0 %v4084
      %v4259 = vpop.f32.mrf.mxu0
      %v4260 = vadd.f32 0.0, %v4259
      %v4261 = vpop.f32.mrf.mxu0
      %4262 = vmatprep.mubr.f32.mxu0 0.0
      %4263 = vmatmul.mubr.f32.gmra.mxu0 %v4087
      %v4264 = vpop.f32.mrf.mxu0
      %v4265 = vadd.f32 0.0, %v4264
      %v4266 = vpop.f32.mrf.mxu0
      %4267 = vmatprep.mubr.f32.mxu0 0.0
      %4268 = vmatmul.mubr.f32.gmra.mxu0 %v4090
      %v4269 = vpop.f32.mrf.mxu0
      %v4270 = vadd.f32 0.0, %v4269
      %v4271 = vpop.f32.mrf.mxu0
      %4272 = vmatprep.mubr.f32.mxu0 0.0
      %4273 = vmatmul.mubr.f32.gmra.mxu0 %v4093
      %v4274 = vpop.f32.mrf.mxu0
      %v4275 = vadd.f32 0.0, %v4274
      %v4276 = vpop.f32.mrf.mxu0
      %4277 = vmatprep.mubr.f32.mxu0 0.0
      %4278 = vmatmul.mubr.f32.gmra.mxu0 %v4096
      %v4279 = vpop.f32.mrf.mxu0
      %v4280 = vadd.f32 0.0, %v4279
      %v4281 = vpop.f32.mrf.mxu0
      %4282 = vmatprep.mubr.f32.mxu0 0.0
      %4283 = vmatmul.mubr.f32.gmra.mxu0 %v4099
      %v4284 = vpop.f32.mrf.mxu0
      %v4285 = vadd.f32 0.0, %v4284
      %v4286 = vpop.f32.mrf.mxu0
      %4287 = vmatprep.mubr.f32.mxu0 0.0
      %4288 = vmatmul.mubr.f32.gmra.mxu0 %v4102
      %v4289 = vpop.f32.mrf.mxu0
      %v4290 = vadd.f32 0.0, %v4289
      %v4291 = vpop.f32.mrf.mxu0
      %4292 = vmatprep.mubr.f32.mxu0 0.0
      %4293 = vmatmul.mubr.f32.gmra.mxu0 %v4105
      %v4294 = vpop.f32.mrf.mxu0
      %v4295 = vadd.f32 0.0, %v4294
      %v4296 = vpop.f32.mrf.mxu0
      %4297 = vmatprep.mubr.f32.mxu0 0.0
      %4298 = vmatmul.mubr.f32.gmra.mxu0 %v4108
      %v4299 = vpop.f32.mrf.mxu0
      %v4300 = vadd.f32 0.0, %v4299
      %v4301 = vpop.f32.mrf.mxu0
      %4302 = vmatprep.mubr.f32.mxu0 0.0
      %4303 = vmatmul.mubr.f32.gmra.mxu0 %v4111
      %v4304 = vpop.f32.mrf.mxu0
      %v4305 = vadd.f32 0.0, %v4304
      %v4306 = vpop.f32.mrf.mxu0
      %4307 = vmatprep.mubr.f32.mxu0 0.0
      %4308 = vmatmul.mubr.f32.gmra.mxu0 %v4114
      %v4309 = vpop.f32.mrf.mxu0
      %v4310 = vadd.f32 0.0, %v4309
      %v4311 = vpop.f32.mrf.mxu0
      %4312 = vmatprep.mubr.f32.mxu0 0.0
      %4313 = vmatmul.mubr.f32.gmra.mxu0 %v4117
      %v4314 = vpop.f32.mrf.mxu0
      %v4315 = vadd.f32 0.0, %v4314
      %v4316 = vpop.f32.mrf.mxu0
      %4317 = vmatprep.mubr.f32.mxu0 0.0
      %4318 = vmatmul.mubr.f32.gmra.mxu0 %v4120
      %v4319 = vpop.f32.mrf.mxu0
      %v4320 = vadd.f32 0.0, %v4319
      %v4321 = vpop.f32.mrf.mxu0
      %4322 = vmatprep.mubr.f32.mxu0 0.0
      %4323 = vmatmul.mubr.f32.gmra.mxu0 %v4123
      %v4324 = vpop.f32.mrf.mxu0
      %v4325 = vadd.f32 0.0, %v4324
      %v4326 = vpop.f32.mrf.mxu0
      %4327 = vmatprep.mubr.f32.mxu0 0.0
      %4328 = vmatmul.mubr.f32.gmra.mxu0 %v4126
      %v4329 = vpop.f32.mrf.mxu0
      %v4330 = vadd.f32 0.0, %v4329
      %v4331 = vpop.f32.mrf.mxu0
      %4332 = vmatprep.mubr.f32.mxu0 0.0
      %4333 = vmatmul.mubr.f32.gmra.mxu0 %v4129
      %v4334 = vpop.f32.mrf.mxu0
      %v4335 = vadd.f32 0.0, %v4334
      %v4336 = vpop.f32.mrf.mxu0
      %4337 = vmatprep.mubr.f32.mxu0 0.0
      %4338 = vmatmul.mubr.f32.gmra.mxu0 %v4132
      %v4339 = vpop.f32.mrf.mxu0
      %v4340 = vadd.f32 0.0, %v4339
      %v4341 = vpop.f32.mrf.mxu0
      %4342 = vmatprep.mubr.f32.mxu0 0.0
      %4343 = vmatmul.mubr.f32.gmra.mxu0 %v4135
      %v4344 = vpop.f32.mrf.mxu0
      %v4345 = vadd.f32 0.0, %v4344
      %v4346 = vpop.f32.mrf.mxu0
      %4347 = vmatprep.mubr.f32.mxu0 0.0
      %4348 = vmatmul.mubr.f32.gmra.mxu0 %v4138
      %v4349 = vpop.f32.mrf.mxu0
      %v4350 = vadd.f32 0.0, %v4349
      %v4351 = vpop.f32.mrf.mxu0
      %4352 = vmatprep.mubr.f32.mxu0 0.0
      %4353 = vmatmul.mubr.f32.gmra.mxu0 %v4141
      %v4354 = vpop.f32.mrf.mxu0
      %v4355 = vadd.f32 0.0, %v4354
      %v4356 = vpop.f32.mrf.mxu0
      %4357 = vmatprep.mubr.f32.mxu0 0.0
      %4358 = vmatmul.mubr.f32.gmra.mxu0 %v4144
      %v4359 = vpop.f32.mrf.mxu0
      %v4360 = vadd.f32 0.0, %v4359
      %v4361 = vpop.f32.mrf.mxu0
      %4362 = vmatprep.mubr.f32.mxu0 0.0
      %4363 = vmatmul.mubr.f32.gmra.mxu0 %v4147
      %v4364 = vpop.f32.mrf.mxu0
      %v4365 = vadd.f32 0.0, %v4364
      %v4366 = vpop.f32.mrf.mxu0
      %4367 = vmatprep.mubr.f32.mxu0 0.0
      %4368 = vmatmul.mubr.f32.gmra.mxu0 %v4150
      %v4369 = vpop.f32.mrf.mxu0
      %v4370 = vadd.f32 0.0, %v4369
      %v4371 = vpop.f32.mrf.mxu0
      %4372 = vmatprep.mubr.f32.mxu0 0.0
      %4373 = vmatmul.mubr.f32.gmra.mxu0 %v4153
      %v4374 = vpop.f32.mrf.mxu0
      %v4375 = vadd.f32 0.0, %v4374
      %v4376 = vpop.f32.mrf.mxu0
      %4377 = vmatprep.mubr.f32.mxu0 0.0
      %4378 = vmatmul.mubr.f32.gmra.mxu0 %v4156
      %v4379 = vpop.f32.mrf.mxu0
      %v4380 = vadd.f32 0.0, %v4379
      %v4381 = vpop.f32.mrf.mxu0
      %4382 = vdwg.mxu0
      %v4383 = vadd.f32 %v3963, %v4225
      %v4384 = vadd.f32 %v3964, %v4230
      %v4385 = vadd.f32 %v3965, %v4235
      %v4386 = vadd.f32 %v3966, %v4240
      %v4387 = vadd.f32 %v3967, %v4245
      %v4388 = vadd.f32 %v3968, %v4250
      %v4389 = vadd.f32 %v3969, %v4255
      %v4390 = vadd.f32 %v3970, %v4260
      %v4391 = vadd.f32 %v3971, %v4265
      %v4392 = vadd.f32 %v3972, %v4270
      %v4393 = vadd.f32 %v3973, %v4275
      %v4394 = vadd.f32 %v3974, %v4280
      %v4395 = vadd.f32 %v3975, %v4285
      %v4396 = vadd.f32 %v3976, %v4290
      %v4397 = vadd.f32 %v3977, %v4295
      %v4398 = vadd.f32 %v3978, %v4300
      %v4399 = vadd.f32 %v3979, %v4305
      %v4400 = vadd.f32 %v3980, %v4310
      %v4401 = vadd.f32 %v3981, %v4315
      %v4402 = vadd.f32 %v3982, %v4320
      %v4403 = vadd.f32 %v3983, %v4325
      %v4404 = vadd.f32 %v3984, %v4330
      %v4405 = vadd.f32 %v3985, %v4335
      %v4406 = vadd.f32 %v3986, %v4340
      %v4407 = vadd.f32 %v3987, %v4345
      %v4408 = vadd.f32 %v3988, %v4350
      %v4409 = vadd.f32 %v3989, %v4355
      %v4410 = vadd.f32 %v3990, %v4360
      %v4411 = vadd.f32 %v3991, %v4365
      %v4412 = vadd.f32 %v3992, %v4370
      %v4413 = vadd.f32 %v3993, %v4375
      %v4414 = vadd.f32 %v3994, %v4380
      %4415 = vst.msk [vmem:[%s258] sm:$0xff] %vm405, %v4383
      %4416 = vst.msk [vmem:[%s258 + $0x8] sm:$0xff] %vm405, %v4384
      %4417 = vst.msk [vmem:[%s258 + $0x10] sm:$0xff] %vm405, %v4385
      %4418 = vst.msk [vmem:[%s258 + $0x18] sm:$0xff] %vm405, %v4386
      %4419 = vst.msk [vmem:[%s258 + $0x20] sm:$0xff] %vm405, %v4387
      %4420 = vst.msk [vmem:[%s258 + $0x28] sm:$0xff] %vm405, %v4388
      %4421 = vst.msk [vmem:[%s258 + $0x30] sm:$0xff] %vm405, %v4389
      %4422 = vst.msk [vmem:[%s258 + $0x38] sm:$0xff] %vm405, %v4390
      %4423 = vst.msk [vmem:[%s258 + $0x40] sm:$0xff] %vm405, %v4391
      %4424 = vst.msk [vmem:[%s258 + $0x48] sm:$0xff] %vm405, %v4392
      %4425 = vst.msk [vmem:[%s258 + $0x50] sm:$0xff] %vm405, %v4393
      %4426 = vst.msk [vmem:[%s258 + $0x58] sm:$0xff] %vm405, %v4394
      %4427 = vst.msk [vmem:[%s258 + $0x60] sm:$0xff] %vm405, %v4395
      %4428 = vst.msk [vmem:[%s258 + $0x68] sm:$0xff] %vm405, %v4396
      %4429 = vst.msk [vmem:[%s258 + $0x70] sm:$0xff] %vm405, %v4397
      %4430 = vst.msk [vmem:[%s258 + $0x78] sm:$0xff] %vm405, %v4398
      %4431 = vst.msk [vmem:[%s258 + $0x80] sm:$0xff] %vm405, %v4399
      %4432 = vst.msk [vmem:[%s258 + $0x88] sm:$0xff] %vm405, %v4400
      %4433 = vst.msk [vmem:[%s258 + $0x90] sm:$0xff] %vm405, %v4401
      %4434 = vst.msk [vmem:[%s258 + $0x98] sm:$0xff] %vm405, %v4402
      %4435 = vst.msk [vmem:[%s258 + $0xa0] sm:$0xff] %vm405, %v4403
      %4436 = vst.msk [vmem:[%s258 + $0xa8] sm:$0xff] %vm405, %v4404
      %4437 = vst.msk [vmem:[%s258 + $0xb0] sm:$0xff] %vm405, %v4405
      %4438 = vst.msk [vmem:[%s258 + $0xb8] sm:$0xff] %vm405, %v4406
      %4439 = vst.msk [vmem:[%s258 + $0xc0] sm:$0xff] %vm405, %v4407
      %4440 = vst.msk [vmem:[%s258 + $0xc8] sm:$0xff] %vm405, %v4408
      %4441 = vst.msk [vmem:[%s258 + $0xd0] sm:$0xff] %vm405, %v4409
      %4442 = vst.msk [vmem:[%s258 + $0xd8] sm:$0xff] %vm405, %v4410
      %4443 = vst.msk [vmem:[%s258 + $0xe0] sm:$0xff] %vm405, %v4411
      %4444 = vst.msk [vmem:[%s258 + $0xe8] sm:$0xff] %vm405, %v4412
      %4445 = vst.msk [vmem:[%s258 + $0xf0] sm:$0xff] %vm405, %v4413
      %4446 = vst.msk [vmem:[%s258 + $0xf8] sm:$0xff] %vm405, %v4414
      %v4447 = vsel %vm405, %v4383, 0.0
      %v4448 = vsel %vm405, %v4384, 0.0
      %v4449 = vadd.f32 %v4447, %v4448
      %v4450 = vsel %vm405, %v4385, 0.0
      %v4451 = vadd.f32 %v4449, %v4450
      %v4452 = vsel %vm405, %v4386, 0.0
      %v4453 = vadd.f32 %v4451, %v4452
      %v4454 = vsel %vm405, %v4387, 0.0
      %v4455 = vadd.f32 %v4453, %v4454
      %v4456 = vsel %vm405, %v4388, 0.0
      %v4457 = vadd.f32 %v4455, %v4456
      %v4458 = vsel %vm405, %v4389, 0.0
      %v4459 = vadd.f32 %v4457, %v4458
      %v4460 = vsel %vm405, %v4390, 0.0
      %v4461 = vadd.f32 %v4459, %v4460
      %v4462 = vsel %vm405, %v4391, 0.0
      %v4463 = vadd.f32 %v4461, %v4462
      %v4464 = vsel %vm405, %v4392, 0.0
      %v4465 = vadd.f32 %v4463, %v4464
      %v4466 = vsel %vm405, %v4393, 0.0
      %v4467 = vadd.f32 %v4465, %v4466
      %v4468 = vsel %vm405, %v4394, 0.0
      %v4469 = vadd.f32 %v4467, %v4468
      %v4470 = vsel %vm405, %v4395, 0.0
      %v4471 = vadd.f32 %v4469, %v4470
      %v4472 = vsel %vm405, %v4396, 0.0
      %v4473 = vadd.f32 %v4471, %v4472
      %v4474 = vsel %vm405, %v4397, 0.0
      %v4475 = vadd.f32 %v4473, %v4474
      %v4476 = vsel %vm405, %v4398, 0.0
      %v4477 = vadd.f32 %v4475, %v4476
      %v4478 = vsel %vm405, %v4399, 0.0
      %v4479 = vadd.f32 %v4477, %v4478
      %v4480 = vsel %vm405, %v4400, 0.0
      %v4481 = vadd.f32 %v4479, %v4480
      %v4482 = vsel %vm405, %v4401, 0.0
      %v4483 = vadd.f32 %v4481, %v4482
      %v4484 = vsel %vm405, %v4402, 0.0
      %v4485 = vadd.f32 %v4483, %v4484
      %v4486 = vsel %vm405, %v4403, 0.0
      %v4487 = vadd.f32 %v4485, %v4486
      %v4488 = vsel %vm405, %v4404, 0.0
      %v4489 = vadd.f32 %v4487, %v4488
      %v4490 = vsel %vm405, %v4405, 0.0
      %v4491 = vadd.f32 %v4489, %v4490
      %v4492 = vsel %vm405, %v4406, 0.0
      %v4493 = vadd.f32 %v4491, %v4492
      %v4494 = vsel %vm405, %v4407, 0.0
      %v4495 = vadd.f32 %v4493, %v4494
      %v4496 = vsel %vm405, %v4408, 0.0
      %v4497 = vadd.f32 %v4495, %v4496
      %v4498 = vsel %vm405, %v4409, 0.0
      %v4499 = vadd.f32 %v4497, %v4498
      %v4500 = vsel %vm405, %v4410, 0.0
      %v4501 = vadd.f32 %v4499, %v4500
      %v4502 = vsel %vm405, %v4411, 0.0
      %v4503 = vadd.f32 %v4501, %v4502
      %v4504 = vsel %vm405, %v4412, 0.0
      %v4505 = vadd.f32 %v4503, %v4504
      %v4506 = vsel %vm405, %v4413, 0.0
      %v4507 = vadd.f32 %v4505, %v4506
      %v4508 = vsel %vm405, %v4414, 0.0
      %v4509 = vadd.f32 %v4507, %v4508
      %v4510 = vrot.slane %v4509, 4
      %v4511 = vadd.f32 %v4509, %v4510
      %v4512 = vrot.slane %v4511, 2
      %v4513 = vadd.f32 %v4511, %v4512
      %v4514 = vrot.slane %v4513, 1
      %v4515 = vadd.f32 %v4513, %v4514
      %vm4516 = vcmask 122880
      %4517 = vst.msk [vmem:[%s262] sm:$0x1] %vm4516, %v4515
      %v4518 = vmul.f32 %v4383, %v4383
      %v4519 = vmul.f32 %v4384, %v4384
      %v4520 = vmul.f32 %v4385, %v4385
      %v4521 = vmul.f32 %v4386, %v4386
      %v4522 = vmul.f32 %v4387, %v4387
      %v4523 = vmul.f32 %v4388, %v4388
      %v4524 = vmul.f32 %v4389, %v4389
      %v4525 = vmul.f32 %v4390, %v4390
      %v4526 = vmul.f32 %v4391, %v4391
      %v4527 = vmul.f32 %v4392, %v4392
      %v4528 = vmul.f32 %v4393, %v4393
      %v4529 = vmul.f32 %v4394, %v4394
      %v4530 = vmul.f32 %v4395, %v4395
      %v4531 = vmul.f32 %v4396, %v4396
      %v4532 = vmul.f32 %v4397, %v4397
      %v4533 = vmul.f32 %v4398, %v4398
      %v4534 = vmul.f32 %v4399, %v4399
      %v4535 = vmul.f32 %v4400, %v4400
      %v4536 = vmul.f32 %v4401, %v4401
      %v4537 = vmul.f32 %v4402, %v4402
      %v4538 = vmul.f32 %v4403, %v4403
      %v4539 = vmul.f32 %v4404, %v4404
      %v4540 = vmul.f32 %v4405, %v4405
      %v4541 = vmul.f32 %v4406, %v4406
      %v4542 = vmul.f32 %v4407, %v4407
      %v4543 = vmul.f32 %v4408, %v4408
      %v4544 = vmul.f32 %v4409, %v4409
      %v4545 = vmul.f32 %v4410, %v4410
      %v4546 = vmul.f32 %v4411, %v4411
      %v4547 = vmul.f32 %v4412, %v4412
      %v4548 = vmul.f32 %v4413, %v4413
      %v4549 = vmul.f32 %v4414, %v4414
      %v4550 = vsel %vm405, %v4518, 0.0
      %v4551 = vsel %vm405, %v4519, 0.0
      %v4552 = vadd.f32 %v4550, %v4551
      %v4553 = vsel %vm405, %v4520, 0.0
      %v4554 = vadd.f32 %v4552, %v4553
      %v4555 = vsel %vm405, %v4521, 0.0
      %v4556 = vadd.f32 %v4554, %v4555
      %v4557 = vsel %vm405, %v4522, 0.0
      %v4558 = vadd.f32 %v4556, %v4557
      %v4559 = vsel %vm405, %v4523, 0.0
      %v4560 = vadd.f32 %v4558, %v4559
      %v4561 = vsel %vm405, %v4524, 0.0
      %v4562 = vadd.f32 %v4560, %v4561
      %v4563 = vsel %vm405, %v4525, 0.0
      %v4564 = vadd.f32 %v4562, %v4563
      %v4565 = vsel %vm405, %v4526, 0.0
      %v4566 = vadd.f32 %v4564, %v4565
      %v4567 = vsel %vm405, %v4527, 0.0
      %v4568 = vadd.f32 %v4566, %v4567
      %v4569 = vsel %vm405, %v4528, 0.0
      %v4570 = vadd.f32 %v4568, %v4569
      %v4571 = vsel %vm405, %v4529, 0.0
      %v4572 = vadd.f32 %v4570, %v4571
      %v4573 = vsel %vm405, %v4530, 0.0
      %v4574 = vadd.f32 %v4572, %v4573
      %v4575 = vsel %vm405, %v4531, 0.0
      %v4576 = vadd.f32 %v4574, %v4575
      %v4577 = vsel %vm405, %v4532, 0.0
      %v4578 = vadd.f32 %v4576, %v4577
      %v4579 = vsel %vm405, %v4533, 0.0
      %v4580 = vadd.f32 %v4578, %v4579
      %v4581 = vsel %vm405, %v4534, 0.0
      %v4582 = vadd.f32 %v4580, %v4581
      %v4583 = vsel %vm405, %v4535, 0.0
      %v4584 = vadd.f32 %v4582, %v4583
      %v4585 = vsel %vm405, %v4536, 0.0
      %v4586 = vadd.f32 %v4584, %v4585
      %v4587 = vsel %vm405, %v4537, 0.0
      %v4588 = vadd.f32 %v4586, %v4587
      %v4589 = vsel %vm405, %v4538, 0.0
      %v4590 = vadd.f32 %v4588, %v4589
      %v4591 = vsel %vm405, %v4539, 0.0
      %v4592 = vadd.f32 %v4590, %v4591
      %v4593 = vsel %vm405, %v4540, 0.0
      %v4594 = vadd.f32 %v4592, %v4593
      %v4595 = vsel %vm405, %v4541, 0.0
      %v4596 = vadd.f32 %v4594, %v4595
      %v4597 = vsel %vm405, %v4542, 0.0
      %v4598 = vadd.f32 %v4596, %v4597
      %v4599 = vsel %vm405, %v4543, 0.0
      %v4600 = vadd.f32 %v4598, %v4599
      %v4601 = vsel %vm405, %v4544, 0.0
      %v4602 = vadd.f32 %v4600, %v4601
      %v4603 = vsel %vm405, %v4545, 0.0
      %v4604 = vadd.f32 %v4602, %v4603
      %v4605 = vsel %vm405, %v4546, 0.0
      %v4606 = vadd.f32 %v4604, %v4605
      %v4607 = vsel %vm405, %v4547, 0.0
      %v4608 = vadd.f32 %v4606, %v4607
      %v4609 = vsel %vm405, %v4548, 0.0
      %v4610 = vadd.f32 %v4608, %v4609
      %v4611 = vsel %vm405, %v4549, 0.0
      %v4612 = vadd.f32 %v4610, %v4611
      %v4613 = vrot.slane %v4612, 4
      %v4614 = vadd.f32 %v4612, %v4613
      %v4615 = vrot.slane %v4614, 2
      %v4616 = vadd.f32 %v4614, %v4615
      %v4617 = vrot.slane %v4616, 1
      %v4618 = vadd.f32 %v4616, %v4617
      %4619 = vst.msk [vmem:[%s262 + $0x1] sm:$0x1] %vm4516, %v4618
      %p4620 = scmp.lt.s32.totalorder %s18, 1
      %s4621 = scalar_select %p4620, %s18, 1
      %s4622 = smul.addr %s4621, 32
      %s4623 = smul.addr %s4622, 8
      %s4624 = scalar_lea.vmem %s5, %s4623
      %p4625 = scmp.lt.s32.totalorder %s18, 1
      %s4626 = scalar_select %p4625, %s18, 1
      %s4627 = smul.addr %s4626, 2
      %s4628 = scalar_lea.vmem %s6, %s4627
      // Predicated region
      $region41: #{bottleneck_forward.5} parent=39 // pred_check
        %p4629 = pneg %p146
      $region42: #{bottleneck_forward.5} parent=39 // pred_check_branch
        %4631 = sbr.rel (%p4629) target = $region44
      $region43: #{bottleneck_forward.5} parent=39 // pred_region
        _
      $region44: #{bottleneck_forward.5} parent=39 // pred_fallthru
        _
      // Predicated region
      $region45: #{bottleneck_forward.5} parent=39 // pred_check
        %p4632 = pneg %p172
      $region46: #{bottleneck_forward.5} parent=39 // pred_check_branch
        %4634 = sbr.rel (%p4632) target = $region48
      $region47: #{bottleneck_forward.5} parent=39 // pred_region
        _
      $region48: #{bottleneck_forward.5} parent=39 // pred_fallthru
        _
    $region40: #{bottleneck_forward.5} parent=5 // pred_fallthru
      _
    %p4635 = scmp.le.s32.totalorder 2, %s13
    // Predicated region
    $region49: #{bottleneck_forward.5} parent=5 // pred_check
      %p4636 = pneg %p4635
    $region50: #{bottleneck_forward.5} parent=5 // pred_check_branch
      %4638 = sbr.rel (%p4636) target = $region52
    $region51: #{bottleneck_forward.5} parent=5 // pred_region
      %s4639 = ssub.s32 %s13, 2
      // Predicated region
      $region53: #{bottleneck_forward.5} parent=51 // pred_check
        %p4640 = pneg %p152
      $region54: #{bottleneck_forward.5} parent=51 // pred_check_branch
        %4642 = sbr.rel (%p4640) target = $region56
      $region55: #{bottleneck_forward.5} parent=51 // pred_region
        %p4643 = scmp.lt.s32.totalorder %s19, 1
        %s4644 = scalar_select %p4643, %s19, 1
        %s4645 = smul.addr %s4644, 32
        %s4646 = smul.addr %s4645, 8
        %s4647 = scalar_lea.vmem %s5, %s4646
      $region56: #{bottleneck_forward.5} parent=51 // pred_fallthru
        _
      // Predicated region
      $region57: #{bottleneck_forward.5} parent=51 // pred_check
        %p4648 = pneg %p178
      $region58: #{bottleneck_forward.5} parent=51 // pred_check_branch
        %4650 = sbr.rel (%p4648) target = $region60
      $region59: #{bottleneck_forward.5} parent=51 // pred_region
        %p4651 = scmp.lt.s32.totalorder %s19, 1
        %s4652 = scalar_select %p4651, %s19, 1
        %s4653 = smul.addr %s4652, 2
        %s4654 = scalar_lea.vmem %s6, %s4653
      $region60: #{bottleneck_forward.5} parent=51 // pred_fallthru
        _
    $region52: #{bottleneck_forward.5} parent=5 // pred_fallthru
      _
  $region6: #{bottleneck_forward.5} parent=0 // loop_footer
    %s17 = sadd.s32 1, %s13
  $region7: #{bottleneck_forward.5} parent=0 // loop_footer_branch
    %12 = sbr.rel target = $region3
  $region8: #{bottleneck_forward.5} parent=0 // loop_exit
    _

</llo_original>
